<compile_context>
chip_gen: v7x
topology: tpu7x:2x2x1
jax: 0.10.0
libtpu: 0.0.40
codegen_flags: <defaults>
</compile_context>

<pallas_src>
import functools

import jax
import jax.numpy as jnp
import numpy as np
from jax import lax
from jax.experimental import pallas as pl
from jax.experimental.pallas import tpu as pltpu

EPS = 1e-5
LANE = 128
# Above the 16/32 MiB scoped defaults, safely below every generation's
# physical VMEM (including v7x's 64 MiB per TensorCore).
_VMEM_LIMIT = 48 * 1024 * 1024


def _round_up(x, m):
    return (x + m - 1) // m * m


def _pick_tile_rows(H, Wp):
    """Output pixel-rows per grid step.

    Target ~1024 (TH*Wp) rows per tile: >=512 rows reaches ~85% of the HBM
    roofline and amortizes the ~0.35us per-grid-step overhead, while the tile
    (+ double buffering) stays far below v7x's 64 MiB VMEM.
    """
    th = max(1, min(H, 1024 // Wp))
    while H % th != 0:
        th -= 1
    return th


# ---------------------------------------------------------------------------
# Pass 1 kernel: 3x3 conv (9 accumulated MXU matmuls) + bias + ReLU,
#                plus per-tile BatchNorm partial statistics.
# ---------------------------------------------------------------------------
def _conv_relu_stats_kernel(halo_ref, w_ref, b_ref, y_ref, stats_ref,
                            *, TH, W, Wp):
    """
    halo_ref : (1, HALO_ROWS, Cin)  row-major flattened reflection-padded halo
    w_ref    : (9, Cin, Coutp)      per-tap weights, tap index = kh*3 + kw
    b_ref    : (1, Coutp)           conv bias (f32)
    y_ref    : (1, TH*Wp, Coutp)    un-normalized ReLU(conv+bias); columns
                                    w in [W, Wp) are junk, discarded later
    stats_ref: (1, 2, Coutp)        [sum, sum_sq] over valid pixels (f32)
    """
    rows = TH * Wp
    coutp = w_ref.shape[-1]
    acc = jnp.zeros((rows, coutp), jnp.float32)
    # 3x3 conv == 9 shifted matmuls over the flattened halo slab:
    #   out[r*Wp + w] += halo[(r+kh)*Wp + (w+kw)] @ W[kh, kw]
    for kh in range(3):
        for kw in range(3):
            off = kh * Wp + kw
            xs = halo_ref[0, off:off + rows, :]
            acc = acc + jnp.dot(xs, w_ref[kh * 3 + kw],
                                preferred_element_type=jnp.float32)
    y = jnp.maximum(acc + b_ref[...], 0.0)
    y_ref[0] = y.astype(y_ref.dtype)

    # BatchNorm partials: mask the junk width columns so statistics only see
    # the N*H*W valid pixels.  The global (cross-tile) reduction is outside.
    col = lax.broadcasted_iota(jnp.int32, (rows, 1), 0) % Wp
    valid = (col < W).astype(jnp.float32)
    yv = y * valid
    s = jnp.sum(yv, axis=0, keepdims=True)
    sq = jnp.sum(yv * yv, axis=0, keepdims=True)
    stats_ref[0] = jnp.concatenate([s, sq], axis=0)


# ---------------------------------------------------------------------------
# Pass 2 kernel: y * scale + shift   (per-channel BatchNorm application)
# ---------------------------------------------------------------------------
def _normalize_kernel(y_ref, scale_ref, shift_ref, o_ref):
    y = y_ref[0].astype(jnp.float32)
    o_ref[0] = (y * scale_ref[...] + shift_ref[...]).astype(o_ref.dtype)


# ---------------------------------------------------------------------------
# Wrappers
# ---------------------------------------------------------------------------
def _conv_pass(x_nhwc, w_tap, bias_p, TH, compute_dtype, out_dtype):
    """ReflectionPad2d(1) -> Conv3x3 -> ReLU, tiled over image rows.

    Returns (un-normalized activation slab (num_tiles, TH*Wp, Coutp),
             per-tile BN partial statistics (num_tiles, 2, Coutp)).
    """
    N, H, W, C = x_nhwc.shape
    Coutp = w_tap.shape[-1]
    Wp = W + 2
    nH = H // TH
    num_tiles = N * nH
    ROWS = TH * Wp
    # +2 keeps the largest tap slice (offset 2*Wp + 2) in bounds; round to 8.
    HALO_ROWS = _round_up((TH + 2) * Wp + 2, 8)

    # Glue: reflection pad + overlapping row-blocks (halo of 1 row each side).
    xp = jnp.pad(x_nhwc, ((0, 0), (1, 1), (1, 1), (0, 0)), mode="reflect")
    halo = jnp.stack([xp[:, i * TH:i * TH + TH + 2] for i in range(nH)], axis=1)
    halo = halo.reshape(num_tiles, (TH + 2) * Wp, C)
    halo = jnp.pad(halo, ((0, 0), (0, HALO_ROWS - (TH + 2) * Wp), (0, 0)))
    halo = halo.astype(compute_dtype)

    kern = functools.partial(_conv_relu_stats_kernel, TH=TH, W=W, Wp=Wp)
    flops = 2 * num_tiles * ROWS * (9 * C) * Coutp
    bytes_accessed = (int(halo.size) * halo.dtype.itemsize
                      + int(w_tap.size) * w_tap.dtype.itemsize
                      + num_tiles * ROWS * Coutp * jnp.dtype(out_dtype).itemsize)

    y_slab, stats = pl.pallas_call(
        kern,
        grid=(num_tiles,),
        in_specs=[
            pl.BlockSpec((1, HALO_ROWS, C), lambda t: (t, 0, 0)),  # halo tile
            pl.BlockSpec((9, C, Coutp), lambda t: (0, 0, 0)),      # weights (resident)
            pl.BlockSpec((1, Coutp), lambda t: (0, 0)),            # bias (resident)
        ],
        out_specs=(
            pl.BlockSpec((1, ROWS, Coutp), lambda t: (t, 0, 0)),   # activation tile
            pl.BlockSpec((1, 2, Coutp), lambda t: (t, 0, 0)),      # BN partials
        ),
        out_shape=(
            jax.ShapeDtypeStruct((num_tiles, ROWS, Coutp), out_dtype),
            jax.ShapeDtypeStruct((num_tiles, 2, Coutp), jnp.float32),
        ),
        compiler_params=pltpu.CompilerParams(
            dimension_semantics=("parallel",),   # shard tiles across TCs (v7x)
            vmem_limit_bytes=_VMEM_LIMIT,
        ),
        cost_estimate=pl.CostEstimate(flops=flops, transcendentals=0,
                                      bytes_accessed=bytes_accessed),
    )(halo, w_tap, bias_p)
    return y_slab, stats


def _bn_scale_shift(stats, gamma, beta, count, Cout):
    """Per-channel BatchNorm scale/shift from per-tile sum / sum-of-squares."""
    s = jnp.sum(stats[:, 0, :Cout], axis=0)                 # f32 accumulation
    sq = jnp.sum(stats[:, 1, :Cout], axis=0)
    mean = s / count
    var = jnp.maximum(sq / count - mean * mean, 0.0)         # biased (train-mode)
    scale = gamma * lax.rsqrt(var + EPS)
    shift = beta - mean * scale
    return scale, shift


def _prep_weight(w_oihw, Cinp, Coutp, compute_dtype):
    Cout, Cin = w_oihw.shape[0], w_oihw.shape[1]
    w = jnp.transpose(w_oihw, (2, 3, 1, 0)).reshape(9, Cin, Cout)  # taps (kh, kw)
    w = jnp.pad(w, ((0, 0), (0, Cinp - Cin), (0, Coutp - Cout)))
    return w.astype(compute_dtype)


def _prep_bias(b, Coutp):
    return jnp.pad(b, (0, Coutp - b.shape[0])).reshape(1, Coutp).astype(jnp.float32)


def encode_block_forward(x_nchw, params, compute_dtype=jnp.bfloat16):
    """encode_block forward; NCHW in/out (PyTorch layout), NHWC internally."""
    x = jnp.transpose(x_nchw, (0, 2, 3, 1)).astype(jnp.float32)
    N, H, W, Cin = x.shape
    Cout = params["w1"].shape[0]
    Coutp = _round_up(Cout, LANE)        # lane-dense / MXU-aligned channel dim
    Wp = W + 2
    TH = _pick_tile_rows(H, Wp)
    nH = H // TH
    num_tiles = N * nH
    ROWS = TH * Wp
    count = N * H * W

    # ---- block 1: ReflectionPad -> Conv1 -> ReLU  (+ batch statistics)
    w1 = _prep_weight(params["w1"], Cin, Coutp, compute_dtype)
    b1 = _prep_bias(params["b1"], Coutp)
    y1_slab, stats1 = _conv_pass(x, w1, b1, TH, compute_dtype, out_dtype=compute_dtype)
    scale1, shift1 = _bn_scale_shift(stats1, params["g1"], params["beta1"], count, Cout)

    # BatchNorm1 is a per-channel affine; it commutes with reflection padding
    # and folds into conv2:  conv2(BN1(y1)) == conv2'(y1)  with
    #   w2'[o,i] = w2[o,i] * scale1[i],  b2'[o] = b2[o] + sum w2[o,i,:,:]*shift1[i]
    w2f = params["w2"] * scale1[None, :, None, None]
    b2f = params["b2"] + jnp.einsum("oikl,i->o", params["w2"], shift1)

    # Rebuild the valid NHWC activation (padded channels stay zero) for the
    # block-2 halos; intermediate stays NHWC (and bf16 in the fast path).
    y1 = y1_slab.reshape(N, nH, TH, Wp, Coutp)[:, :, :, :W, :].reshape(N, H, W, Coutp)

    # ---- block 2: ReflectionPad -> Conv2' -> ReLU  (+ batch statistics)
    w2 = _prep_weight(w2f, Coutp, Coutp, compute_dtype)
    b2 = _prep_bias(b2f, Coutp)
    y2_slab, stats2 = _conv_pass(y1, w2, b2, TH, compute_dtype, out_dtype=jnp.float32)
    scale2, shift2 = _bn_scale_shift(stats2, params["g2"], params["beta2"], count, Cout)

    # ---- BatchNorm2: cheap lane-dense normalize pass (y*scale + shift)
    scale2p = jnp.pad(scale2, (0, Coutp - Cout)).reshape(1, Coutp).astype(jnp.float32)
    shift2p = jnp.pad(shift2, (0, Coutp - Cout)).reshape(1, Coutp).astype(jnp.float32)
    out_slab = pl.pallas_call(
        _normalize_kernel,
        grid=(num_tiles,),
        in_specs=[
            pl.BlockSpec((1, ROWS, Coutp), lambda t: (t, 0, 0)),
            pl.BlockSpec((1, Coutp), lambda t: (0, 0)),
            pl.BlockSpec((1, Coutp), lambda t: (0, 0)),
        ],
        out_specs=pl.BlockSpec((1, ROWS, Coutp), lambda t: (t, 0, 0)),
        out_shape=jax.ShapeDtypeStruct((num_tiles, ROWS, Coutp), jnp.float32),
        compiler_params=pltpu.CompilerParams(
            dimension_semantics=("parallel",),
            vmem_limit_bytes=_VMEM_LIMIT,
        ),
    )(y2_slab, scale2p, shift2p)

    out = out_slab.reshape(N, nH, TH, Wp, Coutp)[:, :, :, :W, :Cout]
    out = out.reshape(N, H, W, Cout)
    return jnp.transpose(out, (0, 3, 1, 2))  # NHWC -> NCHW (module interface)


# ----------------------- pure-JAX reference (for checking) -----------------
def _ref_block(x_nchw, w, b, gamma, beta):
    xp = jnp.pad(x_nchw, ((0, 0), (0, 0), (1, 1), (1, 1)), mode="reflect")
    y = lax.conv_general_dilated(
        xp, w, window_strides=(1, 1), padding="VALID",
        dimension_numbers=("NCHW", "OIHW", "NCHW"),
    ) + b.reshape(1, -1, 1, 1)
    y = jnp.maximum(y, 0.0)
    mean = jnp.mean(y, axis=(0, 2, 3), keepdims=True)
    var = jnp.mean((y - mean) ** 2, axis=(0, 2, 3), keepdims=True)
    return (y - mean) * lax.rsqrt(var + EPS) * gamma.reshape(1, -1, 1, 1) \
        + beta.reshape(1, -1, 1, 1)


def encode_block_reference(x_nchw, params):
    y = _ref_block(x_nchw, params["w1"], params["b1"], params["g1"], params["beta1"])
    y = _ref_block(y, params["w2"], params["b2"], params["g2"], params["beta2"])
    return y


if __name__ == "__main__":
    N, C_in, C_out, H, W = 2, 4, 8, 16, 16

    key = jax.random.PRNGKey(0)
    kx, kw1, kb1, kw2, kb2 = jax.random.split(key, 5)
    x = jax.random.normal(kx, (N, C_in, H, W), dtype=jnp.float32)

    # Deterministic parameter init (Conv2d-like uniform fan-in bounds).
    bound1 = 1.0 / np.sqrt(C_in * 9)
    bound2 = 1.0 / np.sqrt(C_out * 9)
    params = {
        "w1": jax.random.uniform(kw1, (C_out, C_in, 3, 3), jnp.float32, -bound1, bound1),
        "b1": jax.random.uniform(kb1, (C_out,), jnp.float32, -bound1, bound1),
        "g1": jnp.ones((C_out,), jnp.float32),
        "beta1": jnp.zeros((C_out,), jnp.float32),
        "w2": jax.random.uniform(kw2, (C_out, C_out, 3, 3), jnp.float32, -bound2, bound2),
        "b2": jax.random.uniform(kb2, (C_out,), jnp.float32, -bound2, bound2),
        "g2": jnp.ones((C_out,), jnp.float32),
        "beta2": jnp.zeros((C_out,), jnp.float32),
    }

    ref = jax.block_until_ready(encode_block_reference(x, params))

    # float32 path: validates the kernel math (reflect pad, conv, ReLU,
    # train-mode BatchNorm with batch statistics) at tight tolerance.
    fwd_f32 = jax.jit(functools.partial(encode_block_forward, compute_dtype=jnp.float32))
    out_f32 = jax.block_until_ready(fwd_f32(x, params))
    assert out_f32.shape == (N, C_out, H, W), out_f32.shape
    np.testing.assert_allclose(np.asarray(out_f32), np.asarray(ref), rtol=1e-3, atol=1e-3)

    # bf16 MXU path (default performance configuration): bf16 operands with
    # f32 accumulation and f32 statistics.  Two chained 3x3 convs plus the
    # BatchNorm rescaling amplify bf16 (eps ~ 8e-3) operand rounding to a few
    # 1e-2 absolute, hence the looser tolerance.
    fwd_bf16 = jax.jit(functools.partial(encode_block_forward, compute_dtype=jnp.bfloat16))
    out_bf16 = jax.block_until_ready(fwd_bf16(x, params))
    assert out_bf16.shape == (N, C_out, H, W), out_bf16.shape
    np.testing.assert_allclose(np.asarray(out_bf16), np.asarray(ref), rtol=5e-2, atol=5e-2)

    print("KERNEL_OK")
</pallas_src>

<mosaic_0001>
module attributes {stable_mosaic.version = 11 : i64} {
  func.func @_conv_relu_stats_kernel(%arg0: i32, %arg1: memref<1x328x4xf32, #tpu.memory_space<vmem>>, %arg2: memref<9x4x128xf32, #tpu.memory_space<vmem>>, %arg3: memref<1x128xf32, #tpu.memory_space<vmem>>, %arg4: memref<1x288x128xf32, #tpu.memory_space<vmem>>, %arg5: memref<1x2x128xf32, #tpu.memory_space<vmem>>) attributes {dimension_semantics = [#tpu.dimension_semantics<parallel>], iteration_bounds = array<i64: 2>, scalar_prefetch = 0 : i64, scratch_operands = 0 : i64, tpu.core_type = #tpu.core_type<tc>, window_params = [{transform_indices = @transform_0, window_bounds = array<i64: 1, 328, 4>}, {pipeline_mode = #tpu.pipeline_mode<synchronous>, transform_indices = @transform_1, window_bounds = array<i64: 9, 4, 128>}, {pipeline_mode = #tpu.pipeline_mode<synchronous>, transform_indices = @transform_2, window_bounds = array<i64: 1, 128>}, {transform_indices = @transform_3, window_bounds = array<i64: 1, 288, 128>}, {transform_indices = @transform_4, window_bounds = array<i64: 1, 2, 128>}]} {
    %cst = arith.constant 0.000000e+00 : f32
    %0 = vector.broadcast %cst : f32 to vector<288x128xf32>
    %c0 = arith.constant 0 : index
    %c0_0 = arith.constant 0 : index
    %c0_1 = arith.constant 0 : index
    %1 = vector.load %arg1[%c0, %c0_0, %c0_1] : memref<1x328x4xf32, #tpu.memory_space<vmem>>, vector<1x288x4xf32>
    %2 = vector.shape_cast %1 : vector<1x288x4xf32> to vector<288x4xf32>
    %c0_2 = arith.constant 0 : index
    %c0_3 = arith.constant 0 : index
    %c0_4 = arith.constant 0 : index
    %3 = vector.load %arg2[%c0_2, %c0_3, %c0_4] : memref<9x4x128xf32, #tpu.memory_space<vmem>>, vector<1x4x128xf32>
    %4 = vector.shape_cast %3 : vector<1x4x128xf32> to vector<4x128xf32>
    %cst_5 = arith.constant dense<0.000000e+00> : vector<288x128xf32>
    %5 = tpu.matmul %2, %4, %cst_5 {dimension_numbers = #tpu.dot_dimension_numbers<[1], [0], [0], [1], [0, 0, 1, 1], [], []>} : vector<288x4xf32>, vector<4x128xf32>, vector<288x128xf32> -> vector<288x128xf32>
    %6 = arith.addf %0, %5 : vector<288x128xf32>
    %c0_6 = arith.constant 0 : index
    %c1 = arith.constant 1 : index
    %c0_7 = arith.constant 0 : index
    %7 = vector.load %arg1[%c0_6, %c1, %c0_7] : memref<1x328x4xf32, #tpu.memory_space<vmem>>, vector<1x288x4xf32>
    %8 = vector.shape_cast %7 : vector<1x288x4xf32> to vector<288x4xf32>
    %c1_8 = arith.constant 1 : index
    %c0_9 = arith.constant 0 : index
    %c0_10 = arith.constant 0 : index
    %9 = vector.load %arg2[%c1_8, %c0_9, %c0_10] : memref<9x4x128xf32, #tpu.memory_space<vmem>>, vector<1x4x128xf32>
    %10 = vector.shape_cast %9 : vector<1x4x128xf32> to vector<4x128xf32>
    %cst_11 = arith.constant dense<0.000000e+00> : vector<288x128xf32>
    %11 = tpu.matmul %8, %10, %cst_11 {dimension_numbers = #tpu.dot_dimension_numbers<[1], [0], [0], [1], [0, 0, 1, 1], [], []>} : vector<288x4xf32>, vector<4x128xf32>, vector<288x128xf32> -> vector<288x128xf32>
    %12 = arith.addf %6, %11 : vector<288x128xf32>
    %c0_12 = arith.constant 0 : index
    %c2 = arith.constant 2 : index
    %c0_13 = arith.constant 0 : index
    %13 = vector.load %arg1[%c0_12, %c2, %c0_13] : memref<1x328x4xf32, #tpu.memory_space<vmem>>, vector<1x288x4xf32>
    %14 = vector.shape_cast %13 : vector<1x288x4xf32> to vector<288x4xf32>
    %c2_14 = arith.constant 2 : index
    %c0_15 = arith.constant 0 : index
    %c0_16 = arith.constant 0 : index
    %15 = vector.load %arg2[%c2_14, %c0_15, %c0_16] : memref<9x4x128xf32, #tpu.memory_space<vmem>>, vector<1x4x128xf32>
    %16 = vector.shape_cast %15 : vector<1x4x128xf32> to vector<4x128xf32>
    %cst_17 = arith.constant dense<0.000000e+00> : vector<288x128xf32>
    %17 = tpu.matmul %14, %16, %cst_17 {dimension_numbers = #tpu.dot_dimension_numbers<[1], [0], [0], [1], [0, 0, 1, 1], [], []>} : vector<288x4xf32>, vector<4x128xf32>, vector<288x128xf32> -> vector<288x128xf32>
    %18 = arith.addf %12, %17 : vector<288x128xf32>
    %c0_18 = arith.constant 0 : index
    %c18 = arith.constant 18 : index
    %c0_19 = arith.constant 0 : index
    %19 = vector.load %arg1[%c0_18, %c18, %c0_19] : memref<1x328x4xf32, #tpu.memory_space<vmem>>, vector<1x288x4xf32>
    %20 = vector.shape_cast %19 : vector<1x288x4xf32> to vector<288x4xf32>
    %c3 = arith.constant 3 : index
    %c0_20 = arith.constant 0 : index
    %c0_21 = arith.constant 0 : index
    %21 = vector.load %arg2[%c3, %c0_20, %c0_21] : memref<9x4x128xf32, #tpu.memory_space<vmem>>, vector<1x4x128xf32>
    %22 = vector.shape_cast %21 : vector<1x4x128xf32> to vector<4x128xf32>
    %cst_22 = arith.constant dense<0.000000e+00> : vector<288x128xf32>
    %23 = tpu.matmul %20, %22, %cst_22 {dimension_numbers = #tpu.dot_dimension_numbers<[1], [0], [0], [1], [0, 0, 1, 1], [], []>} : vector<288x4xf32>, vector<4x128xf32>, vector<288x128xf32> -> vector<288x128xf32>
    %24 = arith.addf %18, %23 : vector<288x128xf32>
    %c0_23 = arith.constant 0 : index
    %c19 = arith.constant 19 : index
    %c0_24 = arith.constant 0 : index
    %25 = vector.load %arg1[%c0_23, %c19, %c0_24] : memref<1x328x4xf32, #tpu.memory_space<vmem>>, vector<1x288x4xf32>
    %26 = vector.shape_cast %25 : vector<1x288x4xf32> to vector<288x4xf32>
    %c4 = arith.constant 4 : index
    %c0_25 = arith.constant 0 : index
    %c0_26 = arith.constant 0 : index
    %27 = vector.load %arg2[%c4, %c0_25, %c0_26] : memref<9x4x128xf32, #tpu.memory_space<vmem>>, vector<1x4x128xf32>
    %28 = vector.shape_cast %27 : vector<1x4x128xf32> to vector<4x128xf32>
    %cst_27 = arith.constant dense<0.000000e+00> : vector<288x128xf32>
    %29 = tpu.matmul %26, %28, %cst_27 {dimension_numbers = #tpu.dot_dimension_numbers<[1], [0], [0], [1], [0, 0, 1, 1], [], []>} : vector<288x4xf32>, vector<4x128xf32>, vector<288x128xf32> -> vector<288x128xf32>
    %30 = arith.addf %24, %29 : vector<288x128xf32>
    %c0_28 = arith.constant 0 : index
    %c20 = arith.constant 20 : index
    %c0_29 = arith.constant 0 : index
    %31 = vector.load %arg1[%c0_28, %c20, %c0_29] : memref<1x328x4xf32, #tpu.memory_space<vmem>>, vector<1x288x4xf32>
    %32 = vector.shape_cast %31 : vector<1x288x4xf32> to vector<288x4xf32>
    %c5 = arith.constant 5 : index
    %c0_30 = arith.constant 0 : index
    %c0_31 = arith.constant 0 : index
    %33 = vector.load %arg2[%c5, %c0_30, %c0_31] : memref<9x4x128xf32, #tpu.memory_space<vmem>>, vector<1x4x128xf32>
    %34 = vector.shape_cast %33 : vector<1x4x128xf32> to vector<4x128xf32>
    %cst_32 = arith.constant dense<0.000000e+00> : vector<288x128xf32>
    %35 = tpu.matmul %32, %34, %cst_32 {dimension_numbers = #tpu.dot_dimension_numbers<[1], [0], [0], [1], [0, 0, 1, 1], [], []>} : vector<288x4xf32>, vector<4x128xf32>, vector<288x128xf32> -> vector<288x128xf32>
    %36 = arith.addf %30, %35 : vector<288x128xf32>
    %c0_33 = arith.constant 0 : index
    %c36 = arith.constant 36 : index
    %c0_34 = arith.constant 0 : index
    %37 = vector.load %arg1[%c0_33, %c36, %c0_34] : memref<1x328x4xf32, #tpu.memory_space<vmem>>, vector<1x288x4xf32>
    %38 = vector.shape_cast %37 : vector<1x288x4xf32> to vector<288x4xf32>
    %c6 = arith.constant 6 : index
    %c0_35 = arith.constant 0 : index
    %c0_36 = arith.constant 0 : index
    %39 = vector.load %arg2[%c6, %c0_35, %c0_36] : memref<9x4x128xf32, #tpu.memory_space<vmem>>, vector<1x4x128xf32>
    %40 = vector.shape_cast %39 : vector<1x4x128xf32> to vector<4x128xf32>
    %cst_37 = arith.constant dense<0.000000e+00> : vector<288x128xf32>
    %41 = tpu.matmul %38, %40, %cst_37 {dimension_numbers = #tpu.dot_dimension_numbers<[1], [0], [0], [1], [0, 0, 1, 1], [], []>} : vector<288x4xf32>, vector<4x128xf32>, vector<288x128xf32> -> vector<288x128xf32>
    %42 = arith.addf %36, %41 : vector<288x128xf32>
    %c0_38 = arith.constant 0 : index
    %c37 = arith.constant 37 : index
    %c0_39 = arith.constant 0 : index
    %43 = vector.load %arg1[%c0_38, %c37, %c0_39] : memref<1x328x4xf32, #tpu.memory_space<vmem>>, vector<1x288x4xf32>
    %44 = vector.shape_cast %43 : vector<1x288x4xf32> to vector<288x4xf32>
    %c7 = arith.constant 7 : index
    %c0_40 = arith.constant 0 : index
    %c0_41 = arith.constant 0 : index
    %45 = vector.load %arg2[%c7, %c0_40, %c0_41] : memref<9x4x128xf32, #tpu.memory_space<vmem>>, vector<1x4x128xf32>
    %46 = vector.shape_cast %45 : vector<1x4x128xf32> to vector<4x128xf32>
    %cst_42 = arith.constant dense<0.000000e+00> : vector<288x128xf32>
    %47 = tpu.matmul %44, %46, %cst_42 {dimension_numbers = #tpu.dot_dimension_numbers<[1], [0], [0], [1], [0, 0, 1, 1], [], []>} : vector<288x4xf32>, vector<4x128xf32>, vector<288x128xf32> -> vector<288x128xf32>
    %48 = arith.addf %42, %47 : vector<288x128xf32>
    %c0_43 = arith.constant 0 : index
    %c38 = arith.constant 38 : index
    %c0_44 = arith.constant 0 : index
    %49 = vector.load %arg1[%c0_43, %c38, %c0_44] : memref<1x328x4xf32, #tpu.memory_space<vmem>>, vector<1x288x4xf32>
    %50 = vector.shape_cast %49 : vector<1x288x4xf32> to vector<288x4xf32>
    %c8 = arith.constant 8 : index
    %c0_45 = arith.constant 0 : index
    %c0_46 = arith.constant 0 : index
    %51 = vector.load %arg2[%c8, %c0_45, %c0_46] : memref<9x4x128xf32, #tpu.memory_space<vmem>>, vector<1x4x128xf32>
    %52 = vector.shape_cast %51 : vector<1x4x128xf32> to vector<4x128xf32>
    %cst_47 = arith.constant dense<0.000000e+00> : vector<288x128xf32>
    %53 = tpu.matmul %50, %52, %cst_47 {dimension_numbers = #tpu.dot_dimension_numbers<[1], [0], [0], [1], [0, 0, 1, 1], [], []>} : vector<288x4xf32>, vector<4x128xf32>, vector<288x128xf32> -> vector<288x128xf32>
    %54 = arith.addf %48, %53 : vector<288x128xf32>
    %c0_48 = arith.constant 0 : index
    %c0_49 = arith.constant 0 : index
    %55 = vector.load %arg3[%c0_48, %c0_49] : memref<1x128xf32, #tpu.memory_space<vmem>>, vector<1x128xf32>
    %56 = vector.broadcast %55 : vector<1x128xf32> to vector<288x128xf32>
    %57 = arith.addf %54, %56 : vector<288x128xf32>
    %cst_50 = arith.constant 0.000000e+00 : f32
    %58 = vector.broadcast %cst_50 : f32 to vector<288x128xf32>
    %59 = arith.maximumf %57, %58 : vector<288x128xf32>
    %c0_51 = arith.constant 0 : index
    %c0_52 = arith.constant 0 : index
    %c0_53 = arith.constant 0 : index
    %60 = vector.load %arg4[%c0_51, %c0_52, %c0_53] : memref<1x288x128xf32, #tpu.memory_space<vmem>>, vector<1x288x128xf32>
    %61 = vector.shape_cast %60 : vector<1x288x128xf32> to vector<288x128xf32>
    %62 = vector.shape_cast %59 : vector<288x128xf32> to vector<1x288x128xf32>
    tpu.vector_store %arg4[%c0_51, %c0_52, %c0_53], %62 {strides = array<i32>} : memref<1x288x128xf32, #tpu.memory_space<vmem>>, vector<1x288x128xf32>,
    %63 = tpu.iota {dimensions = array<i32: 0>} : vector<288x1xi32>
    %c18_i32 = arith.constant 18 : i32
    %c0_i32 = arith.constant 0 : i32
    %64 = arith.cmpi eq, %c18_i32, %c0_i32 : i32
    %c1_i32 = arith.constant 1 : i32
    %65 = arith.select %64, %c1_i32, %c18_i32 : i32
    %66 = vector.broadcast %65 : i32 to vector<288x1xi32>
    %67 = arith.remsi %63, %66 : vector<288x1xi32>
    %c0_i32_54 = arith.constant 0 : i32
    %68 = vector.broadcast %c0_i32_54 : i32 to vector<288x1xi32>
    %69 = arith.cmpi ne, %67, %68 : vector<288x1xi32>
    %c0_i32_55 = arith.constant 0 : i32
    %70 = vector.broadcast %c0_i32_55 : i32 to vector<288x1xi32>
    %71 = arith.cmpi slt, %67, %70 : vector<288x1xi32>
    %c0_i32_56 = arith.constant 0 : i32
    %72 = arith.cmpi slt, %65, %c0_i32_56 : i32
    %73 = vector.broadcast %72 : i1 to vector<288x1xi1>
    %74 = vector.broadcast %73 : vector<288x1xi1> to vector<288x1xi1>
    %75 = arith.xori %71, %74 : vector<288x1xi1>
    %76 = arith.andi %75, %69 : vector<288x1xi1>
    %77 = vector.broadcast %65 : i32 to vector<288x1xi32>
    %78 = arith.addi %67, %77 : vector<288x1xi32>
    %79 = arith.select %76, %78, %67 : vector<288x1xi1>, vector<288x1xi32>
    %c16_i32 = arith.constant 16 : i32
    %80 = vector.broadcast %c16_i32 : i32 to vector<288x1xi32>
    %81 = arith.cmpi slt, %79, %80 : vector<288x1xi32>
    %82 = arith.extui %81 : vector<288x1xi1> to vector<288x1xi32>
    %83 = arith.sitofp %82 : vector<288x1xi32> to vector<288x1xf32>
    %84 = vector.broadcast %83 : vector<288x1xf32> to vector<288x128xf32>
    %85 = arith.mulf %59, %84 : vector<288x128xf32>
    %cst_57 = arith.constant dense<0.000000e+00> : vector<128xf32>
    %86 = vector.multi_reduction <add>, %85, %cst_57 [0] : vector<288x128xf32> to vector<128xf32>
    %87 = vector.shape_cast %86 : vector<128xf32> to vector<1x128xf32>
    %88 = arith.mulf %85, %85 : vector<288x128xf32>
    %cst_58 = arith.constant dense<0.000000e+00> : vector<128xf32>
    %89 = vector.multi_reduction <add>, %88, %cst_58 [0] : vector<288x128xf32> to vector<128xf32>
    %90 = vector.shape_cast %89 : vector<128xf32> to vector<1x128xf32>
    %91 = tpu.concatenate %87, %90 in 0 : vector<1x128xf32>, vector<1x128xf32> -> vector<2x128xf32>
    %c0_59 = arith.constant 0 : index
    %c0_60 = arith.constant 0 : index
    %c0_61 = arith.constant 0 : index
    %92 = vector.load %arg5[%c0_59, %c0_60, %c0_61] : memref<1x2x128xf32, #tpu.memory_space<vmem>>, vector<1x2x128xf32>
    %93 = vector.shape_cast %92 : vector<1x2x128xf32> to vector<2x128xf32>
    %94 = vector.shape_cast %91 : vector<2x128xf32> to vector<1x2x128xf32>
    tpu.vector_store %arg5[%c0_59, %c0_60, %c0_61], %94 {strides = array<i32>} : memref<1x2x128xf32, #tpu.memory_space<vmem>>, vector<1x2x128xf32>,
    return
  }
  func.func @transform_0(%arg0: i32) -> (i32, i32, i32) {
    %c0_i32 = arith.constant 0 : i32
    %c0_i32_0 = arith.constant 0 : i32
    %c0_i32_1 = arith.constant 0 : i32
    return %arg0, %c0_i32, %c0_i32_0 : i32, i32, i32
  }
  func.func @transform_1(%arg0: i32) -> (i32, i32, i32) {
    %c0_i32 = arith.constant 0 : i32
    %c0_i32_0 = arith.constant 0 : i32
    %c0_i32_1 = arith.constant 0 : i32
    %c0_i32_2 = arith.constant 0 : i32
    return %c0_i32, %c0_i32_0, %c0_i32_1 : i32, i32, i32
  }
  func.func @transform_2(%arg0: i32) -> (i32, i32) {
    %c0_i32 = arith.constant 0 : i32
    %c0_i32_0 = arith.constant 0 : i32
    %c0_i32_1 = arith.constant 0 : i32
    return %c0_i32, %c0_i32_0 : i32, i32
  }
  func.func @transform_3(%arg0: i32) -> (i32, i32, i32) {
    %c0_i32 = arith.constant 0 : i32
    %c0_i32_0 = arith.constant 0 : i32
    %c0_i32_1 = arith.constant 0 : i32
    return %arg0, %c0_i32, %c0_i32_0 : i32, i32, i32
  }
  func.func @transform_4(%arg0: i32) -> (i32, i32, i32) {
    %c0_i32 = arith.constant 0 : i32
    %c0_i32_0 = arith.constant 0 : i32
    %c0_i32_1 = arith.constant 0 : i32
    return %arg0, %c0_i32, %c0_i32_0 : i32, i32, i32
  }
}

module attributes {stable_mosaic.version = 11 : i64} {
  func.func @_normalize_kernel(%arg0: i32, %arg1: memref<1x288x128xf32, #tpu.memory_space<vmem>>, %arg2: memref<1x128xf32, #tpu.memory_space<vmem>>, %arg3: memref<1x128xf32, #tpu.memory_space<vmem>>, %arg4: memref<1x288x128xf32, #tpu.memory_space<vmem>>) attributes {dimension_semantics = [#tpu.dimension_semantics<parallel>], iteration_bounds = array<i64: 2>, scalar_prefetch = 0 : i64, scratch_operands = 0 : i64, tpu.core_type = #tpu.core_type<tc>, window_params = [{transform_indices = @transform_0, window_bounds = array<i64: 1, 288, 128>}, {pipeline_mode = #tpu.pipeline_mode<synchronous>, transform_indices = @transform_1, window_bounds = array<i64: 1, 128>}, {pipeline_mode = #tpu.pipeline_mode<synchronous>, transform_indices = @transform_2, window_bounds = array<i64: 1, 128>}, {transform_indices = @transform_3, window_bounds = array<i64: 1, 288, 128>}]} {
    %c0 = arith.constant 0 : index
    %c0_0 = arith.constant 0 : index
    %c0_1 = arith.constant 0 : index
    %0 = vector.load %arg1[%c0, %c0_0, %c0_1] : memref<1x288x128xf32, #tpu.memory_space<vmem>>, vector<1x288x128xf32>
    %1 = vector.shape_cast %0 : vector<1x288x128xf32> to vector<288x128xf32>
    %c0_2 = arith.constant 0 : index
    %c0_3 = arith.constant 0 : index
    %2 = vector.load %arg2[%c0_2, %c0_3] : memref<1x128xf32, #tpu.memory_space<vmem>>, vector<1x128xf32>
    %3 = vector.broadcast %2 : vector<1x128xf32> to vector<288x128xf32>
    %4 = arith.mulf %1, %3 : vector<288x128xf32>
    %c0_4 = arith.constant 0 : index
    %c0_5 = arith.constant 0 : index
    %5 = vector.load %arg3[%c0_4, %c0_5] : memref<1x128xf32, #tpu.memory_space<vmem>>, vector<1x128xf32>
    %6 = vector.broadcast %5 : vector<1x128xf32> to vector<288x128xf32>
    %7 = arith.addf %4, %6 : vector<288x128xf32>
    %c0_6 = arith.constant 0 : index
    %c0_7 = arith.constant 0 : index
    %c0_8 = arith.constant 0 : index
    %8 = vector.load %arg4[%c0_6, %c0_7, %c0_8] : memref<1x288x128xf32, #tpu.memory_space<vmem>>, vector<1x288x128xf32>
    %9 = vector.shape_cast %8 : vector<1x288x128xf32> to vector<288x128xf32>
    %10 = vector.shape_cast %7 : vector<288x128xf32> to vector<1x288x128xf32>
    tpu.vector_store %arg4[%c0_6, %c0_7, %c0_8], %10 {strides = array<i32>} : memref<1x288x128xf32, #tpu.memory_space<vmem>>, vector<1x288x128xf32>,
    return
  }
  func.func @transform_0(%arg0: i32) -> (i32, i32, i32) {
    %c0_i32 = arith.constant 0 : i32
    %c0_i32_0 = arith.constant 0 : i32
    %c0_i32_1 = arith.constant 0 : i32
    return %arg0, %c0_i32, %c0_i32_0 : i32, i32, i32
  }
  func.func @transform_1(%arg0: i32) -> (i32, i32) {
    %c0_i32 = arith.constant 0 : i32
    %c0_i32_0 = arith.constant 0 : i32
    %c0_i32_1 = arith.constant 0 : i32
    return %c0_i32, %c0_i32_0 : i32, i32
  }
  func.func @transform_2(%arg0: i32) -> (i32, i32) {
    %c0_i32 = arith.constant 0 : i32
    %c0_i32_0 = arith.constant 0 : i32
    %c0_i32_1 = arith.constant 0 : i32
    return %c0_i32, %c0_i32_0 : i32, i32
  }
  func.func @transform_3(%arg0: i32) -> (i32, i32, i32) {
    %c0_i32 = arith.constant 0 : i32
    %c0_i32_0 = arith.constant 0 : i32
    %c0_i32_1 = arith.constant 0 : i32
    return %arg0, %c0_i32, %c0_i32_0 : i32, i32, i32
  }
}

module attributes {stable_mosaic.version = 11 : i64} {
  func.func @_conv_relu_stats_kernel(%arg0: i32, %arg1: memref<1x328x128xf32, #tpu.memory_space<vmem>>, %arg2: memref<9x128x128xf32, #tpu.memory_space<vmem>>, %arg3: memref<1x128xf32, #tpu.memory_space<vmem>>, %arg4: memref<1x288x128xf32, #tpu.memory_space<vmem>>, %arg5: memref<1x2x128xf32, #tpu.memory_space<vmem>>) attributes {dimension_semantics = [#tpu.dimension_semantics<parallel>], iteration_bounds = array<i64: 2>, scalar_prefetch = 0 : i64, scratch_operands = 0 : i64, tpu.core_type = #tpu.core_type<tc>, window_params = [{transform_indices = @transform_0, window_bounds = array<i64: 1, 328, 128>}, {pipeline_mode = #tpu.pipeline_mode<synchronous>, transform_indices = @transform_1, window_bounds = array<i64: 9, 128, 128>}, {pipeline_mode = #tpu.pipeline_mode<synchronous>, transform_indices = @transform_2, window_bounds = array<i64: 1, 128>}, {transform_indices = @transform_3, window_bounds = array<i64: 1, 288, 128>}, {transform_indices = @transform_4, window_bounds = array<i64: 1, 2, 128>}]} {
    %cst = arith.constant 0.000000e+00 : f32
    %0 = vector.broadcast %cst : f32 to vector<288x128xf32>
    %c0 = arith.constant 0 : index
    %c0_0 = arith.constant 0 : index
    %c0_1 = arith.constant 0 : index
    %1 = vector.load %arg1[%c0, %c0_0, %c0_1] : memref<1x328x128xf32, #tpu.memory_space<vmem>>, vector<1x288x128xf32>
    %2 = vector.shape_cast %1 : vector<1x288x128xf32> to vector<288x128xf32>
    %c0_2 = arith.constant 0 : index
    %c0_3 = arith.constant 0 : index
    %c0_4 = arith.constant 0 : index
    %3 = vector.load %arg2[%c0_2, %c0_3, %c0_4] : memref<9x128x128xf32, #tpu.memory_space<vmem>>, vector<1x128x128xf32>
    %4 = vector.shape_cast %3 : vector<1x128x128xf32> to vector<128x128xf32>
    %cst_5 = arith.constant dense<0.000000e+00> : vector<288x128xf32>
    %5 = tpu.matmul %2, %4, %cst_5 {dimension_numbers = #tpu.dot_dimension_numbers<[1], [0], [0], [1], [0, 0, 1, 1], [], []>} : vector<288x128xf32>, vector<128x128xf32>, vector<288x128xf32> -> vector<288x128xf32>
    %6 = arith.addf %0, %5 : vector<288x128xf32>
    %c0_6 = arith.constant 0 : index
    %c1 = arith.constant 1 : index
    %c0_7 = arith.constant 0 : index
    %7 = vector.load %arg1[%c0_6, %c1, %c0_7] : memref<1x328x128xf32, #tpu.memory_space<vmem>>, vector<1x288x128xf32>
    %8 = vector.shape_cast %7 : vector<1x288x128xf32> to vector<288x128xf32>
    %c1_8 = arith.constant 1 : index
    %c0_9 = arith.constant 0 : index
    %c0_10 = arith.constant 0 : index
    %9 = vector.load %arg2[%c1_8, %c0_9, %c0_10] : memref<9x128x128xf32, #tpu.memory_space<vmem>>, vector<1x128x128xf32>
    %10 = vector.shape_cast %9 : vector<1x128x128xf32> to vector<128x128xf32>
    %cst_11 = arith.constant dense<0.000000e+00> : vector<288x128xf32>
    %11 = tpu.matmul %8, %10, %cst_11 {dimension_numbers = #tpu.dot_dimension_numbers<[1], [0], [0], [1], [0, 0, 1, 1], [], []>} : vector<288x128xf32>, vector<128x128xf32>, vector<288x128xf32> -> vector<288x128xf32>
    %12 = arith.addf %6, %11 : vector<288x128xf32>
    %c0_12 = arith.constant 0 : index
    %c2 = arith.constant 2 : index
    %c0_13 = arith.constant 0 : index
    %13 = vector.load %arg1[%c0_12, %c2, %c0_13] : memref<1x328x128xf32, #tpu.memory_space<vmem>>, vector<1x288x128xf32>
    %14 = vector.shape_cast %13 : vector<1x288x128xf32> to vector<288x128xf32>
    %c2_14 = arith.constant 2 : index
    %c0_15 = arith.constant 0 : index
    %c0_16 = arith.constant 0 : index
    %15 = vector.load %arg2[%c2_14, %c0_15, %c0_16] : memref<9x128x128xf32, #tpu.memory_space<vmem>>, vector<1x128x128xf32>
    %16 = vector.shape_cast %15 : vector<1x128x128xf32> to vector<128x128xf32>
    %cst_17 = arith.constant dense<0.000000e+00> : vector<288x128xf32>
    %17 = tpu.matmul %14, %16, %cst_17 {dimension_numbers = #tpu.dot_dimension_numbers<[1], [0], [0], [1], [0, 0, 1, 1], [], []>} : vector<288x128xf32>, vector<128x128xf32>, vector<288x128xf32> -> vector<288x128xf32>
    %18 = arith.addf %12, %17 : vector<288x128xf32>
    %c0_18 = arith.constant 0 : index
    %c18 = arith.constant 18 : index
    %c0_19 = arith.constant 0 : index
    %19 = vector.load %arg1[%c0_18, %c18, %c0_19] : memref<1x328x128xf32, #tpu.memory_space<vmem>>, vector<1x288x128xf32>
    %20 = vector.shape_cast %19 : vector<1x288x128xf32> to vector<288x128xf32>
    %c3 = arith.constant 3 : index
    %c0_20 = arith.constant 0 : index
    %c0_21 = arith.constant 0 : index
    %21 = vector.load %arg2[%c3, %c0_20, %c0_21] : memref<9x128x128xf32, #tpu.memory_space<vmem>>, vector<1x128x128xf32>
    %22 = vector.shape_cast %21 : vector<1x128x128xf32> to vector<128x128xf32>
    %cst_22 = arith.constant dense<0.000000e+00> : vector<288x128xf32>
    %23 = tpu.matmul %20, %22, %cst_22 {dimension_numbers = #tpu.dot_dimension_numbers<[1], [0], [0], [1], [0, 0, 1, 1], [], []>} : vector<288x128xf32>, vector<128x128xf32>, vector<288x128xf32> -> vector<288x128xf32>
    %24 = arith.addf %18, %23 : vector<288x128xf32>
    %c0_23 = arith.constant 0 : index
    %c19 = arith.constant 19 : index
    %c0_24 = arith.constant 0 : index
    %25 = vector.load %arg1[%c0_23, %c19, %c0_24] : memref<1x328x128xf32, #tpu.memory_space<vmem>>, vector<1x288x128xf32>
    %26 = vector.shape_cast %25 : vector<1x288x128xf32> to vector<288x128xf32>
    %c4 = arith.constant 4 : index
    %c0_25 = arith.constant 0 : index
    %c0_26 = arith.constant 0 : index
    %27 = vector.load %arg2[%c4, %c0_25, %c0_26] : memref<9x128x128xf32, #tpu.memory_space<vmem>>, vector<1x128x128xf32>
    %28 = vector.shape_cast %27 : vector<1x128x128xf32> to vector<128x128xf32>
    %cst_27 = arith.constant dense<0.000000e+00> : vector<288x128xf32>
    %29 = tpu.matmul %26, %28, %cst_27 {dimension_numbers = #tpu.dot_dimension_numbers<[1], [0], [0], [1], [0, 0, 1, 1], [], []>} : vector<288x128xf32>, vector<128x128xf32>, vector<288x128xf32> -> vector<288x128xf32>
    %30 = arith.addf %24, %29 : vector<288x128xf32>
    %c0_28 = arith.constant 0 : index
    %c20 = arith.constant 20 : index
    %c0_29 = arith.constant 0 : index
    %31 = vector.load %arg1[%c0_28, %c20, %c0_29] : memref<1x328x128xf32, #tpu.memory_space<vmem>>, vector<1x288x128xf32>
    %32 = vector.shape_cast %31 : vector<1x288x128xf32> to vector<288x128xf32>
    %c5 = arith.constant 5 : index
    %c0_30 = arith.constant 0 : index
    %c0_31 = arith.constant 0 : index
    %33 = vector.load %arg2[%c5, %c0_30, %c0_31] : memref<9x128x128xf32, #tpu.memory_space<vmem>>, vector<1x128x128xf32>
    %34 = vector.shape_cast %33 : vector<1x128x128xf32> to vector<128x128xf32>
    %cst_32 = arith.constant dense<0.000000e+00> : vector<288x128xf32>
    %35 = tpu.matmul %32, %34, %cst_32 {dimension_numbers = #tpu.dot_dimension_numbers<[1], [0], [0], [1], [0, 0, 1, 1], [], []>} : vector<288x128xf32>, vector<128x128xf32>, vector<288x128xf32> -> vector<288x128xf32>
    %36 = arith.addf %30, %35 : vector<288x128xf32>
    %c0_33 = arith.constant 0 : index
    %c36 = arith.constant 36 : index
    %c0_34 = arith.constant 0 : index
    %37 = vector.load %arg1[%c0_33, %c36, %c0_34] : memref<1x328x128xf32, #tpu.memory_space<vmem>>, vector<1x288x128xf32>
    %38 = vector.shape_cast %37 : vector<1x288x128xf32> to vector<288x128xf32>
    %c6 = arith.constant 6 : index
    %c0_35 = arith.constant 0 : index
    %c0_36 = arith.constant 0 : index
    %39 = vector.load %arg2[%c6, %c0_35, %c0_36] : memref<9x128x128xf32, #tpu.memory_space<vmem>>, vector<1x128x128xf32>
    %40 = vector.shape_cast %39 : vector<1x128x128xf32> to vector<128x128xf32>
    %cst_37 = arith.constant dense<0.000000e+00> : vector<288x128xf32>
    %41 = tpu.matmul %38, %40, %cst_37 {dimension_numbers = #tpu.dot_dimension_numbers<[1], [0], [0], [1], [0, 0, 1, 1], [], []>} : vector<288x128xf32>, vector<128x128xf32>, vector<288x128xf32> -> vector<288x128xf32>
    %42 = arith.addf %36, %41 : vector<288x128xf32>
    %c0_38 = arith.constant 0 : index
    %c37 = arith.constant 37 : index
    %c0_39 = arith.constant 0 : index
    %43 = vector.load %arg1[%c0_38, %c37, %c0_39] : memref<1x328x128xf32, #tpu.memory_space<vmem>>, vector<1x288x128xf32>
    %44 = vector.shape_cast %43 : vector<1x288x128xf32> to vector<288x128xf32>
    %c7 = arith.constant 7 : index
    %c0_40 = arith.constant 0 : index
    %c0_41 = arith.constant 0 : index
    %45 = vector.load %arg2[%c7, %c0_40, %c0_41] : memref<9x128x128xf32, #tpu.memory_space<vmem>>, vector<1x128x128xf32>
    %46 = vector.shape_cast %45 : vector<1x128x128xf32> to vector<128x128xf32>
    %cst_42 = arith.constant dense<0.000000e+00> : vector<288x128xf32>
    %47 = tpu.matmul %44, %46, %cst_42 {dimension_numbers = #tpu.dot_dimension_numbers<[1], [0], [0], [1], [0, 0, 1, 1], [], []>} : vector<288x128xf32>, vector<128x128xf32>, vector<288x128xf32> -> vector<288x128xf32>
    %48 = arith.addf %42, %47 : vector<288x128xf32>
    %c0_43 = arith.constant 0 : index
    %c38 = arith.constant 38 : index
    %c0_44 = arith.constant 0 : index
    %49 = vector.load %arg1[%c0_43, %c38, %c0_44] : memref<1x328x128xf32, #tpu.memory_space<vmem>>, vector<1x288x128xf32>
    %50 = vector.shape_cast %49 : vector<1x288x128xf32> to vector<288x128xf32>
    %c8 = arith.constant 8 : index
    %c0_45 = arith.constant 0 : index
    %c0_46 = arith.constant 0 : index
    %51 = vector.load %arg2[%c8, %c0_45, %c0_46] : memref<9x128x128xf32, #tpu.memory_space<vmem>>, vector<1x128x128xf32>
    %52 = vector.shape_cast %51 : vector<1x128x128xf32> to vector<128x128xf32>
    %cst_47 = arith.constant dense<0.000000e+00> : vector<288x128xf32>
    %53 = tpu.matmul %50, %52, %cst_47 {dimension_numbers = #tpu.dot_dimension_numbers<[1], [0], [0], [1], [0, 0, 1, 1], [], []>} : vector<288x128xf32>, vector<128x128xf32>, vector<288x128xf32> -> vector<288x128xf32>
    %54 = arith.addf %48, %53 : vector<288x128xf32>
    %c0_48 = arith.constant 0 : index
    %c0_49 = arith.constant 0 : index
    %55 = vector.load %arg3[%c0_48, %c0_49] : memref<1x128xf32, #tpu.memory_space<vmem>>, vector<1x128xf32>
    %56 = vector.broadcast %55 : vector<1x128xf32> to vector<288x128xf32>
    %57 = arith.addf %54, %56 : vector<288x128xf32>
    %cst_50 = arith.constant 0.000000e+00 : f32
    %58 = vector.broadcast %cst_50 : f32 to vector<288x128xf32>
    %59 = arith.maximumf %57, %58 : vector<288x128xf32>
    %c0_51 = arith.constant 0 : index
    %c0_52 = arith.constant 0 : index
    %c0_53 = arith.constant 0 : index
    %60 = vector.load %arg4[%c0_51, %c0_52, %c0_53] : memref<1x288x128xf32, #tpu.memory_space<vmem>>, vector<1x288x128xf32>
    %61 = vector.shape_cast %60 : vector<1x288x128xf32> to vector<288x128xf32>
    %62 = vector.shape_cast %59 : vector<288x128xf32> to vector<1x288x128xf32>
    tpu.vector_store %arg4[%c0_51, %c0_52, %c0_53], %62 {strides = array<i32>} : memref<1x288x128xf32, #tpu.memory_space<vmem>>, vector<1x288x128xf32>,
    %63 = tpu.iota {dimensions = array<i32: 0>} : vector<288x1xi32>
    %c18_i32 = arith.constant 18 : i32
    %c0_i32 = arith.constant 0 : i32
    %64 = arith.cmpi eq, %c18_i32, %c0_i32 : i32
    %c1_i32 = arith.constant 1 : i32
    %65 = arith.select %64, %c1_i32, %c18_i32 : i32
    %66 = vector.broadcast %65 : i32 to vector<288x1xi32>
    %67 = arith.remsi %63, %66 : vector<288x1xi32>
    %c0_i32_54 = arith.constant 0 : i32
    %68 = vector.broadcast %c0_i32_54 : i32 to vector<288x1xi32>
    %69 = arith.cmpi ne, %67, %68 : vector<288x1xi32>
    %c0_i32_55 = arith.constant 0 : i32
    %70 = vector.broadcast %c0_i32_55 : i32 to vector<288x1xi32>
    %71 = arith.cmpi slt, %67, %70 : vector<288x1xi32>
    %c0_i32_56 = arith.constant 0 : i32
    %72 = arith.cmpi slt, %65, %c0_i32_56 : i32
    %73 = vector.broadcast %72 : i1 to vector<288x1xi1>
    %74 = vector.broadcast %73 : vector<288x1xi1> to vector<288x1xi1>
    %75 = arith.xori %71, %74 : vector<288x1xi1>
    %76 = arith.andi %75, %69 : vector<288x1xi1>
    %77 = vector.broadcast %65 : i32 to vector<288x1xi32>
    %78 = arith.addi %67, %77 : vector<288x1xi32>
    %79 = arith.select %76, %78, %67 : vector<288x1xi1>, vector<288x1xi32>
    %c16_i32 = arith.constant 16 : i32
    %80 = vector.broadcast %c16_i32 : i32 to vector<288x1xi32>
    %81 = arith.cmpi slt, %79, %80 : vector<288x1xi32>
    %82 = arith.extui %81 : vector<288x1xi1> to vector<288x1xi32>
    %83 = arith.sitofp %82 : vector<288x1xi32> to vector<288x1xf32>
    %84 = vector.broadcast %83 : vector<288x1xf32> to vector<288x128xf32>
    %85 = arith.mulf %59, %84 : vector<288x128xf32>
    %cst_57 = arith.constant dense<0.000000e+00> : vector<128xf32>
    %86 = vector.multi_reduction <add>, %85, %cst_57 [0] : vector<288x128xf32> to vector<128xf32>
    %87 = vector.shape_cast %86 : vector<128xf32> to vector<1x128xf32>
    %88 = arith.mulf %85, %85 : vector<288x128xf32>
    %cst_58 = arith.constant dense<0.000000e+00> : vector<128xf32>
    %89 = vector.multi_reduction <add>, %88, %cst_58 [0] : vector<288x128xf32> to vector<128xf32>
    %90 = vector.shape_cast %89 : vector<128xf32> to vector<1x128xf32>
    %91 = tpu.concatenate %87, %90 in 0 : vector<1x128xf32>, vector<1x128xf32> -> vector<2x128xf32>
    %c0_59 = arith.constant 0 : index
    %c0_60 = arith.constant 0 : index
    %c0_61 = arith.constant 0 : index
    %92 = vector.load %arg5[%c0_59, %c0_60, %c0_61] : memref<1x2x128xf32, #tpu.memory_space<vmem>>, vector<1x2x128xf32>
    %93 = vector.shape_cast %92 : vector<1x2x128xf32> to vector<2x128xf32>
    %94 = vector.shape_cast %91 : vector<2x128xf32> to vector<1x2x128xf32>
    tpu.vector_store %arg5[%c0_59, %c0_60, %c0_61], %94 {strides = array<i32>} : memref<1x2x128xf32, #tpu.memory_space<vmem>>, vector<1x2x128xf32>,
    return
  }
  func.func @transform_0(%arg0: i32) -> (i32, i32, i32) {
    %c0_i32 = arith.constant 0 : i32
    %c0_i32_0 = arith.constant 0 : i32
    %c0_i32_1 = arith.constant 0 : i32
    return %arg0, %c0_i32, %c0_i32_0 : i32, i32, i32
  }
  func.func @transform_1(%arg0: i32) -> (i32, i32, i32) {
    %c0_i32 = arith.constant 0 : i32
    %c0_i32_0 = arith.constant 0 : i32
    %c0_i32_1 = arith.constant 0 : i32
    %c0_i32_2 = arith.constant 0 : i32
    return %c0_i32, %c0_i32_0, %c0_i32_1 : i32, i32, i32
  }
  func.func @transform_2(%arg0: i32) -> (i32, i32) {
    %c0_i32 = arith.constant 0 : i32
    %c0_i32_0 = arith.constant 0 : i32
    %c0_i32_1 = arith.constant 0 : i32
    return %c0_i32, %c0_i32_0 : i32, i32
  }
  func.func @transform_3(%arg0: i32) -> (i32, i32, i32) {
    %c0_i32 = arith.constant 0 : i32
    %c0_i32_0 = arith.constant 0 : i32
    %c0_i32_1 = arith.constant 0 : i32
    return %arg0, %c0_i32, %c0_i32_0 : i32, i32, i32
  }
  func.func @transform_4(%arg0: i32) -> (i32, i32, i32) {
    %c0_i32 = arith.constant 0 : i32
    %c0_i32_0 = arith.constant 0 : i32
    %c0_i32_1 = arith.constant 0 : i32
    return %arg0, %c0_i32, %c0_i32_0 : i32, i32, i32
  }
}

</mosaic_0001>

<llo_original>
// kernel: encode_block_forward.5
$region0: #{encode_block_forward.5}
  #allocation0 [shape = 'u32[]', space=smem, size = 0x4, offset = 0x4, fixed_abs, tag = 'smem constant byte address 0x4 - core index']
  #allocation1 [shape = 'u32[144,128]{1,0:T(1,128)}', space=vmem, size = 0x12000, scoped, tag = 'internal scratch']
  %s0 = inlined_call_operand.vmem [shape: f32[2,288,128], index: 0, kind: input, shape index: {}]
  %s1 = inlined_call_operand.vmem [shape: f32[1,128], index: 1, kind: input, shape index: {}]
  %s2 = inlined_call_operand.vmem [shape: f32[1,128], index: 2, kind: input, shape index: {}]
  %s3 = inlined_call_operand.vmem [shape: f32[2,288,128], index: 3, kind: output, shape index: {}]
  %s4 = sld [smem:[#allocation0]]
  $region45: #{encode_block_forward.5} parent=0
    _
  %s6 = ssub.s32 1, %s4
  %s7 = scalar_select 0, %s6, %s4
  loop: start=0, step=1, limit=4
  $region2: #{encode_block_forward.5} parent=0 // loop_pre_header
    _
  $region3: #{encode_block_forward.5} parent=0 // loop_header
    %s9 = sphi 0, %s13
    %p10 = scmp.ge.s32.totalorder %s9, 4
    %s19 = sphi 0, %s21
    %s22 = sphi 0, %s19
    %s23 = sphi 0, %s22
    %s39 = sphi 0, %s23
    %s43 = sphi 0, %s43
    %s45 = sphi 0, %s43
    %s46 = sphi 0, %s45
    %s60 = sphi 0, %s46
    %s64 = sphi 0, %s64
    %s66 = sphi 0, %s64
    %s67 = sphi 0, %s66
    %s81 = sphi 0, %s67
    %s87 = sphi 0, %s89
    %s90 = sphi 0, %s87
    %s91 = sphi 0, %s90
    %s107 = sphi 0, %s91
  $region4: #{encode_block_forward.5} parent=0 // loop_header_branch
    %12 = sbr.rel (%p10) target = $region8
  $region5: #{encode_block_forward.5} parent=0 // loop_body
    %s14 = ssub.s32 %s9, 1
    %s15 = ssub.s32 %s9, 2
    %s16 = sadd.s32 %s9, 1
    %s17 = ssub.s32 %s9, %s16
    %p18 = scmp.eq.s32.totalorder %s17, 0
    %s20 = sadd.s32 %s19, 1
    %s21 = scalar_select %p18, %s19, %s20
    %p24 = pneg %p18
    %p25 = scmp.eq.s32.totalorder %s9, 1
    %p26 = por %p24, %p25
    %p27 = scmp.ne.s32.totalorder %s19, %s22
    %p28 = scmp.eq.s32.totalorder %s9, 0
    %p29 = por %p27, %p28
    %p30 = scmp.ne.s32.totalorder %s19, %s22
    %p31 = scmp.eq.s32.totalorder %s14, 1
    %p32 = por %p30, %p31
    %p33 = scmp.ne.s32.totalorder %s22, %s23
    %p34 = scmp.eq.s32.totalorder %s14, 0
    %p35 = por %p33, %p34
    %p36 = scmp.ne.s32.totalorder %s22, %s23
    %p37 = scmp.eq.s32.totalorder %s15, 1
    %p38 = por %p36, %p37
    %p40 = scmp.ne.s32.totalorder %s23, %s39
    %p41 = scmp.eq.s32.totalorder %s15, 0
    %p42 = por %p40, %p41
    %s44 = sadd.s32 %s43, 1
    %p47 = scmp.eq.s32.totalorder %s9, 1
    %p48 = scmp.ne.s32.totalorder %s43, %s45
    %p49 = scmp.eq.s32.totalorder %s9, 0
    %p50 = por %p48, %p49
    %p51 = scmp.ne.s32.totalorder %s43, %s45
    %p52 = scmp.eq.s32.totalorder %s14, 1
    %p53 = por %p51, %p52
    %p54 = scmp.ne.s32.totalorder %s45, %s46
    %p55 = scmp.eq.s32.totalorder %s14, 0
    %p56 = por %p54, %p55
    %p57 = scmp.ne.s32.totalorder %s45, %s46
    %p58 = scmp.eq.s32.totalorder %s15, 1
    %p59 = por %p57, %p58
    %p61 = scmp.ne.s32.totalorder %s46, %s60
    %p62 = scmp.eq.s32.totalorder %s15, 0
    %p63 = por %p61, %p62
    %s65 = sadd.s32 %s64, 1
    %p68 = scmp.eq.s32.totalorder %s9, 1
    %p69 = scmp.ne.s32.totalorder %s64, %s66
    %p70 = scmp.eq.s32.totalorder %s9, 0
    %p71 = por %p69, %p70
    %p72 = scmp.ne.s32.totalorder %s64, %s66
    %p73 = scmp.eq.s32.totalorder %s14, 1
    %p74 = por %p72, %p73
    %p75 = scmp.ne.s32.totalorder %s66, %s67
    %p76 = scmp.eq.s32.totalorder %s14, 0
    %p77 = por %p75, %p76
    %p78 = scmp.ne.s32.totalorder %s66, %s67
    %p79 = scmp.eq.s32.totalorder %s15, 1
    %p80 = por %p78, %p79
    %p82 = scmp.ne.s32.totalorder %s67, %s81
    %p83 = scmp.eq.s32.totalorder %s15, 0
    %p84 = por %p82, %p83
    %s85 = ssub.s32 %s9, %s16
    %p86 = scmp.eq.s32.totalorder %s85, 0
    %s88 = sadd.s32 %s87, 1
    %s89 = scalar_select %p86, %s87, %s88
    %p92 = pneg %p86
    %p93 = scmp.eq.s32.totalorder %s9, 1
    %p94 = por %p92, %p93
    %p95 = scmp.ne.s32.totalorder %s87, %s90
    %p96 = scmp.eq.s32.totalorder %s9, 0
    %p97 = por %p95, %p96
    %p98 = scmp.ne.s32.totalorder %s87, %s90
    %p99 = scmp.eq.s32.totalorder %s14, 1
    %p100 = por %p98, %p99
    %p101 = scmp.ne.s32.totalorder %s90, %s91
    %p102 = scmp.eq.s32.totalorder %s14, 0
    %p103 = por %p101, %p102
    %p104 = scmp.ne.s32.totalorder %s90, %s91
    %p105 = scmp.eq.s32.totalorder %s15, 1
    %p106 = por %p104, %p105
    %p108 = scmp.ne.s32.totalorder %s91, %s107
    %p109 = scmp.eq.s32.totalorder %s15, 0
    %p110 = por %p108, %p109
    %p111 = scmp.le.s32.totalorder 1, %s9
    %p112 = scmp.lt.s32.totalorder %s9, 3
    %p113 = pnand %p111, %p112
    %p114 = pneg %p113
    // Predicated region
    $region9: #{encode_block_forward.5} parent=5 // pred_check
      _
    $region10: #{encode_block_forward.5} parent=5 // pred_check_branch
      %116 = sbr.rel (%p113) target = $region12
    $region11: #{encode_block_forward.5} parent=5 // pred_region
      %s117 = ssub.s32 %s9, 1
      // Predicated region
      $region13: #{encode_block_forward.5} parent=11 // pred_check
        %p118 = pneg %p56
      $region14: #{encode_block_forward.5} parent=11 // pred_check_branch
        %120 = sbr.rel (%p118) target = $region16
      $region15: #{encode_block_forward.5} parent=11 // pred_region
        _
      $region16: #{encode_block_forward.5} parent=11 // pred_fallthru
        _
      // Predicated region
      $region17: #{encode_block_forward.5} parent=11 // pred_check
        %p121 = pneg %p77
      $region18: #{encode_block_forward.5} parent=11 // pred_check_branch
        %123 = sbr.rel (%p121) target = $region20
      $region19: #{encode_block_forward.5} parent=11 // pred_region
        _
      $region20: #{encode_block_forward.5} parent=11 // pred_fallthru
        _
    $region12: #{encode_block_forward.5} parent=5 // pred_fallthru
      _
    %p124 = scmp.lt.s32.totalorder %s9, 2
    // Predicated region
    $region21: #{encode_block_forward.5} parent=5 // pred_check
      %p125 = pneg %p124
    $region22: #{encode_block_forward.5} parent=5 // pred_check_branch
      %127 = sbr.rel (%p125) target = $region24
    $region23: #{encode_block_forward.5} parent=5 // pred_region
      // Predicated region
      $region25: #{encode_block_forward.5} parent=23 // pred_check
        %p128 = pneg %p29
      $region26: #{encode_block_forward.5} parent=23 // pred_check_branch
        %130 = sbr.rel (%p128) target = $region28
      $region27: #{encode_block_forward.5} parent=23 // pred_region
        %p131 = scmp.lt.s32.totalorder %s9, 1
        %s132 = scalar_select %p131, %s9, 1
        %s133 = smul.addr %s132, 36
        %s134 = smul.addr %s133, 8
        %s135 = scalar_lea.vmem %s0, %s134
      $region28: #{encode_block_forward.5} parent=23 // pred_fallthru
        _
    $region24: #{encode_block_forward.5} parent=5 // pred_fallthru
      _
    %p136 = scmp.le.s32.totalorder 1, %s9
    %p137 = scmp.lt.s32.totalorder %s9, 3
    %p138 = pnand %p136, %p137
    %p139 = pneg %p138
    // Predicated region
    $region29: #{encode_block_forward.5} parent=5 // pred_check
      _
    $region30: #{encode_block_forward.5} parent=5 // pred_check_branch
      %141 = sbr.rel (%p138) target = $region32
    $region31: #{encode_block_forward.5} parent=5 // pred_region
      %s142 = ssub.s32 %s9, 1
      %p143 = scmp.lt.s32.totalorder %s14, 1
      %s144 = scalar_select %p143, %s14, 1
      %s145 = smul.addr %s144, 36
      %s146 = smul.addr %s145, 8
      %s147 = scalar_lea.vmem %s0, %s146
      %p148 = pneg %p35
      %p149 = pneg %p32
      %p150 = pneg %p56
      %p151 = pneg %p53
      %p152 = pneg %p77
      %p153 = pneg %p74
      %p154 = pneg %p103
      %p155 = pneg %p100
      %p156 = scmp.lt.s32.totalorder %s14, 1
      %s157 = scalar_select %p156, %s14, 1
      %s158 = smul.addr %s157, 36
      %s159 = smul.addr %s158, 8
      %s160 = scalar_lea.vmem %s3, %s159
      %p161 = scmp.lt.s32.totalorder %s14, 1
      %s162 = scalar_select %p161, %s14, 1
      %s163 = smul.addr %s162, 36
      %s164 = smul.addr %s163, 8
      %s165 = scalar_lea.vmem %s0, %s164
      %p166 = scmp.lt.s32.totalorder %s14, 1
      %s167 = scalar_select %p166, %s14, 1
      %s168 = smul.addr %s167, 36
      %s169 = smul.addr %s168, 8
      %s170 = scalar_lea.vmem %s3, %s169
      %v171 = vld [vmem:[%s165] sm:$0xff]
      %v172 = vld [vmem:[%s165 + $0x8] sm:$0xff]
      %v173 = vld [vmem:[%s165 + $0x10] sm:$0xff]
      %v174 = vld [vmem:[%s165 + $0x18] sm:$0xff]
      %v175 = vld [vmem:[%s165 + $0x20] sm:$0xff]
      %v176 = vld [vmem:[%s165 + $0x28] sm:$0xff]
      %v177 = vld [vmem:[%s165 + $0x30] sm:$0xff]
      %v178 = vld [vmem:[%s165 + $0x38] sm:$0xff]
      %v179 = vld [vmem:[%s165 + $0x40] sm:$0xff]
      %v180 = vld [vmem:[%s165 + $0x48] sm:$0xff]
      %v181 = vld [vmem:[%s165 + $0x50] sm:$0xff]
      %v182 = vld [vmem:[%s165 + $0x58] sm:$0xff]
      %v183 = vld [vmem:[%s165 + $0x60] sm:$0xff]
      %v184 = vld [vmem:[%s165 + $0x68] sm:$0xff]
      %v185 = vld [vmem:[%s165 + $0x70] sm:$0xff]
      %v186 = vld [vmem:[%s165 + $0x78] sm:$0xff]
      %v187 = vld [vmem:[%s165 + $0x80] sm:$0xff]
      %v188 = vld [vmem:[%s165 + $0x88] sm:$0xff]
      %v189 = vld [vmem:[%s165 + $0x90] sm:$0xff]
      %v190 = vld [vmem:[%s165 + $0x98] sm:$0xff]
      %v191 = vld [vmem:[%s165 + $0xa0] sm:$0xff]
      %v192 = vld [vmem:[%s165 + $0xa8] sm:$0xff]
      %v193 = vld [vmem:[%s165 + $0xb0] sm:$0xff]
      %v194 = vld [vmem:[%s165 + $0xb8] sm:$0xff]
      %v195 = vld [vmem:[%s165 + $0xc0] sm:$0xff]
      %v196 = vld [vmem:[%s165 + $0xc8] sm:$0xff]
      %v197 = vld [vmem:[%s165 + $0xd0] sm:$0xff]
      %v198 = vld [vmem:[%s165 + $0xd8] sm:$0xff]
      %v199 = vld [vmem:[%s165 + $0xe0] sm:$0xff]
      %v200 = vld [vmem:[%s165 + $0xe8] sm:$0xff]
      %v201 = vld [vmem:[%s165 + $0xf0] sm:$0xff]
      %v202 = vld [vmem:[%s165 + $0xf8] sm:$0xff]
      %v203 = vld [vmem:[%s165 + $0x100] sm:$0xff]
      %v204 = vld [vmem:[%s165 + $0x108] sm:$0xff]
      %v205 = vld [vmem:[%s165 + $0x110] sm:$0xff]
      %v206 = vld [vmem:[%s165 + $0x118] sm:$0xff]
      %v207 = vld [vmem:[%s1] sm:$0x1]
      %v209 = vlaneseq
      %v210 = vshrl.u32 %v209, 7
      %v211 = vsub.s32 0, %v210
      %v212 = vrot.slane %v207, %v211
      %v214 = vmul.f32 %v171, %v212
      %v215 = vmul.f32 %v172, %v212
      %v216 = vmul.f32 %v173, %v212
      %v217 = vmul.f32 %v174, %v212
      %v218 = vmul.f32 %v175, %v212
      %v219 = vmul.f32 %v176, %v212
      %v220 = vmul.f32 %v177, %v212
      %v221 = vmul.f32 %v178, %v212
      %v222 = vmul.f32 %v179, %v212
      %v223 = vmul.f32 %v180, %v212
      %v224 = vmul.f32 %v181, %v212
      %v225 = vmul.f32 %v182, %v212
      %v226 = vmul.f32 %v183, %v212
      %v227 = vmul.f32 %v184, %v212
      %v228 = vmul.f32 %v185, %v212
      %v229 = vmul.f32 %v186, %v212
      %v230 = vmul.f32 %v187, %v212
      %v231 = vmul.f32 %v188, %v212
      %v232 = vmul.f32 %v189, %v212
      %v233 = vmul.f32 %v190, %v212
      %v234 = vmul.f32 %v191, %v212
      %v235 = vmul.f32 %v192, %v212
      %v236 = vmul.f32 %v193, %v212
      %v237 = vmul.f32 %v194, %v212
      %v238 = vmul.f32 %v195, %v212
      %v239 = vmul.f32 %v196, %v212
      %v240 = vmul.f32 %v197, %v212
      %v241 = vmul.f32 %v198, %v212
      %v242 = vmul.f32 %v199, %v212
      %v243 = vmul.f32 %v200, %v212
      %v244 = vmul.f32 %v201, %v212
      %v245 = vmul.f32 %v202, %v212
      %v246 = vmul.f32 %v203, %v212
      %v247 = vmul.f32 %v204, %v212
      %v248 = vmul.f32 %v205, %v212
      %v249 = vmul.f32 %v206, %v212
      %v250 = vld [vmem:[%s2] sm:$0x1]
      %v252 = vlaneseq
      %v253 = vshrl.u32 %v252, 7
      %v254 = vsub.s32 0, %v253
      %v255 = vrot.slane %v250, %v254
      %v257 = vadd.f32 %v214, %v255
      %v258 = vadd.f32 %v215, %v255
      %v259 = vadd.f32 %v216, %v255
      %v260 = vadd.f32 %v217, %v255
      %v261 = vadd.f32 %v218, %v255
      %v262 = vadd.f32 %v219, %v255
      %v263 = vadd.f32 %v220, %v255
      %v264 = vadd.f32 %v221, %v255
      %v265 = vadd.f32 %v222, %v255
      %v266 = vadd.f32 %v223, %v255
      %v267 = vadd.f32 %v224, %v255
      %v268 = vadd.f32 %v225, %v255
      %v269 = vadd.f32 %v226, %v255
      %v270 = vadd.f32 %v227, %v255
      %v271 = vadd.f32 %v228, %v255
      %v272 = vadd.f32 %v229, %v255
      %v273 = vadd.f32 %v230, %v255
      %v274 = vadd.f32 %v231, %v255
      %v275 = vadd.f32 %v232, %v255
      %v276 = vadd.f32 %v233, %v255
      %v277 = vadd.f32 %v234, %v255
      %v278 = vadd.f32 %v235, %v255
      %v279 = vadd.f32 %v236, %v255
      %v280 = vadd.f32 %v237, %v255
      %v281 = vadd.f32 %v238, %v255
      %v282 = vadd.f32 %v239, %v255
      %v283 = vadd.f32 %v240, %v255
      %v284 = vadd.f32 %v241, %v255
      %v285 = vadd.f32 %v242, %v255
      %v286 = vadd.f32 %v243, %v255
      %v287 = vadd.f32 %v244, %v255
      %v288 = vadd.f32 %v245, %v255
      %v289 = vadd.f32 %v246, %v255
      %v290 = vadd.f32 %v247, %v255
      %v291 = vadd.f32 %v248, %v255
      %v292 = vadd.f32 %v249, %v255
      %293 = vst [vmem:[%s170] sm:$0xff] %v257
      %294 = vst [vmem:[%s170 + $0x8] sm:$0xff] %v258
      %295 = vst [vmem:[%s170 + $0x10] sm:$0xff] %v259
      %296 = vst [vmem:[%s170 + $0x18] sm:$0xff] %v260
      %297 = vst [vmem:[%s170 + $0x20] sm:$0xff] %v261
      %298 = vst [vmem:[%s170 + $0x28] sm:$0xff] %v262
      %299 = vst [vmem:[%s170 + $0x30] sm:$0xff] %v263
      %300 = vst [vmem:[%s170 + $0x38] sm:$0xff] %v264
      %301 = vst [vmem:[%s170 + $0x40] sm:$0xff] %v265
      %302 = vst [vmem:[%s170 + $0x48] sm:$0xff] %v266
      %303 = vst [vmem:[%s170 + $0x50] sm:$0xff] %v267
      %304 = vst [vmem:[%s170 + $0x58] sm:$0xff] %v268
      %305 = vst [vmem:[%s170 + $0x60] sm:$0xff] %v269
      %306 = vst [vmem:[%s170 + $0x68] sm:$0xff] %v270
      %307 = vst [vmem:[%s170 + $0x70] sm:$0xff] %v271
      %308 = vst [vmem:[%s170 + $0x78] sm:$0xff] %v272
      %309 = vst [vmem:[%s170 + $0x80] sm:$0xff] %v273
      %310 = vst [vmem:[%s170 + $0x88] sm:$0xff] %v274
      %311 = vst [vmem:[%s170 + $0x90] sm:$0xff] %v275
      %312 = vst [vmem:[%s170 + $0x98] sm:$0xff] %v276
      %313 = vst [vmem:[%s170 + $0xa0] sm:$0xff] %v277
      %314 = vst [vmem:[%s170 + $0xa8] sm:$0xff] %v278
      %315 = vst [vmem:[%s170 + $0xb0] sm:$0xff] %v279
      %316 = vst [vmem:[%s170 + $0xb8] sm:$0xff] %v280
      %317 = vst [vmem:[%s170 + $0xc0] sm:$0xff] %v281
      %318 = vst [vmem:[%s170 + $0xc8] sm:$0xff] %v282
      %319 = vst [vmem:[%s170 + $0xd0] sm:$0xff] %v283
      %320 = vst [vmem:[%s170 + $0xd8] sm:$0xff] %v284
      %321 = vst [vmem:[%s170 + $0xe0] sm:$0xff] %v285
      %322 = vst [vmem:[%s170 + $0xe8] sm:$0xff] %v286
      %323 = vst [vmem:[%s170 + $0xf0] sm:$0xff] %v287
      %324 = vst [vmem:[%s170 + $0xf8] sm:$0xff] %v288
      %325 = vst [vmem:[%s170 + $0x100] sm:$0xff] %v289
      %326 = vst [vmem:[%s170 + $0x108] sm:$0xff] %v290
      %327 = vst [vmem:[%s170 + $0x110] sm:$0xff] %v291
      %328 = vst [vmem:[%s170 + $0x118] sm:$0xff] %v292
      %p329 = scmp.lt.s32.totalorder %s14, 1
      %s330 = scalar_select %p329, %s14, 1
      %s331 = smul.addr %s330, 36
      %s332 = smul.addr %s331, 8
      %s333 = scalar_lea.vmem %s3, %s332
      // Predicated region
      $region33: #{encode_block_forward.5} parent=31 // pred_check
        %p334 = pneg %p100
      $region34: #{encode_block_forward.5} parent=31 // pred_check_branch
        %336 = sbr.rel (%p334) target = $region36
      $region35: #{encode_block_forward.5} parent=31 // pred_region
        _
      $region36: #{encode_block_forward.5} parent=31 // pred_fallthru
        _
    $region32: #{encode_block_forward.5} parent=5 // pred_fallthru
      _
    %p337 = scmp.le.s32.totalorder 2, %s9
    // Predicated region
    $region37: #{encode_block_forward.5} parent=5 // pred_check
      %p338 = pneg %p337
    $region38: #{encode_block_forward.5} parent=5 // pred_check_branch
      %340 = sbr.rel (%p338) target = $region40
    $region39: #{encode_block_forward.5} parent=5 // pred_region
      %s341 = ssub.s32 %s9, 2
      // Predicated region
      $region41: #{encode_block_forward.5} parent=39 // pred_check
        %p342 = pneg %p106
      $region42: #{encode_block_forward.5} parent=39 // pred_check_branch
        %344 = sbr.rel (%p342) target = $region44
      $region43: #{encode_block_forward.5} parent=39 // pred_region
        %p345 = scmp.lt.s32.totalorder %s15, 1
        %s346 = scalar_select %p345, %s15, 1
        %s347 = smul.addr %s346, 36
        %s348 = smul.addr %s347, 8
        %s349 = scalar_lea.vmem %s3, %s348
      $region44: #{encode_block_forward.5} parent=39 // pred_fallthru
        _
    $region40: #{encode_block_forward.5} parent=5 // pred_fallthru
      _
  $region6: #{encode_block_forward.5} parent=0 // loop_footer
    %s13 = sadd.s32 1, %s9
  $region7: #{encode_block_forward.5} parent=0 // loop_footer_branch
    %8 = sbr.rel target = $region3
  $region8: #{encode_block_forward.5} parent=0 // loop_exit
    _

// kernel: encode_block_forward.3
$region0: #{encode_block_forward.3}
  #allocation0 [shape = 'u32[]', space=smem, size = 0x4, offset = 0x4, fixed_abs, tag = 'smem constant byte address 0x4 - core index']
  #allocation1 [shape = 'u32[144,128]{1,0:T(1,128)}', space=vmem, size = 0x12000, scoped, tag = 'internal scratch']
  %s0 = inlined_call_operand.vmem [shape: f32[2,328,4], index: 0, kind: input, shape index: {}]
  %s1 = inlined_call_operand.vmem [shape: f32[9,4,128], index: 1, kind: input, shape index: {}]
  %s2 = inlined_call_operand.vmem [shape: f32[1,128], index: 2, kind: input, shape index: {}]
  %s3 = inlined_call_operand.vmem [shape: f32[2,288,128], index: 3, kind: output, shape index: {0}]
  %s4 = inlined_call_operand.vmem [shape: f32[2,2,128], index: 4, kind: output, shape index: {1}]
  %5 = xla_tuple %s3, %s4
  %s6 = sld [smem:[#allocation0]]
  $region53: #{encode_block_forward.3} parent=0
    _
  %s8 = ssub.s32 1, %s6
  %s9 = scalar_select 0, %s8, %s6
  loop: start=0, step=1, limit=4
  $region2: #{encode_block_forward.3} parent=0 // loop_pre_header
    _
  $region3: #{encode_block_forward.3} parent=0 // loop_header
    %s11 = sphi 0, %s15
    %p12 = scmp.ge.s32.totalorder %s11, 4
    %s21 = sphi 0, %s23
    %s24 = sphi 0, %s21
    %s25 = sphi 0, %s24
    %s41 = sphi 0, %s25
    %s45 = sphi 0, %s45
    %s47 = sphi 0, %s45
    %s48 = sphi 0, %s47
    %s62 = sphi 0, %s48
    %s66 = sphi 0, %s66
    %s68 = sphi 0, %s66
    %s69 = sphi 0, %s68
    %s83 = sphi 0, %s69
    %s89 = sphi 0, %s91
    %s92 = sphi 0, %s89
    %s93 = sphi 0, %s92
    %s109 = sphi 0, %s93
    %s115 = sphi 0, %s117
    %s118 = sphi 0, %s115
    %s119 = sphi 0, %s118
    %s135 = sphi 0, %s119
  $region4: #{encode_block_forward.3} parent=0 // loop_header_branch
    %14 = sbr.rel (%p12) target = $region8
  $region5: #{encode_block_forward.3} parent=0 // loop_body
    %s16 = ssub.s32 %s11, 1
    %s17 = ssub.s32 %s11, 2
    %s18 = sadd.s32 %s11, 1
    %s19 = ssub.s32 %s11, %s18
    %p20 = scmp.eq.s32.totalorder %s19, 0
    %s22 = sadd.s32 %s21, 1
    %s23 = scalar_select %p20, %s21, %s22
    %p26 = pneg %p20
    %p27 = scmp.eq.s32.totalorder %s11, 1
    %p28 = por %p26, %p27
    %p29 = scmp.ne.s32.totalorder %s21, %s24
    %p30 = scmp.eq.s32.totalorder %s11, 0
    %p31 = por %p29, %p30
    %p32 = scmp.ne.s32.totalorder %s21, %s24
    %p33 = scmp.eq.s32.totalorder %s16, 1
    %p34 = por %p32, %p33
    %p35 = scmp.ne.s32.totalorder %s24, %s25
    %p36 = scmp.eq.s32.totalorder %s16, 0
    %p37 = por %p35, %p36
    %p38 = scmp.ne.s32.totalorder %s24, %s25
    %p39 = scmp.eq.s32.totalorder %s17, 1
    %p40 = por %p38, %p39
    %p42 = scmp.ne.s32.totalorder %s25, %s41
    %p43 = scmp.eq.s32.totalorder %s17, 0
    %p44 = por %p42, %p43
    %s46 = sadd.s32 %s45, 1
    %p49 = scmp.eq.s32.totalorder %s11, 1
    %p50 = scmp.ne.s32.totalorder %s45, %s47
    %p51 = scmp.eq.s32.totalorder %s11, 0
    %p52 = por %p50, %p51
    %p53 = scmp.ne.s32.totalorder %s45, %s47
    %p54 = scmp.eq.s32.totalorder %s16, 1
    %p55 = por %p53, %p54
    %p56 = scmp.ne.s32.totalorder %s47, %s48
    %p57 = scmp.eq.s32.totalorder %s16, 0
    %p58 = por %p56, %p57
    %p59 = scmp.ne.s32.totalorder %s47, %s48
    %p60 = scmp.eq.s32.totalorder %s17, 1
    %p61 = por %p59, %p60
    %p63 = scmp.ne.s32.totalorder %s48, %s62
    %p64 = scmp.eq.s32.totalorder %s17, 0
    %p65 = por %p63, %p64
    %s67 = sadd.s32 %s66, 1
    %p70 = scmp.eq.s32.totalorder %s11, 1
    %p71 = scmp.ne.s32.totalorder %s66, %s68
    %p72 = scmp.eq.s32.totalorder %s11, 0
    %p73 = por %p71, %p72
    %p74 = scmp.ne.s32.totalorder %s66, %s68
    %p75 = scmp.eq.s32.totalorder %s16, 1
    %p76 = por %p74, %p75
    %p77 = scmp.ne.s32.totalorder %s68, %s69
    %p78 = scmp.eq.s32.totalorder %s16, 0
    %p79 = por %p77, %p78
    %p80 = scmp.ne.s32.totalorder %s68, %s69
    %p81 = scmp.eq.s32.totalorder %s17, 1
    %p82 = por %p80, %p81
    %p84 = scmp.ne.s32.totalorder %s69, %s83
    %p85 = scmp.eq.s32.totalorder %s17, 0
    %p86 = por %p84, %p85
    %s87 = ssub.s32 %s11, %s18
    %p88 = scmp.eq.s32.totalorder %s87, 0
    %s90 = sadd.s32 %s89, 1
    %s91 = scalar_select %p88, %s89, %s90
    %p94 = pneg %p88
    %p95 = scmp.eq.s32.totalorder %s11, 1
    %p96 = por %p94, %p95
    %p97 = scmp.ne.s32.totalorder %s89, %s92
    %p98 = scmp.eq.s32.totalorder %s11, 0
    %p99 = por %p97, %p98
    %p100 = scmp.ne.s32.totalorder %s89, %s92
    %p101 = scmp.eq.s32.totalorder %s16, 1
    %p102 = por %p100, %p101
    %p103 = scmp.ne.s32.totalorder %s92, %s93
    %p104 = scmp.eq.s32.totalorder %s16, 0
    %p105 = por %p103, %p104
    %p106 = scmp.ne.s32.totalorder %s92, %s93
    %p107 = scmp.eq.s32.totalorder %s17, 1
    %p108 = por %p106, %p107
    %p110 = scmp.ne.s32.totalorder %s93, %s109
    %p111 = scmp.eq.s32.totalorder %s17, 0
    %p112 = por %p110, %p111
    %s113 = ssub.s32 %s11, %s18
    %p114 = scmp.eq.s32.totalorder %s113, 0
    %s116 = sadd.s32 %s115, 1
    %s117 = scalar_select %p114, %s115, %s116
    %p120 = pneg %p114
    %p121 = scmp.eq.s32.totalorder %s11, 1
    %p122 = por %p120, %p121
    %p123 = scmp.ne.s32.totalorder %s115, %s118
    %p124 = scmp.eq.s32.totalorder %s11, 0
    %p125 = por %p123, %p124
    %p126 = scmp.ne.s32.totalorder %s115, %s118
    %p127 = scmp.eq.s32.totalorder %s16, 1
    %p128 = por %p126, %p127
    %p129 = scmp.ne.s32.totalorder %s118, %s119
    %p130 = scmp.eq.s32.totalorder %s16, 0
    %p131 = por %p129, %p130
    %p132 = scmp.ne.s32.totalorder %s118, %s119
    %p133 = scmp.eq.s32.totalorder %s17, 1
    %p134 = por %p132, %p133
    %p136 = scmp.ne.s32.totalorder %s119, %s135
    %p137 = scmp.eq.s32.totalorder %s17, 0
    %p138 = por %p136, %p137
    %p139 = scmp.le.s32.totalorder 1, %s11
    %p140 = scmp.lt.s32.totalorder %s11, 3
    %p141 = pnand %p139, %p140
    %p142 = pneg %p141
    // Predicated region
    $region9: #{encode_block_forward.3} parent=5 // pred_check
      _
    $region10: #{encode_block_forward.3} parent=5 // pred_check_branch
      %144 = sbr.rel (%p141) target = $region12
    $region11: #{encode_block_forward.3} parent=5 // pred_region
      %s145 = ssub.s32 %s11, 1
      // Predicated region
      $region13: #{encode_block_forward.3} parent=11 // pred_check
        %p146 = pneg %p58
      $region14: #{encode_block_forward.3} parent=11 // pred_check_branch
        %148 = sbr.rel (%p146) target = $region16
      $region15: #{encode_block_forward.3} parent=11 // pred_region
        _
      $region16: #{encode_block_forward.3} parent=11 // pred_fallthru
        _
      // Predicated region
      $region17: #{encode_block_forward.3} parent=11 // pred_check
        %p149 = pneg %p79
      $region18: #{encode_block_forward.3} parent=11 // pred_check_branch
        %151 = sbr.rel (%p149) target = $region20
      $region19: #{encode_block_forward.3} parent=11 // pred_region
        _
      $region20: #{encode_block_forward.3} parent=11 // pred_fallthru
        _
    $region12: #{encode_block_forward.3} parent=5 // pred_fallthru
      _
    %p152 = scmp.lt.s32.totalorder %s11, 2
    // Predicated region
    $region21: #{encode_block_forward.3} parent=5 // pred_check
      %p153 = pneg %p152
    $region22: #{encode_block_forward.3} parent=5 // pred_check_branch
      %155 = sbr.rel (%p153) target = $region24
    $region23: #{encode_block_forward.3} parent=5 // pred_region
      // Predicated region
      $region25: #{encode_block_forward.3} parent=23 // pred_check
        %p156 = pneg %p31
      $region26: #{encode_block_forward.3} parent=23 // pred_check_branch
        %158 = sbr.rel (%p156) target = $region28
      $region27: #{encode_block_forward.3} parent=23 // pred_region
        %p159 = scmp.lt.s32.totalorder %s11, 1
        %s160 = scalar_select %p159, %s11, 1
        %s161 = smul.addr %s160, 41
        %s162 = smul.addr %s161, 8
        %s163 = scalar_lea.vmem %s0, %s162
      $region28: #{encode_block_forward.3} parent=23 // pred_fallthru
        _
    $region24: #{encode_block_forward.3} parent=5 // pred_fallthru
      _
    %p164 = scmp.le.s32.totalorder 1, %s11
    %p165 = scmp.lt.s32.totalorder %s11, 3
    %p166 = pnand %p164, %p165
    %p167 = pneg %p166
    // Predicated region
    $region29: #{encode_block_forward.3} parent=5 // pred_check
      _
    $region30: #{encode_block_forward.3} parent=5 // pred_check_branch
      %169 = sbr.rel (%p166) target = $region32
    $region31: #{encode_block_forward.3} parent=5 // pred_region
      %s170 = ssub.s32 %s11, 1
      %p171 = scmp.lt.s32.totalorder %s16, 1
      %s172 = scalar_select %p171, %s16, 1
      %s173 = smul.addr %s172, 41
      %s174 = smul.addr %s173, 8
      %s175 = scalar_lea.vmem %s0, %s174
      %p176 = pneg %p37
      %p177 = pneg %p34
      %p178 = pneg %p58
      %p179 = pneg %p55
      %p180 = pneg %p79
      %p181 = pneg %p76
      %p182 = pneg %p105
      %p183 = pneg %p102
      %p184 = scmp.lt.s32.totalorder %s16, 1
      %s185 = scalar_select %p184, %s16, 1
      %s186 = smul.addr %s185, 36
      %s187 = smul.addr %s186, 8
      %s188 = scalar_lea.vmem %s3, %s187
      %p189 = pneg %p131
      %p190 = pneg %p128
      %p191 = scmp.lt.s32.totalorder %s16, 1
      %s192 = scalar_select %p191, %s16, 1
      %s193 = smul.addr %s192, 2
      %s194 = scalar_lea.vmem %s4, %s193
      %p195 = scmp.lt.s32.totalorder %s16, 1
      %s196 = scalar_select %p195, %s16, 1
      %s197 = smul.addr %s196, 41
      %s198 = smul.addr %s197, 8
      %s199 = scalar_lea.vmem %s0, %s198
      %p200 = scmp.lt.s32.totalorder %s16, 1
      %s201 = scalar_select %p200, %s16, 1
      %s202 = smul.addr %s201, 36
      %s203 = smul.addr %s202, 8
      %s204 = scalar_lea.vmem %s3, %s203
      %p205 = scmp.lt.s32.totalorder %s16, 1
      %s206 = scalar_select %p205, %s16, 1
      %s207 = smul.addr %s206, 2
      %s208 = scalar_lea.vmem %s4, %s207
      %v209 = vld [vmem:[%s199] sm:$0xff]
      %v210 = vld [vmem:[%s199 + $0x8] sm:$0xff]
      %v211 = vld [vmem:[%s199 + $0x10] sm:$0xff]
      %v212 = vld [vmem:[%s199 + $0x18] sm:$0xff]
      %v213 = vld [vmem:[%s199 + $0x20] sm:$0xff]
      %v214 = vld [vmem:[%s199 + $0x28] sm:$0xff]
      %v215 = vld [vmem:[%s199 + $0x30] sm:$0xff]
      %v216 = vld [vmem:[%s199 + $0x38] sm:$0xff]
      %v217 = vld [vmem:[%s199 + $0x40] sm:$0xff]
      %v218 = vld [vmem:[%s199 + $0x48] sm:$0xff]
      %v219 = vld [vmem:[%s199 + $0x50] sm:$0xff]
      %v220 = vld [vmem:[%s199 + $0x58] sm:$0xff]
      %v221 = vld [vmem:[%s199 + $0x60] sm:$0xff]
      %v222 = vld [vmem:[%s199 + $0x68] sm:$0xff]
      %v223 = vld [vmem:[%s199 + $0x70] sm:$0xff]
      %v224 = vld [vmem:[%s199 + $0x78] sm:$0xff]
      %v225 = vld [vmem:[%s199 + $0x80] sm:$0xff]
      %v226 = vld [vmem:[%s199 + $0x88] sm:$0xff]
      %v227 = vld [vmem:[%s199 + $0x90] sm:$0xff]
      %v228 = vld [vmem:[%s199 + $0x98] sm:$0xff]
      %v229 = vld [vmem:[%s199 + $0xa0] sm:$0xff]
      %v230 = vld [vmem:[%s199 + $0xa8] sm:$0xff]
      %v231 = vld [vmem:[%s199 + $0xb0] sm:$0xff]
      %v232 = vld [vmem:[%s199 + $0xb8] sm:$0xff]
      %v233 = vld [vmem:[%s199 + $0xc0] sm:$0xff]
      %v234 = vld [vmem:[%s199 + $0xc8] sm:$0xff]
      %v235 = vld [vmem:[%s199 + $0xd0] sm:$0xff]
      %v236 = vld [vmem:[%s199 + $0xd8] sm:$0xff]
      %v237 = vld [vmem:[%s199 + $0xe0] sm:$0xff]
      %v238 = vld [vmem:[%s199 + $0xe8] sm:$0xff]
      %v239 = vld [vmem:[%s199 + $0xf0] sm:$0xff]
      %v240 = vld [vmem:[%s199 + $0xf8] sm:$0xff]
      %v241 = vld [vmem:[%s199 + $0x100] sm:$0xff]
      %v242 = vld [vmem:[%s199 + $0x108] sm:$0xff]
      %v243 = vld [vmem:[%s199 + $0x110] sm:$0xff]
      %v244 = vld [vmem:[%s199 + $0x118] sm:$0xff]
      %v245 = vld [vmem:[%s1] sm:$0xf]
      %v246 = vld [vmem:[%s199 + $0x1] sm:$0xff]
      %v247 = vld [vmem:[%s199 + $0x9] sm:$0xff]
      %v248 = vld [vmem:[%s199 + $0x11] sm:$0xff]
      %v249 = vld [vmem:[%s199 + $0x19] sm:$0xff]
      %v250 = vld [vmem:[%s199 + $0x21] sm:$0xff]
      %v251 = vld [vmem:[%s199 + $0x29] sm:$0xff]
      %v252 = vld [vmem:[%s199 + $0x31] sm:$0xff]
      %v253 = vld [vmem:[%s199 + $0x39] sm:$0xff]
      %v254 = vld [vmem:[%s199 + $0x41] sm:$0xff]
      %v255 = vld [vmem:[%s199 + $0x49] sm:$0xff]
      %v256 = vld [vmem:[%s199 + $0x51] sm:$0xff]
      %v257 = vld [vmem:[%s199 + $0x59] sm:$0xff]
      %v258 = vld [vmem:[%s199 + $0x61] sm:$0xff]
      %v259 = vld [vmem:[%s199 + $0x69] sm:$0xff]
      %v260 = vld [vmem:[%s199 + $0x71] sm:$0xff]
      %v261 = vld [vmem:[%s199 + $0x79] sm:$0xff]
      %v262 = vld [vmem:[%s199 + $0x81] sm:$0xff]
      %v263 = vld [vmem:[%s199 + $0x89] sm:$0xff]
      %v264 = vld [vmem:[%s199 + $0x91] sm:$0xff]
      %v265 = vld [vmem:[%s199 + $0x99] sm:$0xff]
      %v266 = vld [vmem:[%s199 + $0xa1] sm:$0xff]
      %v267 = vld [vmem:[%s199 + $0xa9] sm:$0xff]
      %v268 = vld [vmem:[%s199 + $0xb1] sm:$0xff]
      %v269 = vld [vmem:[%s199 + $0xb9] sm:$0xff]
      %v270 = vld [vmem:[%s199 + $0xc1] sm:$0xff]
      %v271 = vld [vmem:[%s199 + $0xc9] sm:$0xff]
      %v272 = vld [vmem:[%s199 + $0xd1] sm:$0xff]
      %v273 = vld [vmem:[%s199 + $0xd9] sm:$0xff]
      %v274 = vld [vmem:[%s199 + $0xe1] sm:$0xff]
      %v275 = vld [vmem:[%s199 + $0xe9] sm:$0xff]
      %v276 = vld [vmem:[%s199 + $0xf1] sm:$0xff]
      %v277 = vld [vmem:[%s199 + $0xf9] sm:$0xff]
      %v278 = vld [vmem:[%s199 + $0x101] sm:$0xff]
      %v279 = vld [vmem:[%s199 + $0x109] sm:$0xff]
      %v280 = vld [vmem:[%s199 + $0x111] sm:$0xff]
      %v281 = vld [vmem:[%s199 + $0x119] sm:$0xff]
      %s282 = scalar_lea.vmem %s1, 4
      %v283 = vld [vmem:[%s282] sm:$0xf]
      %vm284 = vcmask 31744
      %v286 = vsel %vm284, %v246, 0
      %v289 = vsel %vm284, %v247, 0
      %v292 = vsel %vm284, %v248, 0
      %v295 = vsel %vm284, %v249, 0
      %v298 = vsel %vm284, %v250, 0
      %v301 = vsel %vm284, %v251, 0
      %v304 = vsel %vm284, %v252, 0
      %v307 = vsel %vm284, %v253, 0
      %v310 = vsel %vm284, %v254, 0
      %v313 = vsel %vm284, %v255, 0
      %v316 = vsel %vm284, %v256, 0
      %v319 = vsel %vm284, %v257, 0
      %v322 = vsel %vm284, %v258, 0
      %v325 = vsel %vm284, %v259, 0
      %v328 = vsel %vm284, %v260, 0
      %v331 = vsel %vm284, %v261, 0
      %v334 = vsel %vm284, %v262, 0
      %v337 = vsel %vm284, %v263, 0
      %v340 = vsel %vm284, %v264, 0
      %v343 = vsel %vm284, %v265, 0
      %v346 = vsel %vm284, %v266, 0
      %v349 = vsel %vm284, %v267, 0
      %v352 = vsel %vm284, %v268, 0
      %v355 = vsel %vm284, %v269, 0
      %v358 = vsel %vm284, %v270, 0
      %v361 = vsel %vm284, %v271, 0
      %v364 = vsel %vm284, %v272, 0
      %v367 = vsel %vm284, %v273, 0
      %v370 = vsel %vm284, %v274, 0
      %v373 = vsel %vm284, %v275, 0
      %v376 = vsel %vm284, %v276, 0
      %v379 = vsel %vm284, %v277, 0
      %v382 = vsel %vm284, %v278, 0
      %v385 = vsel %vm284, %v279, 0
      %v388 = vsel %vm284, %v280, 0
      %v391 = vsel %vm284, %v281, 0
      %vm393 = vcmask 1043456
      %v395 = vsel %vm393, %v283, 0
      %397 = vmatprep.subr.mxu0 0.0
      %398 = vmatpush1.msra.mxu0 %v395
      %399 = vmatprep.subr.mxu0 0.0
      %400 = vmatpush1.msra.mxu0 0.0
      %401 = vmatprep.subr.mxu0 0.0
      %402 = vmatpush1.msra.mxu0 0.0
      %403 = vmatprep.subr.mxu0 0.0
      %404 = vmatpush1.msra.mxu0 0.0
      %405 = vmatprep.subr.mxu0 0.0
      %406 = vmatpush1.msra.mxu0 0.0
      %407 = vmatprep.subr.mxu0 0.0
      %408 = vmatpush1.msra.mxu0 0.0
      %409 = vmatprep.subr.mxu0 0.0
      %410 = vmatpush1.msra.mxu0 0.0
      %411 = vmatprep.subr.mxu0 0.0
      %412 = vmatpush1.msra.mxu0 0.0
      %413 = vmatprep.subr.mxu0 0.0
      %414 = vmatpush1.msra.mxu0 0.0
      %415 = vmatprep.subr.mxu0 0.0
      %416 = vmatpush1.msra.mxu0 0.0
      %417 = vmatprep.subr.mxu0 0.0
      %418 = vmatpush1.msra.mxu0 0.0
      %419 = vmatprep.subr.mxu0 0.0
      %420 = vmatpush1.msra.mxu0 0.0
      %421 = vmatprep.subr.mxu0 0.0
      %422 = vmatpush1.msra.mxu0 0.0
      %423 = vmatprep.subr.mxu0 0.0
      %424 = vmatpush1.msra.mxu0 0.0
      %425 = vmatprep.subr.mxu0 0.0
      %426 = vmatpush1.msra.mxu0 0.0
      %427 = vmatprep.subr.mxu0 0.0
      %428 = vmatpush1.msra.mxu0 0.0
      %429 = vmatprep.subr.mxu0 0.0
      %430 = vmatpush1.msra.mxu0 0.0
      %431 = vmatprep.subr.mxu0 0.0
      %432 = vmatpush1.msra.mxu0 0.0
      %433 = vmatprep.subr.mxu0 0.0
      %434 = vmatpush1.msra.mxu0 0.0
      %435 = vmatprep.subr.mxu0 0.0
      %436 = vmatpush1.msra.mxu0 0.0
      %437 = vmatprep.subr.mxu0 0.0
      %438 = vmatpush1.msra.mxu0 0.0
      %439 = vmatprep.subr.mxu0 0.0
      %440 = vmatpush1.msra.mxu0 0.0
      %441 = vmatprep.subr.mxu0 0.0
      %442 = vmatpush1.msra.mxu0 0.0
      %443 = vmatprep.subr.mxu0 0.0
      %444 = vmatpush1.msra.mxu0 0.0
      %445 = vmatprep.subr.mxu0 0.0
      %446 = vmatpush1.msra.mxu0 0.0
      %447 = vmatprep.subr.mxu0 0.0
      %448 = vmatpush1.msra.mxu0 0.0
      %449 = vmatprep.subr.mxu0 0.0
      %450 = vmatpush1.msra.mxu0 0.0
      %451 = vmatprep.subr.mxu0 0.0
      %452 = vmatpush1.msra.mxu0 0.0
      %453 = vmatprep.subr.mxu0 0.0
      %454 = vmatpush1.msra.mxu0 0.0
      %455 = vmatprep.subr.mxu0 0.0
      %456 = vmatpush1.msra.mxu0 0.0
      %457 = vmatprep.subr.mxu0 0.0
      %458 = vmatpush1.msra.mxu0 0.0
      %459 = vmatprep.subr.mxu0 0.0
      %460 = vmatpush1.msra.mxu0 0.0
      %461 = vmatprep.mubr.f32.mxu0 0.0
      %462 = vmatmul.mubr.f32.gmra.mrb[0].mxu0 %v286
      %v463 = vpop.f32.mrb[0].mxu0
      %v464 = vadd.f32 0.0, %v463
      %v465 = vpop.f32.mrb[0].mxu0
      %466 = vmatprep.mubr.f32.mxu0 0.0
      %467 = vmatmul.mubr.f32.gmra.mrb[0].mxu0 %v289
      %v468 = vpop.f32.mrb[0].mxu0
      %v469 = vadd.f32 0.0, %v468
      %v470 = vpop.f32.mrb[0].mxu0
      %471 = vmatprep.mubr.f32.mxu0 0.0
      %472 = vmatmul.mubr.f32.gmra.mrb[0].mxu0 %v292
      %v473 = vpop.f32.mrb[0].mxu0
      %v474 = vadd.f32 0.0, %v473
      %v475 = vpop.f32.mrb[0].mxu0
      %476 = vmatprep.mubr.f32.mxu0 0.0
      %477 = vmatmul.mubr.f32.gmra.mrb[0].mxu0 %v295
      %v478 = vpop.f32.mrb[0].mxu0
      %v479 = vadd.f32 0.0, %v478
      %v480 = vpop.f32.mrb[0].mxu0
      %481 = vmatprep.mubr.f32.mxu0 0.0
      %482 = vmatmul.mubr.f32.gmra.mrb[0].mxu0 %v298
      %v483 = vpop.f32.mrb[0].mxu0
      %v484 = vadd.f32 0.0, %v483
      %v485 = vpop.f32.mrb[0].mxu0
      %486 = vmatprep.mubr.f32.mxu0 0.0
      %487 = vmatmul.mubr.f32.gmra.mrb[0].mxu0 %v301
      %v488 = vpop.f32.mrb[0].mxu0
      %v489 = vadd.f32 0.0, %v488
      %v490 = vpop.f32.mrb[0].mxu0
      %491 = vmatprep.mubr.f32.mxu0 0.0
      %492 = vmatmul.mubr.f32.gmra.mrb[0].mxu0 %v304
      %v493 = vpop.f32.mrb[0].mxu0
      %v494 = vadd.f32 0.0, %v493
      %v495 = vpop.f32.mrb[0].mxu0
      %496 = vmatprep.mubr.f32.mxu0 0.0
      %497 = vmatmul.mubr.f32.gmra.mrb[0].mxu0 %v307
      %v498 = vpop.f32.mrb[0].mxu0
      %v499 = vadd.f32 0.0, %v498
      %v500 = vpop.f32.mrb[0].mxu0
      %501 = vmatprep.mubr.f32.mxu0 0.0
      %502 = vmatmul.mubr.f32.gmra.mrb[0].mxu0 %v310
      %v503 = vpop.f32.mrb[0].mxu0
      %v504 = vadd.f32 0.0, %v503
      %v505 = vpop.f32.mrb[0].mxu0
      %506 = vmatprep.mubr.f32.mxu0 0.0
      %507 = vmatmul.mubr.f32.gmra.mrb[0].mxu0 %v313
      %v508 = vpop.f32.mrb[0].mxu0
      %v509 = vadd.f32 0.0, %v508
      %v510 = vpop.f32.mrb[0].mxu0
      %511 = vmatprep.mubr.f32.mxu0 0.0
      %512 = vmatmul.mubr.f32.gmra.mrb[0].mxu0 %v316
      %v513 = vpop.f32.mrb[0].mxu0
      %v514 = vadd.f32 0.0, %v513
      %v515 = vpop.f32.mrb[0].mxu0
      %516 = vmatprep.mubr.f32.mxu0 0.0
      %517 = vmatmul.mubr.f32.gmra.mrb[0].mxu0 %v319
      %v518 = vpop.f32.mrb[0].mxu0
      %v519 = vadd.f32 0.0, %v518
      %v520 = vpop.f32.mrb[0].mxu0
      %521 = vmatprep.mubr.f32.mxu0 0.0
      %522 = vmatmul.mubr.f32.gmra.mrb[0].mxu0 %v322
      %v523 = vpop.f32.mrb[0].mxu0
      %v524 = vadd.f32 0.0, %v523
      %v525 = vpop.f32.mrb[0].mxu0
      %526 = vmatprep.mubr.f32.mxu0 0.0
      %527 = vmatmul.mubr.f32.gmra.mrb[0].mxu0 %v325
      %v528 = vpop.f32.mrb[0].mxu0
      %v529 = vadd.f32 0.0, %v528
      %v530 = vpop.f32.mrb[0].mxu0
      %531 = vmatprep.mubr.f32.mxu0 0.0
      %532 = vmatmul.mubr.f32.gmra.mrb[0].mxu0 %v328
      %v533 = vpop.f32.mrb[0].mxu0
      %v534 = vadd.f32 0.0, %v533
      %v535 = vpop.f32.mrb[0].mxu0
      %536 = vmatprep.mubr.f32.mxu0 0.0
      %537 = vmatmul.mubr.f32.gmra.mrb[0].mxu0 %v331
      %v538 = vpop.f32.mrb[0].mxu0
      %v539 = vadd.f32 0.0, %v538
      %v540 = vpop.f32.mrb[0].mxu0
      %541 = vmatprep.mubr.f32.mxu0 0.0
      %542 = vmatmul.mubr.f32.gmra.mrb[0].mxu0 %v334
      %v543 = vpop.f32.mrb[0].mxu0
      %v544 = vadd.f32 0.0, %v543
      %v545 = vpop.f32.mrb[0].mxu0
      %546 = vmatprep.mubr.f32.mxu0 0.0
      %547 = vmatmul.mubr.f32.gmra.mrb[0].mxu0 %v337
      %v548 = vpop.f32.mrb[0].mxu0
      %v549 = vadd.f32 0.0, %v548
      %v550 = vpop.f32.mrb[0].mxu0
      %551 = vmatprep.mubr.f32.mxu0 0.0
      %552 = vmatmul.mubr.f32.gmra.mrb[0].mxu0 %v340
      %v553 = vpop.f32.mrb[0].mxu0
      %v554 = vadd.f32 0.0, %v553
      %v555 = vpop.f32.mrb[0].mxu0
      %556 = vmatprep.mubr.f32.mxu0 0.0
      %557 = vmatmul.mubr.f32.gmra.mrb[0].mxu0 %v343
      %v558 = vpop.f32.mrb[0].mxu0
      %v559 = vadd.f32 0.0, %v558
      %v560 = vpop.f32.mrb[0].mxu0
      %561 = vmatprep.mubr.f32.mxu0 0.0
      %562 = vmatmul.mubr.f32.gmra.mrb[0].mxu0 %v346
      %v563 = vpop.f32.mrb[0].mxu0
      %v564 = vadd.f32 0.0, %v563
      %v565 = vpop.f32.mrb[0].mxu0
      %566 = vmatprep.mubr.f32.mxu0 0.0
      %567 = vmatmul.mubr.f32.gmra.mrb[0].mxu0 %v349
      %v568 = vpop.f32.mrb[0].mxu0
      %v569 = vadd.f32 0.0, %v568
      %v570 = vpop.f32.mrb[0].mxu0
      %571 = vmatprep.mubr.f32.mxu0 0.0
      %572 = vmatmul.mubr.f32.gmra.mrb[0].mxu0 %v352
      %v573 = vpop.f32.mrb[0].mxu0
      %v574 = vadd.f32 0.0, %v573
      %v575 = vpop.f32.mrb[0].mxu0
      %576 = vmatprep.mubr.f32.mxu0 0.0
      %577 = vmatmul.mubr.f32.gmra.mrb[0].mxu0 %v355
      %v578 = vpop.f32.mrb[0].mxu0
      %v579 = vadd.f32 0.0, %v578
      %v580 = vpop.f32.mrb[0].mxu0
      %581 = vmatprep.mubr.f32.mxu0 0.0
      %582 = vmatmul.mubr.f32.gmra.mrb[0].mxu0 %v358
      %v583 = vpop.f32.mrb[0].mxu0
      %v584 = vadd.f32 0.0, %v583
      %v585 = vpop.f32.mrb[0].mxu0
      %586 = vmatprep.mubr.f32.mxu0 0.0
      %587 = vmatmul.mubr.f32.gmra.mrb[0].mxu0 %v361
      %v588 = vpop.f32.mrb[0].mxu0
      %v589 = vadd.f32 0.0, %v588
      %v590 = vpop.f32.mrb[0].mxu0
      %591 = vmatprep.mubr.f32.mxu0 0.0
      %592 = vmatmul.mubr.f32.gmra.mrb[0].mxu0 %v364
      %v593 = vpop.f32.mrb[0].mxu0
      %v594 = vadd.f32 0.0, %v593
      %v595 = vpop.f32.mrb[0].mxu0
      %596 = vmatprep.mubr.f32.mxu0 0.0
      %597 = vmatmul.mubr.f32.gmra.mrb[0].mxu0 %v367
      %v598 = vpop.f32.mrb[0].mxu0
      %v599 = vadd.f32 0.0, %v598
      %v600 = vpop.f32.mrb[0].mxu0
      %601 = vmatprep.mubr.f32.mxu0 0.0
      %602 = vmatmul.mubr.f32.gmra.mrb[0].mxu0 %v370
      %v603 = vpop.f32.mrb[0].mxu0
      %v604 = vadd.f32 0.0, %v603
      %v605 = vpop.f32.mrb[0].mxu0
      %606 = vmatprep.mubr.f32.mxu0 0.0
      %607 = vmatmul.mubr.f32.gmra.mrb[0].mxu0 %v373
      %v608 = vpop.f32.mrb[0].mxu0
      %v609 = vadd.f32 0.0, %v608
      %v610 = vpop.f32.mrb[0].mxu0
      %611 = vmatprep.mubr.f32.mxu0 0.0
      %612 = vmatmul.mubr.f32.gmra.mrb[0].mxu0 %v376
      %v613 = vpop.f32.mrb[0].mxu0
      %v614 = vadd.f32 0.0, %v613
      %v615 = vpop.f32.mrb[0].mxu0
      %616 = vmatprep.mubr.f32.mxu0 0.0
      %617 = vmatmul.mubr.f32.gmra.mrb[0].mxu0 %v379
      %v618 = vpop.f32.mrb[0].mxu0
      %v619 = vadd.f32 0.0, %v618
      %v620 = vpop.f32.mrb[0].mxu0
      %621 = vmatprep.mubr.f32.mxu0 0.0
      %622 = vmatmul.mubr.f32.gmra.mrb[0].mxu0 %v382
      %v623 = vpop.f32.mrb[0].mxu0
      %v624 = vadd.f32 0.0, %v623
      %v625 = vpop.f32.mrb[0].mxu0
      %626 = vmatprep.mubr.f32.mxu0 0.0
      %627 = vmatmul.mubr.f32.gmra.mrb[0].mxu0 %v385
      %v628 = vpop.f32.mrb[0].mxu0
      %v629 = vadd.f32 0.0, %v628
      %v630 = vpop.f32.mrb[0].mxu0
      %631 = vmatprep.mubr.f32.mxu0 0.0
      %632 = vmatmul.mubr.f32.gmra.mrb[0].mxu0 %v388
      %v633 = vpop.f32.mrb[0].mxu0
      %v634 = vadd.f32 0.0, %v633
      %v635 = vpop.f32.mrb[0].mxu0
      %636 = vmatprep.mubr.f32.mxu0 0.0
      %637 = vmatmul.mubr.f32.gmra.mrb[0].mxu0 %v391
      %v638 = vpop.f32.mrb[0].mxu0
      %v639 = vadd.f32 0.0, %v638
      %v640 = vpop.f32.mrb[0].mxu0
      %641 = vdwg.mxu0
      %v643 = vsel %vm284, %v209, 0
      %v646 = vsel %vm284, %v210, 0
      %v649 = vsel %vm284, %v211, 0
      %v652 = vsel %vm284, %v212, 0
      %v655 = vsel %vm284, %v213, 0
      %v658 = vsel %vm284, %v214, 0
      %v661 = vsel %vm284, %v215, 0
      %v664 = vsel %vm284, %v216, 0
      %v667 = vsel %vm284, %v217, 0
      %v670 = vsel %vm284, %v218, 0
      %v673 = vsel %vm284, %v219, 0
      %v676 = vsel %vm284, %v220, 0
      %v679 = vsel %vm284, %v221, 0
      %v682 = vsel %vm284, %v222, 0
      %v685 = vsel %vm284, %v223, 0
      %v688 = vsel %vm284, %v224, 0
      %v691 = vsel %vm284, %v225, 0
      %v694 = vsel %vm284, %v226, 0
      %v697 = vsel %vm284, %v227, 0
      %v700 = vsel %vm284, %v228, 0
      %v703 = vsel %vm284, %v229, 0
      %v706 = vsel %vm284, %v230, 0
      %v709 = vsel %vm284, %v231, 0
      %v712 = vsel %vm284, %v232, 0
      %v715 = vsel %vm284, %v233, 0
      %v718 = vsel %vm284, %v234, 0
      %v721 = vsel %vm284, %v235, 0
      %v724 = vsel %vm284, %v236, 0
      %v727 = vsel %vm284, %v237, 0
      %v730 = vsel %vm284, %v238, 0
      %v733 = vsel %vm284, %v239, 0
      %v736 = vsel %vm284, %v240, 0
      %v739 = vsel %vm284, %v241, 0
      %v742 = vsel %vm284, %v242, 0
      %v745 = vsel %vm284, %v243, 0
      %v748 = vsel %vm284, %v244, 0
      %v751 = vsel %vm393, %v245, 0
      %753 = vmatprep.subr.mxu0 0.0
      %754 = vmatpush1.msra.mxu0 %v751
      %755 = vmatprep.subr.mxu0 0.0
      %756 = vmatpush1.msra.mxu0 0.0
      %757 = vmatprep.subr.mxu0 0.0
      %758 = vmatpush1.msra.mxu0 0.0
      %759 = vmatprep.subr.mxu0 0.0
      %760 = vmatpush1.msra.mxu0 0.0
      %761 = vmatprep.subr.mxu0 0.0
      %762 = vmatpush1.msra.mxu0 0.0
      %763 = vmatprep.subr.mxu0 0.0
      %764 = vmatpush1.msra.mxu0 0.0
      %765 = vmatprep.subr.mxu0 0.0
      %766 = vmatpush1.msra.mxu0 0.0
      %767 = vmatprep.subr.mxu0 0.0
      %768 = vmatpush1.msra.mxu0 0.0
      %769 = vmatprep.subr.mxu0 0.0
      %770 = vmatpush1.msra.mxu0 0.0
      %771 = vmatprep.subr.mxu0 0.0
      %772 = vmatpush1.msra.mxu0 0.0
      %773 = vmatprep.subr.mxu0 0.0
      %774 = vmatpush1.msra.mxu0 0.0
      %775 = vmatprep.subr.mxu0 0.0
      %776 = vmatpush1.msra.mxu0 0.0
      %777 = vmatprep.subr.mxu0 0.0
      %778 = vmatpush1.msra.mxu0 0.0
      %779 = vmatprep.subr.mxu0 0.0
      %780 = vmatpush1.msra.mxu0 0.0
      %781 = vmatprep.subr.mxu0 0.0
      %782 = vmatpush1.msra.mxu0 0.0
      %783 = vmatprep.subr.mxu0 0.0
      %784 = vmatpush1.msra.mxu0 0.0
      %785 = vmatprep.subr.mxu0 0.0
      %786 = vmatpush1.msra.mxu0 0.0
      %787 = vmatprep.subr.mxu0 0.0
      %788 = vmatpush1.msra.mxu0 0.0
      %789 = vmatprep.subr.mxu0 0.0
      %790 = vmatpush1.msra.mxu0 0.0
      %791 = vmatprep.subr.mxu0 0.0
      %792 = vmatpush1.msra.mxu0 0.0
      %793 = vmatprep.subr.mxu0 0.0
      %794 = vmatpush1.msra.mxu0 0.0
      %795 = vmatprep.subr.mxu0 0.0
      %796 = vmatpush1.msra.mxu0 0.0
      %797 = vmatprep.subr.mxu0 0.0
      %798 = vmatpush1.msra.mxu0 0.0
      %799 = vmatprep.subr.mxu0 0.0
      %800 = vmatpush1.msra.mxu0 0.0
      %801 = vmatprep.subr.mxu0 0.0
      %802 = vmatpush1.msra.mxu0 0.0
      %803 = vmatprep.subr.mxu0 0.0
      %804 = vmatpush1.msra.mxu0 0.0
      %805 = vmatprep.subr.mxu0 0.0
      %806 = vmatpush1.msra.mxu0 0.0
      %807 = vmatprep.subr.mxu0 0.0
      %808 = vmatpush1.msra.mxu0 0.0
      %809 = vmatprep.subr.mxu0 0.0
      %810 = vmatpush1.msra.mxu0 0.0
      %811 = vmatprep.subr.mxu0 0.0
      %812 = vmatpush1.msra.mxu0 0.0
      %813 = vmatprep.subr.mxu0 0.0
      %814 = vmatpush1.msra.mxu0 0.0
      %815 = vmatprep.subr.mxu0 0.0
      %816 = vmatpush1.msra.mxu0 0.0
      %817 = vmatprep.mubr.f32.mxu0 0.0
      %818 = vmatmul.mubr.f32.gmra.mrb[0].mxu0 %v643
      %v819 = vpop.f32.mrb[0].mxu0
      %v820 = vadd.f32 %v464, %v819
      %v821 = vpop.f32.mrb[0].mxu0
      %822 = vmatprep.mubr.f32.mxu0 0.0
      %823 = vmatmul.mubr.f32.gmra.mrb[0].mxu0 %v646
      %v824 = vpop.f32.mrb[0].mxu0
      %v825 = vadd.f32 %v469, %v824
      %v826 = vpop.f32.mrb[0].mxu0
      %827 = vmatprep.mubr.f32.mxu0 0.0
      %828 = vmatmul.mubr.f32.gmra.mrb[0].mxu0 %v649
      %v829 = vpop.f32.mrb[0].mxu0
      %v830 = vadd.f32 %v474, %v829
      %v831 = vpop.f32.mrb[0].mxu0
      %832 = vmatprep.mubr.f32.mxu0 0.0
      %833 = vmatmul.mubr.f32.gmra.mrb[0].mxu0 %v652
      %v834 = vpop.f32.mrb[0].mxu0
      %v835 = vadd.f32 %v479, %v834
      %v836 = vpop.f32.mrb[0].mxu0
      %837 = vmatprep.mubr.f32.mxu0 0.0
      %838 = vmatmul.mubr.f32.gmra.mrb[0].mxu0 %v655
      %v839 = vpop.f32.mrb[0].mxu0
      %v840 = vadd.f32 %v484, %v839
      %v841 = vpop.f32.mrb[0].mxu0
      %842 = vmatprep.mubr.f32.mxu0 0.0
      %843 = vmatmul.mubr.f32.gmra.mrb[0].mxu0 %v658
      %v844 = vpop.f32.mrb[0].mxu0
      %v845 = vadd.f32 %v489, %v844
      %v846 = vpop.f32.mrb[0].mxu0
      %847 = vmatprep.mubr.f32.mxu0 0.0
      %848 = vmatmul.mubr.f32.gmra.mrb[0].mxu0 %v661
      %v849 = vpop.f32.mrb[0].mxu0
      %v850 = vadd.f32 %v494, %v849
      %v851 = vpop.f32.mrb[0].mxu0
      %852 = vmatprep.mubr.f32.mxu0 0.0
      %853 = vmatmul.mubr.f32.gmra.mrb[0].mxu0 %v664
      %v854 = vpop.f32.mrb[0].mxu0
      %v855 = vadd.f32 %v499, %v854
      %v856 = vpop.f32.mrb[0].mxu0
      %857 = vmatprep.mubr.f32.mxu0 0.0
      %858 = vmatmul.mubr.f32.gmra.mrb[0].mxu0 %v667
      %v859 = vpop.f32.mrb[0].mxu0
      %v860 = vadd.f32 %v504, %v859
      %v861 = vpop.f32.mrb[0].mxu0
      %862 = vmatprep.mubr.f32.mxu0 0.0
      %863 = vmatmul.mubr.f32.gmra.mrb[0].mxu0 %v670
      %v864 = vpop.f32.mrb[0].mxu0
      %v865 = vadd.f32 %v509, %v864
      %v866 = vpop.f32.mrb[0].mxu0
      %867 = vmatprep.mubr.f32.mxu0 0.0
      %868 = vmatmul.mubr.f32.gmra.mrb[0].mxu0 %v673
      %v869 = vpop.f32.mrb[0].mxu0
      %v870 = vadd.f32 %v514, %v869
      %v871 = vpop.f32.mrb[0].mxu0
      %872 = vmatprep.mubr.f32.mxu0 0.0
      %873 = vmatmul.mubr.f32.gmra.mrb[0].mxu0 %v676
      %v874 = vpop.f32.mrb[0].mxu0
      %v875 = vadd.f32 %v519, %v874
      %v876 = vpop.f32.mrb[0].mxu0
      %877 = vmatprep.mubr.f32.mxu0 0.0
      %878 = vmatmul.mubr.f32.gmra.mrb[0].mxu0 %v679
      %v879 = vpop.f32.mrb[0].mxu0
      %v880 = vadd.f32 %v524, %v879
      %v881 = vpop.f32.mrb[0].mxu0
      %882 = vmatprep.mubr.f32.mxu0 0.0
      %883 = vmatmul.mubr.f32.gmra.mrb[0].mxu0 %v682
      %v884 = vpop.f32.mrb[0].mxu0
      %v885 = vadd.f32 %v529, %v884
      %v886 = vpop.f32.mrb[0].mxu0
      %887 = vmatprep.mubr.f32.mxu0 0.0
      %888 = vmatmul.mubr.f32.gmra.mrb[0].mxu0 %v685
      %v889 = vpop.f32.mrb[0].mxu0
      %v890 = vadd.f32 %v534, %v889
      %v891 = vpop.f32.mrb[0].mxu0
      %892 = vmatprep.mubr.f32.mxu0 0.0
      %893 = vmatmul.mubr.f32.gmra.mrb[0].mxu0 %v688
      %v894 = vpop.f32.mrb[0].mxu0
      %v895 = vadd.f32 %v539, %v894
      %v896 = vpop.f32.mrb[0].mxu0
      %897 = vmatprep.mubr.f32.mxu0 0.0
      %898 = vmatmul.mubr.f32.gmra.mrb[0].mxu0 %v691
      %v899 = vpop.f32.mrb[0].mxu0
      %v900 = vadd.f32 %v544, %v899
      %v901 = vpop.f32.mrb[0].mxu0
      %902 = vmatprep.mubr.f32.mxu0 0.0
      %903 = vmatmul.mubr.f32.gmra.mrb[0].mxu0 %v694
      %v904 = vpop.f32.mrb[0].mxu0
      %v905 = vadd.f32 %v549, %v904
      %v906 = vpop.f32.mrb[0].mxu0
      %907 = vmatprep.mubr.f32.mxu0 0.0
      %908 = vmatmul.mubr.f32.gmra.mrb[0].mxu0 %v697
      %v909 = vpop.f32.mrb[0].mxu0
      %v910 = vadd.f32 %v554, %v909
      %v911 = vpop.f32.mrb[0].mxu0
      %912 = vmatprep.mubr.f32.mxu0 0.0
      %913 = vmatmul.mubr.f32.gmra.mrb[0].mxu0 %v700
      %v914 = vpop.f32.mrb[0].mxu0
      %v915 = vadd.f32 %v559, %v914
      %v916 = vpop.f32.mrb[0].mxu0
      %917 = vmatprep.mubr.f32.mxu0 0.0
      %918 = vmatmul.mubr.f32.gmra.mrb[0].mxu0 %v703
      %v919 = vpop.f32.mrb[0].mxu0
      %v920 = vadd.f32 %v564, %v919
      %v921 = vpop.f32.mrb[0].mxu0
      %922 = vmatprep.mubr.f32.mxu0 0.0
      %923 = vmatmul.mubr.f32.gmra.mrb[0].mxu0 %v706
      %v924 = vpop.f32.mrb[0].mxu0
      %v925 = vadd.f32 %v569, %v924
      %v926 = vpop.f32.mrb[0].mxu0
      %927 = vmatprep.mubr.f32.mxu0 0.0
      %928 = vmatmul.mubr.f32.gmra.mrb[0].mxu0 %v709
      %v929 = vpop.f32.mrb[0].mxu0
      %v930 = vadd.f32 %v574, %v929
      %v931 = vpop.f32.mrb[0].mxu0
      %932 = vmatprep.mubr.f32.mxu0 0.0
      %933 = vmatmul.mubr.f32.gmra.mrb[0].mxu0 %v712
      %v934 = vpop.f32.mrb[0].mxu0
      %v935 = vadd.f32 %v579, %v934
      %v936 = vpop.f32.mrb[0].mxu0
      %937 = vmatprep.mubr.f32.mxu0 0.0
      %938 = vmatmul.mubr.f32.gmra.mrb[0].mxu0 %v715
      %v939 = vpop.f32.mrb[0].mxu0
      %v940 = vadd.f32 %v584, %v939
      %v941 = vpop.f32.mrb[0].mxu0
      %942 = vmatprep.mubr.f32.mxu0 0.0
      %943 = vmatmul.mubr.f32.gmra.mrb[0].mxu0 %v718
      %v944 = vpop.f32.mrb[0].mxu0
      %v945 = vadd.f32 %v589, %v944
      %v946 = vpop.f32.mrb[0].mxu0
      %947 = vmatprep.mubr.f32.mxu0 0.0
      %948 = vmatmul.mubr.f32.gmra.mrb[0].mxu0 %v721
      %v949 = vpop.f32.mrb[0].mxu0
      %v950 = vadd.f32 %v594, %v949
      %v951 = vpop.f32.mrb[0].mxu0
      %952 = vmatprep.mubr.f32.mxu0 0.0
      %953 = vmatmul.mubr.f32.gmra.mrb[0].mxu0 %v724
      %v954 = vpop.f32.mrb[0].mxu0
      %v955 = vadd.f32 %v599, %v954
      %v956 = vpop.f32.mrb[0].mxu0
      %957 = vmatprep.mubr.f32.mxu0 0.0
      %958 = vmatmul.mubr.f32.gmra.mrb[0].mxu0 %v727
      %v959 = vpop.f32.mrb[0].mxu0
      %v960 = vadd.f32 %v604, %v959
      %v961 = vpop.f32.mrb[0].mxu0
      %962 = vmatprep.mubr.f32.mxu0 0.0
      %963 = vmatmul.mubr.f32.gmra.mrb[0].mxu0 %v730
      %v964 = vpop.f32.mrb[0].mxu0
      %v965 = vadd.f32 %v609, %v964
      %v966 = vpop.f32.mrb[0].mxu0
      %967 = vmatprep.mubr.f32.mxu0 0.0
      %968 = vmatmul.mubr.f32.gmra.mrb[0].mxu0 %v733
      %v969 = vpop.f32.mrb[0].mxu0
      %v970 = vadd.f32 %v614, %v969
      %v971 = vpop.f32.mrb[0].mxu0
      %972 = vmatprep.mubr.f32.mxu0 0.0
      %973 = vmatmul.mubr.f32.gmra.mrb[0].mxu0 %v736
      %v974 = vpop.f32.mrb[0].mxu0
      %v975 = vadd.f32 %v619, %v974
      %v976 = vpop.f32.mrb[0].mxu0
      %977 = vmatprep.mubr.f32.mxu0 0.0
      %978 = vmatmul.mubr.f32.gmra.mrb[0].mxu0 %v739
      %v979 = vpop.f32.mrb[0].mxu0
      %v980 = vadd.f32 %v624, %v979
      %v981 = vpop.f32.mrb[0].mxu0
      %982 = vmatprep.mubr.f32.mxu0 0.0
      %983 = vmatmul.mubr.f32.gmra.mrb[0].mxu0 %v742
      %v984 = vpop.f32.mrb[0].mxu0
      %v985 = vadd.f32 %v629, %v984
      %v986 = vpop.f32.mrb[0].mxu0
      %987 = vmatprep.mubr.f32.mxu0 0.0
      %988 = vmatmul.mubr.f32.gmra.mrb[0].mxu0 %v745
      %v989 = vpop.f32.mrb[0].mxu0
      %v990 = vadd.f32 %v634, %v989
      %v991 = vpop.f32.mrb[0].mxu0
      %992 = vmatprep.mubr.f32.mxu0 0.0
      %993 = vmatmul.mubr.f32.gmra.mrb[0].mxu0 %v748
      %v994 = vpop.f32.mrb[0].mxu0
      %v995 = vadd.f32 %v639, %v994
      %v996 = vpop.f32.mrb[0].mxu0
      %997 = vdwg.mxu0
      %v998 = vld [vmem:[%s199 + $0x2] sm:$0xff]
      %v999 = vld [vmem:[%s199 + $0xa] sm:$0xff]
      %v1000 = vld [vmem:[%s199 + $0x12] sm:$0xff]
      %v1001 = vld [vmem:[%s199 + $0x1a] sm:$0xff]
      %v1002 = vld [vmem:[%s199 + $0x22] sm:$0xff]
      %v1003 = vld [vmem:[%s199 + $0x2a] sm:$0xff]
      %v1004 = vld [vmem:[%s199 + $0x32] sm:$0xff]
      %v1005 = vld [vmem:[%s199 + $0x3a] sm:$0xff]
      %v1006 = vld [vmem:[%s199 + $0x42] sm:$0xff]
      %v1007 = vld [vmem:[%s199 + $0x4a] sm:$0xff]
      %v1008 = vld [vmem:[%s199 + $0x52] sm:$0xff]
      %v1009 = vld [vmem:[%s199 + $0x5a] sm:$0xff]
      %v1010 = vld [vmem:[%s199 + $0x62] sm:$0xff]
      %v1011 = vld [vmem:[%s199 + $0x6a] sm:$0xff]
      %v1012 = vld [vmem:[%s199 + $0x72] sm:$0xff]
      %v1013 = vld [vmem:[%s199 + $0x7a] sm:$0xff]
      %v1014 = vld [vmem:[%s199 + $0x82] sm:$0xff]
      %v1015 = vld [vmem:[%s199 + $0x8a] sm:$0xff]
      %v1016 = vld [vmem:[%s199 + $0x92] sm:$0xff]
      %v1017 = vld [vmem:[%s199 + $0x9a] sm:$0xff]
      %v1018 = vld [vmem:[%s199 + $0xa2] sm:$0xff]
      %v1019 = vld [vmem:[%s199 + $0xaa] sm:$0xff]
      %v1020 = vld [vmem:[%s199 + $0xb2] sm:$0xff]
      %v1021 = vld [vmem:[%s199 + $0xba] sm:$0xff]
      %v1022 = vld [vmem:[%s199 + $0xc2] sm:$0xff]
      %v1023 = vld [vmem:[%s199 + $0xca] sm:$0xff]
      %v1024 = vld [vmem:[%s199 + $0xd2] sm:$0xff]
      %v1025 = vld [vmem:[%s199 + $0xda] sm:$0xff]
      %v1026 = vld [vmem:[%s199 + $0xe2] sm:$0xff]
      %v1027 = vld [vmem:[%s199 + $0xea] sm:$0xff]
      %v1028 = vld [vmem:[%s199 + $0xf2] sm:$0xff]
      %v1029 = vld [vmem:[%s199 + $0xfa] sm:$0xff]
      %v1030 = vld [vmem:[%s199 + $0x102] sm:$0xff]
      %v1031 = vld [vmem:[%s199 + $0x10a] sm:$0xff]
      %v1032 = vld [vmem:[%s199 + $0x112] sm:$0xff]
      %v1033 = vld [vmem:[%s199 + $0x11a] sm:$0xff]
      %s1034 = scalar_lea.vmem %s1, 8
      %v1035 = vld [vmem:[%s1034] sm:$0xf]
      %v1037 = vsel %vm284, %v998, 0
      %v1040 = vsel %vm284, %v999, 0
      %v1043 = vsel %vm284, %v1000, 0
      %v1046 = vsel %vm284, %v1001, 0
      %v1049 = vsel %vm284, %v1002, 0
      %v1052 = vsel %vm284, %v1003, 0
      %v1055 = vsel %vm284, %v1004, 0
      %v1058 = vsel %vm284, %v1005, 0
      %v1061 = vsel %vm284, %v1006, 0
      %v1064 = vsel %vm284, %v1007, 0
      %v1067 = vsel %vm284, %v1008, 0
      %v1070 = vsel %vm284, %v1009, 0
      %v1073 = vsel %vm284, %v1010, 0
      %v1076 = vsel %vm284, %v1011, 0
      %v1079 = vsel %vm284, %v1012, 0
      %v1082 = vsel %vm284, %v1013, 0
      %v1085 = vsel %vm284, %v1014, 0
      %v1088 = vsel %vm284, %v1015, 0
      %v1091 = vsel %vm284, %v1016, 0
      %v1094 = vsel %vm284, %v1017, 0
      %v1097 = vsel %vm284, %v1018, 0
      %v1100 = vsel %vm284, %v1019, 0
      %v1103 = vsel %vm284, %v1020, 0
      %v1106 = vsel %vm284, %v1021, 0
      %v1109 = vsel %vm284, %v1022, 0
      %v1112 = vsel %vm284, %v1023, 0
      %v1115 = vsel %vm284, %v1024, 0
      %v1118 = vsel %vm284, %v1025, 0
      %v1121 = vsel %vm284, %v1026, 0
      %v1124 = vsel %vm284, %v1027, 0
      %v1127 = vsel %vm284, %v1028, 0
      %v1130 = vsel %vm284, %v1029, 0
      %v1133 = vsel %vm284, %v1030, 0
      %v1136 = vsel %vm284, %v1031, 0
      %v1139 = vsel %vm284, %v1032, 0
      %v1142 = vsel %vm284, %v1033, 0
      %v1145 = vsel %vm393, %v1035, 0
      %1147 = vmatprep.subr.mxu0 0.0
      %1148 = vmatpush1.msra.mxu0 %v1145
      %1149 = vmatprep.subr.mxu0 0.0
      %1150 = vmatpush1.msra.mxu0 0.0
      %1151 = vmatprep.subr.mxu0 0.0
      %1152 = vmatpush1.msra.mxu0 0.0
      %1153 = vmatprep.subr.mxu0 0.0
      %1154 = vmatpush1.msra.mxu0 0.0
      %1155 = vmatprep.subr.mxu0 0.0
      %1156 = vmatpush1.msra.mxu0 0.0
      %1157 = vmatprep.subr.mxu0 0.0
      %1158 = vmatpush1.msra.mxu0 0.0
      %1159 = vmatprep.subr.mxu0 0.0
      %1160 = vmatpush1.msra.mxu0 0.0
      %1161 = vmatprep.subr.mxu0 0.0
      %1162 = vmatpush1.msra.mxu0 0.0
      %1163 = vmatprep.subr.mxu0 0.0
      %1164 = vmatpush1.msra.mxu0 0.0
      %1165 = vmatprep.subr.mxu0 0.0
      %1166 = vmatpush1.msra.mxu0 0.0
      %1167 = vmatprep.subr.mxu0 0.0
      %1168 = vmatpush1.msra.mxu0 0.0
      %1169 = vmatprep.subr.mxu0 0.0
      %1170 = vmatpush1.msra.mxu0 0.0
      %1171 = vmatprep.subr.mxu0 0.0
      %1172 = vmatpush1.msra.mxu0 0.0
      %1173 = vmatprep.subr.mxu0 0.0
      %1174 = vmatpush1.msra.mxu0 0.0
      %1175 = vmatprep.subr.mxu0 0.0
      %1176 = vmatpush1.msra.mxu0 0.0
      %1177 = vmatprep.subr.mxu0 0.0
      %1178 = vmatpush1.msra.mxu0 0.0
      %1179 = vmatprep.subr.mxu0 0.0
      %1180 = vmatpush1.msra.mxu0 0.0
      %1181 = vmatprep.subr.mxu0 0.0
      %1182 = vmatpush1.msra.mxu0 0.0
      %1183 = vmatprep.subr.mxu0 0.0
      %1184 = vmatpush1.msra.mxu0 0.0
      %1185 = vmatprep.subr.mxu0 0.0
      %1186 = vmatpush1.msra.mxu0 0.0
      %1187 = vmatprep.subr.mxu0 0.0
      %1188 = vmatpush1.msra.mxu0 0.0
      %1189 = vmatprep.subr.mxu0 0.0
      %1190 = vmatpush1.msra.mxu0 0.0
      %1191 = vmatprep.subr.mxu0 0.0
      %1192 = vmatpush1.msra.mxu0 0.0
      %1193 = vmatprep.subr.mxu0 0.0
      %1194 = vmatpush1.msra.mxu0 0.0
      %1195 = vmatprep.subr.mxu0 0.0
      %1196 = vmatpush1.msra.mxu0 0.0
      %1197 = vmatprep.subr.mxu0 0.0
      %1198 = vmatpush1.msra.mxu0 0.0
      %1199 = vmatprep.subr.mxu0 0.0
      %1200 = vmatpush1.msra.mxu0 0.0
      %1201 = vmatprep.subr.mxu0 0.0
      %1202 = vmatpush1.msra.mxu0 0.0
      %1203 = vmatprep.subr.mxu0 0.0
      %1204 = vmatpush1.msra.mxu0 0.0
      %1205 = vmatprep.subr.mxu0 0.0
      %1206 = vmatpush1.msra.mxu0 0.0
      %1207 = vmatprep.subr.mxu0 0.0
      %1208 = vmatpush1.msra.mxu0 0.0
      %1209 = vmatprep.subr.mxu0 0.0
      %1210 = vmatpush1.msra.mxu0 0.0
      %1211 = vmatprep.mubr.f32.mxu0 0.0
      %1212 = vmatmul.mubr.f32.gmra.mrb[0].mxu0 %v1037
      %v1213 = vpop.f32.mrb[0].mxu0
      %v1214 = vadd.f32 0.0, %v1213
      %v1215 = vpop.f32.mrb[0].mxu0
      %1216 = vmatprep.mubr.f32.mxu0 0.0
      %1217 = vmatmul.mubr.f32.gmra.mrb[0].mxu0 %v1040
      %v1218 = vpop.f32.mrb[0].mxu0
      %v1219 = vadd.f32 0.0, %v1218
      %v1220 = vpop.f32.mrb[0].mxu0
      %1221 = vmatprep.mubr.f32.mxu0 0.0
      %1222 = vmatmul.mubr.f32.gmra.mrb[0].mxu0 %v1043
      %v1223 = vpop.f32.mrb[0].mxu0
      %v1224 = vadd.f32 0.0, %v1223
      %v1225 = vpop.f32.mrb[0].mxu0
      %1226 = vmatprep.mubr.f32.mxu0 0.0
      %1227 = vmatmul.mubr.f32.gmra.mrb[0].mxu0 %v1046
      %v1228 = vpop.f32.mrb[0].mxu0
      %v1229 = vadd.f32 0.0, %v1228
      %v1230 = vpop.f32.mrb[0].mxu0
      %1231 = vmatprep.mubr.f32.mxu0 0.0
      %1232 = vmatmul.mubr.f32.gmra.mrb[0].mxu0 %v1049
      %v1233 = vpop.f32.mrb[0].mxu0
      %v1234 = vadd.f32 0.0, %v1233
      %v1235 = vpop.f32.mrb[0].mxu0
      %1236 = vmatprep.mubr.f32.mxu0 0.0
      %1237 = vmatmul.mubr.f32.gmra.mrb[0].mxu0 %v1052
      %v1238 = vpop.f32.mrb[0].mxu0
      %v1239 = vadd.f32 0.0, %v1238
      %v1240 = vpop.f32.mrb[0].mxu0
      %1241 = vmatprep.mubr.f32.mxu0 0.0
      %1242 = vmatmul.mubr.f32.gmra.mrb[0].mxu0 %v1055
      %v1243 = vpop.f32.mrb[0].mxu0
      %v1244 = vadd.f32 0.0, %v1243
      %v1245 = vpop.f32.mrb[0].mxu0
      %1246 = vmatprep.mubr.f32.mxu0 0.0
      %1247 = vmatmul.mubr.f32.gmra.mrb[0].mxu0 %v1058
      %v1248 = vpop.f32.mrb[0].mxu0
      %v1249 = vadd.f32 0.0, %v1248
      %v1250 = vpop.f32.mrb[0].mxu0
      %1251 = vmatprep.mubr.f32.mxu0 0.0
      %1252 = vmatmul.mubr.f32.gmra.mrb[0].mxu0 %v1061
      %v1253 = vpop.f32.mrb[0].mxu0
      %v1254 = vadd.f32 0.0, %v1253
      %v1255 = vpop.f32.mrb[0].mxu0
      %1256 = vmatprep.mubr.f32.mxu0 0.0
      %1257 = vmatmul.mubr.f32.gmra.mrb[0].mxu0 %v1064
      %v1258 = vpop.f32.mrb[0].mxu0
      %v1259 = vadd.f32 0.0, %v1258
      %v1260 = vpop.f32.mrb[0].mxu0
      %1261 = vmatprep.mubr.f32.mxu0 0.0
      %1262 = vmatmul.mubr.f32.gmra.mrb[0].mxu0 %v1067
      %v1263 = vpop.f32.mrb[0].mxu0
      %v1264 = vadd.f32 0.0, %v1263
      %v1265 = vpop.f32.mrb[0].mxu0
      %1266 = vmatprep.mubr.f32.mxu0 0.0
      %1267 = vmatmul.mubr.f32.gmra.mrb[0].mxu0 %v1070
      %v1268 = vpop.f32.mrb[0].mxu0
      %v1269 = vadd.f32 0.0, %v1268
      %v1270 = vpop.f32.mrb[0].mxu0
      %1271 = vmatprep.mubr.f32.mxu0 0.0
      %1272 = vmatmul.mubr.f32.gmra.mrb[0].mxu0 %v1073
      %v1273 = vpop.f32.mrb[0].mxu0
      %v1274 = vadd.f32 0.0, %v1273
      %v1275 = vpop.f32.mrb[0].mxu0
      %1276 = vmatprep.mubr.f32.mxu0 0.0
      %1277 = vmatmul.mubr.f32.gmra.mrb[0].mxu0 %v1076
      %v1278 = vpop.f32.mrb[0].mxu0
      %v1279 = vadd.f32 0.0, %v1278
      %v1280 = vpop.f32.mrb[0].mxu0
      %1281 = vmatprep.mubr.f32.mxu0 0.0
      %1282 = vmatmul.mubr.f32.gmra.mrb[0].mxu0 %v1079
      %v1283 = vpop.f32.mrb[0].mxu0
      %v1284 = vadd.f32 0.0, %v1283
      %v1285 = vpop.f32.mrb[0].mxu0
      %1286 = vmatprep.mubr.f32.mxu0 0.0
      %1287 = vmatmul.mubr.f32.gmra.mrb[0].mxu0 %v1082
      %v1288 = vpop.f32.mrb[0].mxu0
      %v1289 = vadd.f32 0.0, %v1288
      %v1290 = vpop.f32.mrb[0].mxu0
      %1291 = vmatprep.mubr.f32.mxu0 0.0
      %1292 = vmatmul.mubr.f32.gmra.mrb[0].mxu0 %v1085
      %v1293 = vpop.f32.mrb[0].mxu0
      %v1294 = vadd.f32 0.0, %v1293
      %v1295 = vpop.f32.mrb[0].mxu0
      %1296 = vmatprep.mubr.f32.mxu0 0.0
      %1297 = vmatmul.mubr.f32.gmra.mrb[0].mxu0 %v1088
      %v1298 = vpop.f32.mrb[0].mxu0
      %v1299 = vadd.f32 0.0, %v1298
      %v1300 = vpop.f32.mrb[0].mxu0
      %1301 = vmatprep.mubr.f32.mxu0 0.0
      %1302 = vmatmul.mubr.f32.gmra.mrb[0].mxu0 %v1091
      %v1303 = vpop.f32.mrb[0].mxu0
      %v1304 = vadd.f32 0.0, %v1303
      %v1305 = vpop.f32.mrb[0].mxu0
      %1306 = vmatprep.mubr.f32.mxu0 0.0
      %1307 = vmatmul.mubr.f32.gmra.mrb[0].mxu0 %v1094
      %v1308 = vpop.f32.mrb[0].mxu0
      %v1309 = vadd.f32 0.0, %v1308
      %v1310 = vpop.f32.mrb[0].mxu0
      %1311 = vmatprep.mubr.f32.mxu0 0.0
      %1312 = vmatmul.mubr.f32.gmra.mrb[0].mxu0 %v1097
      %v1313 = vpop.f32.mrb[0].mxu0
      %v1314 = vadd.f32 0.0, %v1313
      %v1315 = vpop.f32.mrb[0].mxu0
      %1316 = vmatprep.mubr.f32.mxu0 0.0
      %1317 = vmatmul.mubr.f32.gmra.mrb[0].mxu0 %v1100
      %v1318 = vpop.f32.mrb[0].mxu0
      %v1319 = vadd.f32 0.0, %v1318
      %v1320 = vpop.f32.mrb[0].mxu0
      %1321 = vmatprep.mubr.f32.mxu0 0.0
      %1322 = vmatmul.mubr.f32.gmra.mrb[0].mxu0 %v1103
      %v1323 = vpop.f32.mrb[0].mxu0
      %v1324 = vadd.f32 0.0, %v1323
      %v1325 = vpop.f32.mrb[0].mxu0
      %1326 = vmatprep.mubr.f32.mxu0 0.0
      %1327 = vmatmul.mubr.f32.gmra.mrb[0].mxu0 %v1106
      %v1328 = vpop.f32.mrb[0].mxu0
      %v1329 = vadd.f32 0.0, %v1328
      %v1330 = vpop.f32.mrb[0].mxu0
      %1331 = vmatprep.mubr.f32.mxu0 0.0
      %1332 = vmatmul.mubr.f32.gmra.mrb[0].mxu0 %v1109
      %v1333 = vpop.f32.mrb[0].mxu0
      %v1334 = vadd.f32 0.0, %v1333
      %v1335 = vpop.f32.mrb[0].mxu0
      %1336 = vmatprep.mubr.f32.mxu0 0.0
      %1337 = vmatmul.mubr.f32.gmra.mrb[0].mxu0 %v1112
      %v1338 = vpop.f32.mrb[0].mxu0
      %v1339 = vadd.f32 0.0, %v1338
      %v1340 = vpop.f32.mrb[0].mxu0
      %1341 = vmatprep.mubr.f32.mxu0 0.0
      %1342 = vmatmul.mubr.f32.gmra.mrb[0].mxu0 %v1115
      %v1343 = vpop.f32.mrb[0].mxu0
      %v1344 = vadd.f32 0.0, %v1343
      %v1345 = vpop.f32.mrb[0].mxu0
      %1346 = vmatprep.mubr.f32.mxu0 0.0
      %1347 = vmatmul.mubr.f32.gmra.mrb[0].mxu0 %v1118
      %v1348 = vpop.f32.mrb[0].mxu0
      %v1349 = vadd.f32 0.0, %v1348
      %v1350 = vpop.f32.mrb[0].mxu0
      %1351 = vmatprep.mubr.f32.mxu0 0.0
      %1352 = vmatmul.mubr.f32.gmra.mrb[0].mxu0 %v1121
      %v1353 = vpop.f32.mrb[0].mxu0
      %v1354 = vadd.f32 0.0, %v1353
      %v1355 = vpop.f32.mrb[0].mxu0
      %1356 = vmatprep.mubr.f32.mxu0 0.0
      %1357 = vmatmul.mubr.f32.gmra.mrb[0].mxu0 %v1124
      %v1358 = vpop.f32.mrb[0].mxu0
      %v1359 = vadd.f32 0.0, %v1358
      %v1360 = vpop.f32.mrb[0].mxu0
      %1361 = vmatprep.mubr.f32.mxu0 0.0
      %1362 = vmatmul.mubr.f32.gmra.mrb[0].mxu0 %v1127
      %v1363 = vpop.f32.mrb[0].mxu0
      %v1364 = vadd.f32 0.0, %v1363
      %v1365 = vpop.f32.mrb[0].mxu0
      %1366 = vmatprep.mubr.f32.mxu0 0.0
      %1367 = vmatmul.mubr.f32.gmra.mrb[0].mxu0 %v1130
      %v1368 = vpop.f32.mrb[0].mxu0
      %v1369 = vadd.f32 0.0, %v1368
      %v1370 = vpop.f32.mrb[0].mxu0
      %1371 = vmatprep.mubr.f32.mxu0 0.0
      %1372 = vmatmul.mubr.f32.gmra.mrb[0].mxu0 %v1133
      %v1373 = vpop.f32.mrb[0].mxu0
      %v1374 = vadd.f32 0.0, %v1373
      %v1375 = vpop.f32.mrb[0].mxu0
      %1376 = vmatprep.mubr.f32.mxu0 0.0
      %1377 = vmatmul.mubr.f32.gmra.mrb[0].mxu0 %v1136
      %v1378 = vpop.f32.mrb[0].mxu0
      %v1379 = vadd.f32 0.0, %v1378
      %v1380 = vpop.f32.mrb[0].mxu0
      %1381 = vmatprep.mubr.f32.mxu0 0.0
      %1382 = vmatmul.mubr.f32.gmra.mrb[0].mxu0 %v1139
      %v1383 = vpop.f32.mrb[0].mxu0
      %v1384 = vadd.f32 0.0, %v1383
      %v1385 = vpop.f32.mrb[0].mxu0
      %1386 = vmatprep.mubr.f32.mxu0 0.0
      %1387 = vmatmul.mubr.f32.gmra.mrb[0].mxu0 %v1142
      %v1388 = vpop.f32.mrb[0].mxu0
      %v1389 = vadd.f32 0.0, %v1388
      %v1390 = vpop.f32.mrb[0].mxu0
      %1391 = vdwg.mxu0
      %v1392 = vadd.f32 %v820, %v1214
      %v1393 = vadd.f32 %v825, %v1219
      %v1394 = vadd.f32 %v830, %v1224
      %v1395 = vadd.f32 %v835, %v1229
      %v1396 = vadd.f32 %v840, %v1234
      %v1397 = vadd.f32 %v845, %v1239
      %v1398 = vadd.f32 %v850, %v1244
      %v1399 = vadd.f32 %v855, %v1249
      %v1400 = vadd.f32 %v860, %v1254
      %v1401 = vadd.f32 %v865, %v1259
      %v1402 = vadd.f32 %v870, %v1264
      %v1403 = vadd.f32 %v875, %v1269
      %v1404 = vadd.f32 %v880, %v1274
      %v1405 = vadd.f32 %v885, %v1279
      %v1406 = vadd.f32 %v890, %v1284
      %v1407 = vadd.f32 %v895, %v1289
      %v1408 = vadd.f32 %v900, %v1294
      %v1409 = vadd.f32 %v905, %v1299
      %v1410 = vadd.f32 %v910, %v1304
      %v1411 = vadd.f32 %v915, %v1309
      %v1412 = vadd.f32 %v920, %v1314
      %v1413 = vadd.f32 %v925, %v1319
      %v1414 = vadd.f32 %v930, %v1324
      %v1415 = vadd.f32 %v935, %v1329
      %v1416 = vadd.f32 %v940, %v1334
      %v1417 = vadd.f32 %v945, %v1339
      %v1418 = vadd.f32 %v950, %v1344
      %v1419 = vadd.f32 %v955, %v1349
      %v1420 = vadd.f32 %v960, %v1354
      %v1421 = vadd.f32 %v965, %v1359
      %v1422 = vadd.f32 %v970, %v1364
      %v1423 = vadd.f32 %v975, %v1369
      %v1424 = vadd.f32 %v980, %v1374
      %v1425 = vadd.f32 %v985, %v1379
      %v1426 = vadd.f32 %v990, %v1384
      %v1427 = vadd.f32 %v995, %v1389
      %v1428 = vld [vmem:[%s199 + $0x12] sm:$0xff]
      %v1429 = vld [vmem:[%s199 + $0x1a] sm:$0xff]
      %v1430 = vld [vmem:[%s199 + $0x22] sm:$0xff]
      %v1431 = vld [vmem:[%s199 + $0x2a] sm:$0xff]
      %v1432 = vld [vmem:[%s199 + $0x32] sm:$0xff]
      %v1433 = vld [vmem:[%s199 + $0x3a] sm:$0xff]
      %v1434 = vld [vmem:[%s199 + $0x42] sm:$0xff]
      %v1435 = vld [vmem:[%s199 + $0x4a] sm:$0xff]
      %v1436 = vld [vmem:[%s199 + $0x52] sm:$0xff]
      %v1437 = vld [vmem:[%s199 + $0x5a] sm:$0xff]
      %v1438 = vld [vmem:[%s199 + $0x62] sm:$0xff]
      %v1439 = vld [vmem:[%s199 + $0x6a] sm:$0xff]
      %v1440 = vld [vmem:[%s199 + $0x72] sm:$0xff]
      %v1441 = vld [vmem:[%s199 + $0x7a] sm:$0xff]
      %v1442 = vld [vmem:[%s199 + $0x82] sm:$0xff]
      %v1443 = vld [vmem:[%s199 + $0x8a] sm:$0xff]
      %v1444 = vld [vmem:[%s199 + $0x92] sm:$0xff]
      %v1445 = vld [vmem:[%s199 + $0x9a] sm:$0xff]
      %v1446 = vld [vmem:[%s199 + $0xa2] sm:$0xff]
      %v1447 = vld [vmem:[%s199 + $0xaa] sm:$0xff]
      %v1448 = vld [vmem:[%s199 + $0xb2] sm:$0xff]
      %v1449 = vld [vmem:[%s199 + $0xba] sm:$0xff]
      %v1450 = vld [vmem:[%s199 + $0xc2] sm:$0xff]
      %v1451 = vld [vmem:[%s199 + $0xca] sm:$0xff]
      %v1452 = vld [vmem:[%s199 + $0xd2] sm:$0xff]
      %v1453 = vld [vmem:[%s199 + $0xda] sm:$0xff]
      %v1454 = vld [vmem:[%s199 + $0xe2] sm:$0xff]
      %v1455 = vld [vmem:[%s199 + $0xea] sm:$0xff]
      %v1456 = vld [vmem:[%s199 + $0xf2] sm:$0xff]
      %v1457 = vld [vmem:[%s199 + $0xfa] sm:$0xff]
      %v1458 = vld [vmem:[%s199 + $0x102] sm:$0xff]
      %v1459 = vld [vmem:[%s199 + $0x10a] sm:$0xff]
      %v1460 = vld [vmem:[%s199 + $0x112] sm:$0xff]
      %v1461 = vld [vmem:[%s199 + $0x11a] sm:$0xff]
      %v1462 = vld [vmem:[%s199 + $0x122] sm:$0xff]
      %v1463 = vld [vmem:[%s199 + $0x12a] sm:$0xff]
      %s1464 = scalar_lea.vmem %s1, 12
      %v1465 = vld [vmem:[%s1464] sm:$0xf]
      %v1467 = vsel %vm284, %v1428, 0
      %v1470 = vsel %vm284, %v1429, 0
      %v1473 = vsel %vm284, %v1430, 0
      %v1476 = vsel %vm284, %v1431, 0
      %v1479 = vsel %vm284, %v1432, 0
      %v1482 = vsel %vm284, %v1433, 0
      %v1485 = vsel %vm284, %v1434, 0
      %v1488 = vsel %vm284, %v1435, 0
      %v1491 = vsel %vm284, %v1436, 0
      %v1494 = vsel %vm284, %v1437, 0
      %v1497 = vsel %vm284, %v1438, 0
      %v1500 = vsel %vm284, %v1439, 0
      %v1503 = vsel %vm284, %v1440, 0
      %v1506 = vsel %vm284, %v1441, 0
      %v1509 = vsel %vm284, %v1442, 0
      %v1512 = vsel %vm284, %v1443, 0
      %v1515 = vsel %vm284, %v1444, 0
      %v1518 = vsel %vm284, %v1445, 0
      %v1521 = vsel %vm284, %v1446, 0
      %v1524 = vsel %vm284, %v1447, 0
      %v1527 = vsel %vm284, %v1448, 0
      %v1530 = vsel %vm284, %v1449, 0
      %v1533 = vsel %vm284, %v1450, 0
      %v1536 = vsel %vm284, %v1451, 0
      %v1539 = vsel %vm284, %v1452, 0
      %v1542 = vsel %vm284, %v1453, 0
      %v1545 = vsel %vm284, %v1454, 0
      %v1548 = vsel %vm284, %v1455, 0
      %v1551 = vsel %vm284, %v1456, 0
      %v1554 = vsel %vm284, %v1457, 0
      %v1557 = vsel %vm284, %v1458, 0
      %v1560 = vsel %vm284, %v1459, 0
      %v1563 = vsel %vm284, %v1460, 0
      %v1566 = vsel %vm284, %v1461, 0
      %v1569 = vsel %vm284, %v1462, 0
      %v1572 = vsel %vm284, %v1463, 0
      %v1575 = vsel %vm393, %v1465, 0
      %1577 = vmatprep.subr.mxu0 0.0
      %1578 = vmatpush1.msra.mxu0 %v1575
      %1579 = vmatprep.subr.mxu0 0.0
      %1580 = vmatpush1.msra.mxu0 0.0
      %1581 = vmatprep.subr.mxu0 0.0
      %1582 = vmatpush1.msra.mxu0 0.0
      %1583 = vmatprep.subr.mxu0 0.0
      %1584 = vmatpush1.msra.mxu0 0.0
      %1585 = vmatprep.subr.mxu0 0.0
      %1586 = vmatpush1.msra.mxu0 0.0
      %1587 = vmatprep.subr.mxu0 0.0
      %1588 = vmatpush1.msra.mxu0 0.0
      %1589 = vmatprep.subr.mxu0 0.0
      %1590 = vmatpush1.msra.mxu0 0.0
      %1591 = vmatprep.subr.mxu0 0.0
      %1592 = vmatpush1.msra.mxu0 0.0
      %1593 = vmatprep.subr.mxu0 0.0
      %1594 = vmatpush1.msra.mxu0 0.0
      %1595 = vmatprep.subr.mxu0 0.0
      %1596 = vmatpush1.msra.mxu0 0.0
      %1597 = vmatprep.subr.mxu0 0.0
      %1598 = vmatpush1.msra.mxu0 0.0
      %1599 = vmatprep.subr.mxu0 0.0
      %1600 = vmatpush1.msra.mxu0 0.0
      %1601 = vmatprep.subr.mxu0 0.0
      %1602 = vmatpush1.msra.mxu0 0.0
      %1603 = vmatprep.subr.mxu0 0.0
      %1604 = vmatpush1.msra.mxu0 0.0
      %1605 = vmatprep.subr.mxu0 0.0
      %1606 = vmatpush1.msra.mxu0 0.0
      %1607 = vmatprep.subr.mxu0 0.0
      %1608 = vmatpush1.msra.mxu0 0.0
      %1609 = vmatprep.subr.mxu0 0.0
      %1610 = vmatpush1.msra.mxu0 0.0
      %1611 = vmatprep.subr.mxu0 0.0
      %1612 = vmatpush1.msra.mxu0 0.0
      %1613 = vmatprep.subr.mxu0 0.0
      %1614 = vmatpush1.msra.mxu0 0.0
      %1615 = vmatprep.subr.mxu0 0.0
      %1616 = vmatpush1.msra.mxu0 0.0
      %1617 = vmatprep.subr.mxu0 0.0
      %1618 = vmatpush1.msra.mxu0 0.0
      %1619 = vmatprep.subr.mxu0 0.0
      %1620 = vmatpush1.msra.mxu0 0.0
      %1621 = vmatprep.subr.mxu0 0.0
      %1622 = vmatpush1.msra.mxu0 0.0
      %1623 = vmatprep.subr.mxu0 0.0
      %1624 = vmatpush1.msra.mxu0 0.0
      %1625 = vmatprep.subr.mxu0 0.0
      %1626 = vmatpush1.msra.mxu0 0.0
      %1627 = vmatprep.subr.mxu0 0.0
      %1628 = vmatpush1.msra.mxu0 0.0
      %1629 = vmatprep.subr.mxu0 0.0
      %1630 = vmatpush1.msra.mxu0 0.0
      %1631 = vmatprep.subr.mxu0 0.0
      %1632 = vmatpush1.msra.mxu0 0.0
      %1633 = vmatprep.subr.mxu0 0.0
      %1634 = vmatpush1.msra.mxu0 0.0
      %1635 = vmatprep.subr.mxu0 0.0
      %1636 = vmatpush1.msra.mxu0 0.0
      %1637 = vmatprep.subr.mxu0 0.0
      %1638 = vmatpush1.msra.mxu0 0.0
      %1639 = vmatprep.subr.mxu0 0.0
      %1640 = vmatpush1.msra.mxu0 0.0
      %1641 = vmatprep.mubr.f32.mxu0 0.0
      %1642 = vmatmul.mubr.f32.gmra.mrb[0].mxu0 %v1467
      %v1643 = vpop.f32.mrb[0].mxu0
      %v1644 = vadd.f32 0.0, %v1643
      %v1645 = vpop.f32.mrb[0].mxu0
      %1646 = vmatprep.mubr.f32.mxu0 0.0
      %1647 = vmatmul.mubr.f32.gmra.mrb[0].mxu0 %v1470
      %v1648 = vpop.f32.mrb[0].mxu0
      %v1649 = vadd.f32 0.0, %v1648
      %v1650 = vpop.f32.mrb[0].mxu0
      %1651 = vmatprep.mubr.f32.mxu0 0.0
      %1652 = vmatmul.mubr.f32.gmra.mrb[0].mxu0 %v1473
      %v1653 = vpop.f32.mrb[0].mxu0
      %v1654 = vadd.f32 0.0, %v1653
      %v1655 = vpop.f32.mrb[0].mxu0
      %1656 = vmatprep.mubr.f32.mxu0 0.0
      %1657 = vmatmul.mubr.f32.gmra.mrb[0].mxu0 %v1476
      %v1658 = vpop.f32.mrb[0].mxu0
      %v1659 = vadd.f32 0.0, %v1658
      %v1660 = vpop.f32.mrb[0].mxu0
      %1661 = vmatprep.mubr.f32.mxu0 0.0
      %1662 = vmatmul.mubr.f32.gmra.mrb[0].mxu0 %v1479
      %v1663 = vpop.f32.mrb[0].mxu0
      %v1664 = vadd.f32 0.0, %v1663
      %v1665 = vpop.f32.mrb[0].mxu0
      %1666 = vmatprep.mubr.f32.mxu0 0.0
      %1667 = vmatmul.mubr.f32.gmra.mrb[0].mxu0 %v1482
      %v1668 = vpop.f32.mrb[0].mxu0
      %v1669 = vadd.f32 0.0, %v1668
      %v1670 = vpop.f32.mrb[0].mxu0
      %1671 = vmatprep.mubr.f32.mxu0 0.0
      %1672 = vmatmul.mubr.f32.gmra.mrb[0].mxu0 %v1485
      %v1673 = vpop.f32.mrb[0].mxu0
      %v1674 = vadd.f32 0.0, %v1673
      %v1675 = vpop.f32.mrb[0].mxu0
      %1676 = vmatprep.mubr.f32.mxu0 0.0
      %1677 = vmatmul.mubr.f32.gmra.mrb[0].mxu0 %v1488
      %v1678 = vpop.f32.mrb[0].mxu0
      %v1679 = vadd.f32 0.0, %v1678
      %v1680 = vpop.f32.mrb[0].mxu0
      %1681 = vmatprep.mubr.f32.mxu0 0.0
      %1682 = vmatmul.mubr.f32.gmra.mrb[0].mxu0 %v1491
      %v1683 = vpop.f32.mrb[0].mxu0
      %v1684 = vadd.f32 0.0, %v1683
      %v1685 = vpop.f32.mrb[0].mxu0
      %1686 = vmatprep.mubr.f32.mxu0 0.0
      %1687 = vmatmul.mubr.f32.gmra.mrb[0].mxu0 %v1494
      %v1688 = vpop.f32.mrb[0].mxu0
      %v1689 = vadd.f32 0.0, %v1688
      %v1690 = vpop.f32.mrb[0].mxu0
      %1691 = vmatprep.mubr.f32.mxu0 0.0
      %1692 = vmatmul.mubr.f32.gmra.mrb[0].mxu0 %v1497
      %v1693 = vpop.f32.mrb[0].mxu0
      %v1694 = vadd.f32 0.0, %v1693
      %v1695 = vpop.f32.mrb[0].mxu0
      %1696 = vmatprep.mubr.f32.mxu0 0.0
      %1697 = vmatmul.mubr.f32.gmra.mrb[0].mxu0 %v1500
      %v1698 = vpop.f32.mrb[0].mxu0
      %v1699 = vadd.f32 0.0, %v1698
      %v1700 = vpop.f32.mrb[0].mxu0
      %1701 = vmatprep.mubr.f32.mxu0 0.0
      %1702 = vmatmul.mubr.f32.gmra.mrb[0].mxu0 %v1503
      %v1703 = vpop.f32.mrb[0].mxu0
      %v1704 = vadd.f32 0.0, %v1703
      %v1705 = vpop.f32.mrb[0].mxu0
      %1706 = vmatprep.mubr.f32.mxu0 0.0
      %1707 = vmatmul.mubr.f32.gmra.mrb[0].mxu0 %v1506
      %v1708 = vpop.f32.mrb[0].mxu0
      %v1709 = vadd.f32 0.0, %v1708
      %v1710 = vpop.f32.mrb[0].mxu0
      %1711 = vmatprep.mubr.f32.mxu0 0.0
      %1712 = vmatmul.mubr.f32.gmra.mrb[0].mxu0 %v1509
      %v1713 = vpop.f32.mrb[0].mxu0
      %v1714 = vadd.f32 0.0, %v1713
      %v1715 = vpop.f32.mrb[0].mxu0
      %1716 = vmatprep.mubr.f32.mxu0 0.0
      %1717 = vmatmul.mubr.f32.gmra.mrb[0].mxu0 %v1512
      %v1718 = vpop.f32.mrb[0].mxu0
      %v1719 = vadd.f32 0.0, %v1718
      %v1720 = vpop.f32.mrb[0].mxu0
      %1721 = vmatprep.mubr.f32.mxu0 0.0
      %1722 = vmatmul.mubr.f32.gmra.mrb[0].mxu0 %v1515
      %v1723 = vpop.f32.mrb[0].mxu0
      %v1724 = vadd.f32 0.0, %v1723
      %v1725 = vpop.f32.mrb[0].mxu0
      %1726 = vmatprep.mubr.f32.mxu0 0.0
      %1727 = vmatmul.mubr.f32.gmra.mrb[0].mxu0 %v1518
      %v1728 = vpop.f32.mrb[0].mxu0
      %v1729 = vadd.f32 0.0, %v1728
      %v1730 = vpop.f32.mrb[0].mxu0
      %1731 = vmatprep.mubr.f32.mxu0 0.0
      %1732 = vmatmul.mubr.f32.gmra.mrb[0].mxu0 %v1521
      %v1733 = vpop.f32.mrb[0].mxu0
      %v1734 = vadd.f32 0.0, %v1733
      %v1735 = vpop.f32.mrb[0].mxu0
      %1736 = vmatprep.mubr.f32.mxu0 0.0
      %1737 = vmatmul.mubr.f32.gmra.mrb[0].mxu0 %v1524
      %v1738 = vpop.f32.mrb[0].mxu0
      %v1739 = vadd.f32 0.0, %v1738
      %v1740 = vpop.f32.mrb[0].mxu0
      %1741 = vmatprep.mubr.f32.mxu0 0.0
      %1742 = vmatmul.mubr.f32.gmra.mrb[0].mxu0 %v1527
      %v1743 = vpop.f32.mrb[0].mxu0
      %v1744 = vadd.f32 0.0, %v1743
      %v1745 = vpop.f32.mrb[0].mxu0
      %1746 = vmatprep.mubr.f32.mxu0 0.0
      %1747 = vmatmul.mubr.f32.gmra.mrb[0].mxu0 %v1530
      %v1748 = vpop.f32.mrb[0].mxu0
      %v1749 = vadd.f32 0.0, %v1748
      %v1750 = vpop.f32.mrb[0].mxu0
      %1751 = vmatprep.mubr.f32.mxu0 0.0
      %1752 = vmatmul.mubr.f32.gmra.mrb[0].mxu0 %v1533
      %v1753 = vpop.f32.mrb[0].mxu0
      %v1754 = vadd.f32 0.0, %v1753
      %v1755 = vpop.f32.mrb[0].mxu0
      %1756 = vmatprep.mubr.f32.mxu0 0.0
      %1757 = vmatmul.mubr.f32.gmra.mrb[0].mxu0 %v1536
      %v1758 = vpop.f32.mrb[0].mxu0
      %v1759 = vadd.f32 0.0, %v1758
      %v1760 = vpop.f32.mrb[0].mxu0
      %1761 = vmatprep.mubr.f32.mxu0 0.0
      %1762 = vmatmul.mubr.f32.gmra.mrb[0].mxu0 %v1539
      %v1763 = vpop.f32.mrb[0].mxu0
      %v1764 = vadd.f32 0.0, %v1763
      %v1765 = vpop.f32.mrb[0].mxu0
      %1766 = vmatprep.mubr.f32.mxu0 0.0
      %1767 = vmatmul.mubr.f32.gmra.mrb[0].mxu0 %v1542
      %v1768 = vpop.f32.mrb[0].mxu0
      %v1769 = vadd.f32 0.0, %v1768
      %v1770 = vpop.f32.mrb[0].mxu0
      %1771 = vmatprep.mubr.f32.mxu0 0.0
      %1772 = vmatmul.mubr.f32.gmra.mrb[0].mxu0 %v1545
      %v1773 = vpop.f32.mrb[0].mxu0
      %v1774 = vadd.f32 0.0, %v1773
      %v1775 = vpop.f32.mrb[0].mxu0
      %1776 = vmatprep.mubr.f32.mxu0 0.0
      %1777 = vmatmul.mubr.f32.gmra.mrb[0].mxu0 %v1548
      %v1778 = vpop.f32.mrb[0].mxu0
      %v1779 = vadd.f32 0.0, %v1778
      %v1780 = vpop.f32.mrb[0].mxu0
      %1781 = vmatprep.mubr.f32.mxu0 0.0
      %1782 = vmatmul.mubr.f32.gmra.mrb[0].mxu0 %v1551
      %v1783 = vpop.f32.mrb[0].mxu0
      %v1784 = vadd.f32 0.0, %v1783
      %v1785 = vpop.f32.mrb[0].mxu0
      %1786 = vmatprep.mubr.f32.mxu0 0.0
      %1787 = vmatmul.mubr.f32.gmra.mrb[0].mxu0 %v1554
      %v1788 = vpop.f32.mrb[0].mxu0
      %v1789 = vadd.f32 0.0, %v1788
      %v1790 = vpop.f32.mrb[0].mxu0
      %1791 = vmatprep.mubr.f32.mxu0 0.0
      %1792 = vmatmul.mubr.f32.gmra.mrb[0].mxu0 %v1557
      %v1793 = vpop.f32.mrb[0].mxu0
      %v1794 = vadd.f32 0.0, %v1793
      %v1795 = vpop.f32.mrb[0].mxu0
      %1796 = vmatprep.mubr.f32.mxu0 0.0
      %1797 = vmatmul.mubr.f32.gmra.mrb[0].mxu0 %v1560
      %v1798 = vpop.f32.mrb[0].mxu0
      %v1799 = vadd.f32 0.0, %v1798
      %v1800 = vpop.f32.mrb[0].mxu0
      %1801 = vmatprep.mubr.f32.mxu0 0.0
      %1802 = vmatmul.mubr.f32.gmra.mrb[0].mxu0 %v1563
      %v1803 = vpop.f32.mrb[0].mxu0
      %v1804 = vadd.f32 0.0, %v1803
      %v1805 = vpop.f32.mrb[0].mxu0
      %1806 = vmatprep.mubr.f32.mxu0 0.0
      %1807 = vmatmul.mubr.f32.gmra.mrb[0].mxu0 %v1566
      %v1808 = vpop.f32.mrb[0].mxu0
      %v1809 = vadd.f32 0.0, %v1808
      %v1810 = vpop.f32.mrb[0].mxu0
      %1811 = vmatprep.mubr.f32.mxu0 0.0
      %1812 = vmatmul.mubr.f32.gmra.mrb[0].mxu0 %v1569
      %v1813 = vpop.f32.mrb[0].mxu0
      %v1814 = vadd.f32 0.0, %v1813
      %v1815 = vpop.f32.mrb[0].mxu0
      %1816 = vmatprep.mubr.f32.mxu0 0.0
      %1817 = vmatmul.mubr.f32.gmra.mrb[0].mxu0 %v1572
      %v1818 = vpop.f32.mrb[0].mxu0
      %v1819 = vadd.f32 0.0, %v1818
      %v1820 = vpop.f32.mrb[0].mxu0
      %1821 = vdwg.mxu0
      %v1822 = vadd.f32 %v1392, %v1644
      %v1823 = vadd.f32 %v1393, %v1649
      %v1824 = vadd.f32 %v1394, %v1654
      %v1825 = vadd.f32 %v1395, %v1659
      %v1826 = vadd.f32 %v1396, %v1664
      %v1827 = vadd.f32 %v1397, %v1669
      %v1828 = vadd.f32 %v1398, %v1674
      %v1829 = vadd.f32 %v1399, %v1679
      %v1830 = vadd.f32 %v1400, %v1684
      %v1831 = vadd.f32 %v1401, %v1689
      %v1832 = vadd.f32 %v1402, %v1694
      %v1833 = vadd.f32 %v1403, %v1699
      %v1834 = vadd.f32 %v1404, %v1704
      %v1835 = vadd.f32 %v1405, %v1709
      %v1836 = vadd.f32 %v1406, %v1714
      %v1837 = vadd.f32 %v1407, %v1719
      %v1838 = vadd.f32 %v1408, %v1724
      %v1839 = vadd.f32 %v1409, %v1729
      %v1840 = vadd.f32 %v1410, %v1734
      %v1841 = vadd.f32 %v1411, %v1739
      %v1842 = vadd.f32 %v1412, %v1744
      %v1843 = vadd.f32 %v1413, %v1749
      %v1844 = vadd.f32 %v1414, %v1754
      %v1845 = vadd.f32 %v1415, %v1759
      %v1846 = vadd.f32 %v1416, %v1764
      %v1847 = vadd.f32 %v1417, %v1769
      %v1848 = vadd.f32 %v1418, %v1774
      %v1849 = vadd.f32 %v1419, %v1779
      %v1850 = vadd.f32 %v1420, %v1784
      %v1851 = vadd.f32 %v1421, %v1789
      %v1852 = vadd.f32 %v1422, %v1794
      %v1853 = vadd.f32 %v1423, %v1799
      %v1854 = vadd.f32 %v1424, %v1804
      %v1855 = vadd.f32 %v1425, %v1809
      %v1856 = vadd.f32 %v1426, %v1814
      %v1857 = vadd.f32 %v1427, %v1819
      %v1858 = vld [vmem:[%s199 + $0x13] sm:$0xff]
      %v1859 = vld [vmem:[%s199 + $0x1b] sm:$0xff]
      %v1860 = vld [vmem:[%s199 + $0x23] sm:$0xff]
      %v1861 = vld [vmem:[%s199 + $0x2b] sm:$0xff]
      %v1862 = vld [vmem:[%s199 + $0x33] sm:$0xff]
      %v1863 = vld [vmem:[%s199 + $0x3b] sm:$0xff]
      %v1864 = vld [vmem:[%s199 + $0x43] sm:$0xff]
      %v1865 = vld [vmem:[%s199 + $0x4b] sm:$0xff]
      %v1866 = vld [vmem:[%s199 + $0x53] sm:$0xff]
      %v1867 = vld [vmem:[%s199 + $0x5b] sm:$0xff]
      %v1868 = vld [vmem:[%s199 + $0x63] sm:$0xff]
      %v1869 = vld [vmem:[%s199 + $0x6b] sm:$0xff]
      %v1870 = vld [vmem:[%s199 + $0x73] sm:$0xff]
      %v1871 = vld [vmem:[%s199 + $0x7b] sm:$0xff]
      %v1872 = vld [vmem:[%s199 + $0x83] sm:$0xff]
      %v1873 = vld [vmem:[%s199 + $0x8b] sm:$0xff]
      %v1874 = vld [vmem:[%s199 + $0x93] sm:$0xff]
      %v1875 = vld [vmem:[%s199 + $0x9b] sm:$0xff]
      %v1876 = vld [vmem:[%s199 + $0xa3] sm:$0xff]
      %v1877 = vld [vmem:[%s199 + $0xab] sm:$0xff]
      %v1878 = vld [vmem:[%s199 + $0xb3] sm:$0xff]
      %v1879 = vld [vmem:[%s199 + $0xbb] sm:$0xff]
      %v1880 = vld [vmem:[%s199 + $0xc3] sm:$0xff]
      %v1881 = vld [vmem:[%s199 + $0xcb] sm:$0xff]
      %v1882 = vld [vmem:[%s199 + $0xd3] sm:$0xff]
      %v1883 = vld [vmem:[%s199 + $0xdb] sm:$0xff]
      %v1884 = vld [vmem:[%s199 + $0xe3] sm:$0xff]
      %v1885 = vld [vmem:[%s199 + $0xeb] sm:$0xff]
      %v1886 = vld [vmem:[%s199 + $0xf3] sm:$0xff]
      %v1887 = vld [vmem:[%s199 + $0xfb] sm:$0xff]
      %v1888 = vld [vmem:[%s199 + $0x103] sm:$0xff]
      %v1889 = vld [vmem:[%s199 + $0x10b] sm:$0xff]
      %v1890 = vld [vmem:[%s199 + $0x113] sm:$0xff]
      %v1891 = vld [vmem:[%s199 + $0x11b] sm:$0xff]
      %v1892 = vld [vmem:[%s199 + $0x123] sm:$0xff]
      %v1893 = vld [vmem:[%s199 + $0x12b] sm:$0xff]
      %s1894 = scalar_lea.vmem %s1, 16
      %v1895 = vld [vmem:[%s1894] sm:$0xf]
      %v1897 = vsel %vm284, %v1858, 0
      %v1900 = vsel %vm284, %v1859, 0
      %v1903 = vsel %vm284, %v1860, 0
      %v1906 = vsel %vm284, %v1861, 0
      %v1909 = vsel %vm284, %v1862, 0
      %v1912 = vsel %vm284, %v1863, 0
      %v1915 = vsel %vm284, %v1864, 0
      %v1918 = vsel %vm284, %v1865, 0
      %v1921 = vsel %vm284, %v1866, 0
      %v1924 = vsel %vm284, %v1867, 0
      %v1927 = vsel %vm284, %v1868, 0
      %v1930 = vsel %vm284, %v1869, 0
      %v1933 = vsel %vm284, %v1870, 0
      %v1936 = vsel %vm284, %v1871, 0
      %v1939 = vsel %vm284, %v1872, 0
      %v1942 = vsel %vm284, %v1873, 0
      %v1945 = vsel %vm284, %v1874, 0
      %v1948 = vsel %vm284, %v1875, 0
      %v1951 = vsel %vm284, %v1876, 0
      %v1954 = vsel %vm284, %v1877, 0
      %v1957 = vsel %vm284, %v1878, 0
      %v1960 = vsel %vm284, %v1879, 0
      %v1963 = vsel %vm284, %v1880, 0
      %v1966 = vsel %vm284, %v1881, 0
      %v1969 = vsel %vm284, %v1882, 0
      %v1972 = vsel %vm284, %v1883, 0
      %v1975 = vsel %vm284, %v1884, 0
      %v1978 = vsel %vm284, %v1885, 0
      %v1981 = vsel %vm284, %v1886, 0
      %v1984 = vsel %vm284, %v1887, 0
      %v1987 = vsel %vm284, %v1888, 0
      %v1990 = vsel %vm284, %v1889, 0
      %v1993 = vsel %vm284, %v1890, 0
      %v1996 = vsel %vm284, %v1891, 0
      %v1999 = vsel %vm284, %v1892, 0
      %v2002 = vsel %vm284, %v1893, 0
      %v2005 = vsel %vm393, %v1895, 0
      %2007 = vmatprep.subr.mxu0 0.0
      %2008 = vmatpush1.msra.mxu0 %v2005
      %2009 = vmatprep.subr.mxu0 0.0
      %2010 = vmatpush1.msra.mxu0 0.0
      %2011 = vmatprep.subr.mxu0 0.0
      %2012 = vmatpush1.msra.mxu0 0.0
      %2013 = vmatprep.subr.mxu0 0.0
      %2014 = vmatpush1.msra.mxu0 0.0
      %2015 = vmatprep.subr.mxu0 0.0
      %2016 = vmatpush1.msra.mxu0 0.0
      %2017 = vmatprep.subr.mxu0 0.0
      %2018 = vmatpush1.msra.mxu0 0.0
      %2019 = vmatprep.subr.mxu0 0.0
      %2020 = vmatpush1.msra.mxu0 0.0
      %2021 = vmatprep.subr.mxu0 0.0
      %2022 = vmatpush1.msra.mxu0 0.0
      %2023 = vmatprep.subr.mxu0 0.0
      %2024 = vmatpush1.msra.mxu0 0.0
      %2025 = vmatprep.subr.mxu0 0.0
      %2026 = vmatpush1.msra.mxu0 0.0
      %2027 = vmatprep.subr.mxu0 0.0
      %2028 = vmatpush1.msra.mxu0 0.0
      %2029 = vmatprep.subr.mxu0 0.0
      %2030 = vmatpush1.msra.mxu0 0.0
      %2031 = vmatprep.subr.mxu0 0.0
      %2032 = vmatpush1.msra.mxu0 0.0
      %2033 = vmatprep.subr.mxu0 0.0
      %2034 = vmatpush1.msra.mxu0 0.0
      %2035 = vmatprep.subr.mxu0 0.0
      %2036 = vmatpush1.msra.mxu0 0.0
      %2037 = vmatprep.subr.mxu0 0.0
      %2038 = vmatpush1.msra.mxu0 0.0
      %2039 = vmatprep.subr.mxu0 0.0
      %2040 = vmatpush1.msra.mxu0 0.0
      %2041 = vmatprep.subr.mxu0 0.0
      %2042 = vmatpush1.msra.mxu0 0.0
      %2043 = vmatprep.subr.mxu0 0.0
      %2044 = vmatpush1.msra.mxu0 0.0
      %2045 = vmatprep.subr.mxu0 0.0
      %2046 = vmatpush1.msra.mxu0 0.0
      %2047 = vmatprep.subr.mxu0 0.0
      %2048 = vmatpush1.msra.mxu0 0.0
      %2049 = vmatprep.subr.mxu0 0.0
      %2050 = vmatpush1.msra.mxu0 0.0
      %2051 = vmatprep.subr.mxu0 0.0
      %2052 = vmatpush1.msra.mxu0 0.0
      %2053 = vmatprep.subr.mxu0 0.0
      %2054 = vmatpush1.msra.mxu0 0.0
      %2055 = vmatprep.subr.mxu0 0.0
      %2056 = vmatpush1.msra.mxu0 0.0
      %2057 = vmatprep.subr.mxu0 0.0
      %2058 = vmatpush1.msra.mxu0 0.0
      %2059 = vmatprep.subr.mxu0 0.0
      %2060 = vmatpush1.msra.mxu0 0.0
      %2061 = vmatprep.subr.mxu0 0.0
      %2062 = vmatpush1.msra.mxu0 0.0
      %2063 = vmatprep.subr.mxu0 0.0
      %2064 = vmatpush1.msra.mxu0 0.0
      %2065 = vmatprep.subr.mxu0 0.0
      %2066 = vmatpush1.msra.mxu0 0.0
      %2067 = vmatprep.subr.mxu0 0.0
      %2068 = vmatpush1.msra.mxu0 0.0
      %2069 = vmatprep.subr.mxu0 0.0
      %2070 = vmatpush1.msra.mxu0 0.0
      %2071 = vmatprep.mubr.f32.mxu0 0.0
      %2072 = vmatmul.mubr.f32.gmra.mrb[0].mxu0 %v1897
      %v2073 = vpop.f32.mrb[0].mxu0
      %v2074 = vadd.f32 0.0, %v2073
      %v2075 = vpop.f32.mrb[0].mxu0
      %2076 = vmatprep.mubr.f32.mxu0 0.0
      %2077 = vmatmul.mubr.f32.gmra.mrb[0].mxu0 %v1900
      %v2078 = vpop.f32.mrb[0].mxu0
      %v2079 = vadd.f32 0.0, %v2078
      %v2080 = vpop.f32.mrb[0].mxu0
      %2081 = vmatprep.mubr.f32.mxu0 0.0
      %2082 = vmatmul.mubr.f32.gmra.mrb[0].mxu0 %v1903
      %v2083 = vpop.f32.mrb[0].mxu0
      %v2084 = vadd.f32 0.0, %v2083
      %v2085 = vpop.f32.mrb[0].mxu0
      %2086 = vmatprep.mubr.f32.mxu0 0.0
      %2087 = vmatmul.mubr.f32.gmra.mrb[0].mxu0 %v1906
      %v2088 = vpop.f32.mrb[0].mxu0
      %v2089 = vadd.f32 0.0, %v2088
      %v2090 = vpop.f32.mrb[0].mxu0
      %2091 = vmatprep.mubr.f32.mxu0 0.0
      %2092 = vmatmul.mubr.f32.gmra.mrb[0].mxu0 %v1909
      %v2093 = vpop.f32.mrb[0].mxu0
      %v2094 = vadd.f32 0.0, %v2093
      %v2095 = vpop.f32.mrb[0].mxu0
      %2096 = vmatprep.mubr.f32.mxu0 0.0
      %2097 = vmatmul.mubr.f32.gmra.mrb[0].mxu0 %v1912
      %v2098 = vpop.f32.mrb[0].mxu0
      %v2099 = vadd.f32 0.0, %v2098
      %v2100 = vpop.f32.mrb[0].mxu0
      %2101 = vmatprep.mubr.f32.mxu0 0.0
      %2102 = vmatmul.mubr.f32.gmra.mrb[0].mxu0 %v1915
      %v2103 = vpop.f32.mrb[0].mxu0
      %v2104 = vadd.f32 0.0, %v2103
      %v2105 = vpop.f32.mrb[0].mxu0
      %2106 = vmatprep.mubr.f32.mxu0 0.0
      %2107 = vmatmul.mubr.f32.gmra.mrb[0].mxu0 %v1918
      %v2108 = vpop.f32.mrb[0].mxu0
      %v2109 = vadd.f32 0.0, %v2108
      %v2110 = vpop.f32.mrb[0].mxu0
      %2111 = vmatprep.mubr.f32.mxu0 0.0
      %2112 = vmatmul.mubr.f32.gmra.mrb[0].mxu0 %v1921
      %v2113 = vpop.f32.mrb[0].mxu0
      %v2114 = vadd.f32 0.0, %v2113
      %v2115 = vpop.f32.mrb[0].mxu0
      %2116 = vmatprep.mubr.f32.mxu0 0.0
      %2117 = vmatmul.mubr.f32.gmra.mrb[0].mxu0 %v1924
      %v2118 = vpop.f32.mrb[0].mxu0
      %v2119 = vadd.f32 0.0, %v2118
      %v2120 = vpop.f32.mrb[0].mxu0
      %2121 = vmatprep.mubr.f32.mxu0 0.0
      %2122 = vmatmul.mubr.f32.gmra.mrb[0].mxu0 %v1927
      %v2123 = vpop.f32.mrb[0].mxu0
      %v2124 = vadd.f32 0.0, %v2123
      %v2125 = vpop.f32.mrb[0].mxu0
      %2126 = vmatprep.mubr.f32.mxu0 0.0
      %2127 = vmatmul.mubr.f32.gmra.mrb[0].mxu0 %v1930
      %v2128 = vpop.f32.mrb[0].mxu0
      %v2129 = vadd.f32 0.0, %v2128
      %v2130 = vpop.f32.mrb[0].mxu0
      %2131 = vmatprep.mubr.f32.mxu0 0.0
      %2132 = vmatmul.mubr.f32.gmra.mrb[0].mxu0 %v1933
      %v2133 = vpop.f32.mrb[0].mxu0
      %v2134 = vadd.f32 0.0, %v2133
      %v2135 = vpop.f32.mrb[0].mxu0
      %2136 = vmatprep.mubr.f32.mxu0 0.0
      %2137 = vmatmul.mubr.f32.gmra.mrb[0].mxu0 %v1936
      %v2138 = vpop.f32.mrb[0].mxu0
      %v2139 = vadd.f32 0.0, %v2138
      %v2140 = vpop.f32.mrb[0].mxu0
      %2141 = vmatprep.mubr.f32.mxu0 0.0
      %2142 = vmatmul.mubr.f32.gmra.mrb[0].mxu0 %v1939
      %v2143 = vpop.f32.mrb[0].mxu0
      %v2144 = vadd.f32 0.0, %v2143
      %v2145 = vpop.f32.mrb[0].mxu0
      %2146 = vmatprep.mubr.f32.mxu0 0.0
      %2147 = vmatmul.mubr.f32.gmra.mrb[0].mxu0 %v1942
      %v2148 = vpop.f32.mrb[0].mxu0
      %v2149 = vadd.f32 0.0, %v2148
      %v2150 = vpop.f32.mrb[0].mxu0
      %2151 = vmatprep.mubr.f32.mxu0 0.0
      %2152 = vmatmul.mubr.f32.gmra.mrb[0].mxu0 %v1945
      %v2153 = vpop.f32.mrb[0].mxu0
      %v2154 = vadd.f32 0.0, %v2153
      %v2155 = vpop.f32.mrb[0].mxu0
      %2156 = vmatprep.mubr.f32.mxu0 0.0
      %2157 = vmatmul.mubr.f32.gmra.mrb[0].mxu0 %v1948
      %v2158 = vpop.f32.mrb[0].mxu0
      %v2159 = vadd.f32 0.0, %v2158
      %v2160 = vpop.f32.mrb[0].mxu0
      %2161 = vmatprep.mubr.f32.mxu0 0.0
      %2162 = vmatmul.mubr.f32.gmra.mrb[0].mxu0 %v1951
      %v2163 = vpop.f32.mrb[0].mxu0
      %v2164 = vadd.f32 0.0, %v2163
      %v2165 = vpop.f32.mrb[0].mxu0
      %2166 = vmatprep.mubr.f32.mxu0 0.0
      %2167 = vmatmul.mubr.f32.gmra.mrb[0].mxu0 %v1954
      %v2168 = vpop.f32.mrb[0].mxu0
      %v2169 = vadd.f32 0.0, %v2168
      %v2170 = vpop.f32.mrb[0].mxu0
      %2171 = vmatprep.mubr.f32.mxu0 0.0
      %2172 = vmatmul.mubr.f32.gmra.mrb[0].mxu0 %v1957
      %v2173 = vpop.f32.mrb[0].mxu0
      %v2174 = vadd.f32 0.0, %v2173
      %v2175 = vpop.f32.mrb[0].mxu0
      %2176 = vmatprep.mubr.f32.mxu0 0.0
      %2177 = vmatmul.mubr.f32.gmra.mrb[0].mxu0 %v1960
      %v2178 = vpop.f32.mrb[0].mxu0
      %v2179 = vadd.f32 0.0, %v2178
      %v2180 = vpop.f32.mrb[0].mxu0
      %2181 = vmatprep.mubr.f32.mxu0 0.0
      %2182 = vmatmul.mubr.f32.gmra.mrb[0].mxu0 %v1963
      %v2183 = vpop.f32.mrb[0].mxu0
      %v2184 = vadd.f32 0.0, %v2183
      %v2185 = vpop.f32.mrb[0].mxu0
      %2186 = vmatprep.mubr.f32.mxu0 0.0
      %2187 = vmatmul.mubr.f32.gmra.mrb[0].mxu0 %v1966
      %v2188 = vpop.f32.mrb[0].mxu0
      %v2189 = vadd.f32 0.0, %v2188
      %v2190 = vpop.f32.mrb[0].mxu0
      %2191 = vmatprep.mubr.f32.mxu0 0.0
      %2192 = vmatmul.mubr.f32.gmra.mrb[0].mxu0 %v1969
      %v2193 = vpop.f32.mrb[0].mxu0
      %v2194 = vadd.f32 0.0, %v2193
      %v2195 = vpop.f32.mrb[0].mxu0
      %2196 = vmatprep.mubr.f32.mxu0 0.0
      %2197 = vmatmul.mubr.f32.gmra.mrb[0].mxu0 %v1972
      %v2198 = vpop.f32.mrb[0].mxu0
      %v2199 = vadd.f32 0.0, %v2198
      %v2200 = vpop.f32.mrb[0].mxu0
      %2201 = vmatprep.mubr.f32.mxu0 0.0
      %2202 = vmatmul.mubr.f32.gmra.mrb[0].mxu0 %v1975
      %v2203 = vpop.f32.mrb[0].mxu0
      %v2204 = vadd.f32 0.0, %v2203
      %v2205 = vpop.f32.mrb[0].mxu0
      %2206 = vmatprep.mubr.f32.mxu0 0.0
      %2207 = vmatmul.mubr.f32.gmra.mrb[0].mxu0 %v1978
      %v2208 = vpop.f32.mrb[0].mxu0
      %v2209 = vadd.f32 0.0, %v2208
      %v2210 = vpop.f32.mrb[0].mxu0
      %2211 = vmatprep.mubr.f32.mxu0 0.0
      %2212 = vmatmul.mubr.f32.gmra.mrb[0].mxu0 %v1981
      %v2213 = vpop.f32.mrb[0].mxu0
      %v2214 = vadd.f32 0.0, %v2213
      %v2215 = vpop.f32.mrb[0].mxu0
      %2216 = vmatprep.mubr.f32.mxu0 0.0
      %2217 = vmatmul.mubr.f32.gmra.mrb[0].mxu0 %v1984
      %v2218 = vpop.f32.mrb[0].mxu0
      %v2219 = vadd.f32 0.0, %v2218
      %v2220 = vpop.f32.mrb[0].mxu0
      %2221 = vmatprep.mubr.f32.mxu0 0.0
      %2222 = vmatmul.mubr.f32.gmra.mrb[0].mxu0 %v1987
      %v2223 = vpop.f32.mrb[0].mxu0
      %v2224 = vadd.f32 0.0, %v2223
      %v2225 = vpop.f32.mrb[0].mxu0
      %2226 = vmatprep.mubr.f32.mxu0 0.0
      %2227 = vmatmul.mubr.f32.gmra.mrb[0].mxu0 %v1990
      %v2228 = vpop.f32.mrb[0].mxu0
      %v2229 = vadd.f32 0.0, %v2228
      %v2230 = vpop.f32.mrb[0].mxu0
      %2231 = vmatprep.mubr.f32.mxu0 0.0
      %2232 = vmatmul.mubr.f32.gmra.mrb[0].mxu0 %v1993
      %v2233 = vpop.f32.mrb[0].mxu0
      %v2234 = vadd.f32 0.0, %v2233
      %v2235 = vpop.f32.mrb[0].mxu0
      %2236 = vmatprep.mubr.f32.mxu0 0.0
      %2237 = vmatmul.mubr.f32.gmra.mrb[0].mxu0 %v1996
      %v2238 = vpop.f32.mrb[0].mxu0
      %v2239 = vadd.f32 0.0, %v2238
      %v2240 = vpop.f32.mrb[0].mxu0
      %2241 = vmatprep.mubr.f32.mxu0 0.0
      %2242 = vmatmul.mubr.f32.gmra.mrb[0].mxu0 %v1999
      %v2243 = vpop.f32.mrb[0].mxu0
      %v2244 = vadd.f32 0.0, %v2243
      %v2245 = vpop.f32.mrb[0].mxu0
      %2246 = vmatprep.mubr.f32.mxu0 0.0
      %2247 = vmatmul.mubr.f32.gmra.mrb[0].mxu0 %v2002
      %v2248 = vpop.f32.mrb[0].mxu0
      %v2249 = vadd.f32 0.0, %v2248
      %v2250 = vpop.f32.mrb[0].mxu0
      %2251 = vdwg.mxu0
      %v2252 = vadd.f32 %v1822, %v2074
      %v2253 = vadd.f32 %v1823, %v2079
      %v2254 = vadd.f32 %v1824, %v2084
      %v2255 = vadd.f32 %v1825, %v2089
      %v2256 = vadd.f32 %v1826, %v2094
      %v2257 = vadd.f32 %v1827, %v2099
      %v2258 = vadd.f32 %v1828, %v2104
      %v2259 = vadd.f32 %v1829, %v2109
      %v2260 = vadd.f32 %v1830, %v2114
      %v2261 = vadd.f32 %v1831, %v2119
      %v2262 = vadd.f32 %v1832, %v2124
      %v2263 = vadd.f32 %v1833, %v2129
      %v2264 = vadd.f32 %v1834, %v2134
      %v2265 = vadd.f32 %v1835, %v2139
      %v2266 = vadd.f32 %v1836, %v2144
      %v2267 = vadd.f32 %v1837, %v2149
      %v2268 = vadd.f32 %v1838, %v2154
      %v2269 = vadd.f32 %v1839, %v2159
      %v2270 = vadd.f32 %v1840, %v2164
      %v2271 = vadd.f32 %v1841, %v2169
      %v2272 = vadd.f32 %v1842, %v2174
      %v2273 = vadd.f32 %v1843, %v2179
      %v2274 = vadd.f32 %v1844, %v2184
      %v2275 = vadd.f32 %v1845, %v2189
      %v2276 = vadd.f32 %v1846, %v2194
      %v2277 = vadd.f32 %v1847, %v2199
      %v2278 = vadd.f32 %v1848, %v2204
      %v2279 = vadd.f32 %v1849, %v2209
      %v2280 = vadd.f32 %v1850, %v2214
      %v2281 = vadd.f32 %v1851, %v2219
      %v2282 = vadd.f32 %v1852, %v2224
      %v2283 = vadd.f32 %v1853, %v2229
      %v2284 = vadd.f32 %v1854, %v2234
      %v2285 = vadd.f32 %v1855, %v2239
      %v2286 = vadd.f32 %v1856, %v2244
      %v2287 = vadd.f32 %v1857, %v2249
      %v2288 = vld [vmem:[%s199 + $0x14] sm:$0xff]
      %v2289 = vld [vmem:[%s199 + $0x1c] sm:$0xff]
      %v2290 = vld [vmem:[%s199 + $0x24] sm:$0xff]
      %v2291 = vld [vmem:[%s199 + $0x2c] sm:$0xff]
      %v2292 = vld [vmem:[%s199 + $0x34] sm:$0xff]
      %v2293 = vld [vmem:[%s199 + $0x3c] sm:$0xff]
      %v2294 = vld [vmem:[%s199 + $0x44] sm:$0xff]
      %v2295 = vld [vmem:[%s199 + $0x4c] sm:$0xff]
      %v2296 = vld [vmem:[%s199 + $0x54] sm:$0xff]
      %v2297 = vld [vmem:[%s199 + $0x5c] sm:$0xff]
      %v2298 = vld [vmem:[%s199 + $0x64] sm:$0xff]
      %v2299 = vld [vmem:[%s199 + $0x6c] sm:$0xff]
      %v2300 = vld [vmem:[%s199 + $0x74] sm:$0xff]
      %v2301 = vld [vmem:[%s199 + $0x7c] sm:$0xff]
      %v2302 = vld [vmem:[%s199 + $0x84] sm:$0xff]
      %v2303 = vld [vmem:[%s199 + $0x8c] sm:$0xff]
      %v2304 = vld [vmem:[%s199 + $0x94] sm:$0xff]
      %v2305 = vld [vmem:[%s199 + $0x9c] sm:$0xff]
      %v2306 = vld [vmem:[%s199 + $0xa4] sm:$0xff]
      %v2307 = vld [vmem:[%s199 + $0xac] sm:$0xff]
      %v2308 = vld [vmem:[%s199 + $0xb4] sm:$0xff]
      %v2309 = vld [vmem:[%s199 + $0xbc] sm:$0xff]
      %v2310 = vld [vmem:[%s199 + $0xc4] sm:$0xff]
      %v2311 = vld [vmem:[%s199 + $0xcc] sm:$0xff]
      %v2312 = vld [vmem:[%s199 + $0xd4] sm:$0xff]
      %v2313 = vld [vmem:[%s199 + $0xdc] sm:$0xff]
      %v2314 = vld [vmem:[%s199 + $0xe4] sm:$0xff]
      %v2315 = vld [vmem:[%s199 + $0xec] sm:$0xff]
      %v2316 = vld [vmem:[%s199 + $0xf4] sm:$0xff]
      %v2317 = vld [vmem:[%s199 + $0xfc] sm:$0xff]
      %v2318 = vld [vmem:[%s199 + $0x104] sm:$0xff]
      %v2319 = vld [vmem:[%s199 + $0x10c] sm:$0xff]
      %v2320 = vld [vmem:[%s199 + $0x114] sm:$0xff]
      %v2321 = vld [vmem:[%s199 + $0x11c] sm:$0xff]
      %v2322 = vld [vmem:[%s199 + $0x124] sm:$0xff]
      %v2323 = vld [vmem:[%s199 + $0x12c] sm:$0xff]
      %s2324 = scalar_lea.vmem %s1, 20
      %v2325 = vld [vmem:[%s2324] sm:$0xf]
      %v2327 = vsel %vm284, %v2288, 0
      %v2330 = vsel %vm284, %v2289, 0
      %v2333 = vsel %vm284, %v2290, 0
      %v2336 = vsel %vm284, %v2291, 0
      %v2339 = vsel %vm284, %v2292, 0
      %v2342 = vsel %vm284, %v2293, 0
      %v2345 = vsel %vm284, %v2294, 0
      %v2348 = vsel %vm284, %v2295, 0
      %v2351 = vsel %vm284, %v2296, 0
      %v2354 = vsel %vm284, %v2297, 0
      %v2357 = vsel %vm284, %v2298, 0
      %v2360 = vsel %vm284, %v2299, 0
      %v2363 = vsel %vm284, %v2300, 0
      %v2366 = vsel %vm284, %v2301, 0
      %v2369 = vsel %vm284, %v2302, 0
      %v2372 = vsel %vm284, %v2303, 0
      %v2375 = vsel %vm284, %v2304, 0
      %v2378 = vsel %vm284, %v2305, 0
      %v2381 = vsel %vm284, %v2306, 0
      %v2384 = vsel %vm284, %v2307, 0
      %v2387 = vsel %vm284, %v2308, 0
      %v2390 = vsel %vm284, %v2309, 0
      %v2393 = vsel %vm284, %v2310, 0
      %v2396 = vsel %vm284, %v2311, 0
      %v2399 = vsel %vm284, %v2312, 0
      %v2402 = vsel %vm284, %v2313, 0
      %v2405 = vsel %vm284, %v2314, 0
      %v2408 = vsel %vm284, %v2315, 0
      %v2411 = vsel %vm284, %v2316, 0
      %v2414 = vsel %vm284, %v2317, 0
      %v2417 = vsel %vm284, %v2318, 0
      %v2420 = vsel %vm284, %v2319, 0
      %v2423 = vsel %vm284, %v2320, 0
      %v2426 = vsel %vm284, %v2321, 0
      %v2429 = vsel %vm284, %v2322, 0
      %v2432 = vsel %vm284, %v2323, 0
      %v2435 = vsel %vm393, %v2325, 0
      %2437 = vmatprep.subr.mxu0 0.0
      %2438 = vmatpush1.msra.mxu0 %v2435
      %2439 = vmatprep.subr.mxu0 0.0
      %2440 = vmatpush1.msra.mxu0 0.0
      %2441 = vmatprep.subr.mxu0 0.0
      %2442 = vmatpush1.msra.mxu0 0.0
      %2443 = vmatprep.subr.mxu0 0.0
      %2444 = vmatpush1.msra.mxu0 0.0
      %2445 = vmatprep.subr.mxu0 0.0
      %2446 = vmatpush1.msra.mxu0 0.0
      %2447 = vmatprep.subr.mxu0 0.0
      %2448 = vmatpush1.msra.mxu0 0.0
      %2449 = vmatprep.subr.mxu0 0.0
      %2450 = vmatpush1.msra.mxu0 0.0
      %2451 = vmatprep.subr.mxu0 0.0
      %2452 = vmatpush1.msra.mxu0 0.0
      %2453 = vmatprep.subr.mxu0 0.0
      %2454 = vmatpush1.msra.mxu0 0.0
      %2455 = vmatprep.subr.mxu0 0.0
      %2456 = vmatpush1.msra.mxu0 0.0
      %2457 = vmatprep.subr.mxu0 0.0
      %2458 = vmatpush1.msra.mxu0 0.0
      %2459 = vmatprep.subr.mxu0 0.0
      %2460 = vmatpush1.msra.mxu0 0.0
      %2461 = vmatprep.subr.mxu0 0.0
      %2462 = vmatpush1.msra.mxu0 0.0
      %2463 = vmatprep.subr.mxu0 0.0
      %2464 = vmatpush1.msra.mxu0 0.0
      %2465 = vmatprep.subr.mxu0 0.0
      %2466 = vmatpush1.msra.mxu0 0.0
      %2467 = vmatprep.subr.mxu0 0.0
      %2468 = vmatpush1.msra.mxu0 0.0
      %2469 = vmatprep.subr.mxu0 0.0
      %2470 = vmatpush1.msra.mxu0 0.0
      %2471 = vmatprep.subr.mxu0 0.0
      %2472 = vmatpush1.msra.mxu0 0.0
      %2473 = vmatprep.subr.mxu0 0.0
      %2474 = vmatpush1.msra.mxu0 0.0
      %2475 = vmatprep.subr.mxu0 0.0
      %2476 = vmatpush1.msra.mxu0 0.0
      %2477 = vmatprep.subr.mxu0 0.0
      %2478 = vmatpush1.msra.mxu0 0.0
      %2479 = vmatprep.subr.mxu0 0.0
      %2480 = vmatpush1.msra.mxu0 0.0
      %2481 = vmatprep.subr.mxu0 0.0
      %2482 = vmatpush1.msra.mxu0 0.0
      %2483 = vmatprep.subr.mxu0 0.0
      %2484 = vmatpush1.msra.mxu0 0.0
      %2485 = vmatprep.subr.mxu0 0.0
      %2486 = vmatpush1.msra.mxu0 0.0
      %2487 = vmatprep.subr.mxu0 0.0
      %2488 = vmatpush1.msra.mxu0 0.0
      %2489 = vmatprep.subr.mxu0 0.0
      %2490 = vmatpush1.msra.mxu0 0.0
      %2491 = vmatprep.subr.mxu0 0.0
      %2492 = vmatpush1.msra.mxu0 0.0
      %2493 = vmatprep.subr.mxu0 0.0
      %2494 = vmatpush1.msra.mxu0 0.0
      %2495 = vmatprep.subr.mxu0 0.0
      %2496 = vmatpush1.msra.mxu0 0.0
      %2497 = vmatprep.subr.mxu0 0.0
      %2498 = vmatpush1.msra.mxu0 0.0
      %2499 = vmatprep.subr.mxu0 0.0
      %2500 = vmatpush1.msra.mxu0 0.0
      %2501 = vmatprep.mubr.f32.mxu0 0.0
      %2502 = vmatmul.mubr.f32.gmra.mrb[0].mxu0 %v2327
      %v2503 = vpop.f32.mrb[0].mxu0
      %v2504 = vadd.f32 0.0, %v2503
      %v2505 = vpop.f32.mrb[0].mxu0
      %2506 = vmatprep.mubr.f32.mxu0 0.0
      %2507 = vmatmul.mubr.f32.gmra.mrb[0].mxu0 %v2330
      %v2508 = vpop.f32.mrb[0].mxu0
      %v2509 = vadd.f32 0.0, %v2508
      %v2510 = vpop.f32.mrb[0].mxu0
      %2511 = vmatprep.mubr.f32.mxu0 0.0
      %2512 = vmatmul.mubr.f32.gmra.mrb[0].mxu0 %v2333
      %v2513 = vpop.f32.mrb[0].mxu0
      %v2514 = vadd.f32 0.0, %v2513
      %v2515 = vpop.f32.mrb[0].mxu0
      %2516 = vmatprep.mubr.f32.mxu0 0.0
      %2517 = vmatmul.mubr.f32.gmra.mrb[0].mxu0 %v2336
      %v2518 = vpop.f32.mrb[0].mxu0
      %v2519 = vadd.f32 0.0, %v2518
      %v2520 = vpop.f32.mrb[0].mxu0
      %2521 = vmatprep.mubr.f32.mxu0 0.0
      %2522 = vmatmul.mubr.f32.gmra.mrb[0].mxu0 %v2339
      %v2523 = vpop.f32.mrb[0].mxu0
      %v2524 = vadd.f32 0.0, %v2523
      %v2525 = vpop.f32.mrb[0].mxu0
      %2526 = vmatprep.mubr.f32.mxu0 0.0
      %2527 = vmatmul.mubr.f32.gmra.mrb[0].mxu0 %v2342
      %v2528 = vpop.f32.mrb[0].mxu0
      %v2529 = vadd.f32 0.0, %v2528
      %v2530 = vpop.f32.mrb[0].mxu0
      %2531 = vmatprep.mubr.f32.mxu0 0.0
      %2532 = vmatmul.mubr.f32.gmra.mrb[0].mxu0 %v2345
      %v2533 = vpop.f32.mrb[0].mxu0
      %v2534 = vadd.f32 0.0, %v2533
      %v2535 = vpop.f32.mrb[0].mxu0
      %2536 = vmatprep.mubr.f32.mxu0 0.0
      %2537 = vmatmul.mubr.f32.gmra.mrb[0].mxu0 %v2348
      %v2538 = vpop.f32.mrb[0].mxu0
      %v2539 = vadd.f32 0.0, %v2538
      %v2540 = vpop.f32.mrb[0].mxu0
      %2541 = vmatprep.mubr.f32.mxu0 0.0
      %2542 = vmatmul.mubr.f32.gmra.mrb[0].mxu0 %v2351
      %v2543 = vpop.f32.mrb[0].mxu0
      %v2544 = vadd.f32 0.0, %v2543
      %v2545 = vpop.f32.mrb[0].mxu0
      %2546 = vmatprep.mubr.f32.mxu0 0.0
      %2547 = vmatmul.mubr.f32.gmra.mrb[0].mxu0 %v2354
      %v2548 = vpop.f32.mrb[0].mxu0
      %v2549 = vadd.f32 0.0, %v2548
      %v2550 = vpop.f32.mrb[0].mxu0
      %2551 = vmatprep.mubr.f32.mxu0 0.0
      %2552 = vmatmul.mubr.f32.gmra.mrb[0].mxu0 %v2357
      %v2553 = vpop.f32.mrb[0].mxu0
      %v2554 = vadd.f32 0.0, %v2553
      %v2555 = vpop.f32.mrb[0].mxu0
      %2556 = vmatprep.mubr.f32.mxu0 0.0
      %2557 = vmatmul.mubr.f32.gmra.mrb[0].mxu0 %v2360
      %v2558 = vpop.f32.mrb[0].mxu0
      %v2559 = vadd.f32 0.0, %v2558
      %v2560 = vpop.f32.mrb[0].mxu0
      %2561 = vmatprep.mubr.f32.mxu0 0.0
      %2562 = vmatmul.mubr.f32.gmra.mrb[0].mxu0 %v2363
      %v2563 = vpop.f32.mrb[0].mxu0
      %v2564 = vadd.f32 0.0, %v2563
      %v2565 = vpop.f32.mrb[0].mxu0
      %2566 = vmatprep.mubr.f32.mxu0 0.0
      %2567 = vmatmul.mubr.f32.gmra.mrb[0].mxu0 %v2366
      %v2568 = vpop.f32.mrb[0].mxu0
      %v2569 = vadd.f32 0.0, %v2568
      %v2570 = vpop.f32.mrb[0].mxu0
      %2571 = vmatprep.mubr.f32.mxu0 0.0
      %2572 = vmatmul.mubr.f32.gmra.mrb[0].mxu0 %v2369
      %v2573 = vpop.f32.mrb[0].mxu0
      %v2574 = vadd.f32 0.0, %v2573
      %v2575 = vpop.f32.mrb[0].mxu0
      %2576 = vmatprep.mubr.f32.mxu0 0.0
      %2577 = vmatmul.mubr.f32.gmra.mrb[0].mxu0 %v2372
      %v2578 = vpop.f32.mrb[0].mxu0
      %v2579 = vadd.f32 0.0, %v2578
      %v2580 = vpop.f32.mrb[0].mxu0
      %2581 = vmatprep.mubr.f32.mxu0 0.0
      %2582 = vmatmul.mubr.f32.gmra.mrb[0].mxu0 %v2375
      %v2583 = vpop.f32.mrb[0].mxu0
      %v2584 = vadd.f32 0.0, %v2583
      %v2585 = vpop.f32.mrb[0].mxu0
      %2586 = vmatprep.mubr.f32.mxu0 0.0
      %2587 = vmatmul.mubr.f32.gmra.mrb[0].mxu0 %v2378
      %v2588 = vpop.f32.mrb[0].mxu0
      %v2589 = vadd.f32 0.0, %v2588
      %v2590 = vpop.f32.mrb[0].mxu0
      %2591 = vmatprep.mubr.f32.mxu0 0.0
      %2592 = vmatmul.mubr.f32.gmra.mrb[0].mxu0 %v2381
      %v2593 = vpop.f32.mrb[0].mxu0
      %v2594 = vadd.f32 0.0, %v2593
      %v2595 = vpop.f32.mrb[0].mxu0
      %2596 = vmatprep.mubr.f32.mxu0 0.0
      %2597 = vmatmul.mubr.f32.gmra.mrb[0].mxu0 %v2384
      %v2598 = vpop.f32.mrb[0].mxu0
      %v2599 = vadd.f32 0.0, %v2598
      %v2600 = vpop.f32.mrb[0].mxu0
      %2601 = vmatprep.mubr.f32.mxu0 0.0
      %2602 = vmatmul.mubr.f32.gmra.mrb[0].mxu0 %v2387
      %v2603 = vpop.f32.mrb[0].mxu0
      %v2604 = vadd.f32 0.0, %v2603
      %v2605 = vpop.f32.mrb[0].mxu0
      %2606 = vmatprep.mubr.f32.mxu0 0.0
      %2607 = vmatmul.mubr.f32.gmra.mrb[0].mxu0 %v2390
      %v2608 = vpop.f32.mrb[0].mxu0
      %v2609 = vadd.f32 0.0, %v2608
      %v2610 = vpop.f32.mrb[0].mxu0
      %2611 = vmatprep.mubr.f32.mxu0 0.0
      %2612 = vmatmul.mubr.f32.gmra.mrb[0].mxu0 %v2393
      %v2613 = vpop.f32.mrb[0].mxu0
      %v2614 = vadd.f32 0.0, %v2613
      %v2615 = vpop.f32.mrb[0].mxu0
      %2616 = vmatprep.mubr.f32.mxu0 0.0
      %2617 = vmatmul.mubr.f32.gmra.mrb[0].mxu0 %v2396
      %v2618 = vpop.f32.mrb[0].mxu0
      %v2619 = vadd.f32 0.0, %v2618
      %v2620 = vpop.f32.mrb[0].mxu0
      %2621 = vmatprep.mubr.f32.mxu0 0.0
      %2622 = vmatmul.mubr.f32.gmra.mrb[0].mxu0 %v2399
      %v2623 = vpop.f32.mrb[0].mxu0
      %v2624 = vadd.f32 0.0, %v2623
      %v2625 = vpop.f32.mrb[0].mxu0
      %2626 = vmatprep.mubr.f32.mxu0 0.0
      %2627 = vmatmul.mubr.f32.gmra.mrb[0].mxu0 %v2402
      %v2628 = vpop.f32.mrb[0].mxu0
      %v2629 = vadd.f32 0.0, %v2628
      %v2630 = vpop.f32.mrb[0].mxu0
      %2631 = vmatprep.mubr.f32.mxu0 0.0
      %2632 = vmatmul.mubr.f32.gmra.mrb[0].mxu0 %v2405
      %v2633 = vpop.f32.mrb[0].mxu0
      %v2634 = vadd.f32 0.0, %v2633
      %v2635 = vpop.f32.mrb[0].mxu0
      %2636 = vmatprep.mubr.f32.mxu0 0.0
      %2637 = vmatmul.mubr.f32.gmra.mrb[0].mxu0 %v2408
      %v2638 = vpop.f32.mrb[0].mxu0
      %v2639 = vadd.f32 0.0, %v2638
      %v2640 = vpop.f32.mrb[0].mxu0
      %2641 = vmatprep.mubr.f32.mxu0 0.0
      %2642 = vmatmul.mubr.f32.gmra.mrb[0].mxu0 %v2411
      %v2643 = vpop.f32.mrb[0].mxu0
      %v2644 = vadd.f32 0.0, %v2643
      %v2645 = vpop.f32.mrb[0].mxu0
      %2646 = vmatprep.mubr.f32.mxu0 0.0
      %2647 = vmatmul.mubr.f32.gmra.mrb[0].mxu0 %v2414
      %v2648 = vpop.f32.mrb[0].mxu0
      %v2649 = vadd.f32 0.0, %v2648
      %v2650 = vpop.f32.mrb[0].mxu0
      %2651 = vmatprep.mubr.f32.mxu0 0.0
      %2652 = vmatmul.mubr.f32.gmra.mrb[0].mxu0 %v2417
      %v2653 = vpop.f32.mrb[0].mxu0
      %v2654 = vadd.f32 0.0, %v2653
      %v2655 = vpop.f32.mrb[0].mxu0
      %2656 = vmatprep.mubr.f32.mxu0 0.0
      %2657 = vmatmul.mubr.f32.gmra.mrb[0].mxu0 %v2420
      %v2658 = vpop.f32.mrb[0].mxu0
      %v2659 = vadd.f32 0.0, %v2658
      %v2660 = vpop.f32.mrb[0].mxu0
      %2661 = vmatprep.mubr.f32.mxu0 0.0
      %2662 = vmatmul.mubr.f32.gmra.mrb[0].mxu0 %v2423
      %v2663 = vpop.f32.mrb[0].mxu0
      %v2664 = vadd.f32 0.0, %v2663
      %v2665 = vpop.f32.mrb[0].mxu0
      %2666 = vmatprep.mubr.f32.mxu0 0.0
      %2667 = vmatmul.mubr.f32.gmra.mrb[0].mxu0 %v2426
      %v2668 = vpop.f32.mrb[0].mxu0
      %v2669 = vadd.f32 0.0, %v2668
      %v2670 = vpop.f32.mrb[0].mxu0
      %2671 = vmatprep.mubr.f32.mxu0 0.0
      %2672 = vmatmul.mubr.f32.gmra.mrb[0].mxu0 %v2429
      %v2673 = vpop.f32.mrb[0].mxu0
      %v2674 = vadd.f32 0.0, %v2673
      %v2675 = vpop.f32.mrb[0].mxu0
      %2676 = vmatprep.mubr.f32.mxu0 0.0
      %2677 = vmatmul.mubr.f32.gmra.mrb[0].mxu0 %v2432
      %v2678 = vpop.f32.mrb[0].mxu0
      %v2679 = vadd.f32 0.0, %v2678
      %v2680 = vpop.f32.mrb[0].mxu0
      %2681 = vdwg.mxu0
      %v2682 = vadd.f32 %v2252, %v2504
      %v2683 = vadd.f32 %v2253, %v2509
      %v2684 = vadd.f32 %v2254, %v2514
      %v2685 = vadd.f32 %v2255, %v2519
      %v2686 = vadd.f32 %v2256, %v2524
      %v2687 = vadd.f32 %v2257, %v2529
      %v2688 = vadd.f32 %v2258, %v2534
      %v2689 = vadd.f32 %v2259, %v2539
      %v2690 = vadd.f32 %v2260, %v2544
      %v2691 = vadd.f32 %v2261, %v2549
      %v2692 = vadd.f32 %v2262, %v2554
      %v2693 = vadd.f32 %v2263, %v2559
      %v2694 = vadd.f32 %v2264, %v2564
      %v2695 = vadd.f32 %v2265, %v2569
      %v2696 = vadd.f32 %v2266, %v2574
      %v2697 = vadd.f32 %v2267, %v2579
      %v2698 = vadd.f32 %v2268, %v2584
      %v2699 = vadd.f32 %v2269, %v2589
      %v2700 = vadd.f32 %v2270, %v2594
      %v2701 = vadd.f32 %v2271, %v2599
      %v2702 = vadd.f32 %v2272, %v2604
      %v2703 = vadd.f32 %v2273, %v2609
      %v2704 = vadd.f32 %v2274, %v2614
      %v2705 = vadd.f32 %v2275, %v2619
      %v2706 = vadd.f32 %v2276, %v2624
      %v2707 = vadd.f32 %v2277, %v2629
      %v2708 = vadd.f32 %v2278, %v2634
      %v2709 = vadd.f32 %v2279, %v2639
      %v2710 = vadd.f32 %v2280, %v2644
      %v2711 = vadd.f32 %v2281, %v2649
      %v2712 = vadd.f32 %v2282, %v2654
      %v2713 = vadd.f32 %v2283, %v2659
      %v2714 = vadd.f32 %v2284, %v2664
      %v2715 = vadd.f32 %v2285, %v2669
      %v2716 = vadd.f32 %v2286, %v2674
      %v2717 = vadd.f32 %v2287, %v2679
      %v2718 = vld [vmem:[%s199 + $0x24] sm:$0xff]
      %v2719 = vld [vmem:[%s199 + $0x2c] sm:$0xff]
      %v2720 = vld [vmem:[%s199 + $0x34] sm:$0xff]
      %v2721 = vld [vmem:[%s199 + $0x3c] sm:$0xff]
      %v2722 = vld [vmem:[%s199 + $0x44] sm:$0xff]
      %v2723 = vld [vmem:[%s199 + $0x4c] sm:$0xff]
      %v2724 = vld [vmem:[%s199 + $0x54] sm:$0xff]
      %v2725 = vld [vmem:[%s199 + $0x5c] sm:$0xff]
      %v2726 = vld [vmem:[%s199 + $0x64] sm:$0xff]
      %v2727 = vld [vmem:[%s199 + $0x6c] sm:$0xff]
      %v2728 = vld [vmem:[%s199 + $0x74] sm:$0xff]
      %v2729 = vld [vmem:[%s199 + $0x7c] sm:$0xff]
      %v2730 = vld [vmem:[%s199 + $0x84] sm:$0xff]
      %v2731 = vld [vmem:[%s199 + $0x8c] sm:$0xff]
      %v2732 = vld [vmem:[%s199 + $0x94] sm:$0xff]
      %v2733 = vld [vmem:[%s199 + $0x9c] sm:$0xff]
      %v2734 = vld [vmem:[%s199 + $0xa4] sm:$0xff]
      %v2735 = vld [vmem:[%s199 + $0xac] sm:$0xff]
      %v2736 = vld [vmem:[%s199 + $0xb4] sm:$0xff]
      %v2737 = vld [vmem:[%s199 + $0xbc] sm:$0xff]
      %v2738 = vld [vmem:[%s199 + $0xc4] sm:$0xff]
      %v2739 = vld [vmem:[%s199 + $0xcc] sm:$0xff]
      %v2740 = vld [vmem:[%s199 + $0xd4] sm:$0xff]
      %v2741 = vld [vmem:[%s199 + $0xdc] sm:$0xff]
      %v2742 = vld [vmem:[%s199 + $0xe4] sm:$0xff]
      %v2743 = vld [vmem:[%s199 + $0xec] sm:$0xff]
      %v2744 = vld [vmem:[%s199 + $0xf4] sm:$0xff]
      %v2745 = vld [vmem:[%s199 + $0xfc] sm:$0xff]
      %v2746 = vld [vmem:[%s199 + $0x104] sm:$0xff]
      %v2747 = vld [vmem:[%s199 + $0x10c] sm:$0xff]
      %v2748 = vld [vmem:[%s199 + $0x114] sm:$0xff]
      %v2749 = vld [vmem:[%s199 + $0x11c] sm:$0xff]
      %v2750 = vld [vmem:[%s199 + $0x124] sm:$0xff]
      %v2751 = vld [vmem:[%s199 + $0x12c] sm:$0xff]
      %v2752 = vld [vmem:[%s199 + $0x134] sm:$0xff]
      %v2753 = vld [vmem:[%s199 + $0x13c] sm:$0xff]
      %s2754 = scalar_lea.vmem %s1, 24
      %v2755 = vld [vmem:[%s2754] sm:$0xf]
      %v2757 = vsel %vm284, %v2718, 0
      %v2760 = vsel %vm284, %v2719, 0
      %v2763 = vsel %vm284, %v2720, 0
      %v2766 = vsel %vm284, %v2721, 0
      %v2769 = vsel %vm284, %v2722, 0
      %v2772 = vsel %vm284, %v2723, 0
      %v2775 = vsel %vm284, %v2724, 0
      %v2778 = vsel %vm284, %v2725, 0
      %v2781 = vsel %vm284, %v2726, 0
      %v2784 = vsel %vm284, %v2727, 0
      %v2787 = vsel %vm284, %v2728, 0
      %v2790 = vsel %vm284, %v2729, 0
      %v2793 = vsel %vm284, %v2730, 0
      %v2796 = vsel %vm284, %v2731, 0
      %v2799 = vsel %vm284, %v2732, 0
      %v2802 = vsel %vm284, %v2733, 0
      %v2805 = vsel %vm284, %v2734, 0
      %v2808 = vsel %vm284, %v2735, 0
      %v2811 = vsel %vm284, %v2736, 0
      %v2814 = vsel %vm284, %v2737, 0
      %v2817 = vsel %vm284, %v2738, 0
      %v2820 = vsel %vm284, %v2739, 0
      %v2823 = vsel %vm284, %v2740, 0
      %v2826 = vsel %vm284, %v2741, 0
      %v2829 = vsel %vm284, %v2742, 0
      %v2832 = vsel %vm284, %v2743, 0
      %v2835 = vsel %vm284, %v2744, 0
      %v2838 = vsel %vm284, %v2745, 0
      %v2841 = vsel %vm284, %v2746, 0
      %v2844 = vsel %vm284, %v2747, 0
      %v2847 = vsel %vm284, %v2748, 0
      %v2850 = vsel %vm284, %v2749, 0
      %v2853 = vsel %vm284, %v2750, 0
      %v2856 = vsel %vm284, %v2751, 0
      %v2859 = vsel %vm284, %v2752, 0
      %v2862 = vsel %vm284, %v2753, 0
      %v2865 = vsel %vm393, %v2755, 0
      %2867 = vmatprep.subr.mxu0 0.0
      %2868 = vmatpush1.msra.mxu0 %v2865
      %2869 = vmatprep.subr.mxu0 0.0
      %2870 = vmatpush1.msra.mxu0 0.0
      %2871 = vmatprep.subr.mxu0 0.0
      %2872 = vmatpush1.msra.mxu0 0.0
      %2873 = vmatprep.subr.mxu0 0.0
      %2874 = vmatpush1.msra.mxu0 0.0
      %2875 = vmatprep.subr.mxu0 0.0
      %2876 = vmatpush1.msra.mxu0 0.0
      %2877 = vmatprep.subr.mxu0 0.0
      %2878 = vmatpush1.msra.mxu0 0.0
      %2879 = vmatprep.subr.mxu0 0.0
      %2880 = vmatpush1.msra.mxu0 0.0
      %2881 = vmatprep.subr.mxu0 0.0
      %2882 = vmatpush1.msra.mxu0 0.0
      %2883 = vmatprep.subr.mxu0 0.0
      %2884 = vmatpush1.msra.mxu0 0.0
      %2885 = vmatprep.subr.mxu0 0.0
      %2886 = vmatpush1.msra.mxu0 0.0
      %2887 = vmatprep.subr.mxu0 0.0
      %2888 = vmatpush1.msra.mxu0 0.0
      %2889 = vmatprep.subr.mxu0 0.0
      %2890 = vmatpush1.msra.mxu0 0.0
      %2891 = vmatprep.subr.mxu0 0.0
      %2892 = vmatpush1.msra.mxu0 0.0
      %2893 = vmatprep.subr.mxu0 0.0
      %2894 = vmatpush1.msra.mxu0 0.0
      %2895 = vmatprep.subr.mxu0 0.0
      %2896 = vmatpush1.msra.mxu0 0.0
      %2897 = vmatprep.subr.mxu0 0.0
      %2898 = vmatpush1.msra.mxu0 0.0
      %2899 = vmatprep.subr.mxu0 0.0
      %2900 = vmatpush1.msra.mxu0 0.0
      %2901 = vmatprep.subr.mxu0 0.0
      %2902 = vmatpush1.msra.mxu0 0.0
      %2903 = vmatprep.subr.mxu0 0.0
      %2904 = vmatpush1.msra.mxu0 0.0
      %2905 = vmatprep.subr.mxu0 0.0
      %2906 = vmatpush1.msra.mxu0 0.0
      %2907 = vmatprep.subr.mxu0 0.0
      %2908 = vmatpush1.msra.mxu0 0.0
      %2909 = vmatprep.subr.mxu0 0.0
      %2910 = vmatpush1.msra.mxu0 0.0
      %2911 = vmatprep.subr.mxu0 0.0
      %2912 = vmatpush1.msra.mxu0 0.0
      %2913 = vmatprep.subr.mxu0 0.0
      %2914 = vmatpush1.msra.mxu0 0.0
      %2915 = vmatprep.subr.mxu0 0.0
      %2916 = vmatpush1.msra.mxu0 0.0
      %2917 = vmatprep.subr.mxu0 0.0
      %2918 = vmatpush1.msra.mxu0 0.0
      %2919 = vmatprep.subr.mxu0 0.0
      %2920 = vmatpush1.msra.mxu0 0.0
      %2921 = vmatprep.subr.mxu0 0.0
      %2922 = vmatpush1.msra.mxu0 0.0
      %2923 = vmatprep.subr.mxu0 0.0
      %2924 = vmatpush1.msra.mxu0 0.0
      %2925 = vmatprep.subr.mxu0 0.0
      %2926 = vmatpush1.msra.mxu0 0.0
      %2927 = vmatprep.subr.mxu0 0.0
      %2928 = vmatpush1.msra.mxu0 0.0
      %2929 = vmatprep.subr.mxu0 0.0
      %2930 = vmatpush1.msra.mxu0 0.0
      %2931 = vmatprep.mubr.f32.mxu0 0.0
      %2932 = vmatmul.mubr.f32.gmra.mrb[0].mxu0 %v2757
      %v2933 = vpop.f32.mrb[0].mxu0
      %v2934 = vadd.f32 0.0, %v2933
      %v2935 = vpop.f32.mrb[0].mxu0
      %2936 = vmatprep.mubr.f32.mxu0 0.0
      %2937 = vmatmul.mubr.f32.gmra.mrb[0].mxu0 %v2760
      %v2938 = vpop.f32.mrb[0].mxu0
      %v2939 = vadd.f32 0.0, %v2938
      %v2940 = vpop.f32.mrb[0].mxu0
      %2941 = vmatprep.mubr.f32.mxu0 0.0
      %2942 = vmatmul.mubr.f32.gmra.mrb[0].mxu0 %v2763
      %v2943 = vpop.f32.mrb[0].mxu0
      %v2944 = vadd.f32 0.0, %v2943
      %v2945 = vpop.f32.mrb[0].mxu0
      %2946 = vmatprep.mubr.f32.mxu0 0.0
      %2947 = vmatmul.mubr.f32.gmra.mrb[0].mxu0 %v2766
      %v2948 = vpop.f32.mrb[0].mxu0
      %v2949 = vadd.f32 0.0, %v2948
      %v2950 = vpop.f32.mrb[0].mxu0
      %2951 = vmatprep.mubr.f32.mxu0 0.0
      %2952 = vmatmul.mubr.f32.gmra.mrb[0].mxu0 %v2769
      %v2953 = vpop.f32.mrb[0].mxu0
      %v2954 = vadd.f32 0.0, %v2953
      %v2955 = vpop.f32.mrb[0].mxu0
      %2956 = vmatprep.mubr.f32.mxu0 0.0
      %2957 = vmatmul.mubr.f32.gmra.mrb[0].mxu0 %v2772
      %v2958 = vpop.f32.mrb[0].mxu0
      %v2959 = vadd.f32 0.0, %v2958
      %v2960 = vpop.f32.mrb[0].mxu0
      %2961 = vmatprep.mubr.f32.mxu0 0.0
      %2962 = vmatmul.mubr.f32.gmra.mrb[0].mxu0 %v2775
      %v2963 = vpop.f32.mrb[0].mxu0
      %v2964 = vadd.f32 0.0, %v2963
      %v2965 = vpop.f32.mrb[0].mxu0
      %2966 = vmatprep.mubr.f32.mxu0 0.0
      %2967 = vmatmul.mubr.f32.gmra.mrb[0].mxu0 %v2778
      %v2968 = vpop.f32.mrb[0].mxu0
      %v2969 = vadd.f32 0.0, %v2968
      %v2970 = vpop.f32.mrb[0].mxu0
      %2971 = vmatprep.mubr.f32.mxu0 0.0
      %2972 = vmatmul.mubr.f32.gmra.mrb[0].mxu0 %v2781
      %v2973 = vpop.f32.mrb[0].mxu0
      %v2974 = vadd.f32 0.0, %v2973
      %v2975 = vpop.f32.mrb[0].mxu0
      %2976 = vmatprep.mubr.f32.mxu0 0.0
      %2977 = vmatmul.mubr.f32.gmra.mrb[0].mxu0 %v2784
      %v2978 = vpop.f32.mrb[0].mxu0
      %v2979 = vadd.f32 0.0, %v2978
      %v2980 = vpop.f32.mrb[0].mxu0
      %2981 = vmatprep.mubr.f32.mxu0 0.0
      %2982 = vmatmul.mubr.f32.gmra.mrb[0].mxu0 %v2787
      %v2983 = vpop.f32.mrb[0].mxu0
      %v2984 = vadd.f32 0.0, %v2983
      %v2985 = vpop.f32.mrb[0].mxu0
      %2986 = vmatprep.mubr.f32.mxu0 0.0
      %2987 = vmatmul.mubr.f32.gmra.mrb[0].mxu0 %v2790
      %v2988 = vpop.f32.mrb[0].mxu0
      %v2989 = vadd.f32 0.0, %v2988
      %v2990 = vpop.f32.mrb[0].mxu0
      %2991 = vmatprep.mubr.f32.mxu0 0.0
      %2992 = vmatmul.mubr.f32.gmra.mrb[0].mxu0 %v2793
      %v2993 = vpop.f32.mrb[0].mxu0
      %v2994 = vadd.f32 0.0, %v2993
      %v2995 = vpop.f32.mrb[0].mxu0
      %2996 = vmatprep.mubr.f32.mxu0 0.0
      %2997 = vmatmul.mubr.f32.gmra.mrb[0].mxu0 %v2796
      %v2998 = vpop.f32.mrb[0].mxu0
      %v2999 = vadd.f32 0.0, %v2998
      %v3000 = vpop.f32.mrb[0].mxu0
      %3001 = vmatprep.mubr.f32.mxu0 0.0
      %3002 = vmatmul.mubr.f32.gmra.mrb[0].mxu0 %v2799
      %v3003 = vpop.f32.mrb[0].mxu0
      %v3004 = vadd.f32 0.0, %v3003
      %v3005 = vpop.f32.mrb[0].mxu0
      %3006 = vmatprep.mubr.f32.mxu0 0.0
      %3007 = vmatmul.mubr.f32.gmra.mrb[0].mxu0 %v2802
      %v3008 = vpop.f32.mrb[0].mxu0
      %v3009 = vadd.f32 0.0, %v3008
      %v3010 = vpop.f32.mrb[0].mxu0
      %3011 = vmatprep.mubr.f32.mxu0 0.0
      %3012 = vmatmul.mubr.f32.gmra.mrb[0].mxu0 %v2805
      %v3013 = vpop.f32.mrb[0].mxu0
      %v3014 = vadd.f32 0.0, %v3013
      %v3015 = vpop.f32.mrb[0].mxu0
      %3016 = vmatprep.mubr.f32.mxu0 0.0
      %3017 = vmatmul.mubr.f32.gmra.mrb[0].mxu0 %v2808
      %v3018 = vpop.f32.mrb[0].mxu0
      %v3019 = vadd.f32 0.0, %v3018
      %v3020 = vpop.f32.mrb[0].mxu0
      %3021 = vmatprep.mubr.f32.mxu0 0.0
      %3022 = vmatmul.mubr.f32.gmra.mrb[0].mxu0 %v2811
      %v3023 = vpop.f32.mrb[0].mxu0
      %v3024 = vadd.f32 0.0, %v3023
      %v3025 = vpop.f32.mrb[0].mxu0
      %3026 = vmatprep.mubr.f32.mxu0 0.0
      %3027 = vmatmul.mubr.f32.gmra.mrb[0].mxu0 %v2814
      %v3028 = vpop.f32.mrb[0].mxu0
      %v3029 = vadd.f32 0.0, %v3028
      %v3030 = vpop.f32.mrb[0].mxu0
      %3031 = vmatprep.mubr.f32.mxu0 0.0
      %3032 = vmatmul.mubr.f32.gmra.mrb[0].mxu0 %v2817
      %v3033 = vpop.f32.mrb[0].mxu0
      %v3034 = vadd.f32 0.0, %v3033
      %v3035 = vpop.f32.mrb[0].mxu0
      %3036 = vmatprep.mubr.f32.mxu0 0.0
      %3037 = vmatmul.mubr.f32.gmra.mrb[0].mxu0 %v2820
      %v3038 = vpop.f32.mrb[0].mxu0
      %v3039 = vadd.f32 0.0, %v3038
      %v3040 = vpop.f32.mrb[0].mxu0
      %3041 = vmatprep.mubr.f32.mxu0 0.0
      %3042 = vmatmul.mubr.f32.gmra.mrb[0].mxu0 %v2823
      %v3043 = vpop.f32.mrb[0].mxu0
      %v3044 = vadd.f32 0.0, %v3043
      %v3045 = vpop.f32.mrb[0].mxu0
      %3046 = vmatprep.mubr.f32.mxu0 0.0
      %3047 = vmatmul.mubr.f32.gmra.mrb[0].mxu0 %v2826
      %v3048 = vpop.f32.mrb[0].mxu0
      %v3049 = vadd.f32 0.0, %v3048
      %v3050 = vpop.f32.mrb[0].mxu0
      %3051 = vmatprep.mubr.f32.mxu0 0.0
      %3052 = vmatmul.mubr.f32.gmra.mrb[0].mxu0 %v2829
      %v3053 = vpop.f32.mrb[0].mxu0
      %v3054 = vadd.f32 0.0, %v3053
      %v3055 = vpop.f32.mrb[0].mxu0
      %3056 = vmatprep.mubr.f32.mxu0 0.0
      %3057 = vmatmul.mubr.f32.gmra.mrb[0].mxu0 %v2832
      %v3058 = vpop.f32.mrb[0].mxu0
      %v3059 = vadd.f32 0.0, %v3058
      %v3060 = vpop.f32.mrb[0].mxu0
      %3061 = vmatprep.mubr.f32.mxu0 0.0
      %3062 = vmatmul.mubr.f32.gmra.mrb[0].mxu0 %v2835
      %v3063 = vpop.f32.mrb[0].mxu0
      %v3064 = vadd.f32 0.0, %v3063
      %v3065 = vpop.f32.mrb[0].mxu0
      %3066 = vmatprep.mubr.f32.mxu0 0.0
      %3067 = vmatmul.mubr.f32.gmra.mrb[0].mxu0 %v2838
      %v3068 = vpop.f32.mrb[0].mxu0
      %v3069 = vadd.f32 0.0, %v3068
      %v3070 = vpop.f32.mrb[0].mxu0
      %3071 = vmatprep.mubr.f32.mxu0 0.0
      %3072 = vmatmul.mubr.f32.gmra.mrb[0].mxu0 %v2841
      %v3073 = vpop.f32.mrb[0].mxu0
      %v3074 = vadd.f32 0.0, %v3073
      %v3075 = vpop.f32.mrb[0].mxu0
      %3076 = vmatprep.mubr.f32.mxu0 0.0
      %3077 = vmatmul.mubr.f32.gmra.mrb[0].mxu0 %v2844
      %v3078 = vpop.f32.mrb[0].mxu0
      %v3079 = vadd.f32 0.0, %v3078
      %v3080 = vpop.f32.mrb[0].mxu0
      %3081 = vmatprep.mubr.f32.mxu0 0.0
      %3082 = vmatmul.mubr.f32.gmra.mrb[0].mxu0 %v2847
      %v3083 = vpop.f32.mrb[0].mxu0
      %v3084 = vadd.f32 0.0, %v3083
      %v3085 = vpop.f32.mrb[0].mxu0
      %3086 = vmatprep.mubr.f32.mxu0 0.0
      %3087 = vmatmul.mubr.f32.gmra.mrb[0].mxu0 %v2850
      %v3088 = vpop.f32.mrb[0].mxu0
      %v3089 = vadd.f32 0.0, %v3088
      %v3090 = vpop.f32.mrb[0].mxu0
      %3091 = vmatprep.mubr.f32.mxu0 0.0
      %3092 = vmatmul.mubr.f32.gmra.mrb[0].mxu0 %v2853
      %v3093 = vpop.f32.mrb[0].mxu0
      %v3094 = vadd.f32 0.0, %v3093
      %v3095 = vpop.f32.mrb[0].mxu0
      %3096 = vmatprep.mubr.f32.mxu0 0.0
      %3097 = vmatmul.mubr.f32.gmra.mrb[0].mxu0 %v2856
      %v3098 = vpop.f32.mrb[0].mxu0
      %v3099 = vadd.f32 0.0, %v3098
      %v3100 = vpop.f32.mrb[0].mxu0
      %3101 = vmatprep.mubr.f32.mxu0 0.0
      %3102 = vmatmul.mubr.f32.gmra.mrb[0].mxu0 %v2859
      %v3103 = vpop.f32.mrb[0].mxu0
      %v3104 = vadd.f32 0.0, %v3103
      %v3105 = vpop.f32.mrb[0].mxu0
      %3106 = vmatprep.mubr.f32.mxu0 0.0
      %3107 = vmatmul.mubr.f32.gmra.mrb[0].mxu0 %v2862
      %v3108 = vpop.f32.mrb[0].mxu0
      %v3109 = vadd.f32 0.0, %v3108
      %v3110 = vpop.f32.mrb[0].mxu0
      %3111 = vdwg.mxu0
      %v3112 = vadd.f32 %v2682, %v2934
      %v3113 = vadd.f32 %v2683, %v2939
      %v3114 = vadd.f32 %v2684, %v2944
      %v3115 = vadd.f32 %v2685, %v2949
      %v3116 = vadd.f32 %v2686, %v2954
      %v3117 = vadd.f32 %v2687, %v2959
      %v3118 = vadd.f32 %v2688, %v2964
      %v3119 = vadd.f32 %v2689, %v2969
      %v3120 = vadd.f32 %v2690, %v2974
      %v3121 = vadd.f32 %v2691, %v2979
      %v3122 = vadd.f32 %v2692, %v2984
      %v3123 = vadd.f32 %v2693, %v2989
      %v3124 = vadd.f32 %v2694, %v2994
      %v3125 = vadd.f32 %v2695, %v2999
      %v3126 = vadd.f32 %v2696, %v3004
      %v3127 = vadd.f32 %v2697, %v3009
      %v3128 = vadd.f32 %v2698, %v3014
      %v3129 = vadd.f32 %v2699, %v3019
      %v3130 = vadd.f32 %v2700, %v3024
      %v3131 = vadd.f32 %v2701, %v3029
      %v3132 = vadd.f32 %v2702, %v3034
      %v3133 = vadd.f32 %v2703, %v3039
      %v3134 = vadd.f32 %v2704, %v3044
      %v3135 = vadd.f32 %v2705, %v3049
      %v3136 = vadd.f32 %v2706, %v3054
      %v3137 = vadd.f32 %v2707, %v3059
      %v3138 = vadd.f32 %v2708, %v3064
      %v3139 = vadd.f32 %v2709, %v3069
      %v3140 = vadd.f32 %v2710, %v3074
      %v3141 = vadd.f32 %v2711, %v3079
      %v3142 = vadd.f32 %v2712, %v3084
      %v3143 = vadd.f32 %v2713, %v3089
      %v3144 = vadd.f32 %v2714, %v3094
      %v3145 = vadd.f32 %v2715, %v3099
      %v3146 = vadd.f32 %v2716, %v3104
      %v3147 = vadd.f32 %v2717, %v3109
      %v3148 = vld [vmem:[%s199 + $0x25] sm:$0xff]
      %v3149 = vld [vmem:[%s199 + $0x2d] sm:$0xff]
      %v3150 = vld [vmem:[%s199 + $0x35] sm:$0xff]
      %v3151 = vld [vmem:[%s199 + $0x3d] sm:$0xff]
      %v3152 = vld [vmem:[%s199 + $0x45] sm:$0xff]
      %v3153 = vld [vmem:[%s199 + $0x4d] sm:$0xff]
      %v3154 = vld [vmem:[%s199 + $0x55] sm:$0xff]
      %v3155 = vld [vmem:[%s199 + $0x5d] sm:$0xff]
      %v3156 = vld [vmem:[%s199 + $0x65] sm:$0xff]
      %v3157 = vld [vmem:[%s199 + $0x6d] sm:$0xff]
      %v3158 = vld [vmem:[%s199 + $0x75] sm:$0xff]
      %v3159 = vld [vmem:[%s199 + $0x7d] sm:$0xff]
      %v3160 = vld [vmem:[%s199 + $0x85] sm:$0xff]
      %v3161 = vld [vmem:[%s199 + $0x8d] sm:$0xff]
      %v3162 = vld [vmem:[%s199 + $0x95] sm:$0xff]
      %v3163 = vld [vmem:[%s199 + $0x9d] sm:$0xff]
      %v3164 = vld [vmem:[%s199 + $0xa5] sm:$0xff]
      %v3165 = vld [vmem:[%s199 + $0xad] sm:$0xff]
      %v3166 = vld [vmem:[%s199 + $0xb5] sm:$0xff]
      %v3167 = vld [vmem:[%s199 + $0xbd] sm:$0xff]
      %v3168 = vld [vmem:[%s199 + $0xc5] sm:$0xff]
      %v3169 = vld [vmem:[%s199 + $0xcd] sm:$0xff]
      %v3170 = vld [vmem:[%s199 + $0xd5] sm:$0xff]
      %v3171 = vld [vmem:[%s199 + $0xdd] sm:$0xff]
      %v3172 = vld [vmem:[%s199 + $0xe5] sm:$0xff]
      %v3173 = vld [vmem:[%s199 + $0xed] sm:$0xff]
      %v3174 = vld [vmem:[%s199 + $0xf5] sm:$0xff]
      %v3175 = vld [vmem:[%s199 + $0xfd] sm:$0xff]
      %v3176 = vld [vmem:[%s199 + $0x105] sm:$0xff]
      %v3177 = vld [vmem:[%s199 + $0x10d] sm:$0xff]
      %v3178 = vld [vmem:[%s199 + $0x115] sm:$0xff]
      %v3179 = vld [vmem:[%s199 + $0x11d] sm:$0xff]
      %v3180 = vld [vmem:[%s199 + $0x125] sm:$0xff]
      %v3181 = vld [vmem:[%s199 + $0x12d] sm:$0xff]
      %v3182 = vld [vmem:[%s199 + $0x135] sm:$0xff]
      %v3183 = vld [vmem:[%s199 + $0x13d] sm:$0xff]
      %s3184 = scalar_lea.vmem %s1, 28
      %v3185 = vld [vmem:[%s3184] sm:$0xf]
      %v3187 = vsel %vm284, %v3148, 0
      %v3190 = vsel %vm284, %v3149, 0
      %v3193 = vsel %vm284, %v3150, 0
      %v3196 = vsel %vm284, %v3151, 0
      %v3199 = vsel %vm284, %v3152, 0
      %v3202 = vsel %vm284, %v3153, 0
      %v3205 = vsel %vm284, %v3154, 0
      %v3208 = vsel %vm284, %v3155, 0
      %v3211 = vsel %vm284, %v3156, 0
      %v3214 = vsel %vm284, %v3157, 0
      %v3217 = vsel %vm284, %v3158, 0
      %v3220 = vsel %vm284, %v3159, 0
      %v3223 = vsel %vm284, %v3160, 0
      %v3226 = vsel %vm284, %v3161, 0
      %v3229 = vsel %vm284, %v3162, 0
      %v3232 = vsel %vm284, %v3163, 0
      %v3235 = vsel %vm284, %v3164, 0
      %v3238 = vsel %vm284, %v3165, 0
      %v3241 = vsel %vm284, %v3166, 0
      %v3244 = vsel %vm284, %v3167, 0
      %v3247 = vsel %vm284, %v3168, 0
      %v3250 = vsel %vm284, %v3169, 0
      %v3253 = vsel %vm284, %v3170, 0
      %v3256 = vsel %vm284, %v3171, 0
      %v3259 = vsel %vm284, %v3172, 0
      %v3262 = vsel %vm284, %v3173, 0
      %v3265 = vsel %vm284, %v3174, 0
      %v3268 = vsel %vm284, %v3175, 0
      %v3271 = vsel %vm284, %v3176, 0
      %v3274 = vsel %vm284, %v3177, 0
      %v3277 = vsel %vm284, %v3178, 0
      %v3280 = vsel %vm284, %v3179, 0
      %v3283 = vsel %vm284, %v3180, 0
      %v3286 = vsel %vm284, %v3181, 0
      %v3289 = vsel %vm284, %v3182, 0
      %v3292 = vsel %vm284, %v3183, 0
      %v3295 = vsel %vm393, %v3185, 0
      %3297 = vmatprep.subr.mxu0 0.0
      %3298 = vmatpush1.msra.mxu0 %v3295
      %3299 = vmatprep.subr.mxu0 0.0
      %3300 = vmatpush1.msra.mxu0 0.0
      %3301 = vmatprep.subr.mxu0 0.0
      %3302 = vmatpush1.msra.mxu0 0.0
      %3303 = vmatprep.subr.mxu0 0.0
      %3304 = vmatpush1.msra.mxu0 0.0
      %3305 = vmatprep.subr.mxu0 0.0
      %3306 = vmatpush1.msra.mxu0 0.0
      %3307 = vmatprep.subr.mxu0 0.0
      %3308 = vmatpush1.msra.mxu0 0.0
      %3309 = vmatprep.subr.mxu0 0.0
      %3310 = vmatpush1.msra.mxu0 0.0
      %3311 = vmatprep.subr.mxu0 0.0
      %3312 = vmatpush1.msra.mxu0 0.0
      %3313 = vmatprep.subr.mxu0 0.0
      %3314 = vmatpush1.msra.mxu0 0.0
      %3315 = vmatprep.subr.mxu0 0.0
      %3316 = vmatpush1.msra.mxu0 0.0
      %3317 = vmatprep.subr.mxu0 0.0
      %3318 = vmatpush1.msra.mxu0 0.0
      %3319 = vmatprep.subr.mxu0 0.0
      %3320 = vmatpush1.msra.mxu0 0.0
      %3321 = vmatprep.subr.mxu0 0.0
      %3322 = vmatpush1.msra.mxu0 0.0
      %3323 = vmatprep.subr.mxu0 0.0
      %3324 = vmatpush1.msra.mxu0 0.0
      %3325 = vmatprep.subr.mxu0 0.0
      %3326 = vmatpush1.msra.mxu0 0.0
      %3327 = vmatprep.subr.mxu0 0.0
      %3328 = vmatpush1.msra.mxu0 0.0
      %3329 = vmatprep.subr.mxu0 0.0
      %3330 = vmatpush1.msra.mxu0 0.0
      %3331 = vmatprep.subr.mxu0 0.0
      %3332 = vmatpush1.msra.mxu0 0.0
      %3333 = vmatprep.subr.mxu0 0.0
      %3334 = vmatpush1.msra.mxu0 0.0
      %3335 = vmatprep.subr.mxu0 0.0
      %3336 = vmatpush1.msra.mxu0 0.0
      %3337 = vmatprep.subr.mxu0 0.0
      %3338 = vmatpush1.msra.mxu0 0.0
      %3339 = vmatprep.subr.mxu0 0.0
      %3340 = vmatpush1.msra.mxu0 0.0
      %3341 = vmatprep.subr.mxu0 0.0
      %3342 = vmatpush1.msra.mxu0 0.0
      %3343 = vmatprep.subr.mxu0 0.0
      %3344 = vmatpush1.msra.mxu0 0.0
      %3345 = vmatprep.subr.mxu0 0.0
      %3346 = vmatpush1.msra.mxu0 0.0
      %3347 = vmatprep.subr.mxu0 0.0
      %3348 = vmatpush1.msra.mxu0 0.0
      %3349 = vmatprep.subr.mxu0 0.0
      %3350 = vmatpush1.msra.mxu0 0.0
      %3351 = vmatprep.subr.mxu0 0.0
      %3352 = vmatpush1.msra.mxu0 0.0
      %3353 = vmatprep.subr.mxu0 0.0
      %3354 = vmatpush1.msra.mxu0 0.0
      %3355 = vmatprep.subr.mxu0 0.0
      %3356 = vmatpush1.msra.mxu0 0.0
      %3357 = vmatprep.subr.mxu0 0.0
      %3358 = vmatpush1.msra.mxu0 0.0
      %3359 = vmatprep.subr.mxu0 0.0
      %3360 = vmatpush1.msra.mxu0 0.0
      %3361 = vmatprep.mubr.f32.mxu0 0.0
      %3362 = vmatmul.mubr.f32.gmra.mrb[0].mxu0 %v3187
      %v3363 = vpop.f32.mrb[0].mxu0
      %v3364 = vadd.f32 0.0, %v3363
      %v3365 = vpop.f32.mrb[0].mxu0
      %3366 = vmatprep.mubr.f32.mxu0 0.0
      %3367 = vmatmul.mubr.f32.gmra.mrb[0].mxu0 %v3190
      %v3368 = vpop.f32.mrb[0].mxu0
      %v3369 = vadd.f32 0.0, %v3368
      %v3370 = vpop.f32.mrb[0].mxu0
      %3371 = vmatprep.mubr.f32.mxu0 0.0
      %3372 = vmatmul.mubr.f32.gmra.mrb[0].mxu0 %v3193
      %v3373 = vpop.f32.mrb[0].mxu0
      %v3374 = vadd.f32 0.0, %v3373
      %v3375 = vpop.f32.mrb[0].mxu0
      %3376 = vmatprep.mubr.f32.mxu0 0.0
      %3377 = vmatmul.mubr.f32.gmra.mrb[0].mxu0 %v3196
      %v3378 = vpop.f32.mrb[0].mxu0
      %v3379 = vadd.f32 0.0, %v3378
      %v3380 = vpop.f32.mrb[0].mxu0
      %3381 = vmatprep.mubr.f32.mxu0 0.0
      %3382 = vmatmul.mubr.f32.gmra.mrb[0].mxu0 %v3199
      %v3383 = vpop.f32.mrb[0].mxu0
      %v3384 = vadd.f32 0.0, %v3383
      %v3385 = vpop.f32.mrb[0].mxu0
      %3386 = vmatprep.mubr.f32.mxu0 0.0
      %3387 = vmatmul.mubr.f32.gmra.mrb[0].mxu0 %v3202
      %v3388 = vpop.f32.mrb[0].mxu0
      %v3389 = vadd.f32 0.0, %v3388
      %v3390 = vpop.f32.mrb[0].mxu0
      %3391 = vmatprep.mubr.f32.mxu0 0.0
      %3392 = vmatmul.mubr.f32.gmra.mrb[0].mxu0 %v3205
      %v3393 = vpop.f32.mrb[0].mxu0
      %v3394 = vadd.f32 0.0, %v3393
      %v3395 = vpop.f32.mrb[0].mxu0
      %3396 = vmatprep.mubr.f32.mxu0 0.0
      %3397 = vmatmul.mubr.f32.gmra.mrb[0].mxu0 %v3208
      %v3398 = vpop.f32.mrb[0].mxu0
      %v3399 = vadd.f32 0.0, %v3398
      %v3400 = vpop.f32.mrb[0].mxu0
      %3401 = vmatprep.mubr.f32.mxu0 0.0
      %3402 = vmatmul.mubr.f32.gmra.mrb[0].mxu0 %v3211
      %v3403 = vpop.f32.mrb[0].mxu0
      %v3404 = vadd.f32 0.0, %v3403
      %v3405 = vpop.f32.mrb[0].mxu0
      %3406 = vmatprep.mubr.f32.mxu0 0.0
      %3407 = vmatmul.mubr.f32.gmra.mrb[0].mxu0 %v3214
      %v3408 = vpop.f32.mrb[0].mxu0
      %v3409 = vadd.f32 0.0, %v3408
      %v3410 = vpop.f32.mrb[0].mxu0
      %3411 = vmatprep.mubr.f32.mxu0 0.0
      %3412 = vmatmul.mubr.f32.gmra.mrb[0].mxu0 %v3217
      %v3413 = vpop.f32.mrb[0].mxu0
      %v3414 = vadd.f32 0.0, %v3413
      %v3415 = vpop.f32.mrb[0].mxu0
      %3416 = vmatprep.mubr.f32.mxu0 0.0
      %3417 = vmatmul.mubr.f32.gmra.mrb[0].mxu0 %v3220
      %v3418 = vpop.f32.mrb[0].mxu0
      %v3419 = vadd.f32 0.0, %v3418
      %v3420 = vpop.f32.mrb[0].mxu0
      %3421 = vmatprep.mubr.f32.mxu0 0.0
      %3422 = vmatmul.mubr.f32.gmra.mrb[0].mxu0 %v3223
      %v3423 = vpop.f32.mrb[0].mxu0
      %v3424 = vadd.f32 0.0, %v3423
      %v3425 = vpop.f32.mrb[0].mxu0
      %3426 = vmatprep.mubr.f32.mxu0 0.0
      %3427 = vmatmul.mubr.f32.gmra.mrb[0].mxu0 %v3226
      %v3428 = vpop.f32.mrb[0].mxu0
      %v3429 = vadd.f32 0.0, %v3428
      %v3430 = vpop.f32.mrb[0].mxu0
      %3431 = vmatprep.mubr.f32.mxu0 0.0
      %3432 = vmatmul.mubr.f32.gmra.mrb[0].mxu0 %v3229
      %v3433 = vpop.f32.mrb[0].mxu0
      %v3434 = vadd.f32 0.0, %v3433
      %v3435 = vpop.f32.mrb[0].mxu0
      %3436 = vmatprep.mubr.f32.mxu0 0.0
      %3437 = vmatmul.mubr.f32.gmra.mrb[0].mxu0 %v3232
      %v3438 = vpop.f32.mrb[0].mxu0
      %v3439 = vadd.f32 0.0, %v3438
      %v3440 = vpop.f32.mrb[0].mxu0
      %3441 = vmatprep.mubr.f32.mxu0 0.0
      %3442 = vmatmul.mubr.f32.gmra.mrb[0].mxu0 %v3235
      %v3443 = vpop.f32.mrb[0].mxu0
      %v3444 = vadd.f32 0.0, %v3443
      %v3445 = vpop.f32.mrb[0].mxu0
      %3446 = vmatprep.mubr.f32.mxu0 0.0
      %3447 = vmatmul.mubr.f32.gmra.mrb[0].mxu0 %v3238
      %v3448 = vpop.f32.mrb[0].mxu0
      %v3449 = vadd.f32 0.0, %v3448
      %v3450 = vpop.f32.mrb[0].mxu0
      %3451 = vmatprep.mubr.f32.mxu0 0.0
      %3452 = vmatmul.mubr.f32.gmra.mrb[0].mxu0 %v3241
      %v3453 = vpop.f32.mrb[0].mxu0
      %v3454 = vadd.f32 0.0, %v3453
      %v3455 = vpop.f32.mrb[0].mxu0
      %3456 = vmatprep.mubr.f32.mxu0 0.0
      %3457 = vmatmul.mubr.f32.gmra.mrb[0].mxu0 %v3244
      %v3458 = vpop.f32.mrb[0].mxu0
      %v3459 = vadd.f32 0.0, %v3458
      %v3460 = vpop.f32.mrb[0].mxu0
      %3461 = vmatprep.mubr.f32.mxu0 0.0
      %3462 = vmatmul.mubr.f32.gmra.mrb[0].mxu0 %v3247
      %v3463 = vpop.f32.mrb[0].mxu0
      %v3464 = vadd.f32 0.0, %v3463
      %v3465 = vpop.f32.mrb[0].mxu0
      %3466 = vmatprep.mubr.f32.mxu0 0.0
      %3467 = vmatmul.mubr.f32.gmra.mrb[0].mxu0 %v3250
      %v3468 = vpop.f32.mrb[0].mxu0
      %v3469 = vadd.f32 0.0, %v3468
      %v3470 = vpop.f32.mrb[0].mxu0
      %3471 = vmatprep.mubr.f32.mxu0 0.0
      %3472 = vmatmul.mubr.f32.gmra.mrb[0].mxu0 %v3253
      %v3473 = vpop.f32.mrb[0].mxu0
      %v3474 = vadd.f32 0.0, %v3473
      %v3475 = vpop.f32.mrb[0].mxu0
      %3476 = vmatprep.mubr.f32.mxu0 0.0
      %3477 = vmatmul.mubr.f32.gmra.mrb[0].mxu0 %v3256
      %v3478 = vpop.f32.mrb[0].mxu0
      %v3479 = vadd.f32 0.0, %v3478
      %v3480 = vpop.f32.mrb[0].mxu0
      %3481 = vmatprep.mubr.f32.mxu0 0.0
      %3482 = vmatmul.mubr.f32.gmra.mrb[0].mxu0 %v3259
      %v3483 = vpop.f32.mrb[0].mxu0
      %v3484 = vadd.f32 0.0, %v3483
      %v3485 = vpop.f32.mrb[0].mxu0
      %3486 = vmatprep.mubr.f32.mxu0 0.0
      %3487 = vmatmul.mubr.f32.gmra.mrb[0].mxu0 %v3262
      %v3488 = vpop.f32.mrb[0].mxu0
      %v3489 = vadd.f32 0.0, %v3488
      %v3490 = vpop.f32.mrb[0].mxu0
      %3491 = vmatprep.mubr.f32.mxu0 0.0
      %3492 = vmatmul.mubr.f32.gmra.mrb[0].mxu0 %v3265
      %v3493 = vpop.f32.mrb[0].mxu0
      %v3494 = vadd.f32 0.0, %v3493
      %v3495 = vpop.f32.mrb[0].mxu0
      %3496 = vmatprep.mubr.f32.mxu0 0.0
      %3497 = vmatmul.mubr.f32.gmra.mrb[0].mxu0 %v3268
      %v3498 = vpop.f32.mrb[0].mxu0
      %v3499 = vadd.f32 0.0, %v3498
      %v3500 = vpop.f32.mrb[0].mxu0
      %3501 = vmatprep.mubr.f32.mxu0 0.0
      %3502 = vmatmul.mubr.f32.gmra.mrb[0].mxu0 %v3271
      %v3503 = vpop.f32.mrb[0].mxu0
      %v3504 = vadd.f32 0.0, %v3503
      %v3505 = vpop.f32.mrb[0].mxu0
      %3506 = vmatprep.mubr.f32.mxu0 0.0
      %3507 = vmatmul.mubr.f32.gmra.mrb[0].mxu0 %v3274
      %v3508 = vpop.f32.mrb[0].mxu0
      %v3509 = vadd.f32 0.0, %v3508
      %v3510 = vpop.f32.mrb[0].mxu0
      %3511 = vmatprep.mubr.f32.mxu0 0.0
      %3512 = vmatmul.mubr.f32.gmra.mrb[0].mxu0 %v3277
      %v3513 = vpop.f32.mrb[0].mxu0
      %v3514 = vadd.f32 0.0, %v3513
      %v3515 = vpop.f32.mrb[0].mxu0
      %3516 = vmatprep.mubr.f32.mxu0 0.0
      %3517 = vmatmul.mubr.f32.gmra.mrb[0].mxu0 %v3280
      %v3518 = vpop.f32.mrb[0].mxu0
      %v3519 = vadd.f32 0.0, %v3518
      %v3520 = vpop.f32.mrb[0].mxu0
      %3521 = vmatprep.mubr.f32.mxu0 0.0
      %3522 = vmatmul.mubr.f32.gmra.mrb[0].mxu0 %v3283
      %v3523 = vpop.f32.mrb[0].mxu0
      %v3524 = vadd.f32 0.0, %v3523
      %v3525 = vpop.f32.mrb[0].mxu0
      %3526 = vmatprep.mubr.f32.mxu0 0.0
      %3527 = vmatmul.mubr.f32.gmra.mrb[0].mxu0 %v3286
      %v3528 = vpop.f32.mrb[0].mxu0
      %v3529 = vadd.f32 0.0, %v3528
      %v3530 = vpop.f32.mrb[0].mxu0
      %3531 = vmatprep.mubr.f32.mxu0 0.0
      %3532 = vmatmul.mubr.f32.gmra.mrb[0].mxu0 %v3289
      %v3533 = vpop.f32.mrb[0].mxu0
      %v3534 = vadd.f32 0.0, %v3533
      %v3535 = vpop.f32.mrb[0].mxu0
      %3536 = vmatprep.mubr.f32.mxu0 0.0
      %3537 = vmatmul.mubr.f32.gmra.mrb[0].mxu0 %v3292
      %v3538 = vpop.f32.mrb[0].mxu0
      %v3539 = vadd.f32 0.0, %v3538
      %v3540 = vpop.f32.mrb[0].mxu0
      %3541 = vdwg.mxu0
      %v3542 = vadd.f32 %v3112, %v3364
      %v3543 = vadd.f32 %v3113, %v3369
      %v3544 = vadd.f32 %v3114, %v3374
      %v3545 = vadd.f32 %v3115, %v3379
      %v3546 = vadd.f32 %v3116, %v3384
      %v3547 = vadd.f32 %v3117, %v3389
      %v3548 = vadd.f32 %v3118, %v3394
      %v3549 = vadd.f32 %v3119, %v3399
      %v3550 = vadd.f32 %v3120, %v3404
      %v3551 = vadd.f32 %v3121, %v3409
      %v3552 = vadd.f32 %v3122, %v3414
      %v3553 = vadd.f32 %v3123, %v3419
      %v3554 = vadd.f32 %v3124, %v3424
      %v3555 = vadd.f32 %v3125, %v3429
      %v3556 = vadd.f32 %v3126, %v3434
      %v3557 = vadd.f32 %v3127, %v3439
      %v3558 = vadd.f32 %v3128, %v3444
      %v3559 = vadd.f32 %v3129, %v3449
      %v3560 = vadd.f32 %v3130, %v3454
      %v3561 = vadd.f32 %v3131, %v3459
      %v3562 = vadd.f32 %v3132, %v3464
      %v3563 = vadd.f32 %v3133, %v3469
      %v3564 = vadd.f32 %v3134, %v3474
      %v3565 = vadd.f32 %v3135, %v3479
      %v3566 = vadd.f32 %v3136, %v3484
      %v3567 = vadd.f32 %v3137, %v3489
      %v3568 = vadd.f32 %v3138, %v3494
      %v3569 = vadd.f32 %v3139, %v3499
      %v3570 = vadd.f32 %v3140, %v3504
      %v3571 = vadd.f32 %v3141, %v3509
      %v3572 = vadd.f32 %v3142, %v3514
      %v3573 = vadd.f32 %v3143, %v3519
      %v3574 = vadd.f32 %v3144, %v3524
      %v3575 = vadd.f32 %v3145, %v3529
      %v3576 = vadd.f32 %v3146, %v3534
      %v3577 = vadd.f32 %v3147, %v3539
      %v3578 = vld [vmem:[%s199 + $0x26] sm:$0xff]
      %v3579 = vld [vmem:[%s199 + $0x2e] sm:$0xff]
      %v3580 = vld [vmem:[%s199 + $0x36] sm:$0xff]
      %v3581 = vld [vmem:[%s199 + $0x3e] sm:$0xff]
      %v3582 = vld [vmem:[%s199 + $0x46] sm:$0xff]
      %v3583 = vld [vmem:[%s199 + $0x4e] sm:$0xff]
      %v3584 = vld [vmem:[%s199 + $0x56] sm:$0xff]
      %v3585 = vld [vmem:[%s199 + $0x5e] sm:$0xff]
      %v3586 = vld [vmem:[%s199 + $0x66] sm:$0xff]
      %v3587 = vld [vmem:[%s199 + $0x6e] sm:$0xff]
      %v3588 = vld [vmem:[%s199 + $0x76] sm:$0xff]
      %v3589 = vld [vmem:[%s199 + $0x7e] sm:$0xff]
      %v3590 = vld [vmem:[%s199 + $0x86] sm:$0xff]
      %v3591 = vld [vmem:[%s199 + $0x8e] sm:$0xff]
      %v3592 = vld [vmem:[%s199 + $0x96] sm:$0xff]
      %v3593 = vld [vmem:[%s199 + $0x9e] sm:$0xff]
      %v3594 = vld [vmem:[%s199 + $0xa6] sm:$0xff]
      %v3595 = vld [vmem:[%s199 + $0xae] sm:$0xff]
      %v3596 = vld [vmem:[%s199 + $0xb6] sm:$0xff]
      %v3597 = vld [vmem:[%s199 + $0xbe] sm:$0xff]
      %v3598 = vld [vmem:[%s199 + $0xc6] sm:$0xff]
      %v3599 = vld [vmem:[%s199 + $0xce] sm:$0xff]
      %v3600 = vld [vmem:[%s199 + $0xd6] sm:$0xff]
      %v3601 = vld [vmem:[%s199 + $0xde] sm:$0xff]
      %v3602 = vld [vmem:[%s199 + $0xe6] sm:$0xff]
      %v3603 = vld [vmem:[%s199 + $0xee] sm:$0xff]
      %v3604 = vld [vmem:[%s199 + $0xf6] sm:$0xff]
      %v3605 = vld [vmem:[%s199 + $0xfe] sm:$0xff]
      %v3606 = vld [vmem:[%s199 + $0x106] sm:$0xff]
      %v3607 = vld [vmem:[%s199 + $0x10e] sm:$0xff]
      %v3608 = vld [vmem:[%s199 + $0x116] sm:$0xff]
      %v3609 = vld [vmem:[%s199 + $0x11e] sm:$0xff]
      %v3610 = vld [vmem:[%s199 + $0x126] sm:$0xff]
      %v3611 = vld [vmem:[%s199 + $0x12e] sm:$0xff]
      %v3612 = vld [vmem:[%s199 + $0x136] sm:$0xff]
      %v3613 = vld [vmem:[%s199 + $0x13e] sm:$0xff]
      %s3614 = scalar_lea.vmem %s1, 32
      %v3615 = vld [vmem:[%s3614] sm:$0xf]
      %v3617 = vsel %vm284, %v3578, 0
      %v3620 = vsel %vm284, %v3579, 0
      %v3623 = vsel %vm284, %v3580, 0
      %v3626 = vsel %vm284, %v3581, 0
      %v3629 = vsel %vm284, %v3582, 0
      %v3632 = vsel %vm284, %v3583, 0
      %v3635 = vsel %vm284, %v3584, 0
      %v3638 = vsel %vm284, %v3585, 0
      %v3641 = vsel %vm284, %v3586, 0
      %v3644 = vsel %vm284, %v3587, 0
      %v3647 = vsel %vm284, %v3588, 0
      %v3650 = vsel %vm284, %v3589, 0
      %v3653 = vsel %vm284, %v3590, 0
      %v3656 = vsel %vm284, %v3591, 0
      %v3659 = vsel %vm284, %v3592, 0
      %v3662 = vsel %vm284, %v3593, 0
      %v3665 = vsel %vm284, %v3594, 0
      %v3668 = vsel %vm284, %v3595, 0
      %v3671 = vsel %vm284, %v3596, 0
      %v3674 = vsel %vm284, %v3597, 0
      %v3677 = vsel %vm284, %v3598, 0
      %v3680 = vsel %vm284, %v3599, 0
      %v3683 = vsel %vm284, %v3600, 0
      %v3686 = vsel %vm284, %v3601, 0
      %v3689 = vsel %vm284, %v3602, 0
      %v3692 = vsel %vm284, %v3603, 0
      %v3695 = vsel %vm284, %v3604, 0
      %v3698 = vsel %vm284, %v3605, 0
      %v3701 = vsel %vm284, %v3606, 0
      %v3704 = vsel %vm284, %v3607, 0
      %v3707 = vsel %vm284, %v3608, 0
      %v3710 = vsel %vm284, %v3609, 0
      %v3713 = vsel %vm284, %v3610, 0
      %v3716 = vsel %vm284, %v3611, 0
      %v3719 = vsel %vm284, %v3612, 0
      %v3722 = vsel %vm284, %v3613, 0
      %v3725 = vsel %vm393, %v3615, 0
      %3727 = vmatprep.subr.mxu0 0.0
      %3728 = vmatpush1.msra.mxu0 %v3725
      %3729 = vmatprep.subr.mxu0 0.0
      %3730 = vmatpush1.msra.mxu0 0.0
      %3731 = vmatprep.subr.mxu0 0.0
      %3732 = vmatpush1.msra.mxu0 0.0
      %3733 = vmatprep.subr.mxu0 0.0
      %3734 = vmatpush1.msra.mxu0 0.0
      %3735 = vmatprep.subr.mxu0 0.0
      %3736 = vmatpush1.msra.mxu0 0.0
      %3737 = vmatprep.subr.mxu0 0.0
      %3738 = vmatpush1.msra.mxu0 0.0
      %3739 = vmatprep.subr.mxu0 0.0
      %3740 = vmatpush1.msra.mxu0 0.0
      %3741 = vmatprep.subr.mxu0 0.0
      %3742 = vmatpush1.msra.mxu0 0.0
      %3743 = vmatprep.subr.mxu0 0.0
      %3744 = vmatpush1.msra.mxu0 0.0
      %3745 = vmatprep.subr.mxu0 0.0
      %3746 = vmatpush1.msra.mxu0 0.0
      %3747 = vmatprep.subr.mxu0 0.0
      %3748 = vmatpush1.msra.mxu0 0.0
      %3749 = vmatprep.subr.mxu0 0.0
      %3750 = vmatpush1.msra.mxu0 0.0
      %3751 = vmatprep.subr.mxu0 0.0
      %3752 = vmatpush1.msra.mxu0 0.0
      %3753 = vmatprep.subr.mxu0 0.0
      %3754 = vmatpush1.msra.mxu0 0.0
      %3755 = vmatprep.subr.mxu0 0.0
      %3756 = vmatpush1.msra.mxu0 0.0
      %3757 = vmatprep.subr.mxu0 0.0
      %3758 = vmatpush1.msra.mxu0 0.0
      %3759 = vmatprep.subr.mxu0 0.0
      %3760 = vmatpush1.msra.mxu0 0.0
      %3761 = vmatprep.subr.mxu0 0.0
      %3762 = vmatpush1.msra.mxu0 0.0
      %3763 = vmatprep.subr.mxu0 0.0
      %3764 = vmatpush1.msra.mxu0 0.0
      %3765 = vmatprep.subr.mxu0 0.0
      %3766 = vmatpush1.msra.mxu0 0.0
      %3767 = vmatprep.subr.mxu0 0.0
      %3768 = vmatpush1.msra.mxu0 0.0
      %3769 = vmatprep.subr.mxu0 0.0
      %3770 = vmatpush1.msra.mxu0 0.0
      %3771 = vmatprep.subr.mxu0 0.0
      %3772 = vmatpush1.msra.mxu0 0.0
      %3773 = vmatprep.subr.mxu0 0.0
      %3774 = vmatpush1.msra.mxu0 0.0
      %3775 = vmatprep.subr.mxu0 0.0
      %3776 = vmatpush1.msra.mxu0 0.0
      %3777 = vmatprep.subr.mxu0 0.0
      %3778 = vmatpush1.msra.mxu0 0.0
      %3779 = vmatprep.subr.mxu0 0.0
      %3780 = vmatpush1.msra.mxu0 0.0
      %3781 = vmatprep.subr.mxu0 0.0
      %3782 = vmatpush1.msra.mxu0 0.0
      %3783 = vmatprep.subr.mxu0 0.0
      %3784 = vmatpush1.msra.mxu0 0.0
      %3785 = vmatprep.subr.mxu0 0.0
      %3786 = vmatpush1.msra.mxu0 0.0
      %3787 = vmatprep.subr.mxu0 0.0
      %3788 = vmatpush1.msra.mxu0 0.0
      %3789 = vmatprep.subr.mxu0 0.0
      %3790 = vmatpush1.msra.mxu0 0.0
      %3791 = vmatprep.mubr.f32.mxu0 0.0
      %3792 = vmatmul.mubr.f32.gmra.mrb[0].mxu0 %v3617
      %v3793 = vpop.f32.mrb[0].mxu0
      %v3794 = vadd.f32 0.0, %v3793
      %v3795 = vpop.f32.mrb[0].mxu0
      %3796 = vmatprep.mubr.f32.mxu0 0.0
      %3797 = vmatmul.mubr.f32.gmra.mrb[0].mxu0 %v3620
      %v3798 = vpop.f32.mrb[0].mxu0
      %v3799 = vadd.f32 0.0, %v3798
      %v3800 = vpop.f32.mrb[0].mxu0
      %3801 = vmatprep.mubr.f32.mxu0 0.0
      %3802 = vmatmul.mubr.f32.gmra.mrb[0].mxu0 %v3623
      %v3803 = vpop.f32.mrb[0].mxu0
      %v3804 = vadd.f32 0.0, %v3803
      %v3805 = vpop.f32.mrb[0].mxu0
      %3806 = vmatprep.mubr.f32.mxu0 0.0
      %3807 = vmatmul.mubr.f32.gmra.mrb[0].mxu0 %v3626
      %v3808 = vpop.f32.mrb[0].mxu0
      %v3809 = vadd.f32 0.0, %v3808
      %v3810 = vpop.f32.mrb[0].mxu0
      %3811 = vmatprep.mubr.f32.mxu0 0.0
      %3812 = vmatmul.mubr.f32.gmra.mrb[0].mxu0 %v3629
      %v3813 = vpop.f32.mrb[0].mxu0
      %v3814 = vadd.f32 0.0, %v3813
      %v3815 = vpop.f32.mrb[0].mxu0
      %3816 = vmatprep.mubr.f32.mxu0 0.0
      %3817 = vmatmul.mubr.f32.gmra.mrb[0].mxu0 %v3632
      %v3818 = vpop.f32.mrb[0].mxu0
      %v3819 = vadd.f32 0.0, %v3818
      %v3820 = vpop.f32.mrb[0].mxu0
      %3821 = vmatprep.mubr.f32.mxu0 0.0
      %3822 = vmatmul.mubr.f32.gmra.mrb[0].mxu0 %v3635
      %v3823 = vpop.f32.mrb[0].mxu0
      %v3824 = vadd.f32 0.0, %v3823
      %v3825 = vpop.f32.mrb[0].mxu0
      %3826 = vmatprep.mubr.f32.mxu0 0.0
      %3827 = vmatmul.mubr.f32.gmra.mrb[0].mxu0 %v3638
      %v3828 = vpop.f32.mrb[0].mxu0
      %v3829 = vadd.f32 0.0, %v3828
      %v3830 = vpop.f32.mrb[0].mxu0
      %3831 = vmatprep.mubr.f32.mxu0 0.0
      %3832 = vmatmul.mubr.f32.gmra.mrb[0].mxu0 %v3641
      %v3833 = vpop.f32.mrb[0].mxu0
      %v3834 = vadd.f32 0.0, %v3833
      %v3835 = vpop.f32.mrb[0].mxu0
      %3836 = vmatprep.mubr.f32.mxu0 0.0
      %3837 = vmatmul.mubr.f32.gmra.mrb[0].mxu0 %v3644
      %v3838 = vpop.f32.mrb[0].mxu0
      %v3839 = vadd.f32 0.0, %v3838
      %v3840 = vpop.f32.mrb[0].mxu0
      %3841 = vmatprep.mubr.f32.mxu0 0.0
      %3842 = vmatmul.mubr.f32.gmra.mrb[0].mxu0 %v3647
      %v3843 = vpop.f32.mrb[0].mxu0
      %v3844 = vadd.f32 0.0, %v3843
      %v3845 = vpop.f32.mrb[0].mxu0
      %3846 = vmatprep.mubr.f32.mxu0 0.0
      %3847 = vmatmul.mubr.f32.gmra.mrb[0].mxu0 %v3650
      %v3848 = vpop.f32.mrb[0].mxu0
      %v3849 = vadd.f32 0.0, %v3848
      %v3850 = vpop.f32.mrb[0].mxu0
      %3851 = vmatprep.mubr.f32.mxu0 0.0
      %3852 = vmatmul.mubr.f32.gmra.mrb[0].mxu0 %v3653
      %v3853 = vpop.f32.mrb[0].mxu0
      %v3854 = vadd.f32 0.0, %v3853
      %v3855 = vpop.f32.mrb[0].mxu0
      %3856 = vmatprep.mubr.f32.mxu0 0.0
      %3857 = vmatmul.mubr.f32.gmra.mrb[0].mxu0 %v3656
      %v3858 = vpop.f32.mrb[0].mxu0
      %v3859 = vadd.f32 0.0, %v3858
      %v3860 = vpop.f32.mrb[0].mxu0
      %3861 = vmatprep.mubr.f32.mxu0 0.0
      %3862 = vmatmul.mubr.f32.gmra.mrb[0].mxu0 %v3659
      %v3863 = vpop.f32.mrb[0].mxu0
      %v3864 = vadd.f32 0.0, %v3863
      %v3865 = vpop.f32.mrb[0].mxu0
      %3866 = vmatprep.mubr.f32.mxu0 0.0
      %3867 = vmatmul.mubr.f32.gmra.mrb[0].mxu0 %v3662
      %v3868 = vpop.f32.mrb[0].mxu0
      %v3869 = vadd.f32 0.0, %v3868
      %v3870 = vpop.f32.mrb[0].mxu0
      %3871 = vmatprep.mubr.f32.mxu0 0.0
      %3872 = vmatmul.mubr.f32.gmra.mrb[0].mxu0 %v3665
      %v3873 = vpop.f32.mrb[0].mxu0
      %v3874 = vadd.f32 0.0, %v3873
      %v3875 = vpop.f32.mrb[0].mxu0
      %3876 = vmatprep.mubr.f32.mxu0 0.0
      %3877 = vmatmul.mubr.f32.gmra.mrb[0].mxu0 %v3668
      %v3878 = vpop.f32.mrb[0].mxu0
      %v3879 = vadd.f32 0.0, %v3878
      %v3880 = vpop.f32.mrb[0].mxu0
      %3881 = vmatprep.mubr.f32.mxu0 0.0
      %3882 = vmatmul.mubr.f32.gmra.mrb[0].mxu0 %v3671
      %v3883 = vpop.f32.mrb[0].mxu0
      %v3884 = vadd.f32 0.0, %v3883
      %v3885 = vpop.f32.mrb[0].mxu0
      %3886 = vmatprep.mubr.f32.mxu0 0.0
      %3887 = vmatmul.mubr.f32.gmra.mrb[0].mxu0 %v3674
      %v3888 = vpop.f32.mrb[0].mxu0
      %v3889 = vadd.f32 0.0, %v3888
      %v3890 = vpop.f32.mrb[0].mxu0
      %3891 = vmatprep.mubr.f32.mxu0 0.0
      %3892 = vmatmul.mubr.f32.gmra.mrb[0].mxu0 %v3677
      %v3893 = vpop.f32.mrb[0].mxu0
      %v3894 = vadd.f32 0.0, %v3893
      %v3895 = vpop.f32.mrb[0].mxu0
      %3896 = vmatprep.mubr.f32.mxu0 0.0
      %3897 = vmatmul.mubr.f32.gmra.mrb[0].mxu0 %v3680
      %v3898 = vpop.f32.mrb[0].mxu0
      %v3899 = vadd.f32 0.0, %v3898
      %v3900 = vpop.f32.mrb[0].mxu0
      %3901 = vmatprep.mubr.f32.mxu0 0.0
      %3902 = vmatmul.mubr.f32.gmra.mrb[0].mxu0 %v3683
      %v3903 = vpop.f32.mrb[0].mxu0
      %v3904 = vadd.f32 0.0, %v3903
      %v3905 = vpop.f32.mrb[0].mxu0
      %3906 = vmatprep.mubr.f32.mxu0 0.0
      %3907 = vmatmul.mubr.f32.gmra.mrb[0].mxu0 %v3686
      %v3908 = vpop.f32.mrb[0].mxu0
      %v3909 = vadd.f32 0.0, %v3908
      %v3910 = vpop.f32.mrb[0].mxu0
      %3911 = vmatprep.mubr.f32.mxu0 0.0
      %3912 = vmatmul.mubr.f32.gmra.mrb[0].mxu0 %v3689
      %v3913 = vpop.f32.mrb[0].mxu0
      %v3914 = vadd.f32 0.0, %v3913
      %v3915 = vpop.f32.mrb[0].mxu0
      %3916 = vmatprep.mubr.f32.mxu0 0.0
      %3917 = vmatmul.mubr.f32.gmra.mrb[0].mxu0 %v3692
      %v3918 = vpop.f32.mrb[0].mxu0
      %v3919 = vadd.f32 0.0, %v3918
      %v3920 = vpop.f32.mrb[0].mxu0
      %3921 = vmatprep.mubr.f32.mxu0 0.0
      %3922 = vmatmul.mubr.f32.gmra.mrb[0].mxu0 %v3695
      %v3923 = vpop.f32.mrb[0].mxu0
      %v3924 = vadd.f32 0.0, %v3923
      %v3925 = vpop.f32.mrb[0].mxu0
      %3926 = vmatprep.mubr.f32.mxu0 0.0
      %3927 = vmatmul.mubr.f32.gmra.mrb[0].mxu0 %v3698
      %v3928 = vpop.f32.mrb[0].mxu0
      %v3929 = vadd.f32 0.0, %v3928
      %v3930 = vpop.f32.mrb[0].mxu0
      %3931 = vmatprep.mubr.f32.mxu0 0.0
      %3932 = vmatmul.mubr.f32.gmra.mrb[0].mxu0 %v3701
      %v3933 = vpop.f32.mrb[0].mxu0
      %v3934 = vadd.f32 0.0, %v3933
      %v3935 = vpop.f32.mrb[0].mxu0
      %3936 = vmatprep.mubr.f32.mxu0 0.0
      %3937 = vmatmul.mubr.f32.gmra.mrb[0].mxu0 %v3704
      %v3938 = vpop.f32.mrb[0].mxu0
      %v3939 = vadd.f32 0.0, %v3938
      %v3940 = vpop.f32.mrb[0].mxu0
      %3941 = vmatprep.mubr.f32.mxu0 0.0
      %3942 = vmatmul.mubr.f32.gmra.mrb[0].mxu0 %v3707
      %v3943 = vpop.f32.mrb[0].mxu0
      %v3944 = vadd.f32 0.0, %v3943
      %v3945 = vpop.f32.mrb[0].mxu0
      %3946 = vmatprep.mubr.f32.mxu0 0.0
      %3947 = vmatmul.mubr.f32.gmra.mrb[0].mxu0 %v3710
      %v3948 = vpop.f32.mrb[0].mxu0
      %v3949 = vadd.f32 0.0, %v3948
      %v3950 = vpop.f32.mrb[0].mxu0
      %3951 = vmatprep.mubr.f32.mxu0 0.0
      %3952 = vmatmul.mubr.f32.gmra.mrb[0].mxu0 %v3713
      %v3953 = vpop.f32.mrb[0].mxu0
      %v3954 = vadd.f32 0.0, %v3953
      %v3955 = vpop.f32.mrb[0].mxu0
      %3956 = vmatprep.mubr.f32.mxu0 0.0
      %3957 = vmatmul.mubr.f32.gmra.mrb[0].mxu0 %v3716
      %v3958 = vpop.f32.mrb[0].mxu0
      %v3959 = vadd.f32 0.0, %v3958
      %v3960 = vpop.f32.mrb[0].mxu0
      %3961 = vmatprep.mubr.f32.mxu0 0.0
      %3962 = vmatmul.mubr.f32.gmra.mrb[0].mxu0 %v3719
      %v3963 = vpop.f32.mrb[0].mxu0
      %v3964 = vadd.f32 0.0, %v3963
      %v3965 = vpop.f32.mrb[0].mxu0
      %3966 = vmatprep.mubr.f32.mxu0 0.0
      %3967 = vmatmul.mubr.f32.gmra.mrb[0].mxu0 %v3722
      %v3968 = vpop.f32.mrb[0].mxu0
      %v3969 = vadd.f32 0.0, %v3968
      %v3970 = vpop.f32.mrb[0].mxu0
      %3971 = vdwg.mxu0
      %v3972 = vadd.f32 %v3542, %v3794
      %v3973 = vadd.f32 %v3543, %v3799
      %v3974 = vadd.f32 %v3544, %v3804
      %v3975 = vadd.f32 %v3545, %v3809
      %v3976 = vadd.f32 %v3546, %v3814
      %v3977 = vadd.f32 %v3547, %v3819
      %v3978 = vadd.f32 %v3548, %v3824
      %v3979 = vadd.f32 %v3549, %v3829
      %v3980 = vadd.f32 %v3550, %v3834
      %v3981 = vadd.f32 %v3551, %v3839
      %v3982 = vadd.f32 %v3552, %v3844
      %v3983 = vadd.f32 %v3553, %v3849
      %v3984 = vadd.f32 %v3554, %v3854
      %v3985 = vadd.f32 %v3555, %v3859
      %v3986 = vadd.f32 %v3556, %v3864
      %v3987 = vadd.f32 %v3557, %v3869
      %v3988 = vadd.f32 %v3558, %v3874
      %v3989 = vadd.f32 %v3559, %v3879
      %v3990 = vadd.f32 %v3560, %v3884
      %v3991 = vadd.f32 %v3561, %v3889
      %v3992 = vadd.f32 %v3562, %v3894
      %v3993 = vadd.f32 %v3563, %v3899
      %v3994 = vadd.f32 %v3564, %v3904
      %v3995 = vadd.f32 %v3565, %v3909
      %v3996 = vadd.f32 %v3566, %v3914
      %v3997 = vadd.f32 %v3567, %v3919
      %v3998 = vadd.f32 %v3568, %v3924
      %v3999 = vadd.f32 %v3569, %v3929
      %v4000 = vadd.f32 %v3570, %v3934
      %v4001 = vadd.f32 %v3571, %v3939
      %v4002 = vadd.f32 %v3572, %v3944
      %v4003 = vadd.f32 %v3573, %v3949
      %v4004 = vadd.f32 %v3574, %v3954
      %v4005 = vadd.f32 %v3575, %v3959
      %v4006 = vadd.f32 %v3576, %v3964
      %v4007 = vadd.f32 %v3577, %v3969
      %v4008 = vld [vmem:[%s2] sm:$0x1]
      %v4010 = vlaneseq
      %v4011 = vshrl.u32 %v4010, 7
      %v4012 = vsub.s32 0, %v4011
      %v4013 = vrot.slane %v4008, %v4012
      %v4015 = vadd.f32 %v3972, %v4013
      %v4016 = vadd.f32 %v3973, %v4013
      %v4017 = vadd.f32 %v3974, %v4013
      %v4018 = vadd.f32 %v3975, %v4013
      %v4019 = vadd.f32 %v3976, %v4013
      %v4020 = vadd.f32 %v3977, %v4013
      %v4021 = vadd.f32 %v3978, %v4013
      %v4022 = vadd.f32 %v3979, %v4013
      %v4023 = vadd.f32 %v3980, %v4013
      %v4024 = vadd.f32 %v3981, %v4013
      %v4025 = vadd.f32 %v3982, %v4013
      %v4026 = vadd.f32 %v3983, %v4013
      %v4027 = vadd.f32 %v3984, %v4013
      %v4028 = vadd.f32 %v3985, %v4013
      %v4029 = vadd.f32 %v3986, %v4013
      %v4030 = vadd.f32 %v3987, %v4013
      %v4031 = vadd.f32 %v3988, %v4013
      %v4032 = vadd.f32 %v3989, %v4013
      %v4033 = vadd.f32 %v3990, %v4013
      %v4034 = vadd.f32 %v3991, %v4013
      %v4035 = vadd.f32 %v3992, %v4013
      %v4036 = vadd.f32 %v3993, %v4013
      %v4037 = vadd.f32 %v3994, %v4013
      %v4038 = vadd.f32 %v3995, %v4013
      %v4039 = vadd.f32 %v3996, %v4013
      %v4040 = vadd.f32 %v3997, %v4013
      %v4041 = vadd.f32 %v3998, %v4013
      %v4042 = vadd.f32 %v3999, %v4013
      %v4043 = vadd.f32 %v4000, %v4013
      %v4044 = vadd.f32 %v4001, %v4013
      %v4045 = vadd.f32 %v4002, %v4013
      %v4046 = vadd.f32 %v4003, %v4013
      %v4047 = vadd.f32 %v4004, %v4013
      %v4048 = vadd.f32 %v4005, %v4013
      %v4049 = vadd.f32 %v4006, %v4013
      %v4050 = vadd.f32 %v4007, %v4013
      %v4051 = vmax.f32 %v4015, 0.0
      %v4052 = vmax.f32 %v4016, 0.0
      %v4053 = vmax.f32 %v4017, 0.0
      %v4054 = vmax.f32 %v4018, 0.0
      %v4055 = vmax.f32 %v4019, 0.0
      %v4056 = vmax.f32 %v4020, 0.0
      %v4057 = vmax.f32 %v4021, 0.0
      %v4058 = vmax.f32 %v4022, 0.0
      %v4059 = vmax.f32 %v4023, 0.0
      %v4060 = vmax.f32 %v4024, 0.0
      %v4061 = vmax.f32 %v4025, 0.0
      %v4062 = vmax.f32 %v4026, 0.0
      %v4063 = vmax.f32 %v4027, 0.0
      %v4064 = vmax.f32 %v4028, 0.0
      %v4065 = vmax.f32 %v4029, 0.0
      %v4066 = vmax.f32 %v4030, 0.0
      %v4067 = vmax.f32 %v4031, 0.0
      %v4068 = vmax.f32 %v4032, 0.0
      %v4069 = vmax.f32 %v4033, 0.0
      %v4070 = vmax.f32 %v4034, 0.0
      %v4071 = vmax.f32 %v4035, 0.0
      %v4072 = vmax.f32 %v4036, 0.0
      %v4073 = vmax.f32 %v4037, 0.0
      %v4074 = vmax.f32 %v4038, 0.0
      %v4075 = vmax.f32 %v4039, 0.0
      %v4076 = vmax.f32 %v4040, 0.0
      %v4077 = vmax.f32 %v4041, 0.0
      %v4078 = vmax.f32 %v4042, 0.0
      %v4079 = vmax.f32 %v4043, 0.0
      %v4080 = vmax.f32 %v4044, 0.0
      %v4081 = vmax.f32 %v4045, 0.0
      %v4082 = vmax.f32 %v4046, 0.0
      %v4083 = vmax.f32 %v4047, 0.0
      %v4084 = vmax.f32 %v4048, 0.0
      %v4085 = vmax.f32 %v4049, 0.0
      %v4086 = vmax.f32 %v4050, 0.0
      %4087 = vst [vmem:[%s204] sm:$0xff] %v4051
      %4088 = vst [vmem:[%s204 + $0x8] sm:$0xff] %v4052
      %4089 = vst [vmem:[%s204 + $0x10] sm:$0xff] %v4053
      %4090 = vst [vmem:[%s204 + $0x18] sm:$0xff] %v4054
      %4091 = vst [vmem:[%s204 + $0x20] sm:$0xff] %v4055
      %4092 = vst [vmem:[%s204 + $0x28] sm:$0xff] %v4056
      %4093 = vst [vmem:[%s204 + $0x30] sm:$0xff] %v4057
      %4094 = vst [vmem:[%s204 + $0x38] sm:$0xff] %v4058
      %4095 = vst [vmem:[%s204 + $0x40] sm:$0xff] %v4059
      %4096 = vst [vmem:[%s204 + $0x48] sm:$0xff] %v4060
      %4097 = vst [vmem:[%s204 + $0x50] sm:$0xff] %v4061
      %4098 = vst [vmem:[%s204 + $0x58] sm:$0xff] %v4062
      %4099 = vst [vmem:[%s204 + $0x60] sm:$0xff] %v4063
      %4100 = vst [vmem:[%s204 + $0x68] sm:$0xff] %v4064
      %4101 = vst [vmem:[%s204 + $0x70] sm:$0xff] %v4065
      %4102 = vst [vmem:[%s204 + $0x78] sm:$0xff] %v4066
      %4103 = vst [vmem:[%s204 + $0x80] sm:$0xff] %v4067
      %4104 = vst [vmem:[%s204 + $0x88] sm:$0xff] %v4068
      %4105 = vst [vmem:[%s204 + $0x90] sm:$0xff] %v4069
      %4106 = vst [vmem:[%s204 + $0x98] sm:$0xff] %v4070
      %4107 = vst [vmem:[%s204 + $0xa0] sm:$0xff] %v4071
      %4108 = vst [vmem:[%s204 + $0xa8] sm:$0xff] %v4072
      %4109 = vst [vmem:[%s204 + $0xb0] sm:$0xff] %v4073
      %4110 = vst [vmem:[%s204 + $0xb8] sm:$0xff] %v4074
      %4111 = vst [vmem:[%s204 + $0xc0] sm:$0xff] %v4075
      %4112 = vst [vmem:[%s204 + $0xc8] sm:$0xff] %v4076
      %4113 = vst [vmem:[%s204 + $0xd0] sm:$0xff] %v4077
      %4114 = vst [vmem:[%s204 + $0xd8] sm:$0xff] %v4078
      %4115 = vst [vmem:[%s204 + $0xe0] sm:$0xff] %v4079
      %4116 = vst [vmem:[%s204 + $0xe8] sm:$0xff] %v4080
      %4117 = vst [vmem:[%s204 + $0xf0] sm:$0xff] %v4081
      %4118 = vst [vmem:[%s204 + $0xf8] sm:$0xff] %v4082
      %4119 = vst [vmem:[%s204 + $0x100] sm:$0xff] %v4083
      %4120 = vst [vmem:[%s204 + $0x108] sm:$0xff] %v4084
      %4121 = vst [vmem:[%s204 + $0x110] sm:$0xff] %v4085
      %4122 = vst [vmem:[%s204 + $0x118] sm:$0xff] %v4086
      %v4123 = vlaneseq
      %v4124 = vshrl.u32 %v4123, 7
      %v4125 = vadd.s32 %v4124, 8
      %v4126 = vadd.s32 %v4124, 16
      %v4127 = vadd.s32 %v4124, 24
      %v4128 = vadd.s32 %v4124, 32
      %v4129 = vadd.s32 %v4124, 40
      %v4130 = vadd.s32 %v4124, 48
      %v4131 = vadd.s32 %v4124, 56
      %v4132 = vadd.s32 %v4124, 64
      %v4133 = vadd.s32 %v4124, 72
      %v4134 = vadd.s32 %v4124, 80
      %v4135 = vadd.s32 %v4124, 88
      %v4136 = vadd.s32 %v4124, 96
      %v4137 = vadd.s32 %v4124, 104
      %v4138 = vadd.s32 %v4124, 112
      %v4139 = vadd.s32 %v4124, 120
      %v4140 = vadd.s32 %v4124, 128
      %v4141 = vadd.s32 %v4124, 136
      %v4142 = vadd.s32 %v4124, 144
      %v4143 = vadd.s32 %v4124, 152
      %v4144 = vadd.s32 %v4124, 160
      %v4145 = vadd.s32 %v4124, 168
      %v4146 = vadd.s32 %v4124, 176
      %v4147 = vadd.s32 %v4124, 184
      %v4148 = vadd.s32 %v4124, 192
      %v4149 = vadd.s32 %v4124, 200
      %v4150 = vadd.s32 %v4124, 208
      %v4151 = vadd.s32 %v4124, 216
      %v4152 = vadd.s32 %v4124, 224
      %v4153 = vadd.s32 %v4124, 232
      %v4154 = vadd.s32 %v4124, 240
      %v4155 = vadd.s32 %v4124, 248
      %v4156 = vadd.s32 %v4124, 256
      %v4157 = vadd.s32 %v4124, 264
      %v4158 = vadd.s32 %v4124, 272
      %v4159 = vadd.s32 %v4124, 280
      %vm4160 = vcmp.lt.s32.totalorder %v4124, 0
      %v4161 = vsub.s32 0, %v4124
      %v4162 = vsel %vm4160, %v4161, %v4124
      %v4163 = vmul.u32.u64.compose %v4162, 3817748708
      %v4164 = vextract.low.u32 %v4163
      %v4165 = vextract.high.u32 %v4163
      %v4166 = vshrl.u32 %v4165, 4
      %v4167 = vmul.u32 %v4166, 18
      %v4168 = vsub.s32 %v4162, %v4167
      %v4169 = vsub.s32 0, %v4168
      %v4170 = vsel %vm4160, %v4169, %v4168
      %vm4171 = vcmp.lt.s32.totalorder %v4125, 0
      %v4172 = vsub.s32 0, %v4125
      %v4173 = vsel %vm4171, %v4172, %v4125
      %v4174 = vmul.u32.u64.compose %v4173, 3817748708
      %v4175 = vextract.low.u32 %v4174
      %v4176 = vextract.high.u32 %v4174
      %v4177 = vshrl.u32 %v4176, 4
      %v4178 = vmul.u32 %v4177, 18
      %v4179 = vsub.s32 %v4173, %v4178
      %v4180 = vsub.s32 0, %v4179
      %v4181 = vsel %vm4171, %v4180, %v4179
      %vm4182 = vcmp.lt.s32.totalorder %v4126, 0
      %v4183 = vsub.s32 0, %v4126
      %v4184 = vsel %vm4182, %v4183, %v4126
      %v4185 = vmul.u32.u64.compose %v4184, 3817748708
      %v4186 = vextract.low.u32 %v4185
      %v4187 = vextract.high.u32 %v4185
      %v4188 = vshrl.u32 %v4187, 4
      %v4189 = vmul.u32 %v4188, 18
      %v4190 = vsub.s32 %v4184, %v4189
      %v4191 = vsub.s32 0, %v4190
      %v4192 = vsel %vm4182, %v4191, %v4190
      %vm4193 = vcmp.lt.s32.totalorder %v4127, 0
      %v4194 = vsub.s32 0, %v4127
      %v4195 = vsel %vm4193, %v4194, %v4127
      %v4196 = vmul.u32.u64.compose %v4195, 3817748708
      %v4197 = vextract.low.u32 %v4196
      %v4198 = vextract.high.u32 %v4196
      %v4199 = vshrl.u32 %v4198, 4
      %v4200 = vmul.u32 %v4199, 18
      %v4201 = vsub.s32 %v4195, %v4200
      %v4202 = vsub.s32 0, %v4201
      %v4203 = vsel %vm4193, %v4202, %v4201
      %vm4204 = vcmp.lt.s32.totalorder %v4128, 0
      %v4205 = vsub.s32 0, %v4128
      %v4206 = vsel %vm4204, %v4205, %v4128
      %v4207 = vmul.u32.u64.compose %v4206, 3817748708
      %v4208 = vextract.low.u32 %v4207
      %v4209 = vextract.high.u32 %v4207
      %v4210 = vshrl.u32 %v4209, 4
      %v4211 = vmul.u32 %v4210, 18
      %v4212 = vsub.s32 %v4206, %v4211
      %v4213 = vsub.s32 0, %v4212
      %v4214 = vsel %vm4204, %v4213, %v4212
      %vm4215 = vcmp.lt.s32.totalorder %v4129, 0
      %v4216 = vsub.s32 0, %v4129
      %v4217 = vsel %vm4215, %v4216, %v4129
      %v4218 = vmul.u32.u64.compose %v4217, 3817748708
      %v4219 = vextract.low.u32 %v4218
      %v4220 = vextract.high.u32 %v4218
      %v4221 = vshrl.u32 %v4220, 4
      %v4222 = vmul.u32 %v4221, 18
      %v4223 = vsub.s32 %v4217, %v4222
      %v4224 = vsub.s32 0, %v4223
      %v4225 = vsel %vm4215, %v4224, %v4223
      %vm4226 = vcmp.lt.s32.totalorder %v4130, 0
      %v4227 = vsub.s32 0, %v4130
      %v4228 = vsel %vm4226, %v4227, %v4130
      %v4229 = vmul.u32.u64.compose %v4228, 3817748708
      %v4230 = vextract.low.u32 %v4229
      %v4231 = vextract.high.u32 %v4229
      %v4232 = vshrl.u32 %v4231, 4
      %v4233 = vmul.u32 %v4232, 18
      %v4234 = vsub.s32 %v4228, %v4233
      %v4235 = vsub.s32 0, %v4234
      %v4236 = vsel %vm4226, %v4235, %v4234
      %vm4237 = vcmp.lt.s32.totalorder %v4131, 0
      %v4238 = vsub.s32 0, %v4131
      %v4239 = vsel %vm4237, %v4238, %v4131
      %v4240 = vmul.u32.u64.compose %v4239, 3817748708
      %v4241 = vextract.low.u32 %v4240
      %v4242 = vextract.high.u32 %v4240
      %v4243 = vshrl.u32 %v4242, 4
      %v4244 = vmul.u32 %v4243, 18
      %v4245 = vsub.s32 %v4239, %v4244
      %v4246 = vsub.s32 0, %v4245
      %v4247 = vsel %vm4237, %v4246, %v4245
      %vm4248 = vcmp.lt.s32.totalorder %v4132, 0
      %v4249 = vsub.s32 0, %v4132
      %v4250 = vsel %vm4248, %v4249, %v4132
      %v4251 = vmul.u32.u64.compose %v4250, 3817748708
      %v4252 = vextract.low.u32 %v4251
      %v4253 = vextract.high.u32 %v4251
      %v4254 = vshrl.u32 %v4253, 4
      %v4255 = vmul.u32 %v4254, 18
      %v4256 = vsub.s32 %v4250, %v4255
      %v4257 = vsub.s32 0, %v4256
      %v4258 = vsel %vm4248, %v4257, %v4256
      %vm4259 = vcmp.lt.s32.totalorder %v4133, 0
      %v4260 = vsub.s32 0, %v4133
      %v4261 = vsel %vm4259, %v4260, %v4133
      %v4262 = vmul.u32.u64.compose %v4261, 3817748708
      %v4263 = vextract.low.u32 %v4262
      %v4264 = vextract.high.u32 %v4262
      %v4265 = vshrl.u32 %v4264, 4
      %v4266 = vmul.u32 %v4265, 18
      %v4267 = vsub.s32 %v4261, %v4266
      %v4268 = vsub.s32 0, %v4267
      %v4269 = vsel %vm4259, %v4268, %v4267
      %vm4270 = vcmp.lt.s32.totalorder %v4134, 0
      %v4271 = vsub.s32 0, %v4134
      %v4272 = vsel %vm4270, %v4271, %v4134
      %v4273 = vmul.u32.u64.compose %v4272, 3817748708
      %v4274 = vextract.low.u32 %v4273
      %v4275 = vextract.high.u32 %v4273
      %v4276 = vshrl.u32 %v4275, 4
      %v4277 = vmul.u32 %v4276, 18
      %v4278 = vsub.s32 %v4272, %v4277
      %v4279 = vsub.s32 0, %v4278
      %v4280 = vsel %vm4270, %v4279, %v4278
      %vm4281 = vcmp.lt.s32.totalorder %v4135, 0
      %v4282 = vsub.s32 0, %v4135
      %v4283 = vsel %vm4281, %v4282, %v4135
      %v4284 = vmul.u32.u64.compose %v4283, 3817748708
      %v4285 = vextract.low.u32 %v4284
      %v4286 = vextract.high.u32 %v4284
      %v4287 = vshrl.u32 %v4286, 4
      %v4288 = vmul.u32 %v4287, 18
      %v4289 = vsub.s32 %v4283, %v4288
      %v4290 = vsub.s32 0, %v4289
      %v4291 = vsel %vm4281, %v4290, %v4289
      %vm4292 = vcmp.lt.s32.totalorder %v4136, 0
      %v4293 = vsub.s32 0, %v4136
      %v4294 = vsel %vm4292, %v4293, %v4136
      %v4295 = vmul.u32.u64.compose %v4294, 3817748708
      %v4296 = vextract.low.u32 %v4295
      %v4297 = vextract.high.u32 %v4295
      %v4298 = vshrl.u32 %v4297, 4
      %v4299 = vmul.u32 %v4298, 18
      %v4300 = vsub.s32 %v4294, %v4299
      %v4301 = vsub.s32 0, %v4300
      %v4302 = vsel %vm4292, %v4301, %v4300
      %vm4303 = vcmp.lt.s32.totalorder %v4137, 0
      %v4304 = vsub.s32 0, %v4137
      %v4305 = vsel %vm4303, %v4304, %v4137
      %v4306 = vmul.u32.u64.compose %v4305, 3817748708
      %v4307 = vextract.low.u32 %v4306
      %v4308 = vextract.high.u32 %v4306
      %v4309 = vshrl.u32 %v4308, 4
      %v4310 = vmul.u32 %v4309, 18
      %v4311 = vsub.s32 %v4305, %v4310
      %v4312 = vsub.s32 0, %v4311
      %v4313 = vsel %vm4303, %v4312, %v4311
      %vm4314 = vcmp.lt.s32.totalorder %v4138, 0
      %v4315 = vsub.s32 0, %v4138
      %v4316 = vsel %vm4314, %v4315, %v4138
      %v4317 = vmul.u32.u64.compose %v4316, 3817748708
      %v4318 = vextract.low.u32 %v4317
      %v4319 = vextract.high.u32 %v4317
      %v4320 = vshrl.u32 %v4319, 4
      %v4321 = vmul.u32 %v4320, 18
      %v4322 = vsub.s32 %v4316, %v4321
      %v4323 = vsub.s32 0, %v4322
      %v4324 = vsel %vm4314, %v4323, %v4322
      %vm4325 = vcmp.lt.s32.totalorder %v4139, 0
      %v4326 = vsub.s32 0, %v4139
      %v4327 = vsel %vm4325, %v4326, %v4139
      %v4328 = vmul.u32.u64.compose %v4327, 3817748708
      %v4329 = vextract.low.u32 %v4328
      %v4330 = vextract.high.u32 %v4328
      %v4331 = vshrl.u32 %v4330, 4
      %v4332 = vmul.u32 %v4331, 18
      %v4333 = vsub.s32 %v4327, %v4332
      %v4334 = vsub.s32 0, %v4333
      %v4335 = vsel %vm4325, %v4334, %v4333
      %vm4336 = vcmp.lt.s32.totalorder %v4140, 0
      %v4337 = vsub.s32 0, %v4140
      %v4338 = vsel %vm4336, %v4337, %v4140
      %v4339 = vmul.u32.u64.compose %v4338, 3817748708
      %v4340 = vextract.low.u32 %v4339
      %v4341 = vextract.high.u32 %v4339
      %v4342 = vshrl.u32 %v4341, 4
      %v4343 = vmul.u32 %v4342, 18
      %v4344 = vsub.s32 %v4338, %v4343
      %v4345 = vsub.s32 0, %v4344
      %v4346 = vsel %vm4336, %v4345, %v4344
      %vm4347 = vcmp.lt.s32.totalorder %v4141, 0
      %v4348 = vsub.s32 0, %v4141
      %v4349 = vsel %vm4347, %v4348, %v4141
      %v4350 = vmul.u32.u64.compose %v4349, 3817748708
      %v4351 = vextract.low.u32 %v4350
      %v4352 = vextract.high.u32 %v4350
      %v4353 = vshrl.u32 %v4352, 4
      %v4354 = vmul.u32 %v4353, 18
      %v4355 = vsub.s32 %v4349, %v4354
      %v4356 = vsub.s32 0, %v4355
      %v4357 = vsel %vm4347, %v4356, %v4355
      %vm4358 = vcmp.lt.s32.totalorder %v4142, 0
      %v4359 = vsub.s32 0, %v4142
      %v4360 = vsel %vm4358, %v4359, %v4142
      %v4361 = vmul.u32.u64.compose %v4360, 3817748708
      %v4362 = vextract.low.u32 %v4361
      %v4363 = vextract.high.u32 %v4361
      %v4364 = vshrl.u32 %v4363, 4
      %v4365 = vmul.u32 %v4364, 18
      %v4366 = vsub.s32 %v4360, %v4365
      %v4367 = vsub.s32 0, %v4366
      %v4368 = vsel %vm4358, %v4367, %v4366
      %vm4369 = vcmp.lt.s32.totalorder %v4143, 0
      %v4370 = vsub.s32 0, %v4143
      %v4371 = vsel %vm4369, %v4370, %v4143
      %v4372 = vmul.u32.u64.compose %v4371, 3817748708
      %v4373 = vextract.low.u32 %v4372
      %v4374 = vextract.high.u32 %v4372
      %v4375 = vshrl.u32 %v4374, 4
      %v4376 = vmul.u32 %v4375, 18
      %v4377 = vsub.s32 %v4371, %v4376
      %v4378 = vsub.s32 0, %v4377
      %v4379 = vsel %vm4369, %v4378, %v4377
      %vm4380 = vcmp.lt.s32.totalorder %v4144, 0
      %v4381 = vsub.s32 0, %v4144
      %v4382 = vsel %vm4380, %v4381, %v4144
      %v4383 = vmul.u32.u64.compose %v4382, 3817748708
      %v4384 = vextract.low.u32 %v4383
      %v4385 = vextract.high.u32 %v4383
      %v4386 = vshrl.u32 %v4385, 4
      %v4387 = vmul.u32 %v4386, 18
      %v4388 = vsub.s32 %v4382, %v4387
      %v4389 = vsub.s32 0, %v4388
      %v4390 = vsel %vm4380, %v4389, %v4388
      %vm4391 = vcmp.lt.s32.totalorder %v4145, 0
      %v4392 = vsub.s32 0, %v4145
      %v4393 = vsel %vm4391, %v4392, %v4145
      %v4394 = vmul.u32.u64.compose %v4393, 3817748708
      %v4395 = vextract.low.u32 %v4394
      %v4396 = vextract.high.u32 %v4394
      %v4397 = vshrl.u32 %v4396, 4
      %v4398 = vmul.u32 %v4397, 18
      %v4399 = vsub.s32 %v4393, %v4398
      %v4400 = vsub.s32 0, %v4399
      %v4401 = vsel %vm4391, %v4400, %v4399
      %vm4402 = vcmp.lt.s32.totalorder %v4146, 0
      %v4403 = vsub.s32 0, %v4146
      %v4404 = vsel %vm4402, %v4403, %v4146
      %v4405 = vmul.u32.u64.compose %v4404, 3817748708
      %v4406 = vextract.low.u32 %v4405
      %v4407 = vextract.high.u32 %v4405
      %v4408 = vshrl.u32 %v4407, 4
      %v4409 = vmul.u32 %v4408, 18
      %v4410 = vsub.s32 %v4404, %v4409
      %v4411 = vsub.s32 0, %v4410
      %v4412 = vsel %vm4402, %v4411, %v4410
      %vm4413 = vcmp.lt.s32.totalorder %v4147, 0
      %v4414 = vsub.s32 0, %v4147
      %v4415 = vsel %vm4413, %v4414, %v4147
      %v4416 = vmul.u32.u64.compose %v4415, 3817748708
      %v4417 = vextract.low.u32 %v4416
      %v4418 = vextract.high.u32 %v4416
      %v4419 = vshrl.u32 %v4418, 4
      %v4420 = vmul.u32 %v4419, 18
      %v4421 = vsub.s32 %v4415, %v4420
      %v4422 = vsub.s32 0, %v4421
      %v4423 = vsel %vm4413, %v4422, %v4421
      %vm4424 = vcmp.lt.s32.totalorder %v4148, 0
      %v4425 = vsub.s32 0, %v4148
      %v4426 = vsel %vm4424, %v4425, %v4148
      %v4427 = vmul.u32.u64.compose %v4426, 3817748708
      %v4428 = vextract.low.u32 %v4427
      %v4429 = vextract.high.u32 %v4427
      %v4430 = vshrl.u32 %v4429, 4
      %v4431 = vmul.u32 %v4430, 18
      %v4432 = vsub.s32 %v4426, %v4431
      %v4433 = vsub.s32 0, %v4432
      %v4434 = vsel %vm4424, %v4433, %v4432
      %vm4435 = vcmp.lt.s32.totalorder %v4149, 0
      %v4436 = vsub.s32 0, %v4149
      %v4437 = vsel %vm4435, %v4436, %v4149
      %v4438 = vmul.u32.u64.compose %v4437, 3817748708
      %v4439 = vextract.low.u32 %v4438
      %v4440 = vextract.high.u32 %v4438
      %v4441 = vshrl.u32 %v4440, 4
      %v4442 = vmul.u32 %v4441, 18
      %v4443 = vsub.s32 %v4437, %v4442
      %v4444 = vsub.s32 0, %v4443
      %v4445 = vsel %vm4435, %v4444, %v4443
      %vm4446 = vcmp.lt.s32.totalorder %v4150, 0
      %v4447 = vsub.s32 0, %v4150
      %v4448 = vsel %vm4446, %v4447, %v4150
      %v4449 = vmul.u32.u64.compose %v4448, 3817748708
      %v4450 = vextract.low.u32 %v4449
      %v4451 = vextract.high.u32 %v4449
      %v4452 = vshrl.u32 %v4451, 4
      %v4453 = vmul.u32 %v4452, 18
      %v4454 = vsub.s32 %v4448, %v4453
      %v4455 = vsub.s32 0, %v4454
      %v4456 = vsel %vm4446, %v4455, %v4454
      %vm4457 = vcmp.lt.s32.totalorder %v4151, 0
      %v4458 = vsub.s32 0, %v4151
      %v4459 = vsel %vm4457, %v4458, %v4151
      %v4460 = vmul.u32.u64.compose %v4459, 3817748708
      %v4461 = vextract.low.u32 %v4460
      %v4462 = vextract.high.u32 %v4460
      %v4463 = vshrl.u32 %v4462, 4
      %v4464 = vmul.u32 %v4463, 18
      %v4465 = vsub.s32 %v4459, %v4464
      %v4466 = vsub.s32 0, %v4465
      %v4467 = vsel %vm4457, %v4466, %v4465
      %vm4468 = vcmp.lt.s32.totalorder %v4152, 0
      %v4469 = vsub.s32 0, %v4152
      %v4470 = vsel %vm4468, %v4469, %v4152
      %v4471 = vmul.u32.u64.compose %v4470, 3817748708
      %v4472 = vextract.low.u32 %v4471
      %v4473 = vextract.high.u32 %v4471
      %v4474 = vshrl.u32 %v4473, 4
      %v4475 = vmul.u32 %v4474, 18
      %v4476 = vsub.s32 %v4470, %v4475
      %v4477 = vsub.s32 0, %v4476
      %v4478 = vsel %vm4468, %v4477, %v4476
      %vm4479 = vcmp.lt.s32.totalorder %v4153, 0
      %v4480 = vsub.s32 0, %v4153
      %v4481 = vsel %vm4479, %v4480, %v4153
      %v4482 = vmul.u32.u64.compose %v4481, 3817748708
      %v4483 = vextract.low.u32 %v4482
      %v4484 = vextract.high.u32 %v4482
      %v4485 = vshrl.u32 %v4484, 4
      %v4486 = vmul.u32 %v4485, 18
      %v4487 = vsub.s32 %v4481, %v4486
      %v4488 = vsub.s32 0, %v4487
      %v4489 = vsel %vm4479, %v4488, %v4487
      %vm4490 = vcmp.lt.s32.totalorder %v4154, 0
      %v4491 = vsub.s32 0, %v4154
      %v4492 = vsel %vm4490, %v4491, %v4154
      %v4493 = vmul.u32.u64.compose %v4492, 3817748708
      %v4494 = vextract.low.u32 %v4493
      %v4495 = vextract.high.u32 %v4493
      %v4496 = vshrl.u32 %v4495, 4
      %v4497 = vmul.u32 %v4496, 18
      %v4498 = vsub.s32 %v4492, %v4497
      %v4499 = vsub.s32 0, %v4498
      %v4500 = vsel %vm4490, %v4499, %v4498
      %vm4501 = vcmp.lt.s32.totalorder %v4155, 0
      %v4502 = vsub.s32 0, %v4155
      %v4503 = vsel %vm4501, %v4502, %v4155
      %v4504 = vmul.u32.u64.compose %v4503, 3817748708
      %v4505 = vextract.low.u32 %v4504
      %v4506 = vextract.high.u32 %v4504
      %v4507 = vshrl.u32 %v4506, 4
      %v4508 = vmul.u32 %v4507, 18
      %v4509 = vsub.s32 %v4503, %v4508
      %v4510 = vsub.s32 0, %v4509
      %v4511 = vsel %vm4501, %v4510, %v4509
      %vm4512 = vcmp.lt.s32.totalorder %v4156, 0
      %v4513 = vsub.s32 0, %v4156
      %v4514 = vsel %vm4512, %v4513, %v4156
      %v4515 = vmul.u32.u64.compose %v4514, 3817748708
      %v4516 = vextract.low.u32 %v4515
      %v4517 = vextract.high.u32 %v4515
      %v4518 = vshrl.u32 %v4517, 4
      %v4519 = vmul.u32 %v4518, 18
      %v4520 = vsub.s32 %v4514, %v4519
      %v4521 = vsub.s32 0, %v4520
      %v4522 = vsel %vm4512, %v4521, %v4520
      %vm4523 = vcmp.lt.s32.totalorder %v4157, 0
      %v4524 = vsub.s32 0, %v4157
      %v4525 = vsel %vm4523, %v4524, %v4157
      %v4526 = vmul.u32.u64.compose %v4525, 3817748708
      %v4527 = vextract.low.u32 %v4526
      %v4528 = vextract.high.u32 %v4526
      %v4529 = vshrl.u32 %v4528, 4
      %v4530 = vmul.u32 %v4529, 18
      %v4531 = vsub.s32 %v4525, %v4530
      %v4532 = vsub.s32 0, %v4531
      %v4533 = vsel %vm4523, %v4532, %v4531
      %vm4534 = vcmp.lt.s32.totalorder %v4158, 0
      %v4535 = vsub.s32 0, %v4158
      %v4536 = vsel %vm4534, %v4535, %v4158
      %v4537 = vmul.u32.u64.compose %v4536, 3817748708
      %v4538 = vextract.low.u32 %v4537
      %v4539 = vextract.high.u32 %v4537
      %v4540 = vshrl.u32 %v4539, 4
      %v4541 = vmul.u32 %v4540, 18
      %v4542 = vsub.s32 %v4536, %v4541
      %v4543 = vsub.s32 0, %v4542
      %v4544 = vsel %vm4534, %v4543, %v4542
      %vm4545 = vcmp.lt.s32.totalorder %v4159, 0
      %v4546 = vsub.s32 0, %v4159
      %v4547 = vsel %vm4545, %v4546, %v4159
      %v4548 = vmul.u32.u64.compose %v4547, 3817748708
      %v4549 = vextract.low.u32 %v4548
      %v4550 = vextract.high.u32 %v4548
      %v4551 = vshrl.u32 %v4550, 4
      %v4552 = vmul.u32 %v4551, 18
      %v4553 = vsub.s32 %v4547, %v4552
      %v4554 = vsub.s32 0, %v4553
      %v4555 = vsel %vm4545, %v4554, %v4553
      %vm4556 = vcmp.ne.s32.totalorder %v4170, 0
      %vm4557 = vcmp.ne.s32.totalorder %v4181, 0
      %vm4558 = vcmp.ne.s32.totalorder %v4192, 0
      %vm4559 = vcmp.ne.s32.totalorder %v4203, 0
      %vm4560 = vcmp.ne.s32.totalorder %v4214, 0
      %vm4561 = vcmp.ne.s32.totalorder %v4225, 0
      %vm4562 = vcmp.ne.s32.totalorder %v4236, 0
      %vm4563 = vcmp.ne.s32.totalorder %v4247, 0
      %vm4564 = vcmp.ne.s32.totalorder %v4258, 0
      %vm4565 = vcmp.ne.s32.totalorder %v4269, 0
      %vm4566 = vcmp.ne.s32.totalorder %v4280, 0
      %vm4567 = vcmp.ne.s32.totalorder %v4291, 0
      %vm4568 = vcmp.ne.s32.totalorder %v4302, 0
      %vm4569 = vcmp.ne.s32.totalorder %v4313, 0
      %vm4570 = vcmp.ne.s32.totalorder %v4324, 0
      %vm4571 = vcmp.ne.s32.totalorder %v4335, 0
      %vm4572 = vcmp.ne.s32.totalorder %v4346, 0
      %vm4573 = vcmp.ne.s32.totalorder %v4357, 0
      %vm4574 = vcmp.ne.s32.totalorder %v4368, 0
      %vm4575 = vcmp.ne.s32.totalorder %v4379, 0
      %vm4576 = vcmp.ne.s32.totalorder %v4390, 0
      %vm4577 = vcmp.ne.s32.totalorder %v4401, 0
      %vm4578 = vcmp.ne.s32.totalorder %v4412, 0
      %vm4579 = vcmp.ne.s32.totalorder %v4423, 0
      %vm4580 = vcmp.ne.s32.totalorder %v4434, 0
      %vm4581 = vcmp.ne.s32.totalorder %v4445, 0
      %vm4582 = vcmp.ne.s32.totalorder %v4456, 0
      %vm4583 = vcmp.ne.s32.totalorder %v4467, 0
      %vm4584 = vcmp.ne.s32.totalorder %v4478, 0
      %vm4585 = vcmp.ne.s32.totalorder %v4489, 0
      %vm4586 = vcmp.ne.s32.totalorder %v4500, 0
      %vm4587 = vcmp.ne.s32.totalorder %v4511, 0
      %vm4588 = vcmp.ne.s32.totalorder %v4522, 0
      %vm4589 = vcmp.ne.s32.totalorder %v4533, 0
      %vm4590 = vcmp.ne.s32.totalorder %v4544, 0
      %vm4591 = vcmp.ne.s32.totalorder %v4555, 0
      %vm4592 = vcmp.lt.s32.totalorder %v4170, 0
      %vm4593 = vcmp.lt.s32.totalorder %v4181, 0
      %vm4594 = vcmp.lt.s32.totalorder %v4192, 0
      %vm4595 = vcmp.lt.s32.totalorder %v4203, 0
      %vm4596 = vcmp.lt.s32.totalorder %v4214, 0
      %vm4597 = vcmp.lt.s32.totalorder %v4225, 0
      %vm4598 = vcmp.lt.s32.totalorder %v4236, 0
      %vm4599 = vcmp.lt.s32.totalorder %v4247, 0
      %vm4600 = vcmp.lt.s32.totalorder %v4258, 0
      %vm4601 = vcmp.lt.s32.totalorder %v4269, 0
      %vm4602 = vcmp.lt.s32.totalorder %v4280, 0
      %vm4603 = vcmp.lt.s32.totalorder %v4291, 0
      %vm4604 = vcmp.lt.s32.totalorder %v4302, 0
      %vm4605 = vcmp.lt.s32.totalorder %v4313, 0
      %vm4606 = vcmp.lt.s32.totalorder %v4324, 0
      %vm4607 = vcmp.lt.s32.totalorder %v4335, 0
      %vm4608 = vcmp.lt.s32.totalorder %v4346, 0
      %vm4609 = vcmp.lt.s32.totalorder %v4357, 0
      %vm4610 = vcmp.lt.s32.totalorder %v4368, 0
      %vm4611 = vcmp.lt.s32.totalorder %v4379, 0
      %vm4612 = vcmp.lt.s32.totalorder %v4390, 0
      %vm4613 = vcmp.lt.s32.totalorder %v4401, 0
      %vm4614 = vcmp.lt.s32.totalorder %v4412, 0
      %vm4615 = vcmp.lt.s32.totalorder %v4423, 0
      %vm4616 = vcmp.lt.s32.totalorder %v4434, 0
      %vm4617 = vcmp.lt.s32.totalorder %v4445, 0
      %vm4618 = vcmp.lt.s32.totalorder %v4456, 0
      %vm4619 = vcmp.lt.s32.totalorder %v4467, 0
      %vm4620 = vcmp.lt.s32.totalorder %v4478, 0
      %vm4621 = vcmp.lt.s32.totalorder %v4489, 0
      %vm4622 = vcmp.lt.s32.totalorder %v4500, 0
      %vm4623 = vcmp.lt.s32.totalorder %v4511, 0
      %vm4624 = vcmp.lt.s32.totalorder %v4522, 0
      %vm4625 = vcmp.lt.s32.totalorder %v4533, 0
      %vm4626 = vcmp.lt.s32.totalorder %v4544, 0
      %vm4627 = vcmp.lt.s32.totalorder %v4555, 0
      %vm4628 = vmand %vm4592, %vm4556
      %vm4629 = vmand %vm4593, %vm4557
      %vm4630 = vmand %vm4594, %vm4558
      %vm4631 = vmand %vm4595, %vm4559
      %vm4632 = vmand %vm4596, %vm4560
      %vm4633 = vmand %vm4597, %vm4561
      %vm4634 = vmand %vm4598, %vm4562
      %vm4635 = vmand %vm4599, %vm4563
      %vm4636 = vmand %vm4600, %vm4564
      %vm4637 = vmand %vm4601, %vm4565
      %vm4638 = vmand %vm4602, %vm4566
      %vm4639 = vmand %vm4603, %vm4567
      %vm4640 = vmand %vm4604, %vm4568
      %vm4641 = vmand %vm4605, %vm4569
      %vm4642 = vmand %vm4606, %vm4570
      %vm4643 = vmand %vm4607, %vm4571
      %vm4644 = vmand %vm4608, %vm4572
      %vm4645 = vmand %vm4609, %vm4573
      %vm4646 = vmand %vm4610, %vm4574
      %vm4647 = vmand %vm4611, %vm4575
      %vm4648 = vmand %vm4612, %vm4576
      %vm4649 = vmand %vm4613, %vm4577
      %vm4650 = vmand %vm4614, %vm4578
      %vm4651 = vmand %vm4615, %vm4579
      %vm4652 = vmand %vm4616, %vm4580
      %vm4653 = vmand %vm4617, %vm4581
      %vm4654 = vmand %vm4618, %vm4582
      %vm4655 = vmand %vm4619, %vm4583
      %vm4656 = vmand %vm4620, %vm4584
      %vm4657 = vmand %vm4621, %vm4585
      %vm4658 = vmand %vm4622, %vm4586
      %vm4659 = vmand %vm4623, %vm4587
      %vm4660 = vmand %vm4624, %vm4588
      %vm4661 = vmand %vm4625, %vm4589
      %vm4662 = vmand %vm4626, %vm4590
      %vm4663 = vmand %vm4627, %vm4591
      %v4664 = vadd.s32 %v4170, 18
      %v4665 = vadd.s32 %v4181, 18
      %v4666 = vadd.s32 %v4192, 18
      %v4667 = vadd.s32 %v4203, 18
      %v4668 = vadd.s32 %v4214, 18
      %v4669 = vadd.s32 %v4225, 18
      %v4670 = vadd.s32 %v4236, 18
      %v4671 = vadd.s32 %v4247, 18
      %v4672 = vadd.s32 %v4258, 18
      %v4673 = vadd.s32 %v4269, 18
      %v4674 = vadd.s32 %v4280, 18
      %v4675 = vadd.s32 %v4291, 18
      %v4676 = vadd.s32 %v4302, 18
      %v4677 = vadd.s32 %v4313, 18
      %v4678 = vadd.s32 %v4324, 18
      %v4679 = vadd.s32 %v4335, 18
      %v4680 = vadd.s32 %v4346, 18
      %v4681 = vadd.s32 %v4357, 18
      %v4682 = vadd.s32 %v4368, 18
      %v4683 = vadd.s32 %v4379, 18
      %v4684 = vadd.s32 %v4390, 18
      %v4685 = vadd.s32 %v4401, 18
      %v4686 = vadd.s32 %v4412, 18
      %v4687 = vadd.s32 %v4423, 18
      %v4688 = vadd.s32 %v4434, 18
      %v4689 = vadd.s32 %v4445, 18
      %v4690 = vadd.s32 %v4456, 18
      %v4691 = vadd.s32 %v4467, 18
      %v4692 = vadd.s32 %v4478, 18
      %v4693 = vadd.s32 %v4489, 18
      %v4694 = vadd.s32 %v4500, 18
      %v4695 = vadd.s32 %v4511, 18
      %v4696 = vadd.s32 %v4522, 18
      %v4697 = vadd.s32 %v4533, 18
      %v4698 = vadd.s32 %v4544, 18
      %v4699 = vadd.s32 %v4555, 18
      %v4700 = vsel %vm4628, %v4664, %v4170
      %v4701 = vsel %vm4629, %v4665, %v4181
      %v4702 = vsel %vm4630, %v4666, %v4192
      %v4703 = vsel %vm4631, %v4667, %v4203
      %v4704 = vsel %vm4632, %v4668, %v4214
      %v4705 = vsel %vm4633, %v4669, %v4225
      %v4706 = vsel %vm4634, %v4670, %v4236
      %v4707 = vsel %vm4635, %v4671, %v4247
      %v4708 = vsel %vm4636, %v4672, %v4258
      %v4709 = vsel %vm4637, %v4673, %v4269
      %v4710 = vsel %vm4638, %v4674, %v4280
      %v4711 = vsel %vm4639, %v4675, %v4291
      %v4712 = vsel %vm4640, %v4676, %v4302
      %v4713 = vsel %vm4641, %v4677, %v4313
      %v4714 = vsel %vm4642, %v4678, %v4324
      %v4715 = vsel %vm4643, %v4679, %v4335
      %v4716 = vsel %vm4644, %v4680, %v4346
      %v4717 = vsel %vm4645, %v4681, %v4357
      %v4718 = vsel %vm4646, %v4682, %v4368
      %v4719 = vsel %vm4647, %v4683, %v4379
      %v4720 = vsel %vm4648, %v4684, %v4390
      %v4721 = vsel %vm4649, %v4685, %v4401
      %v4722 = vsel %vm4650, %v4686, %v4412
      %v4723 = vsel %vm4651, %v4687, %v4423
      %v4724 = vsel %vm4652, %v4688, %v4434
      %v4725 = vsel %vm4653, %v4689, %v4445
      %v4726 = vsel %vm4654, %v4690, %v4456
      %v4727 = vsel %vm4655, %v4691, %v4467
      %v4728 = vsel %vm4656, %v4692, %v4478
      %v4729 = vsel %vm4657, %v4693, %v4489
      %v4730 = vsel %vm4658, %v4694, %v4500
      %v4731 = vsel %vm4659, %v4695, %v4511
      %v4732 = vsel %vm4660, %v4696, %v4522
      %v4733 = vsel %vm4661, %v4697, %v4533
      %v4734 = vsel %vm4662, %v4698, %v4544
      %v4735 = vsel %vm4663, %v4699, %v4555
      %vm4736 = vcmp.lt.s32.totalorder %v4700, 16
      %vm4737 = vcmp.lt.s32.totalorder %v4701, 16
      %vm4738 = vcmp.lt.s32.totalorder %v4702, 16
      %vm4739 = vcmp.lt.s32.totalorder %v4703, 16
      %vm4740 = vcmp.lt.s32.totalorder %v4704, 16
      %vm4741 = vcmp.lt.s32.totalorder %v4705, 16
      %vm4742 = vcmp.lt.s32.totalorder %v4706, 16
      %vm4743 = vcmp.lt.s32.totalorder %v4707, 16
      %vm4744 = vcmp.lt.s32.totalorder %v4708, 16
      %vm4745 = vcmp.lt.s32.totalorder %v4709, 16
      %vm4746 = vcmp.lt.s32.totalorder %v4710, 16
      %vm4747 = vcmp.lt.s32.totalorder %v4711, 16
      %vm4748 = vcmp.lt.s32.totalorder %v4712, 16
      %vm4749 = vcmp.lt.s32.totalorder %v4713, 16
      %vm4750 = vcmp.lt.s32.totalorder %v4714, 16
      %vm4751 = vcmp.lt.s32.totalorder %v4715, 16
      %vm4752 = vcmp.lt.s32.totalorder %v4716, 16
      %vm4753 = vcmp.lt.s32.totalorder %v4717, 16
      %vm4754 = vcmp.lt.s32.totalorder %v4718, 16
      %vm4755 = vcmp.lt.s32.totalorder %v4719, 16
      %vm4756 = vcmp.lt.s32.totalorder %v4720, 16
      %vm4757 = vcmp.lt.s32.totalorder %v4721, 16
      %vm4758 = vcmp.lt.s32.totalorder %v4722, 16
      %vm4759 = vcmp.lt.s32.totalorder %v4723, 16
      %vm4760 = vcmp.lt.s32.totalorder %v4724, 16
      %vm4761 = vcmp.lt.s32.totalorder %v4725, 16
      %vm4762 = vcmp.lt.s32.totalorder %v4726, 16
      %vm4763 = vcmp.lt.s32.totalorder %v4727, 16
      %vm4764 = vcmp.lt.s32.totalorder %v4728, 16
      %vm4765 = vcmp.lt.s32.totalorder %v4729, 16
      %vm4766 = vcmp.lt.s32.totalorder %v4730, 16
      %vm4767 = vcmp.lt.s32.totalorder %v4731, 16
      %vm4768 = vcmp.lt.s32.totalorder %v4732, 16
      %vm4769 = vcmp.lt.s32.totalorder %v4733, 16
      %vm4770 = vcmp.lt.s32.totalorder %v4734, 16
      %vm4771 = vcmp.lt.s32.totalorder %v4735, 16
      %v4772 = vsel %vm4736, 1, 0
      %v4773 = vsel %vm4737, 1, 0
      %v4774 = vsel %vm4738, 1, 0
      %v4775 = vsel %vm4739, 1, 0
      %v4776 = vsel %vm4740, 1, 0
      %v4777 = vsel %vm4741, 1, 0
      %v4778 = vsel %vm4742, 1, 0
      %v4779 = vsel %vm4743, 1, 0
      %v4780 = vsel %vm4744, 1, 0
      %v4781 = vsel %vm4745, 1, 0
      %v4782 = vsel %vm4746, 1, 0
      %v4783 = vsel %vm4747, 1, 0
      %v4784 = vsel %vm4748, 1, 0
      %v4785 = vsel %vm4749, 1, 0
      %v4786 = vsel %vm4750, 1, 0
      %v4787 = vsel %vm4751, 1, 0
      %v4788 = vsel %vm4752, 1, 0
      %v4789 = vsel %vm4753, 1, 0
      %v4790 = vsel %vm4754, 1, 0
      %v4791 = vsel %vm4755, 1, 0
      %v4792 = vsel %vm4756, 1, 0
      %v4793 = vsel %vm4757, 1, 0
      %v4794 = vsel %vm4758, 1, 0
      %v4795 = vsel %vm4759, 1, 0
      %v4796 = vsel %vm4760, 1, 0
      %v4797 = vsel %vm4761, 1, 0
      %v4798 = vsel %vm4762, 1, 0
      %v4799 = vsel %vm4763, 1, 0
      %v4800 = vsel %vm4764, 1, 0
      %v4801 = vsel %vm4765, 1, 0
      %v4802 = vsel %vm4766, 1, 0
      %v4803 = vsel %vm4767, 1, 0
      %v4804 = vsel %vm4768, 1, 0
      %v4805 = vsel %vm4769, 1, 0
      %v4806 = vsel %vm4770, 1, 0
      %v4807 = vsel %vm4771, 1, 0
      %v4808 = vcvt.s32.f32 %v4772
      %v4809 = vcvt.s32.f32 %v4773
      %v4810 = vcvt.s32.f32 %v4774
      %v4811 = vcvt.s32.f32 %v4775
      %v4812 = vcvt.s32.f32 %v4776
      %v4813 = vcvt.s32.f32 %v4777
      %v4814 = vcvt.s32.f32 %v4778
      %v4815 = vcvt.s32.f32 %v4779
      %v4816 = vcvt.s32.f32 %v4780
      %v4817 = vcvt.s32.f32 %v4781
      %v4818 = vcvt.s32.f32 %v4782
      %v4819 = vcvt.s32.f32 %v4783
      %v4820 = vcvt.s32.f32 %v4784
      %v4821 = vcvt.s32.f32 %v4785
      %v4822 = vcvt.s32.f32 %v4786
      %v4823 = vcvt.s32.f32 %v4787
      %v4824 = vcvt.s32.f32 %v4788
      %v4825 = vcvt.s32.f32 %v4789
      %v4826 = vcvt.s32.f32 %v4790
      %v4827 = vcvt.s32.f32 %v4791
      %v4828 = vcvt.s32.f32 %v4792
      %v4829 = vcvt.s32.f32 %v4793
      %v4830 = vcvt.s32.f32 %v4794
      %v4831 = vcvt.s32.f32 %v4795
      %v4832 = vcvt.s32.f32 %v4796
      %v4833 = vcvt.s32.f32 %v4797
      %v4834 = vcvt.s32.f32 %v4798
      %v4835 = vcvt.s32.f32 %v4799
      %v4836 = vcvt.s32.f32 %v4800
      %v4837 = vcvt.s32.f32 %v4801
      %v4838 = vcvt.s32.f32 %v4802
      %v4839 = vcvt.s32.f32 %v4803
      %v4840 = vcvt.s32.f32 %v4804
      %v4841 = vcvt.s32.f32 %v4805
      %v4842 = vcvt.s32.f32 %v4806
      %v4843 = vcvt.s32.f32 %v4807
      %v4844 = vmul.f32 %v4051, %v4808
      %v4845 = vmul.f32 %v4052, %v4809
      %v4846 = vmul.f32 %v4053, %v4810
      %v4847 = vmul.f32 %v4054, %v4811
      %v4848 = vmul.f32 %v4055, %v4812
      %v4849 = vmul.f32 %v4056, %v4813
      %v4850 = vmul.f32 %v4057, %v4814
      %v4851 = vmul.f32 %v4058, %v4815
      %v4852 = vmul.f32 %v4059, %v4816
      %v4853 = vmul.f32 %v4060, %v4817
      %v4854 = vmul.f32 %v4061, %v4818
      %v4855 = vmul.f32 %v4062, %v4819
      %v4856 = vmul.f32 %v4063, %v4820
      %v4857 = vmul.f32 %v4064, %v4821
      %v4858 = vmul.f32 %v4065, %v4822
      %v4859 = vmul.f32 %v4066, %v4823
      %v4860 = vmul.f32 %v4067, %v4824
      %v4861 = vmul.f32 %v4068, %v4825
      %v4862 = vmul.f32 %v4069, %v4826
      %v4863 = vmul.f32 %v4070, %v4827
      %v4864 = vmul.f32 %v4071, %v4828
      %v4865 = vmul.f32 %v4072, %v4829
      %v4866 = vmul.f32 %v4073, %v4830
      %v4867 = vmul.f32 %v4074, %v4831
      %v4868 = vmul.f32 %v4075, %v4832
      %v4869 = vmul.f32 %v4076, %v4833
      %v4870 = vmul.f32 %v4077, %v4834
      %v4871 = vmul.f32 %v4078, %v4835
      %v4872 = vmul.f32 %v4079, %v4836
      %v4873 = vmul.f32 %v4080, %v4837
      %v4874 = vmul.f32 %v4081, %v4838
      %v4875 = vmul.f32 %v4082, %v4839
      %v4876 = vmul.f32 %v4083, %v4840
      %v4877 = vmul.f32 %v4084, %v4841
      %v4878 = vmul.f32 %v4085, %v4842
      %v4879 = vmul.f32 %v4086, %v4843
      %v4880 = vadd.f32 %v4844, %v4845
      %v4881 = vadd.f32 %v4880, %v4846
      %v4882 = vadd.f32 %v4881, %v4847
      %v4883 = vadd.f32 %v4882, %v4848
      %v4884 = vadd.f32 %v4883, %v4849
      %v4885 = vadd.f32 %v4884, %v4850
      %v4886 = vadd.f32 %v4885, %v4851
      %v4887 = vadd.f32 %v4886, %v4852
      %v4888 = vadd.f32 %v4887, %v4853
      %v4889 = vadd.f32 %v4888, %v4854
      %v4890 = vadd.f32 %v4889, %v4855
      %v4891 = vadd.f32 %v4890, %v4856
      %v4892 = vadd.f32 %v4891, %v4857
      %v4893 = vadd.f32 %v4892, %v4858
      %v4894 = vadd.f32 %v4893, %v4859
      %v4895 = vadd.f32 %v4894, %v4860
      %v4896 = vadd.f32 %v4895, %v4861
      %v4897 = vadd.f32 %v4896, %v4862
      %v4898 = vadd.f32 %v4897, %v4863
      %v4899 = vadd.f32 %v4898, %v4864
      %v4900 = vadd.f32 %v4899, %v4865
      %v4901 = vadd.f32 %v4900, %v4866
      %v4902 = vadd.f32 %v4901, %v4867
      %v4903 = vadd.f32 %v4902, %v4868
      %v4904 = vadd.f32 %v4903, %v4869
      %v4905 = vadd.f32 %v4904, %v4870
      %v4906 = vadd.f32 %v4905, %v4871
      %v4907 = vadd.f32 %v4906, %v4872
      %v4908 = vadd.f32 %v4907, %v4873
      %v4909 = vadd.f32 %v4908, %v4874
      %v4910 = vadd.f32 %v4909, %v4875
      %v4911 = vadd.f32 %v4910, %v4876
      %v4912 = vadd.f32 %v4911, %v4877
      %v4913 = vadd.f32 %v4912, %v4878
      %v4914 = vadd.f32 %v4913, %v4879
      %v4915 = vrot.slane %v4914, 4
      %v4916 = vadd.f32 %v4914, %v4915
      %v4917 = vrot.slane %v4916, 2
      %v4918 = vadd.f32 %v4916, %v4917
      %v4919 = vrot.slane %v4918, 1
      %v4920 = vadd.f32 %v4918, %v4919
      %v4921 = vmul.f32 %v4844, %v4844
      %v4922 = vmul.f32 %v4845, %v4845
      %v4923 = vmul.f32 %v4846, %v4846
      %v4924 = vmul.f32 %v4847, %v4847
      %v4925 = vmul.f32 %v4848, %v4848
      %v4926 = vmul.f32 %v4849, %v4849
      %v4927 = vmul.f32 %v4850, %v4850
      %v4928 = vmul.f32 %v4851, %v4851
      %v4929 = vmul.f32 %v4852, %v4852
      %v4930 = vmul.f32 %v4853, %v4853
      %v4931 = vmul.f32 %v4854, %v4854
      %v4932 = vmul.f32 %v4855, %v4855
      %v4933 = vmul.f32 %v4856, %v4856
      %v4934 = vmul.f32 %v4857, %v4857
      %v4935 = vmul.f32 %v4858, %v4858
      %v4936 = vmul.f32 %v4859, %v4859
      %v4937 = vmul.f32 %v4860, %v4860
      %v4938 = vmul.f32 %v4861, %v4861
      %v4939 = vmul.f32 %v4862, %v4862
      %v4940 = vmul.f32 %v4863, %v4863
      %v4941 = vmul.f32 %v4864, %v4864
      %v4942 = vmul.f32 %v4865, %v4865
      %v4943 = vmul.f32 %v4866, %v4866
      %v4944 = vmul.f32 %v4867, %v4867
      %v4945 = vmul.f32 %v4868, %v4868
      %v4946 = vmul.f32 %v4869, %v4869
      %v4947 = vmul.f32 %v4870, %v4870
      %v4948 = vmul.f32 %v4871, %v4871
      %v4949 = vmul.f32 %v4872, %v4872
      %v4950 = vmul.f32 %v4873, %v4873
      %v4951 = vmul.f32 %v4874, %v4874
      %v4952 = vmul.f32 %v4875, %v4875
      %v4953 = vmul.f32 %v4876, %v4876
      %v4954 = vmul.f32 %v4877, %v4877
      %v4955 = vmul.f32 %v4878, %v4878
      %v4956 = vmul.f32 %v4879, %v4879
      %v4957 = vadd.f32 %v4921, %v4922
      %v4958 = vadd.f32 %v4957, %v4923
      %v4959 = vadd.f32 %v4958, %v4924
      %v4960 = vadd.f32 %v4959, %v4925
      %v4961 = vadd.f32 %v4960, %v4926
      %v4962 = vadd.f32 %v4961, %v4927
      %v4963 = vadd.f32 %v4962, %v4928
      %v4964 = vadd.f32 %v4963, %v4929
      %v4965 = vadd.f32 %v4964, %v4930
      %v4966 = vadd.f32 %v4965, %v4931
      %v4967 = vadd.f32 %v4966, %v4932
      %v4968 = vadd.f32 %v4967, %v4933
      %v4969 = vadd.f32 %v4968, %v4934
      %v4970 = vadd.f32 %v4969, %v4935
      %v4971 = vadd.f32 %v4970, %v4936
      %v4972 = vadd.f32 %v4971, %v4937
      %v4973 = vadd.f32 %v4972, %v4938
      %v4974 = vadd.f32 %v4973, %v4939
      %v4975 = vadd.f32 %v4974, %v4940
      %v4976 = vadd.f32 %v4975, %v4941
      %v4977 = vadd.f32 %v4976, %v4942
      %v4978 = vadd.f32 %v4977, %v4943
      %v4979 = vadd.f32 %v4978, %v4944
      %v4980 = vadd.f32 %v4979, %v4945
      %v4981 = vadd.f32 %v4980, %v4946
      %v4982 = vadd.f32 %v4981, %v4947
      %v4983 = vadd.f32 %v4982, %v4948
      %v4984 = vadd.f32 %v4983, %v4949
      %v4985 = vadd.f32 %v4984, %v4950
      %v4986 = vadd.f32 %v4985, %v4951
      %v4987 = vadd.f32 %v4986, %v4952
      %v4988 = vadd.f32 %v4987, %v4953
      %v4989 = vadd.f32 %v4988, %v4954
      %v4990 = vadd.f32 %v4989, %v4955
      %v4991 = vadd.f32 %v4990, %v4956
      %v4992 = vrot.slane %v4991, 4
      %v4993 = vadd.f32 %v4991, %v4992
      %v4994 = vrot.slane %v4993, 2
      %v4995 = vadd.f32 %v4993, %v4994
      %v4996 = vrot.slane %v4995, 1
      %v4997 = vadd.f32 %v4995, %v4996
      %vm4998 = vcmask 1040384
      %v4999 = vsel %vm4998, %v4920, %v4997
      %5000 = vst [vmem:[%s208] sm:$0x3] %v4999
      %p5001 = scmp.lt.s32.totalorder %s16, 1
      %s5002 = scalar_select %p5001, %s16, 1
      %s5003 = smul.addr %s5002, 36
      %s5004 = smul.addr %s5003, 8
      %s5005 = scalar_lea.vmem %s3, %s5004
      %p5006 = scmp.lt.s32.totalorder %s16, 1
      %s5007 = scalar_select %p5006, %s16, 1
      %s5008 = smul.addr %s5007, 2
      %s5009 = scalar_lea.vmem %s4, %s5008
      // Predicated region
      $region33: #{encode_block_forward.3} parent=31 // pred_check
        %p5010 = pneg %p102
      $region34: #{encode_block_forward.3} parent=31 // pred_check_branch
        %5012 = sbr.rel (%p5010) target = $region36
      $region35: #{encode_block_forward.3} parent=31 // pred_region
        _
      $region36: #{encode_block_forward.3} parent=31 // pred_fallthru
        _
      // Predicated region
      $region37: #{encode_block_forward.3} parent=31 // pred_check
        %p5013 = pneg %p128
      $region38: #{encode_block_forward.3} parent=31 // pred_check_branch
        %5015 = sbr.rel (%p5013) target = $region40
      $region39: #{encode_block_forward.3} parent=31 // pred_region
        _
      $region40: #{encode_block_forward.3} parent=31 // pred_fallthru
        _
    $region32: #{encode_block_forward.3} parent=5 // pred_fallthru
      _
    %p5016 = scmp.le.s32.totalorder 2, %s11
    // Predicated region
    $region41: #{encode_block_forward.3} parent=5 // pred_check
      %p5017 = pneg %p5016
    $region42: #{encode_block_forward.3} parent=5 // pred_check_branch
      %5019 = sbr.rel (%p5017) target = $region44
    $region43: #{encode_block_forward.3} parent=5 // pred_region
      %s5020 = ssub.s32 %s11, 2
      // Predicated region
      $region45: #{encode_block_forward.3} parent=43 // pred_check
        %p5021 = pneg %p108
      $region46: #{encode_block_forward.3} parent=43 // pred_check_branch
        %5023 = sbr.rel (%p5021) target = $region48
      $region47: #{encode_block_forward.3} parent=43 // pred_region
        %p5024 = scmp.lt.s32.totalorder %s17, 1
        %s5025 = scalar_select %p5024, %s17, 1
        %s5026 = smul.addr %s5025, 36
        %s5027 = smul.addr %s5026, 8
        %s5028 = scalar_lea.vmem %s3, %s5027
      $region48: #{encode_block_forward.3} parent=43 // pred_fallthru
        _
      // Predicated region
      $region49: #{encode_block_forward.3} parent=43 // pred_check
        %p5029 = pneg %p134
      $region50: #{encode_block_forward.3} parent=43 // pred_check_branch
        %5031 = sbr.rel (%p5029) target = $region52
      $region51: #{encode_block_forward.3} parent=43 // pred_region
        %p5032 = scmp.lt.s32.totalorder %s17, 1
        %s5033 = scalar_select %p5032, %s17, 1
        %s5034 = smul.addr %s5033, 2
        %s5035 = scalar_lea.vmem %s4, %s5034
      $region52: #{encode_block_forward.3} parent=43 // pred_fallthru
        _
    $region44: #{encode_block_forward.3} parent=5 // pred_fallthru
      _
  $region6: #{encode_block_forward.3} parent=0 // loop_footer
    %s15 = sadd.s32 1, %s11
  $region7: #{encode_block_forward.3} parent=0 // loop_footer_branch
    %10 = sbr.rel target = $region3
  $region8: #{encode_block_forward.3} parent=0 // loop_exit
    _

// kernel: encode_block_forward.4
$region0: #{encode_block_forward.4}
  #allocation0 [shape = 'u32[]', space=smem, size = 0x4, offset = 0x4, fixed_abs, tag = 'smem constant byte address 0x4 - core index']
  #allocation1 [shape = 'u32[144,128]{1,0:T(1,128)}', space=vmem, size = 0x12000, scoped, tag = 'internal scratch']
  %s0 = inlined_call_operand.vmem [shape: f32[2,328,128], index: 0, kind: input, shape index: {}]
  %s1 = inlined_call_operand.vmem [shape: f32[9,128,128], index: 1, kind: input, shape index: {}]
  %s2 = inlined_call_operand.vmem [shape: f32[1,128], index: 2, kind: input, shape index: {}]
  %s3 = inlined_call_operand.vmem [shape: f32[2,288,128], index: 3, kind: output, shape index: {0}]
  %s4 = inlined_call_operand.vmem [shape: f32[2,2,128], index: 4, kind: output, shape index: {1}]
  %5 = xla_tuple %s3, %s4
  %s6 = sld [smem:[#allocation0]]
  $region53: #{encode_block_forward.4} parent=0
    _
  %s8 = ssub.s32 1, %s6
  %s9 = scalar_select 0, %s8, %s6
  loop: start=0, step=1, limit=4
  $region2: #{encode_block_forward.4} parent=0 // loop_pre_header
    _
  $region3: #{encode_block_forward.4} parent=0 // loop_header
    %s11 = sphi 0, %s15
    %p12 = scmp.ge.s32.totalorder %s11, 4
    %s21 = sphi 0, %s23
    %s24 = sphi 0, %s21
    %s25 = sphi 0, %s24
    %s41 = sphi 0, %s25
    %s45 = sphi 0, %s45
    %s47 = sphi 0, %s45
    %s48 = sphi 0, %s47
    %s62 = sphi 0, %s48
    %s66 = sphi 0, %s66
    %s68 = sphi 0, %s66
    %s69 = sphi 0, %s68
    %s83 = sphi 0, %s69
    %s89 = sphi 0, %s91
    %s92 = sphi 0, %s89
    %s93 = sphi 0, %s92
    %s109 = sphi 0, %s93
    %s115 = sphi 0, %s117
    %s118 = sphi 0, %s115
    %s119 = sphi 0, %s118
    %s135 = sphi 0, %s119
  $region4: #{encode_block_forward.4} parent=0 // loop_header_branch
    %14 = sbr.rel (%p12) target = $region8
  $region5: #{encode_block_forward.4} parent=0 // loop_body
    %s16 = ssub.s32 %s11, 1
    %s17 = ssub.s32 %s11, 2
    %s18 = sadd.s32 %s11, 1
    %s19 = ssub.s32 %s11, %s18
    %p20 = scmp.eq.s32.totalorder %s19, 0
    %s22 = sadd.s32 %s21, 1
    %s23 = scalar_select %p20, %s21, %s22
    %p26 = pneg %p20
    %p27 = scmp.eq.s32.totalorder %s11, 1
    %p28 = por %p26, %p27
    %p29 = scmp.ne.s32.totalorder %s21, %s24
    %p30 = scmp.eq.s32.totalorder %s11, 0
    %p31 = por %p29, %p30
    %p32 = scmp.ne.s32.totalorder %s21, %s24
    %p33 = scmp.eq.s32.totalorder %s16, 1
    %p34 = por %p32, %p33
    %p35 = scmp.ne.s32.totalorder %s24, %s25
    %p36 = scmp.eq.s32.totalorder %s16, 0
    %p37 = por %p35, %p36
    %p38 = scmp.ne.s32.totalorder %s24, %s25
    %p39 = scmp.eq.s32.totalorder %s17, 1
    %p40 = por %p38, %p39
    %p42 = scmp.ne.s32.totalorder %s25, %s41
    %p43 = scmp.eq.s32.totalorder %s17, 0
    %p44 = por %p42, %p43
    %s46 = sadd.s32 %s45, 1
    %p49 = scmp.eq.s32.totalorder %s11, 1
    %p50 = scmp.ne.s32.totalorder %s45, %s47
    %p51 = scmp.eq.s32.totalorder %s11, 0
    %p52 = por %p50, %p51
    %p53 = scmp.ne.s32.totalorder %s45, %s47
    %p54 = scmp.eq.s32.totalorder %s16, 1
    %p55 = por %p53, %p54
    %p56 = scmp.ne.s32.totalorder %s47, %s48
    %p57 = scmp.eq.s32.totalorder %s16, 0
    %p58 = por %p56, %p57
    %p59 = scmp.ne.s32.totalorder %s47, %s48
    %p60 = scmp.eq.s32.totalorder %s17, 1
    %p61 = por %p59, %p60
    %p63 = scmp.ne.s32.totalorder %s48, %s62
    %p64 = scmp.eq.s32.totalorder %s17, 0
    %p65 = por %p63, %p64
    %s67 = sadd.s32 %s66, 1
    %p70 = scmp.eq.s32.totalorder %s11, 1
    %p71 = scmp.ne.s32.totalorder %s66, %s68
    %p72 = scmp.eq.s32.totalorder %s11, 0
    %p73 = por %p71, %p72
    %p74 = scmp.ne.s32.totalorder %s66, %s68
    %p75 = scmp.eq.s32.totalorder %s16, 1
    %p76 = por %p74, %p75
    %p77 = scmp.ne.s32.totalorder %s68, %s69
    %p78 = scmp.eq.s32.totalorder %s16, 0
    %p79 = por %p77, %p78
    %p80 = scmp.ne.s32.totalorder %s68, %s69
    %p81 = scmp.eq.s32.totalorder %s17, 1
    %p82 = por %p80, %p81
    %p84 = scmp.ne.s32.totalorder %s69, %s83
    %p85 = scmp.eq.s32.totalorder %s17, 0
    %p86 = por %p84, %p85
    %s87 = ssub.s32 %s11, %s18
    %p88 = scmp.eq.s32.totalorder %s87, 0
    %s90 = sadd.s32 %s89, 1
    %s91 = scalar_select %p88, %s89, %s90
    %p94 = pneg %p88
    %p95 = scmp.eq.s32.totalorder %s11, 1
    %p96 = por %p94, %p95
    %p97 = scmp.ne.s32.totalorder %s89, %s92
    %p98 = scmp.eq.s32.totalorder %s11, 0
    %p99 = por %p97, %p98
    %p100 = scmp.ne.s32.totalorder %s89, %s92
    %p101 = scmp.eq.s32.totalorder %s16, 1
    %p102 = por %p100, %p101
    %p103 = scmp.ne.s32.totalorder %s92, %s93
    %p104 = scmp.eq.s32.totalorder %s16, 0
    %p105 = por %p103, %p104
    %p106 = scmp.ne.s32.totalorder %s92, %s93
    %p107 = scmp.eq.s32.totalorder %s17, 1
    %p108 = por %p106, %p107
    %p110 = scmp.ne.s32.totalorder %s93, %s109
    %p111 = scmp.eq.s32.totalorder %s17, 0
    %p112 = por %p110, %p111
    %s113 = ssub.s32 %s11, %s18
    %p114 = scmp.eq.s32.totalorder %s113, 0
    %s116 = sadd.s32 %s115, 1
    %s117 = scalar_select %p114, %s115, %s116
    %p120 = pneg %p114
    %p121 = scmp.eq.s32.totalorder %s11, 1
    %p122 = por %p120, %p121
    %p123 = scmp.ne.s32.totalorder %s115, %s118
    %p124 = scmp.eq.s32.totalorder %s11, 0
    %p125 = por %p123, %p124
    %p126 = scmp.ne.s32.totalorder %s115, %s118
    %p127 = scmp.eq.s32.totalorder %s16, 1
    %p128 = por %p126, %p127
    %p129 = scmp.ne.s32.totalorder %s118, %s119
    %p130 = scmp.eq.s32.totalorder %s16, 0
    %p131 = por %p129, %p130
    %p132 = scmp.ne.s32.totalorder %s118, %s119
    %p133 = scmp.eq.s32.totalorder %s17, 1
    %p134 = por %p132, %p133
    %p136 = scmp.ne.s32.totalorder %s119, %s135
    %p137 = scmp.eq.s32.totalorder %s17, 0
    %p138 = por %p136, %p137
    %p139 = scmp.le.s32.totalorder 1, %s11
    %p140 = scmp.lt.s32.totalorder %s11, 3
    %p141 = pnand %p139, %p140
    %p142 = pneg %p141
    // Predicated region
    $region9: #{encode_block_forward.4} parent=5 // pred_check
      _
    $region10: #{encode_block_forward.4} parent=5 // pred_check_branch
      %144 = sbr.rel (%p141) target = $region12
    $region11: #{encode_block_forward.4} parent=5 // pred_region
      %s145 = ssub.s32 %s11, 1
      // Predicated region
      $region13: #{encode_block_forward.4} parent=11 // pred_check
        %p146 = pneg %p58
      $region14: #{encode_block_forward.4} parent=11 // pred_check_branch
        %148 = sbr.rel (%p146) target = $region16
      $region15: #{encode_block_forward.4} parent=11 // pred_region
        _
      $region16: #{encode_block_forward.4} parent=11 // pred_fallthru
        _
      // Predicated region
      $region17: #{encode_block_forward.4} parent=11 // pred_check
        %p149 = pneg %p79
      $region18: #{encode_block_forward.4} parent=11 // pred_check_branch
        %151 = sbr.rel (%p149) target = $region20
      $region19: #{encode_block_forward.4} parent=11 // pred_region
        _
      $region20: #{encode_block_forward.4} parent=11 // pred_fallthru
        _
    $region12: #{encode_block_forward.4} parent=5 // pred_fallthru
      _
    %p152 = scmp.lt.s32.totalorder %s11, 2
    // Predicated region
    $region21: #{encode_block_forward.4} parent=5 // pred_check
      %p153 = pneg %p152
    $region22: #{encode_block_forward.4} parent=5 // pred_check_branch
      %155 = sbr.rel (%p153) target = $region24
    $region23: #{encode_block_forward.4} parent=5 // pred_region
      // Predicated region
      $region25: #{encode_block_forward.4} parent=23 // pred_check
        %p156 = pneg %p31
      $region26: #{encode_block_forward.4} parent=23 // pred_check_branch
        %158 = sbr.rel (%p156) target = $region28
      $region27: #{encode_block_forward.4} parent=23 // pred_region
        %p159 = scmp.lt.s32.totalorder %s11, 1
        %s160 = scalar_select %p159, %s11, 1
        %s161 = smul.addr %s160, 41
        %s162 = smul.addr %s161, 8
        %s163 = scalar_lea.vmem %s0, %s162
      $region28: #{encode_block_forward.4} parent=23 // pred_fallthru
        _
    $region24: #{encode_block_forward.4} parent=5 // pred_fallthru
      _
    %p164 = scmp.le.s32.totalorder 1, %s11
    %p165 = scmp.lt.s32.totalorder %s11, 3
    %p166 = pnand %p164, %p165
    %p167 = pneg %p166
    // Predicated region
    $region29: #{encode_block_forward.4} parent=5 // pred_check
      _
    $region30: #{encode_block_forward.4} parent=5 // pred_check_branch
      %169 = sbr.rel (%p166) target = $region32
    $region31: #{encode_block_forward.4} parent=5 // pred_region
      %s170 = ssub.s32 %s11, 1
      %p171 = scmp.lt.s32.totalorder %s16, 1
      %s172 = scalar_select %p171, %s16, 1
      %s173 = smul.addr %s172, 41
      %s174 = smul.addr %s173, 8
      %s175 = scalar_lea.vmem %s0, %s174
      %p176 = pneg %p37
      %p177 = pneg %p34
      %p178 = pneg %p58
      %p179 = pneg %p55
      %p180 = pneg %p79
      %p181 = pneg %p76
      %p182 = pneg %p105
      %p183 = pneg %p102
      %p184 = scmp.lt.s32.totalorder %s16, 1
      %s185 = scalar_select %p184, %s16, 1
      %s186 = smul.addr %s185, 36
      %s187 = smul.addr %s186, 8
      %s188 = scalar_lea.vmem %s3, %s187
      %p189 = pneg %p131
      %p190 = pneg %p128
      %p191 = scmp.lt.s32.totalorder %s16, 1
      %s192 = scalar_select %p191, %s16, 1
      %s193 = smul.addr %s192, 2
      %s194 = scalar_lea.vmem %s4, %s193
      %p195 = scmp.lt.s32.totalorder %s16, 1
      %s196 = scalar_select %p195, %s16, 1
      %s197 = smul.addr %s196, 41
      %s198 = smul.addr %s197, 8
      %s199 = scalar_lea.vmem %s0, %s198
      %p200 = scmp.lt.s32.totalorder %s16, 1
      %s201 = scalar_select %p200, %s16, 1
      %s202 = smul.addr %s201, 36
      %s203 = smul.addr %s202, 8
      %s204 = scalar_lea.vmem %s3, %s203
      %p205 = scmp.lt.s32.totalorder %s16, 1
      %s206 = scalar_select %p205, %s16, 1
      %s207 = smul.addr %s206, 2
      %s208 = scalar_lea.vmem %s4, %s207
      %v209 = vld [vmem:[%s199] sm:$0xff]
      %v210 = vld [vmem:[%s199 + $0x8] sm:$0xff]
      %v211 = vld [vmem:[%s199 + $0x10] sm:$0xff]
      %v212 = vld [vmem:[%s199 + $0x18] sm:$0xff]
      %v213 = vld [vmem:[%s199 + $0x20] sm:$0xff]
      %v214 = vld [vmem:[%s199 + $0x28] sm:$0xff]
      %v215 = vld [vmem:[%s199 + $0x30] sm:$0xff]
      %v216 = vld [vmem:[%s199 + $0x38] sm:$0xff]
      %v217 = vld [vmem:[%s199 + $0x40] sm:$0xff]
      %v218 = vld [vmem:[%s199 + $0x48] sm:$0xff]
      %v219 = vld [vmem:[%s199 + $0x50] sm:$0xff]
      %v220 = vld [vmem:[%s199 + $0x58] sm:$0xff]
      %v221 = vld [vmem:[%s199 + $0x60] sm:$0xff]
      %v222 = vld [vmem:[%s199 + $0x68] sm:$0xff]
      %v223 = vld [vmem:[%s199 + $0x70] sm:$0xff]
      %v224 = vld [vmem:[%s199 + $0x78] sm:$0xff]
      %v225 = vld [vmem:[%s199 + $0x80] sm:$0xff]
      %v226 = vld [vmem:[%s199 + $0x88] sm:$0xff]
      %v227 = vld [vmem:[%s199 + $0x90] sm:$0xff]
      %v228 = vld [vmem:[%s199 + $0x98] sm:$0xff]
      %v229 = vld [vmem:[%s199 + $0xa0] sm:$0xff]
      %v230 = vld [vmem:[%s199 + $0xa8] sm:$0xff]
      %v231 = vld [vmem:[%s199 + $0xb0] sm:$0xff]
      %v232 = vld [vmem:[%s199 + $0xb8] sm:$0xff]
      %v233 = vld [vmem:[%s199 + $0xc0] sm:$0xff]
      %v234 = vld [vmem:[%s199 + $0xc8] sm:$0xff]
      %v235 = vld [vmem:[%s199 + $0xd0] sm:$0xff]
      %v236 = vld [vmem:[%s199 + $0xd8] sm:$0xff]
      %v237 = vld [vmem:[%s199 + $0xe0] sm:$0xff]
      %v238 = vld [vmem:[%s199 + $0xe8] sm:$0xff]
      %v239 = vld [vmem:[%s199 + $0xf0] sm:$0xff]
      %v240 = vld [vmem:[%s199 + $0xf8] sm:$0xff]
      %v241 = vld [vmem:[%s199 + $0x100] sm:$0xff]
      %v242 = vld [vmem:[%s199 + $0x108] sm:$0xff]
      %v243 = vld [vmem:[%s199 + $0x110] sm:$0xff]
      %v244 = vld [vmem:[%s199 + $0x118] sm:$0xff]
      %v245 = vld [vmem:[%s1] sm:$0xff]
      %v246 = vld [vmem:[%s1 + $0x8] sm:$0xff]
      %v247 = vld [vmem:[%s1 + $0x10] sm:$0xff]
      %v248 = vld [vmem:[%s1 + $0x18] sm:$0xff]
      %v249 = vld [vmem:[%s1 + $0x20] sm:$0xff]
      %v250 = vld [vmem:[%s1 + $0x28] sm:$0xff]
      %v251 = vld [vmem:[%s1 + $0x30] sm:$0xff]
      %v252 = vld [vmem:[%s1 + $0x38] sm:$0xff]
      %v253 = vld [vmem:[%s1 + $0x40] sm:$0xff]
      %v254 = vld [vmem:[%s1 + $0x48] sm:$0xff]
      %v255 = vld [vmem:[%s1 + $0x50] sm:$0xff]
      %v256 = vld [vmem:[%s1 + $0x58] sm:$0xff]
      %v257 = vld [vmem:[%s1 + $0x60] sm:$0xff]
      %v258 = vld [vmem:[%s1 + $0x68] sm:$0xff]
      %v259 = vld [vmem:[%s1 + $0x70] sm:$0xff]
      %v260 = vld [vmem:[%s1 + $0x78] sm:$0xff]
      %v261 = vld [vmem:[%s199 + $0x1] sm:$0xff]
      %v262 = vld [vmem:[%s199 + $0x9] sm:$0xff]
      %v263 = vld [vmem:[%s199 + $0x11] sm:$0xff]
      %v264 = vld [vmem:[%s199 + $0x19] sm:$0xff]
      %v265 = vld [vmem:[%s199 + $0x21] sm:$0xff]
      %v266 = vld [vmem:[%s199 + $0x29] sm:$0xff]
      %v267 = vld [vmem:[%s199 + $0x31] sm:$0xff]
      %v268 = vld [vmem:[%s199 + $0x39] sm:$0xff]
      %v269 = vld [vmem:[%s199 + $0x41] sm:$0xff]
      %v270 = vld [vmem:[%s199 + $0x49] sm:$0xff]
      %v271 = vld [vmem:[%s199 + $0x51] sm:$0xff]
      %v272 = vld [vmem:[%s199 + $0x59] sm:$0xff]
      %v273 = vld [vmem:[%s199 + $0x61] sm:$0xff]
      %v274 = vld [vmem:[%s199 + $0x69] sm:$0xff]
      %v275 = vld [vmem:[%s199 + $0x71] sm:$0xff]
      %v276 = vld [vmem:[%s199 + $0x79] sm:$0xff]
      %v277 = vld [vmem:[%s199 + $0x81] sm:$0xff]
      %v278 = vld [vmem:[%s199 + $0x89] sm:$0xff]
      %v279 = vld [vmem:[%s199 + $0x91] sm:$0xff]
      %v280 = vld [vmem:[%s199 + $0x99] sm:$0xff]
      %v281 = vld [vmem:[%s199 + $0xa1] sm:$0xff]
      %v282 = vld [vmem:[%s199 + $0xa9] sm:$0xff]
      %v283 = vld [vmem:[%s199 + $0xb1] sm:$0xff]
      %v284 = vld [vmem:[%s199 + $0xb9] sm:$0xff]
      %v285 = vld [vmem:[%s199 + $0xc1] sm:$0xff]
      %v286 = vld [vmem:[%s199 + $0xc9] sm:$0xff]
      %v287 = vld [vmem:[%s199 + $0xd1] sm:$0xff]
      %v288 = vld [vmem:[%s199 + $0xd9] sm:$0xff]
      %v289 = vld [vmem:[%s199 + $0xe1] sm:$0xff]
      %v290 = vld [vmem:[%s199 + $0xe9] sm:$0xff]
      %v291 = vld [vmem:[%s199 + $0xf1] sm:$0xff]
      %v292 = vld [vmem:[%s199 + $0xf9] sm:$0xff]
      %v293 = vld [vmem:[%s199 + $0x101] sm:$0xff]
      %v294 = vld [vmem:[%s199 + $0x109] sm:$0xff]
      %v295 = vld [vmem:[%s199 + $0x111] sm:$0xff]
      %v296 = vld [vmem:[%s199 + $0x119] sm:$0xff]
      %s297 = scalar_lea.vmem %s1, 128
      %v298 = vld [vmem:[%s297] sm:$0xff]
      %v299 = vld [vmem:[%s297 + $0x8] sm:$0xff]
      %v300 = vld [vmem:[%s297 + $0x10] sm:$0xff]
      %v301 = vld [vmem:[%s297 + $0x18] sm:$0xff]
      %v302 = vld [vmem:[%s297 + $0x20] sm:$0xff]
      %v303 = vld [vmem:[%s297 + $0x28] sm:$0xff]
      %v304 = vld [vmem:[%s297 + $0x30] sm:$0xff]
      %v305 = vld [vmem:[%s297 + $0x38] sm:$0xff]
      %v306 = vld [vmem:[%s297 + $0x40] sm:$0xff]
      %v307 = vld [vmem:[%s297 + $0x48] sm:$0xff]
      %v308 = vld [vmem:[%s297 + $0x50] sm:$0xff]
      %v309 = vld [vmem:[%s297 + $0x58] sm:$0xff]
      %v310 = vld [vmem:[%s297 + $0x60] sm:$0xff]
      %v311 = vld [vmem:[%s297 + $0x68] sm:$0xff]
      %v312 = vld [vmem:[%s297 + $0x70] sm:$0xff]
      %v313 = vld [vmem:[%s297 + $0x78] sm:$0xff]
      %314 = vmatprep.subr.mxu0 0.0
      %315 = vmatpush1.msra.mxu0 %v298
      %316 = vmatprep.subr.mxu0 0.0
      %317 = vmatpush1.msra.mxu0 %v299
      %318 = vmatprep.subr.mxu0 0.0
      %319 = vmatpush1.msra.mxu0 %v300
      %320 = vmatprep.subr.mxu0 0.0
      %321 = vmatpush1.msra.mxu0 %v301
      %322 = vmatprep.subr.mxu0 0.0
      %323 = vmatpush1.msra.mxu0 %v302
      %324 = vmatprep.subr.mxu0 0.0
      %325 = vmatpush1.msra.mxu0 %v303
      %326 = vmatprep.subr.mxu0 0.0
      %327 = vmatpush1.msra.mxu0 %v304
      %328 = vmatprep.subr.mxu0 0.0
      %329 = vmatpush1.msra.mxu0 %v305
      %330 = vmatprep.subr.mxu0 0.0
      %331 = vmatpush1.msra.mxu0 %v306
      %332 = vmatprep.subr.mxu0 0.0
      %333 = vmatpush1.msra.mxu0 %v307
      %334 = vmatprep.subr.mxu0 0.0
      %335 = vmatpush1.msra.mxu0 %v308
      %336 = vmatprep.subr.mxu0 0.0
      %337 = vmatpush1.msra.mxu0 %v309
      %338 = vmatprep.subr.mxu0 0.0
      %339 = vmatpush1.msra.mxu0 %v310
      %340 = vmatprep.subr.mxu0 0.0
      %341 = vmatpush1.msra.mxu0 %v311
      %342 = vmatprep.subr.mxu0 0.0
      %343 = vmatpush1.msra.mxu0 %v312
      %344 = vmatprep.subr.mxu0 0.0
      %345 = vmatpush1.msra.mxu0 %v313
      %346 = vmatprep.subr.mxu0 0.0
      %347 = vmatpush1.msra.mxu0 0.0
      %348 = vmatprep.subr.mxu0 0.0
      %349 = vmatpush1.msra.mxu0 0.0
      %350 = vmatprep.subr.mxu0 0.0
      %351 = vmatpush1.msra.mxu0 0.0
      %352 = vmatprep.subr.mxu0 0.0
      %353 = vmatpush1.msra.mxu0 0.0
      %354 = vmatprep.subr.mxu0 0.0
      %355 = vmatpush1.msra.mxu0 0.0
      %356 = vmatprep.subr.mxu0 0.0
      %357 = vmatpush1.msra.mxu0 0.0
      %358 = vmatprep.subr.mxu0 0.0
      %359 = vmatpush1.msra.mxu0 0.0
      %360 = vmatprep.subr.mxu0 0.0
      %361 = vmatpush1.msra.mxu0 0.0
      %362 = vmatprep.subr.mxu0 0.0
      %363 = vmatpush1.msra.mxu0 0.0
      %364 = vmatprep.subr.mxu0 0.0
      %365 = vmatpush1.msra.mxu0 0.0
      %366 = vmatprep.subr.mxu0 0.0
      %367 = vmatpush1.msra.mxu0 0.0
      %368 = vmatprep.subr.mxu0 0.0
      %369 = vmatpush1.msra.mxu0 0.0
      %370 = vmatprep.subr.mxu0 0.0
      %371 = vmatpush1.msra.mxu0 0.0
      %372 = vmatprep.subr.mxu0 0.0
      %373 = vmatpush1.msra.mxu0 0.0
      %374 = vmatprep.subr.mxu0 0.0
      %375 = vmatpush1.msra.mxu0 0.0
      %376 = vmatprep.subr.mxu0 0.0
      %377 = vmatpush1.msra.mxu0 0.0
      %378 = vmatprep.mubr.f32.mxu0 0.0
      %379 = vmatmul.mubr.f32.gmra.mrb[0].mxu0 %v261
      %v380 = vpop.f32.mrb[0].mxu0
      %v381 = vadd.f32 0.0, %v380
      %v382 = vpop.f32.mrb[0].mxu0
      %383 = vmatprep.mubr.f32.mxu0 0.0
      %384 = vmatmul.mubr.f32.gmra.mrb[0].mxu0 %v262
      %v385 = vpop.f32.mrb[0].mxu0
      %v386 = vadd.f32 0.0, %v385
      %v387 = vpop.f32.mrb[0].mxu0
      %388 = vmatprep.mubr.f32.mxu0 0.0
      %389 = vmatmul.mubr.f32.gmra.mrb[0].mxu0 %v263
      %v390 = vpop.f32.mrb[0].mxu0
      %v391 = vadd.f32 0.0, %v390
      %v392 = vpop.f32.mrb[0].mxu0
      %393 = vmatprep.mubr.f32.mxu0 0.0
      %394 = vmatmul.mubr.f32.gmra.mrb[0].mxu0 %v264
      %v395 = vpop.f32.mrb[0].mxu0
      %v396 = vadd.f32 0.0, %v395
      %v397 = vpop.f32.mrb[0].mxu0
      %398 = vmatprep.mubr.f32.mxu0 0.0
      %399 = vmatmul.mubr.f32.gmra.mrb[0].mxu0 %v265
      %v400 = vpop.f32.mrb[0].mxu0
      %v401 = vadd.f32 0.0, %v400
      %v402 = vpop.f32.mrb[0].mxu0
      %403 = vmatprep.mubr.f32.mxu0 0.0
      %404 = vmatmul.mubr.f32.gmra.mrb[0].mxu0 %v266
      %v405 = vpop.f32.mrb[0].mxu0
      %v406 = vadd.f32 0.0, %v405
      %v407 = vpop.f32.mrb[0].mxu0
      %408 = vmatprep.mubr.f32.mxu0 0.0
      %409 = vmatmul.mubr.f32.gmra.mrb[0].mxu0 %v267
      %v410 = vpop.f32.mrb[0].mxu0
      %v411 = vadd.f32 0.0, %v410
      %v412 = vpop.f32.mrb[0].mxu0
      %413 = vmatprep.mubr.f32.mxu0 0.0
      %414 = vmatmul.mubr.f32.gmra.mrb[0].mxu0 %v268
      %v415 = vpop.f32.mrb[0].mxu0
      %v416 = vadd.f32 0.0, %v415
      %v417 = vpop.f32.mrb[0].mxu0
      %418 = vmatprep.mubr.f32.mxu0 0.0
      %419 = vmatmul.mubr.f32.gmra.mrb[0].mxu0 %v269
      %v420 = vpop.f32.mrb[0].mxu0
      %v421 = vadd.f32 0.0, %v420
      %v422 = vpop.f32.mrb[0].mxu0
      %423 = vmatprep.mubr.f32.mxu0 0.0
      %424 = vmatmul.mubr.f32.gmra.mrb[0].mxu0 %v270
      %v425 = vpop.f32.mrb[0].mxu0
      %v426 = vadd.f32 0.0, %v425
      %v427 = vpop.f32.mrb[0].mxu0
      %428 = vmatprep.mubr.f32.mxu0 0.0
      %429 = vmatmul.mubr.f32.gmra.mrb[0].mxu0 %v271
      %v430 = vpop.f32.mrb[0].mxu0
      %v431 = vadd.f32 0.0, %v430
      %v432 = vpop.f32.mrb[0].mxu0
      %433 = vmatprep.mubr.f32.mxu0 0.0
      %434 = vmatmul.mubr.f32.gmra.mrb[0].mxu0 %v272
      %v435 = vpop.f32.mrb[0].mxu0
      %v436 = vadd.f32 0.0, %v435
      %v437 = vpop.f32.mrb[0].mxu0
      %438 = vmatprep.mubr.f32.mxu0 0.0
      %439 = vmatmul.mubr.f32.gmra.mrb[0].mxu0 %v273
      %v440 = vpop.f32.mrb[0].mxu0
      %v441 = vadd.f32 0.0, %v440
      %v442 = vpop.f32.mrb[0].mxu0
      %443 = vmatprep.mubr.f32.mxu0 0.0
      %444 = vmatmul.mubr.f32.gmra.mrb[0].mxu0 %v274
      %v445 = vpop.f32.mrb[0].mxu0
      %v446 = vadd.f32 0.0, %v445
      %v447 = vpop.f32.mrb[0].mxu0
      %448 = vmatprep.mubr.f32.mxu0 0.0
      %449 = vmatmul.mubr.f32.gmra.mrb[0].mxu0 %v275
      %v450 = vpop.f32.mrb[0].mxu0
      %v451 = vadd.f32 0.0, %v450
      %v452 = vpop.f32.mrb[0].mxu0
      %453 = vmatprep.mubr.f32.mxu0 0.0
      %454 = vmatmul.mubr.f32.gmra.mrb[0].mxu0 %v276
      %v455 = vpop.f32.mrb[0].mxu0
      %v456 = vadd.f32 0.0, %v455
      %v457 = vpop.f32.mrb[0].mxu0
      %458 = vmatprep.mubr.f32.mxu0 0.0
      %459 = vmatmul.mubr.f32.gmra.mrb[0].mxu0 %v277
      %v460 = vpop.f32.mrb[0].mxu0
      %v461 = vadd.f32 0.0, %v460
      %v462 = vpop.f32.mrb[0].mxu0
      %463 = vmatprep.mubr.f32.mxu0 0.0
      %464 = vmatmul.mubr.f32.gmra.mrb[0].mxu0 %v278
      %v465 = vpop.f32.mrb[0].mxu0
      %v466 = vadd.f32 0.0, %v465
      %v467 = vpop.f32.mrb[0].mxu0
      %468 = vmatprep.mubr.f32.mxu0 0.0
      %469 = vmatmul.mubr.f32.gmra.mrb[0].mxu0 %v279
      %v470 = vpop.f32.mrb[0].mxu0
      %v471 = vadd.f32 0.0, %v470
      %v472 = vpop.f32.mrb[0].mxu0
      %473 = vmatprep.mubr.f32.mxu0 0.0
      %474 = vmatmul.mubr.f32.gmra.mrb[0].mxu0 %v280
      %v475 = vpop.f32.mrb[0].mxu0
      %v476 = vadd.f32 0.0, %v475
      %v477 = vpop.f32.mrb[0].mxu0
      %478 = vmatprep.mubr.f32.mxu0 0.0
      %479 = vmatmul.mubr.f32.gmra.mrb[0].mxu0 %v281
      %v480 = vpop.f32.mrb[0].mxu0
      %v481 = vadd.f32 0.0, %v480
      %v482 = vpop.f32.mrb[0].mxu0
      %483 = vmatprep.mubr.f32.mxu0 0.0
      %484 = vmatmul.mubr.f32.gmra.mrb[0].mxu0 %v282
      %v485 = vpop.f32.mrb[0].mxu0
      %v486 = vadd.f32 0.0, %v485
      %v487 = vpop.f32.mrb[0].mxu0
      %488 = vmatprep.mubr.f32.mxu0 0.0
      %489 = vmatmul.mubr.f32.gmra.mrb[0].mxu0 %v283
      %v490 = vpop.f32.mrb[0].mxu0
      %v491 = vadd.f32 0.0, %v490
      %v492 = vpop.f32.mrb[0].mxu0
      %493 = vmatprep.mubr.f32.mxu0 0.0
      %494 = vmatmul.mubr.f32.gmra.mrb[0].mxu0 %v284
      %v495 = vpop.f32.mrb[0].mxu0
      %v496 = vadd.f32 0.0, %v495
      %v497 = vpop.f32.mrb[0].mxu0
      %498 = vmatprep.mubr.f32.mxu0 0.0
      %499 = vmatmul.mubr.f32.gmra.mrb[0].mxu0 %v285
      %v500 = vpop.f32.mrb[0].mxu0
      %v501 = vadd.f32 0.0, %v500
      %v502 = vpop.f32.mrb[0].mxu0
      %503 = vmatprep.mubr.f32.mxu0 0.0
      %504 = vmatmul.mubr.f32.gmra.mrb[0].mxu0 %v286
      %v505 = vpop.f32.mrb[0].mxu0
      %v506 = vadd.f32 0.0, %v505
      %v507 = vpop.f32.mrb[0].mxu0
      %508 = vmatprep.mubr.f32.mxu0 0.0
      %509 = vmatmul.mubr.f32.gmra.mrb[0].mxu0 %v287
      %v510 = vpop.f32.mrb[0].mxu0
      %v511 = vadd.f32 0.0, %v510
      %v512 = vpop.f32.mrb[0].mxu0
      %513 = vmatprep.mubr.f32.mxu0 0.0
      %514 = vmatmul.mubr.f32.gmra.mrb[0].mxu0 %v288
      %v515 = vpop.f32.mrb[0].mxu0
      %v516 = vadd.f32 0.0, %v515
      %v517 = vpop.f32.mrb[0].mxu0
      %518 = vmatprep.mubr.f32.mxu0 0.0
      %519 = vmatmul.mubr.f32.gmra.mrb[0].mxu0 %v289
      %v520 = vpop.f32.mrb[0].mxu0
      %v521 = vadd.f32 0.0, %v520
      %v522 = vpop.f32.mrb[0].mxu0
      %523 = vmatprep.mubr.f32.mxu0 0.0
      %524 = vmatmul.mubr.f32.gmra.mrb[0].mxu0 %v290
      %v525 = vpop.f32.mrb[0].mxu0
      %v526 = vadd.f32 0.0, %v525
      %v527 = vpop.f32.mrb[0].mxu0
      %528 = vmatprep.mubr.f32.mxu0 0.0
      %529 = vmatmul.mubr.f32.gmra.mrb[0].mxu0 %v291
      %v530 = vpop.f32.mrb[0].mxu0
      %v531 = vadd.f32 0.0, %v530
      %v532 = vpop.f32.mrb[0].mxu0
      %533 = vmatprep.mubr.f32.mxu0 0.0
      %534 = vmatmul.mubr.f32.gmra.mrb[0].mxu0 %v292
      %v535 = vpop.f32.mrb[0].mxu0
      %v536 = vadd.f32 0.0, %v535
      %v537 = vpop.f32.mrb[0].mxu0
      %538 = vmatprep.mubr.f32.mxu0 0.0
      %539 = vmatmul.mubr.f32.gmra.mrb[0].mxu0 %v293
      %v540 = vpop.f32.mrb[0].mxu0
      %v541 = vadd.f32 0.0, %v540
      %v542 = vpop.f32.mrb[0].mxu0
      %543 = vmatprep.mubr.f32.mxu0 0.0
      %544 = vmatmul.mubr.f32.gmra.mrb[0].mxu0 %v294
      %v545 = vpop.f32.mrb[0].mxu0
      %v546 = vadd.f32 0.0, %v545
      %v547 = vpop.f32.mrb[0].mxu0
      %548 = vmatprep.mubr.f32.mxu0 0.0
      %549 = vmatmul.mubr.f32.gmra.mrb[0].mxu0 %v295
      %v550 = vpop.f32.mrb[0].mxu0
      %v551 = vadd.f32 0.0, %v550
      %v552 = vpop.f32.mrb[0].mxu0
      %553 = vmatprep.mubr.f32.mxu0 0.0
      %554 = vmatmul.mubr.f32.gmra.mrb[0].mxu0 %v296
      %v555 = vpop.f32.mrb[0].mxu0
      %v556 = vadd.f32 0.0, %v555
      %v557 = vpop.f32.mrb[0].mxu0
      %558 = vdwg.mxu0
      %559 = vmatprep.subr.mxu0 0.0
      %560 = vmatpush1.msra.mxu0 %v245
      %561 = vmatprep.subr.mxu0 0.0
      %562 = vmatpush1.msra.mxu0 %v246
      %563 = vmatprep.subr.mxu0 0.0
      %564 = vmatpush1.msra.mxu0 %v247
      %565 = vmatprep.subr.mxu0 0.0
      %566 = vmatpush1.msra.mxu0 %v248
      %567 = vmatprep.subr.mxu0 0.0
      %568 = vmatpush1.msra.mxu0 %v249
      %569 = vmatprep.subr.mxu0 0.0
      %570 = vmatpush1.msra.mxu0 %v250
      %571 = vmatprep.subr.mxu0 0.0
      %572 = vmatpush1.msra.mxu0 %v251
      %573 = vmatprep.subr.mxu0 0.0
      %574 = vmatpush1.msra.mxu0 %v252
      %575 = vmatprep.subr.mxu0 0.0
      %576 = vmatpush1.msra.mxu0 %v253
      %577 = vmatprep.subr.mxu0 0.0
      %578 = vmatpush1.msra.mxu0 %v254
      %579 = vmatprep.subr.mxu0 0.0
      %580 = vmatpush1.msra.mxu0 %v255
      %581 = vmatprep.subr.mxu0 0.0
      %582 = vmatpush1.msra.mxu0 %v256
      %583 = vmatprep.subr.mxu0 0.0
      %584 = vmatpush1.msra.mxu0 %v257
      %585 = vmatprep.subr.mxu0 0.0
      %586 = vmatpush1.msra.mxu0 %v258
      %587 = vmatprep.subr.mxu0 0.0
      %588 = vmatpush1.msra.mxu0 %v259
      %589 = vmatprep.subr.mxu0 0.0
      %590 = vmatpush1.msra.mxu0 %v260
      %591 = vmatprep.subr.mxu0 0.0
      %592 = vmatpush1.msra.mxu0 0.0
      %593 = vmatprep.subr.mxu0 0.0
      %594 = vmatpush1.msra.mxu0 0.0
      %595 = vmatprep.subr.mxu0 0.0
      %596 = vmatpush1.msra.mxu0 0.0
      %597 = vmatprep.subr.mxu0 0.0
      %598 = vmatpush1.msra.mxu0 0.0
      %599 = vmatprep.subr.mxu0 0.0
      %600 = vmatpush1.msra.mxu0 0.0
      %601 = vmatprep.subr.mxu0 0.0
      %602 = vmatpush1.msra.mxu0 0.0
      %603 = vmatprep.subr.mxu0 0.0
      %604 = vmatpush1.msra.mxu0 0.0
      %605 = vmatprep.subr.mxu0 0.0
      %606 = vmatpush1.msra.mxu0 0.0
      %607 = vmatprep.subr.mxu0 0.0
      %608 = vmatpush1.msra.mxu0 0.0
      %609 = vmatprep.subr.mxu0 0.0
      %610 = vmatpush1.msra.mxu0 0.0
      %611 = vmatprep.subr.mxu0 0.0
      %612 = vmatpush1.msra.mxu0 0.0
      %613 = vmatprep.subr.mxu0 0.0
      %614 = vmatpush1.msra.mxu0 0.0
      %615 = vmatprep.subr.mxu0 0.0
      %616 = vmatpush1.msra.mxu0 0.0
      %617 = vmatprep.subr.mxu0 0.0
      %618 = vmatpush1.msra.mxu0 0.0
      %619 = vmatprep.subr.mxu0 0.0
      %620 = vmatpush1.msra.mxu0 0.0
      %621 = vmatprep.subr.mxu0 0.0
      %622 = vmatpush1.msra.mxu0 0.0
      %623 = vmatprep.mubr.f32.mxu0 0.0
      %624 = vmatmul.mubr.f32.gmra.mrb[0].mxu0 %v209
      %v625 = vpop.f32.mrb[0].mxu0
      %v626 = vadd.f32 %v381, %v625
      %v627 = vpop.f32.mrb[0].mxu0
      %628 = vmatprep.mubr.f32.mxu0 0.0
      %629 = vmatmul.mubr.f32.gmra.mrb[0].mxu0 %v210
      %v630 = vpop.f32.mrb[0].mxu0
      %v631 = vadd.f32 %v386, %v630
      %v632 = vpop.f32.mrb[0].mxu0
      %633 = vmatprep.mubr.f32.mxu0 0.0
      %634 = vmatmul.mubr.f32.gmra.mrb[0].mxu0 %v211
      %v635 = vpop.f32.mrb[0].mxu0
      %v636 = vadd.f32 %v391, %v635
      %v637 = vpop.f32.mrb[0].mxu0
      %638 = vmatprep.mubr.f32.mxu0 0.0
      %639 = vmatmul.mubr.f32.gmra.mrb[0].mxu0 %v212
      %v640 = vpop.f32.mrb[0].mxu0
      %v641 = vadd.f32 %v396, %v640
      %v642 = vpop.f32.mrb[0].mxu0
      %643 = vmatprep.mubr.f32.mxu0 0.0
      %644 = vmatmul.mubr.f32.gmra.mrb[0].mxu0 %v213
      %v645 = vpop.f32.mrb[0].mxu0
      %v646 = vadd.f32 %v401, %v645
      %v647 = vpop.f32.mrb[0].mxu0
      %648 = vmatprep.mubr.f32.mxu0 0.0
      %649 = vmatmul.mubr.f32.gmra.mrb[0].mxu0 %v214
      %v650 = vpop.f32.mrb[0].mxu0
      %v651 = vadd.f32 %v406, %v650
      %v652 = vpop.f32.mrb[0].mxu0
      %653 = vmatprep.mubr.f32.mxu0 0.0
      %654 = vmatmul.mubr.f32.gmra.mrb[0].mxu0 %v215
      %v655 = vpop.f32.mrb[0].mxu0
      %v656 = vadd.f32 %v411, %v655
      %v657 = vpop.f32.mrb[0].mxu0
      %658 = vmatprep.mubr.f32.mxu0 0.0
      %659 = vmatmul.mubr.f32.gmra.mrb[0].mxu0 %v216
      %v660 = vpop.f32.mrb[0].mxu0
      %v661 = vadd.f32 %v416, %v660
      %v662 = vpop.f32.mrb[0].mxu0
      %663 = vmatprep.mubr.f32.mxu0 0.0
      %664 = vmatmul.mubr.f32.gmra.mrb[0].mxu0 %v217
      %v665 = vpop.f32.mrb[0].mxu0
      %v666 = vadd.f32 %v421, %v665
      %v667 = vpop.f32.mrb[0].mxu0
      %668 = vmatprep.mubr.f32.mxu0 0.0
      %669 = vmatmul.mubr.f32.gmra.mrb[0].mxu0 %v218
      %v670 = vpop.f32.mrb[0].mxu0
      %v671 = vadd.f32 %v426, %v670
      %v672 = vpop.f32.mrb[0].mxu0
      %673 = vmatprep.mubr.f32.mxu0 0.0
      %674 = vmatmul.mubr.f32.gmra.mrb[0].mxu0 %v219
      %v675 = vpop.f32.mrb[0].mxu0
      %v676 = vadd.f32 %v431, %v675
      %v677 = vpop.f32.mrb[0].mxu0
      %678 = vmatprep.mubr.f32.mxu0 0.0
      %679 = vmatmul.mubr.f32.gmra.mrb[0].mxu0 %v220
      %v680 = vpop.f32.mrb[0].mxu0
      %v681 = vadd.f32 %v436, %v680
      %v682 = vpop.f32.mrb[0].mxu0
      %683 = vmatprep.mubr.f32.mxu0 0.0
      %684 = vmatmul.mubr.f32.gmra.mrb[0].mxu0 %v221
      %v685 = vpop.f32.mrb[0].mxu0
      %v686 = vadd.f32 %v441, %v685
      %v687 = vpop.f32.mrb[0].mxu0
      %688 = vmatprep.mubr.f32.mxu0 0.0
      %689 = vmatmul.mubr.f32.gmra.mrb[0].mxu0 %v222
      %v690 = vpop.f32.mrb[0].mxu0
      %v691 = vadd.f32 %v446, %v690
      %v692 = vpop.f32.mrb[0].mxu0
      %693 = vmatprep.mubr.f32.mxu0 0.0
      %694 = vmatmul.mubr.f32.gmra.mrb[0].mxu0 %v223
      %v695 = vpop.f32.mrb[0].mxu0
      %v696 = vadd.f32 %v451, %v695
      %v697 = vpop.f32.mrb[0].mxu0
      %698 = vmatprep.mubr.f32.mxu0 0.0
      %699 = vmatmul.mubr.f32.gmra.mrb[0].mxu0 %v224
      %v700 = vpop.f32.mrb[0].mxu0
      %v701 = vadd.f32 %v456, %v700
      %v702 = vpop.f32.mrb[0].mxu0
      %703 = vmatprep.mubr.f32.mxu0 0.0
      %704 = vmatmul.mubr.f32.gmra.mrb[0].mxu0 %v225
      %v705 = vpop.f32.mrb[0].mxu0
      %v706 = vadd.f32 %v461, %v705
      %v707 = vpop.f32.mrb[0].mxu0
      %708 = vmatprep.mubr.f32.mxu0 0.0
      %709 = vmatmul.mubr.f32.gmra.mrb[0].mxu0 %v226
      %v710 = vpop.f32.mrb[0].mxu0
      %v711 = vadd.f32 %v466, %v710
      %v712 = vpop.f32.mrb[0].mxu0
      %713 = vmatprep.mubr.f32.mxu0 0.0
      %714 = vmatmul.mubr.f32.gmra.mrb[0].mxu0 %v227
      %v715 = vpop.f32.mrb[0].mxu0
      %v716 = vadd.f32 %v471, %v715
      %v717 = vpop.f32.mrb[0].mxu0
      %718 = vmatprep.mubr.f32.mxu0 0.0
      %719 = vmatmul.mubr.f32.gmra.mrb[0].mxu0 %v228
      %v720 = vpop.f32.mrb[0].mxu0
      %v721 = vadd.f32 %v476, %v720
      %v722 = vpop.f32.mrb[0].mxu0
      %723 = vmatprep.mubr.f32.mxu0 0.0
      %724 = vmatmul.mubr.f32.gmra.mrb[0].mxu0 %v229
      %v725 = vpop.f32.mrb[0].mxu0
      %v726 = vadd.f32 %v481, %v725
      %v727 = vpop.f32.mrb[0].mxu0
      %728 = vmatprep.mubr.f32.mxu0 0.0
      %729 = vmatmul.mubr.f32.gmra.mrb[0].mxu0 %v230
      %v730 = vpop.f32.mrb[0].mxu0
      %v731 = vadd.f32 %v486, %v730
      %v732 = vpop.f32.mrb[0].mxu0
      %733 = vmatprep.mubr.f32.mxu0 0.0
      %734 = vmatmul.mubr.f32.gmra.mrb[0].mxu0 %v231
      %v735 = vpop.f32.mrb[0].mxu0
      %v736 = vadd.f32 %v491, %v735
      %v737 = vpop.f32.mrb[0].mxu0
      %738 = vmatprep.mubr.f32.mxu0 0.0
      %739 = vmatmul.mubr.f32.gmra.mrb[0].mxu0 %v232
      %v740 = vpop.f32.mrb[0].mxu0
      %v741 = vadd.f32 %v496, %v740
      %v742 = vpop.f32.mrb[0].mxu0
      %743 = vmatprep.mubr.f32.mxu0 0.0
      %744 = vmatmul.mubr.f32.gmra.mrb[0].mxu0 %v233
      %v745 = vpop.f32.mrb[0].mxu0
      %v746 = vadd.f32 %v501, %v745
      %v747 = vpop.f32.mrb[0].mxu0
      %748 = vmatprep.mubr.f32.mxu0 0.0
      %749 = vmatmul.mubr.f32.gmra.mrb[0].mxu0 %v234
      %v750 = vpop.f32.mrb[0].mxu0
      %v751 = vadd.f32 %v506, %v750
      %v752 = vpop.f32.mrb[0].mxu0
      %753 = vmatprep.mubr.f32.mxu0 0.0
      %754 = vmatmul.mubr.f32.gmra.mrb[0].mxu0 %v235
      %v755 = vpop.f32.mrb[0].mxu0
      %v756 = vadd.f32 %v511, %v755
      %v757 = vpop.f32.mrb[0].mxu0
      %758 = vmatprep.mubr.f32.mxu0 0.0
      %759 = vmatmul.mubr.f32.gmra.mrb[0].mxu0 %v236
      %v760 = vpop.f32.mrb[0].mxu0
      %v761 = vadd.f32 %v516, %v760
      %v762 = vpop.f32.mrb[0].mxu0
      %763 = vmatprep.mubr.f32.mxu0 0.0
      %764 = vmatmul.mubr.f32.gmra.mrb[0].mxu0 %v237
      %v765 = vpop.f32.mrb[0].mxu0
      %v766 = vadd.f32 %v521, %v765
      %v767 = vpop.f32.mrb[0].mxu0
      %768 = vmatprep.mubr.f32.mxu0 0.0
      %769 = vmatmul.mubr.f32.gmra.mrb[0].mxu0 %v238
      %v770 = vpop.f32.mrb[0].mxu0
      %v771 = vadd.f32 %v526, %v770
      %v772 = vpop.f32.mrb[0].mxu0
      %773 = vmatprep.mubr.f32.mxu0 0.0
      %774 = vmatmul.mubr.f32.gmra.mrb[0].mxu0 %v239
      %v775 = vpop.f32.mrb[0].mxu0
      %v776 = vadd.f32 %v531, %v775
      %v777 = vpop.f32.mrb[0].mxu0
      %778 = vmatprep.mubr.f32.mxu0 0.0
      %779 = vmatmul.mubr.f32.gmra.mrb[0].mxu0 %v240
      %v780 = vpop.f32.mrb[0].mxu0
      %v781 = vadd.f32 %v536, %v780
      %v782 = vpop.f32.mrb[0].mxu0
      %783 = vmatprep.mubr.f32.mxu0 0.0
      %784 = vmatmul.mubr.f32.gmra.mrb[0].mxu0 %v241
      %v785 = vpop.f32.mrb[0].mxu0
      %v786 = vadd.f32 %v541, %v785
      %v787 = vpop.f32.mrb[0].mxu0
      %788 = vmatprep.mubr.f32.mxu0 0.0
      %789 = vmatmul.mubr.f32.gmra.mrb[0].mxu0 %v242
      %v790 = vpop.f32.mrb[0].mxu0
      %v791 = vadd.f32 %v546, %v790
      %v792 = vpop.f32.mrb[0].mxu0
      %793 = vmatprep.mubr.f32.mxu0 0.0
      %794 = vmatmul.mubr.f32.gmra.mrb[0].mxu0 %v243
      %v795 = vpop.f32.mrb[0].mxu0
      %v796 = vadd.f32 %v551, %v795
      %v797 = vpop.f32.mrb[0].mxu0
      %798 = vmatprep.mubr.f32.mxu0 0.0
      %799 = vmatmul.mubr.f32.gmra.mrb[0].mxu0 %v244
      %v800 = vpop.f32.mrb[0].mxu0
      %v801 = vadd.f32 %v556, %v800
      %v802 = vpop.f32.mrb[0].mxu0
      %803 = vdwg.mxu0
      %v804 = vld [vmem:[%s199 + $0x2] sm:$0xff]
      %v805 = vld [vmem:[%s199 + $0xa] sm:$0xff]
      %v806 = vld [vmem:[%s199 + $0x12] sm:$0xff]
      %v807 = vld [vmem:[%s199 + $0x1a] sm:$0xff]
      %v808 = vld [vmem:[%s199 + $0x22] sm:$0xff]
      %v809 = vld [vmem:[%s199 + $0x2a] sm:$0xff]
      %v810 = vld [vmem:[%s199 + $0x32] sm:$0xff]
      %v811 = vld [vmem:[%s199 + $0x3a] sm:$0xff]
      %v812 = vld [vmem:[%s199 + $0x42] sm:$0xff]
      %v813 = vld [vmem:[%s199 + $0x4a] sm:$0xff]
      %v814 = vld [vmem:[%s199 + $0x52] sm:$0xff]
      %v815 = vld [vmem:[%s199 + $0x5a] sm:$0xff]
      %v816 = vld [vmem:[%s199 + $0x62] sm:$0xff]
      %v817 = vld [vmem:[%s199 + $0x6a] sm:$0xff]
      %v818 = vld [vmem:[%s199 + $0x72] sm:$0xff]
      %v819 = vld [vmem:[%s199 + $0x7a] sm:$0xff]
      %v820 = vld [vmem:[%s199 + $0x82] sm:$0xff]
      %v821 = vld [vmem:[%s199 + $0x8a] sm:$0xff]
      %v822 = vld [vmem:[%s199 + $0x92] sm:$0xff]
      %v823 = vld [vmem:[%s199 + $0x9a] sm:$0xff]
      %v824 = vld [vmem:[%s199 + $0xa2] sm:$0xff]
      %v825 = vld [vmem:[%s199 + $0xaa] sm:$0xff]
      %v826 = vld [vmem:[%s199 + $0xb2] sm:$0xff]
      %v827 = vld [vmem:[%s199 + $0xba] sm:$0xff]
      %v828 = vld [vmem:[%s199 + $0xc2] sm:$0xff]
      %v829 = vld [vmem:[%s199 + $0xca] sm:$0xff]
      %v830 = vld [vmem:[%s199 + $0xd2] sm:$0xff]
      %v831 = vld [vmem:[%s199 + $0xda] sm:$0xff]
      %v832 = vld [vmem:[%s199 + $0xe2] sm:$0xff]
      %v833 = vld [vmem:[%s199 + $0xea] sm:$0xff]
      %v834 = vld [vmem:[%s199 + $0xf2] sm:$0xff]
      %v835 = vld [vmem:[%s199 + $0xfa] sm:$0xff]
      %v836 = vld [vmem:[%s199 + $0x102] sm:$0xff]
      %v837 = vld [vmem:[%s199 + $0x10a] sm:$0xff]
      %v838 = vld [vmem:[%s199 + $0x112] sm:$0xff]
      %v839 = vld [vmem:[%s199 + $0x11a] sm:$0xff]
      %s840 = scalar_lea.vmem %s1, 256
      %v841 = vld [vmem:[%s840] sm:$0xff]
      %v842 = vld [vmem:[%s840 + $0x8] sm:$0xff]
      %v843 = vld [vmem:[%s840 + $0x10] sm:$0xff]
      %v844 = vld [vmem:[%s840 + $0x18] sm:$0xff]
      %v845 = vld [vmem:[%s840 + $0x20] sm:$0xff]
      %v846 = vld [vmem:[%s840 + $0x28] sm:$0xff]
      %v847 = vld [vmem:[%s840 + $0x30] sm:$0xff]
      %v848 = vld [vmem:[%s840 + $0x38] sm:$0xff]
      %v849 = vld [vmem:[%s840 + $0x40] sm:$0xff]
      %v850 = vld [vmem:[%s840 + $0x48] sm:$0xff]
      %v851 = vld [vmem:[%s840 + $0x50] sm:$0xff]
      %v852 = vld [vmem:[%s840 + $0x58] sm:$0xff]
      %v853 = vld [vmem:[%s840 + $0x60] sm:$0xff]
      %v854 = vld [vmem:[%s840 + $0x68] sm:$0xff]
      %v855 = vld [vmem:[%s840 + $0x70] sm:$0xff]
      %v856 = vld [vmem:[%s840 + $0x78] sm:$0xff]
      %857 = vmatprep.subr.mxu0 0.0
      %858 = vmatpush1.msra.mxu0 %v841
      %859 = vmatprep.subr.mxu0 0.0
      %860 = vmatpush1.msra.mxu0 %v842
      %861 = vmatprep.subr.mxu0 0.0
      %862 = vmatpush1.msra.mxu0 %v843
      %863 = vmatprep.subr.mxu0 0.0
      %864 = vmatpush1.msra.mxu0 %v844
      %865 = vmatprep.subr.mxu0 0.0
      %866 = vmatpush1.msra.mxu0 %v845
      %867 = vmatprep.subr.mxu0 0.0
      %868 = vmatpush1.msra.mxu0 %v846
      %869 = vmatprep.subr.mxu0 0.0
      %870 = vmatpush1.msra.mxu0 %v847
      %871 = vmatprep.subr.mxu0 0.0
      %872 = vmatpush1.msra.mxu0 %v848
      %873 = vmatprep.subr.mxu0 0.0
      %874 = vmatpush1.msra.mxu0 %v849
      %875 = vmatprep.subr.mxu0 0.0
      %876 = vmatpush1.msra.mxu0 %v850
      %877 = vmatprep.subr.mxu0 0.0
      %878 = vmatpush1.msra.mxu0 %v851
      %879 = vmatprep.subr.mxu0 0.0
      %880 = vmatpush1.msra.mxu0 %v852
      %881 = vmatprep.subr.mxu0 0.0
      %882 = vmatpush1.msra.mxu0 %v853
      %883 = vmatprep.subr.mxu0 0.0
      %884 = vmatpush1.msra.mxu0 %v854
      %885 = vmatprep.subr.mxu0 0.0
      %886 = vmatpush1.msra.mxu0 %v855
      %887 = vmatprep.subr.mxu0 0.0
      %888 = vmatpush1.msra.mxu0 %v856
      %889 = vmatprep.subr.mxu0 0.0
      %890 = vmatpush1.msra.mxu0 0.0
      %891 = vmatprep.subr.mxu0 0.0
      %892 = vmatpush1.msra.mxu0 0.0
      %893 = vmatprep.subr.mxu0 0.0
      %894 = vmatpush1.msra.mxu0 0.0
      %895 = vmatprep.subr.mxu0 0.0
      %896 = vmatpush1.msra.mxu0 0.0
      %897 = vmatprep.subr.mxu0 0.0
      %898 = vmatpush1.msra.mxu0 0.0
      %899 = vmatprep.subr.mxu0 0.0
      %900 = vmatpush1.msra.mxu0 0.0
      %901 = vmatprep.subr.mxu0 0.0
      %902 = vmatpush1.msra.mxu0 0.0
      %903 = vmatprep.subr.mxu0 0.0
      %904 = vmatpush1.msra.mxu0 0.0
      %905 = vmatprep.subr.mxu0 0.0
      %906 = vmatpush1.msra.mxu0 0.0
      %907 = vmatprep.subr.mxu0 0.0
      %908 = vmatpush1.msra.mxu0 0.0
      %909 = vmatprep.subr.mxu0 0.0
      %910 = vmatpush1.msra.mxu0 0.0
      %911 = vmatprep.subr.mxu0 0.0
      %912 = vmatpush1.msra.mxu0 0.0
      %913 = vmatprep.subr.mxu0 0.0
      %914 = vmatpush1.msra.mxu0 0.0
      %915 = vmatprep.subr.mxu0 0.0
      %916 = vmatpush1.msra.mxu0 0.0
      %917 = vmatprep.subr.mxu0 0.0
      %918 = vmatpush1.msra.mxu0 0.0
      %919 = vmatprep.subr.mxu0 0.0
      %920 = vmatpush1.msra.mxu0 0.0
      %921 = vmatprep.mubr.f32.mxu0 0.0
      %922 = vmatmul.mubr.f32.gmra.mrb[0].mxu0 %v804
      %v923 = vpop.f32.mrb[0].mxu0
      %v924 = vadd.f32 0.0, %v923
      %v925 = vpop.f32.mrb[0].mxu0
      %926 = vmatprep.mubr.f32.mxu0 0.0
      %927 = vmatmul.mubr.f32.gmra.mrb[0].mxu0 %v805
      %v928 = vpop.f32.mrb[0].mxu0
      %v929 = vadd.f32 0.0, %v928
      %v930 = vpop.f32.mrb[0].mxu0
      %931 = vmatprep.mubr.f32.mxu0 0.0
      %932 = vmatmul.mubr.f32.gmra.mrb[0].mxu0 %v806
      %v933 = vpop.f32.mrb[0].mxu0
      %v934 = vadd.f32 0.0, %v933
      %v935 = vpop.f32.mrb[0].mxu0
      %936 = vmatprep.mubr.f32.mxu0 0.0
      %937 = vmatmul.mubr.f32.gmra.mrb[0].mxu0 %v807
      %v938 = vpop.f32.mrb[0].mxu0
      %v939 = vadd.f32 0.0, %v938
      %v940 = vpop.f32.mrb[0].mxu0
      %941 = vmatprep.mubr.f32.mxu0 0.0
      %942 = vmatmul.mubr.f32.gmra.mrb[0].mxu0 %v808
      %v943 = vpop.f32.mrb[0].mxu0
      %v944 = vadd.f32 0.0, %v943
      %v945 = vpop.f32.mrb[0].mxu0
      %946 = vmatprep.mubr.f32.mxu0 0.0
      %947 = vmatmul.mubr.f32.gmra.mrb[0].mxu0 %v809
      %v948 = vpop.f32.mrb[0].mxu0
      %v949 = vadd.f32 0.0, %v948
      %v950 = vpop.f32.mrb[0].mxu0
      %951 = vmatprep.mubr.f32.mxu0 0.0
      %952 = vmatmul.mubr.f32.gmra.mrb[0].mxu0 %v810
      %v953 = vpop.f32.mrb[0].mxu0
      %v954 = vadd.f32 0.0, %v953
      %v955 = vpop.f32.mrb[0].mxu0
      %956 = vmatprep.mubr.f32.mxu0 0.0
      %957 = vmatmul.mubr.f32.gmra.mrb[0].mxu0 %v811
      %v958 = vpop.f32.mrb[0].mxu0
      %v959 = vadd.f32 0.0, %v958
      %v960 = vpop.f32.mrb[0].mxu0
      %961 = vmatprep.mubr.f32.mxu0 0.0
      %962 = vmatmul.mubr.f32.gmra.mrb[0].mxu0 %v812
      %v963 = vpop.f32.mrb[0].mxu0
      %v964 = vadd.f32 0.0, %v963
      %v965 = vpop.f32.mrb[0].mxu0
      %966 = vmatprep.mubr.f32.mxu0 0.0
      %967 = vmatmul.mubr.f32.gmra.mrb[0].mxu0 %v813
      %v968 = vpop.f32.mrb[0].mxu0
      %v969 = vadd.f32 0.0, %v968
      %v970 = vpop.f32.mrb[0].mxu0
      %971 = vmatprep.mubr.f32.mxu0 0.0
      %972 = vmatmul.mubr.f32.gmra.mrb[0].mxu0 %v814
      %v973 = vpop.f32.mrb[0].mxu0
      %v974 = vadd.f32 0.0, %v973
      %v975 = vpop.f32.mrb[0].mxu0
      %976 = vmatprep.mubr.f32.mxu0 0.0
      %977 = vmatmul.mubr.f32.gmra.mrb[0].mxu0 %v815
      %v978 = vpop.f32.mrb[0].mxu0
      %v979 = vadd.f32 0.0, %v978
      %v980 = vpop.f32.mrb[0].mxu0
      %981 = vmatprep.mubr.f32.mxu0 0.0
      %982 = vmatmul.mubr.f32.gmra.mrb[0].mxu0 %v816
      %v983 = vpop.f32.mrb[0].mxu0
      %v984 = vadd.f32 0.0, %v983
      %v985 = vpop.f32.mrb[0].mxu0
      %986 = vmatprep.mubr.f32.mxu0 0.0
      %987 = vmatmul.mubr.f32.gmra.mrb[0].mxu0 %v817
      %v988 = vpop.f32.mrb[0].mxu0
      %v989 = vadd.f32 0.0, %v988
      %v990 = vpop.f32.mrb[0].mxu0
      %991 = vmatprep.mubr.f32.mxu0 0.0
      %992 = vmatmul.mubr.f32.gmra.mrb[0].mxu0 %v818
      %v993 = vpop.f32.mrb[0].mxu0
      %v994 = vadd.f32 0.0, %v993
      %v995 = vpop.f32.mrb[0].mxu0
      %996 = vmatprep.mubr.f32.mxu0 0.0
      %997 = vmatmul.mubr.f32.gmra.mrb[0].mxu0 %v819
      %v998 = vpop.f32.mrb[0].mxu0
      %v999 = vadd.f32 0.0, %v998
      %v1000 = vpop.f32.mrb[0].mxu0
      %1001 = vmatprep.mubr.f32.mxu0 0.0
      %1002 = vmatmul.mubr.f32.gmra.mrb[0].mxu0 %v820
      %v1003 = vpop.f32.mrb[0].mxu0
      %v1004 = vadd.f32 0.0, %v1003
      %v1005 = vpop.f32.mrb[0].mxu0
      %1006 = vmatprep.mubr.f32.mxu0 0.0
      %1007 = vmatmul.mubr.f32.gmra.mrb[0].mxu0 %v821
      %v1008 = vpop.f32.mrb[0].mxu0
      %v1009 = vadd.f32 0.0, %v1008
      %v1010 = vpop.f32.mrb[0].mxu0
      %1011 = vmatprep.mubr.f32.mxu0 0.0
      %1012 = vmatmul.mubr.f32.gmra.mrb[0].mxu0 %v822
      %v1013 = vpop.f32.mrb[0].mxu0
      %v1014 = vadd.f32 0.0, %v1013
      %v1015 = vpop.f32.mrb[0].mxu0
      %1016 = vmatprep.mubr.f32.mxu0 0.0
      %1017 = vmatmul.mubr.f32.gmra.mrb[0].mxu0 %v823
      %v1018 = vpop.f32.mrb[0].mxu0
      %v1019 = vadd.f32 0.0, %v1018
      %v1020 = vpop.f32.mrb[0].mxu0
      %1021 = vmatprep.mubr.f32.mxu0 0.0
      %1022 = vmatmul.mubr.f32.gmra.mrb[0].mxu0 %v824
      %v1023 = vpop.f32.mrb[0].mxu0
      %v1024 = vadd.f32 0.0, %v1023
      %v1025 = vpop.f32.mrb[0].mxu0
      %1026 = vmatprep.mubr.f32.mxu0 0.0
      %1027 = vmatmul.mubr.f32.gmra.mrb[0].mxu0 %v825
      %v1028 = vpop.f32.mrb[0].mxu0
      %v1029 = vadd.f32 0.0, %v1028
      %v1030 = vpop.f32.mrb[0].mxu0
      %1031 = vmatprep.mubr.f32.mxu0 0.0
      %1032 = vmatmul.mubr.f32.gmra.mrb[0].mxu0 %v826
      %v1033 = vpop.f32.mrb[0].mxu0
      %v1034 = vadd.f32 0.0, %v1033
      %v1035 = vpop.f32.mrb[0].mxu0
      %1036 = vmatprep.mubr.f32.mxu0 0.0
      %1037 = vmatmul.mubr.f32.gmra.mrb[0].mxu0 %v827
      %v1038 = vpop.f32.mrb[0].mxu0
      %v1039 = vadd.f32 0.0, %v1038
      %v1040 = vpop.f32.mrb[0].mxu0
      %1041 = vmatprep.mubr.f32.mxu0 0.0
      %1042 = vmatmul.mubr.f32.gmra.mrb[0].mxu0 %v828
      %v1043 = vpop.f32.mrb[0].mxu0
      %v1044 = vadd.f32 0.0, %v1043
      %v1045 = vpop.f32.mrb[0].mxu0
      %1046 = vmatprep.mubr.f32.mxu0 0.0
      %1047 = vmatmul.mubr.f32.gmra.mrb[0].mxu0 %v829
      %v1048 = vpop.f32.mrb[0].mxu0
      %v1049 = vadd.f32 0.0, %v1048
      %v1050 = vpop.f32.mrb[0].mxu0
      %1051 = vmatprep.mubr.f32.mxu0 0.0
      %1052 = vmatmul.mubr.f32.gmra.mrb[0].mxu0 %v830
      %v1053 = vpop.f32.mrb[0].mxu0
      %v1054 = vadd.f32 0.0, %v1053
      %v1055 = vpop.f32.mrb[0].mxu0
      %1056 = vmatprep.mubr.f32.mxu0 0.0
      %1057 = vmatmul.mubr.f32.gmra.mrb[0].mxu0 %v831
      %v1058 = vpop.f32.mrb[0].mxu0
      %v1059 = vadd.f32 0.0, %v1058
      %v1060 = vpop.f32.mrb[0].mxu0
      %1061 = vmatprep.mubr.f32.mxu0 0.0
      %1062 = vmatmul.mubr.f32.gmra.mrb[0].mxu0 %v832
      %v1063 = vpop.f32.mrb[0].mxu0
      %v1064 = vadd.f32 0.0, %v1063
      %v1065 = vpop.f32.mrb[0].mxu0
      %1066 = vmatprep.mubr.f32.mxu0 0.0
      %1067 = vmatmul.mubr.f32.gmra.mrb[0].mxu0 %v833
      %v1068 = vpop.f32.mrb[0].mxu0
      %v1069 = vadd.f32 0.0, %v1068
      %v1070 = vpop.f32.mrb[0].mxu0
      %1071 = vmatprep.mubr.f32.mxu0 0.0
      %1072 = vmatmul.mubr.f32.gmra.mrb[0].mxu0 %v834
      %v1073 = vpop.f32.mrb[0].mxu0
      %v1074 = vadd.f32 0.0, %v1073
      %v1075 = vpop.f32.mrb[0].mxu0
      %1076 = vmatprep.mubr.f32.mxu0 0.0
      %1077 = vmatmul.mubr.f32.gmra.mrb[0].mxu0 %v835
      %v1078 = vpop.f32.mrb[0].mxu0
      %v1079 = vadd.f32 0.0, %v1078
      %v1080 = vpop.f32.mrb[0].mxu0
      %1081 = vmatprep.mubr.f32.mxu0 0.0
      %1082 = vmatmul.mubr.f32.gmra.mrb[0].mxu0 %v836
      %v1083 = vpop.f32.mrb[0].mxu0
      %v1084 = vadd.f32 0.0, %v1083
      %v1085 = vpop.f32.mrb[0].mxu0
      %1086 = vmatprep.mubr.f32.mxu0 0.0
      %1087 = vmatmul.mubr.f32.gmra.mrb[0].mxu0 %v837
      %v1088 = vpop.f32.mrb[0].mxu0
      %v1089 = vadd.f32 0.0, %v1088
      %v1090 = vpop.f32.mrb[0].mxu0
      %1091 = vmatprep.mubr.f32.mxu0 0.0
      %1092 = vmatmul.mubr.f32.gmra.mrb[0].mxu0 %v838
      %v1093 = vpop.f32.mrb[0].mxu0
      %v1094 = vadd.f32 0.0, %v1093
      %v1095 = vpop.f32.mrb[0].mxu0
      %1096 = vmatprep.mubr.f32.mxu0 0.0
      %1097 = vmatmul.mubr.f32.gmra.mrb[0].mxu0 %v839
      %v1098 = vpop.f32.mrb[0].mxu0
      %v1099 = vadd.f32 0.0, %v1098
      %v1100 = vpop.f32.mrb[0].mxu0
      %1101 = vdwg.mxu0
      %v1102 = vadd.f32 %v626, %v924
      %v1103 = vadd.f32 %v631, %v929
      %v1104 = vadd.f32 %v636, %v934
      %v1105 = vadd.f32 %v641, %v939
      %v1106 = vadd.f32 %v646, %v944
      %v1107 = vadd.f32 %v651, %v949
      %v1108 = vadd.f32 %v656, %v954
      %v1109 = vadd.f32 %v661, %v959
      %v1110 = vadd.f32 %v666, %v964
      %v1111 = vadd.f32 %v671, %v969
      %v1112 = vadd.f32 %v676, %v974
      %v1113 = vadd.f32 %v681, %v979
      %v1114 = vadd.f32 %v686, %v984
      %v1115 = vadd.f32 %v691, %v989
      %v1116 = vadd.f32 %v696, %v994
      %v1117 = vadd.f32 %v701, %v999
      %v1118 = vadd.f32 %v706, %v1004
      %v1119 = vadd.f32 %v711, %v1009
      %v1120 = vadd.f32 %v716, %v1014
      %v1121 = vadd.f32 %v721, %v1019
      %v1122 = vadd.f32 %v726, %v1024
      %v1123 = vadd.f32 %v731, %v1029
      %v1124 = vadd.f32 %v736, %v1034
      %v1125 = vadd.f32 %v741, %v1039
      %v1126 = vadd.f32 %v746, %v1044
      %v1127 = vadd.f32 %v751, %v1049
      %v1128 = vadd.f32 %v756, %v1054
      %v1129 = vadd.f32 %v761, %v1059
      %v1130 = vadd.f32 %v766, %v1064
      %v1131 = vadd.f32 %v771, %v1069
      %v1132 = vadd.f32 %v776, %v1074
      %v1133 = vadd.f32 %v781, %v1079
      %v1134 = vadd.f32 %v786, %v1084
      %v1135 = vadd.f32 %v791, %v1089
      %v1136 = vadd.f32 %v796, %v1094
      %v1137 = vadd.f32 %v801, %v1099
      %v1138 = vld [vmem:[%s199 + $0x12] sm:$0xff]
      %v1139 = vld [vmem:[%s199 + $0x1a] sm:$0xff]
      %v1140 = vld [vmem:[%s199 + $0x22] sm:$0xff]
      %v1141 = vld [vmem:[%s199 + $0x2a] sm:$0xff]
      %v1142 = vld [vmem:[%s199 + $0x32] sm:$0xff]
      %v1143 = vld [vmem:[%s199 + $0x3a] sm:$0xff]
      %v1144 = vld [vmem:[%s199 + $0x42] sm:$0xff]
      %v1145 = vld [vmem:[%s199 + $0x4a] sm:$0xff]
      %v1146 = vld [vmem:[%s199 + $0x52] sm:$0xff]
      %v1147 = vld [vmem:[%s199 + $0x5a] sm:$0xff]
      %v1148 = vld [vmem:[%s199 + $0x62] sm:$0xff]
      %v1149 = vld [vmem:[%s199 + $0x6a] sm:$0xff]
      %v1150 = vld [vmem:[%s199 + $0x72] sm:$0xff]
      %v1151 = vld [vmem:[%s199 + $0x7a] sm:$0xff]
      %v1152 = vld [vmem:[%s199 + $0x82] sm:$0xff]
      %v1153 = vld [vmem:[%s199 + $0x8a] sm:$0xff]
      %v1154 = vld [vmem:[%s199 + $0x92] sm:$0xff]
      %v1155 = vld [vmem:[%s199 + $0x9a] sm:$0xff]
      %v1156 = vld [vmem:[%s199 + $0xa2] sm:$0xff]
      %v1157 = vld [vmem:[%s199 + $0xaa] sm:$0xff]
      %v1158 = vld [vmem:[%s199 + $0xb2] sm:$0xff]
      %v1159 = vld [vmem:[%s199 + $0xba] sm:$0xff]
      %v1160 = vld [vmem:[%s199 + $0xc2] sm:$0xff]
      %v1161 = vld [vmem:[%s199 + $0xca] sm:$0xff]
      %v1162 = vld [vmem:[%s199 + $0xd2] sm:$0xff]
      %v1163 = vld [vmem:[%s199 + $0xda] sm:$0xff]
      %v1164 = vld [vmem:[%s199 + $0xe2] sm:$0xff]
      %v1165 = vld [vmem:[%s199 + $0xea] sm:$0xff]
      %v1166 = vld [vmem:[%s199 + $0xf2] sm:$0xff]
      %v1167 = vld [vmem:[%s199 + $0xfa] sm:$0xff]
      %v1168 = vld [vmem:[%s199 + $0x102] sm:$0xff]
      %v1169 = vld [vmem:[%s199 + $0x10a] sm:$0xff]
      %v1170 = vld [vmem:[%s199 + $0x112] sm:$0xff]
      %v1171 = vld [vmem:[%s199 + $0x11a] sm:$0xff]
      %v1172 = vld [vmem:[%s199 + $0x122] sm:$0xff]
      %v1173 = vld [vmem:[%s199 + $0x12a] sm:$0xff]
      %s1174 = scalar_lea.vmem %s1, 384
      %v1175 = vld [vmem:[%s1174] sm:$0xff]
      %v1176 = vld [vmem:[%s1174 + $0x8] sm:$0xff]
      %v1177 = vld [vmem:[%s1174 + $0x10] sm:$0xff]
      %v1178 = vld [vmem:[%s1174 + $0x18] sm:$0xff]
      %v1179 = vld [vmem:[%s1174 + $0x20] sm:$0xff]
      %v1180 = vld [vmem:[%s1174 + $0x28] sm:$0xff]
      %v1181 = vld [vmem:[%s1174 + $0x30] sm:$0xff]
      %v1182 = vld [vmem:[%s1174 + $0x38] sm:$0xff]
      %v1183 = vld [vmem:[%s1174 + $0x40] sm:$0xff]
      %v1184 = vld [vmem:[%s1174 + $0x48] sm:$0xff]
      %v1185 = vld [vmem:[%s1174 + $0x50] sm:$0xff]
      %v1186 = vld [vmem:[%s1174 + $0x58] sm:$0xff]
      %v1187 = vld [vmem:[%s1174 + $0x60] sm:$0xff]
      %v1188 = vld [vmem:[%s1174 + $0x68] sm:$0xff]
      %v1189 = vld [vmem:[%s1174 + $0x70] sm:$0xff]
      %v1190 = vld [vmem:[%s1174 + $0x78] sm:$0xff]
      %1191 = vmatprep.subr.mxu0 0.0
      %1192 = vmatpush1.msra.mxu0 %v1175
      %1193 = vmatprep.subr.mxu0 0.0
      %1194 = vmatpush1.msra.mxu0 %v1176
      %1195 = vmatprep.subr.mxu0 0.0
      %1196 = vmatpush1.msra.mxu0 %v1177
      %1197 = vmatprep.subr.mxu0 0.0
      %1198 = vmatpush1.msra.mxu0 %v1178
      %1199 = vmatprep.subr.mxu0 0.0
      %1200 = vmatpush1.msra.mxu0 %v1179
      %1201 = vmatprep.subr.mxu0 0.0
      %1202 = vmatpush1.msra.mxu0 %v1180
      %1203 = vmatprep.subr.mxu0 0.0
      %1204 = vmatpush1.msra.mxu0 %v1181
      %1205 = vmatprep.subr.mxu0 0.0
      %1206 = vmatpush1.msra.mxu0 %v1182
      %1207 = vmatprep.subr.mxu0 0.0
      %1208 = vmatpush1.msra.mxu0 %v1183
      %1209 = vmatprep.subr.mxu0 0.0
      %1210 = vmatpush1.msra.mxu0 %v1184
      %1211 = vmatprep.subr.mxu0 0.0
      %1212 = vmatpush1.msra.mxu0 %v1185
      %1213 = vmatprep.subr.mxu0 0.0
      %1214 = vmatpush1.msra.mxu0 %v1186
      %1215 = vmatprep.subr.mxu0 0.0
      %1216 = vmatpush1.msra.mxu0 %v1187
      %1217 = vmatprep.subr.mxu0 0.0
      %1218 = vmatpush1.msra.mxu0 %v1188
      %1219 = vmatprep.subr.mxu0 0.0
      %1220 = vmatpush1.msra.mxu0 %v1189
      %1221 = vmatprep.subr.mxu0 0.0
      %1222 = vmatpush1.msra.mxu0 %v1190
      %1223 = vmatprep.subr.mxu0 0.0
      %1224 = vmatpush1.msra.mxu0 0.0
      %1225 = vmatprep.subr.mxu0 0.0
      %1226 = vmatpush1.msra.mxu0 0.0
      %1227 = vmatprep.subr.mxu0 0.0
      %1228 = vmatpush1.msra.mxu0 0.0
      %1229 = vmatprep.subr.mxu0 0.0
      %1230 = vmatpush1.msra.mxu0 0.0
      %1231 = vmatprep.subr.mxu0 0.0
      %1232 = vmatpush1.msra.mxu0 0.0
      %1233 = vmatprep.subr.mxu0 0.0
      %1234 = vmatpush1.msra.mxu0 0.0
      %1235 = vmatprep.subr.mxu0 0.0
      %1236 = vmatpush1.msra.mxu0 0.0
      %1237 = vmatprep.subr.mxu0 0.0
      %1238 = vmatpush1.msra.mxu0 0.0
      %1239 = vmatprep.subr.mxu0 0.0
      %1240 = vmatpush1.msra.mxu0 0.0
      %1241 = vmatprep.subr.mxu0 0.0
      %1242 = vmatpush1.msra.mxu0 0.0
      %1243 = vmatprep.subr.mxu0 0.0
      %1244 = vmatpush1.msra.mxu0 0.0
      %1245 = vmatprep.subr.mxu0 0.0
      %1246 = vmatpush1.msra.mxu0 0.0
      %1247 = vmatprep.subr.mxu0 0.0
      %1248 = vmatpush1.msra.mxu0 0.0
      %1249 = vmatprep.subr.mxu0 0.0
      %1250 = vmatpush1.msra.mxu0 0.0
      %1251 = vmatprep.subr.mxu0 0.0
      %1252 = vmatpush1.msra.mxu0 0.0
      %1253 = vmatprep.subr.mxu0 0.0
      %1254 = vmatpush1.msra.mxu0 0.0
      %1255 = vmatprep.mubr.f32.mxu0 0.0
      %1256 = vmatmul.mubr.f32.gmra.mrb[0].mxu0 %v1138
      %v1257 = vpop.f32.mrb[0].mxu0
      %v1258 = vadd.f32 0.0, %v1257
      %v1259 = vpop.f32.mrb[0].mxu0
      %1260 = vmatprep.mubr.f32.mxu0 0.0
      %1261 = vmatmul.mubr.f32.gmra.mrb[0].mxu0 %v1139
      %v1262 = vpop.f32.mrb[0].mxu0
      %v1263 = vadd.f32 0.0, %v1262
      %v1264 = vpop.f32.mrb[0].mxu0
      %1265 = vmatprep.mubr.f32.mxu0 0.0
      %1266 = vmatmul.mubr.f32.gmra.mrb[0].mxu0 %v1140
      %v1267 = vpop.f32.mrb[0].mxu0
      %v1268 = vadd.f32 0.0, %v1267
      %v1269 = vpop.f32.mrb[0].mxu0
      %1270 = vmatprep.mubr.f32.mxu0 0.0
      %1271 = vmatmul.mubr.f32.gmra.mrb[0].mxu0 %v1141
      %v1272 = vpop.f32.mrb[0].mxu0
      %v1273 = vadd.f32 0.0, %v1272
      %v1274 = vpop.f32.mrb[0].mxu0
      %1275 = vmatprep.mubr.f32.mxu0 0.0
      %1276 = vmatmul.mubr.f32.gmra.mrb[0].mxu0 %v1142
      %v1277 = vpop.f32.mrb[0].mxu0
      %v1278 = vadd.f32 0.0, %v1277
      %v1279 = vpop.f32.mrb[0].mxu0
      %1280 = vmatprep.mubr.f32.mxu0 0.0
      %1281 = vmatmul.mubr.f32.gmra.mrb[0].mxu0 %v1143
      %v1282 = vpop.f32.mrb[0].mxu0
      %v1283 = vadd.f32 0.0, %v1282
      %v1284 = vpop.f32.mrb[0].mxu0
      %1285 = vmatprep.mubr.f32.mxu0 0.0
      %1286 = vmatmul.mubr.f32.gmra.mrb[0].mxu0 %v1144
      %v1287 = vpop.f32.mrb[0].mxu0
      %v1288 = vadd.f32 0.0, %v1287
      %v1289 = vpop.f32.mrb[0].mxu0
      %1290 = vmatprep.mubr.f32.mxu0 0.0
      %1291 = vmatmul.mubr.f32.gmra.mrb[0].mxu0 %v1145
      %v1292 = vpop.f32.mrb[0].mxu0
      %v1293 = vadd.f32 0.0, %v1292
      %v1294 = vpop.f32.mrb[0].mxu0
      %1295 = vmatprep.mubr.f32.mxu0 0.0
      %1296 = vmatmul.mubr.f32.gmra.mrb[0].mxu0 %v1146
      %v1297 = vpop.f32.mrb[0].mxu0
      %v1298 = vadd.f32 0.0, %v1297
      %v1299 = vpop.f32.mrb[0].mxu0
      %1300 = vmatprep.mubr.f32.mxu0 0.0
      %1301 = vmatmul.mubr.f32.gmra.mrb[0].mxu0 %v1147
      %v1302 = vpop.f32.mrb[0].mxu0
      %v1303 = vadd.f32 0.0, %v1302
      %v1304 = vpop.f32.mrb[0].mxu0
      %1305 = vmatprep.mubr.f32.mxu0 0.0
      %1306 = vmatmul.mubr.f32.gmra.mrb[0].mxu0 %v1148
      %v1307 = vpop.f32.mrb[0].mxu0
      %v1308 = vadd.f32 0.0, %v1307
      %v1309 = vpop.f32.mrb[0].mxu0
      %1310 = vmatprep.mubr.f32.mxu0 0.0
      %1311 = vmatmul.mubr.f32.gmra.mrb[0].mxu0 %v1149
      %v1312 = vpop.f32.mrb[0].mxu0
      %v1313 = vadd.f32 0.0, %v1312
      %v1314 = vpop.f32.mrb[0].mxu0
      %1315 = vmatprep.mubr.f32.mxu0 0.0
      %1316 = vmatmul.mubr.f32.gmra.mrb[0].mxu0 %v1150
      %v1317 = vpop.f32.mrb[0].mxu0
      %v1318 = vadd.f32 0.0, %v1317
      %v1319 = vpop.f32.mrb[0].mxu0
      %1320 = vmatprep.mubr.f32.mxu0 0.0
      %1321 = vmatmul.mubr.f32.gmra.mrb[0].mxu0 %v1151
      %v1322 = vpop.f32.mrb[0].mxu0
      %v1323 = vadd.f32 0.0, %v1322
      %v1324 = vpop.f32.mrb[0].mxu0
      %1325 = vmatprep.mubr.f32.mxu0 0.0
      %1326 = vmatmul.mubr.f32.gmra.mrb[0].mxu0 %v1152
      %v1327 = vpop.f32.mrb[0].mxu0
      %v1328 = vadd.f32 0.0, %v1327
      %v1329 = vpop.f32.mrb[0].mxu0
      %1330 = vmatprep.mubr.f32.mxu0 0.0
      %1331 = vmatmul.mubr.f32.gmra.mrb[0].mxu0 %v1153
      %v1332 = vpop.f32.mrb[0].mxu0
      %v1333 = vadd.f32 0.0, %v1332
      %v1334 = vpop.f32.mrb[0].mxu0
      %1335 = vmatprep.mubr.f32.mxu0 0.0
      %1336 = vmatmul.mubr.f32.gmra.mrb[0].mxu0 %v1154
      %v1337 = vpop.f32.mrb[0].mxu0
      %v1338 = vadd.f32 0.0, %v1337
      %v1339 = vpop.f32.mrb[0].mxu0
      %1340 = vmatprep.mubr.f32.mxu0 0.0
      %1341 = vmatmul.mubr.f32.gmra.mrb[0].mxu0 %v1155
      %v1342 = vpop.f32.mrb[0].mxu0
      %v1343 = vadd.f32 0.0, %v1342
      %v1344 = vpop.f32.mrb[0].mxu0
      %1345 = vmatprep.mubr.f32.mxu0 0.0
      %1346 = vmatmul.mubr.f32.gmra.mrb[0].mxu0 %v1156
      %v1347 = vpop.f32.mrb[0].mxu0
      %v1348 = vadd.f32 0.0, %v1347
      %v1349 = vpop.f32.mrb[0].mxu0
      %1350 = vmatprep.mubr.f32.mxu0 0.0
      %1351 = vmatmul.mubr.f32.gmra.mrb[0].mxu0 %v1157
      %v1352 = vpop.f32.mrb[0].mxu0
      %v1353 = vadd.f32 0.0, %v1352
      %v1354 = vpop.f32.mrb[0].mxu0
      %1355 = vmatprep.mubr.f32.mxu0 0.0
      %1356 = vmatmul.mubr.f32.gmra.mrb[0].mxu0 %v1158
      %v1357 = vpop.f32.mrb[0].mxu0
      %v1358 = vadd.f32 0.0, %v1357
      %v1359 = vpop.f32.mrb[0].mxu0
      %1360 = vmatprep.mubr.f32.mxu0 0.0
      %1361 = vmatmul.mubr.f32.gmra.mrb[0].mxu0 %v1159
      %v1362 = vpop.f32.mrb[0].mxu0
      %v1363 = vadd.f32 0.0, %v1362
      %v1364 = vpop.f32.mrb[0].mxu0
      %1365 = vmatprep.mubr.f32.mxu0 0.0
      %1366 = vmatmul.mubr.f32.gmra.mrb[0].mxu0 %v1160
      %v1367 = vpop.f32.mrb[0].mxu0
      %v1368 = vadd.f32 0.0, %v1367
      %v1369 = vpop.f32.mrb[0].mxu0
      %1370 = vmatprep.mubr.f32.mxu0 0.0
      %1371 = vmatmul.mubr.f32.gmra.mrb[0].mxu0 %v1161
      %v1372 = vpop.f32.mrb[0].mxu0
      %v1373 = vadd.f32 0.0, %v1372
      %v1374 = vpop.f32.mrb[0].mxu0
      %1375 = vmatprep.mubr.f32.mxu0 0.0
      %1376 = vmatmul.mubr.f32.gmra.mrb[0].mxu0 %v1162
      %v1377 = vpop.f32.mrb[0].mxu0
      %v1378 = vadd.f32 0.0, %v1377
      %v1379 = vpop.f32.mrb[0].mxu0
      %1380 = vmatprep.mubr.f32.mxu0 0.0
      %1381 = vmatmul.mubr.f32.gmra.mrb[0].mxu0 %v1163
      %v1382 = vpop.f32.mrb[0].mxu0
      %v1383 = vadd.f32 0.0, %v1382
      %v1384 = vpop.f32.mrb[0].mxu0
      %1385 = vmatprep.mubr.f32.mxu0 0.0
      %1386 = vmatmul.mubr.f32.gmra.mrb[0].mxu0 %v1164
      %v1387 = vpop.f32.mrb[0].mxu0
      %v1388 = vadd.f32 0.0, %v1387
      %v1389 = vpop.f32.mrb[0].mxu0
      %1390 = vmatprep.mubr.f32.mxu0 0.0
      %1391 = vmatmul.mubr.f32.gmra.mrb[0].mxu0 %v1165
      %v1392 = vpop.f32.mrb[0].mxu0
      %v1393 = vadd.f32 0.0, %v1392
      %v1394 = vpop.f32.mrb[0].mxu0
      %1395 = vmatprep.mubr.f32.mxu0 0.0
      %1396 = vmatmul.mubr.f32.gmra.mrb[0].mxu0 %v1166
      %v1397 = vpop.f32.mrb[0].mxu0
      %v1398 = vadd.f32 0.0, %v1397
      %v1399 = vpop.f32.mrb[0].mxu0
      %1400 = vmatprep.mubr.f32.mxu0 0.0
      %1401 = vmatmul.mubr.f32.gmra.mrb[0].mxu0 %v1167
      %v1402 = vpop.f32.mrb[0].mxu0
      %v1403 = vadd.f32 0.0, %v1402
      %v1404 = vpop.f32.mrb[0].mxu0
      %1405 = vmatprep.mubr.f32.mxu0 0.0
      %1406 = vmatmul.mubr.f32.gmra.mrb[0].mxu0 %v1168
      %v1407 = vpop.f32.mrb[0].mxu0
      %v1408 = vadd.f32 0.0, %v1407
      %v1409 = vpop.f32.mrb[0].mxu0
      %1410 = vmatprep.mubr.f32.mxu0 0.0
      %1411 = vmatmul.mubr.f32.gmra.mrb[0].mxu0 %v1169
      %v1412 = vpop.f32.mrb[0].mxu0
      %v1413 = vadd.f32 0.0, %v1412
      %v1414 = vpop.f32.mrb[0].mxu0
      %1415 = vmatprep.mubr.f32.mxu0 0.0
      %1416 = vmatmul.mubr.f32.gmra.mrb[0].mxu0 %v1170
      %v1417 = vpop.f32.mrb[0].mxu0
      %v1418 = vadd.f32 0.0, %v1417
      %v1419 = vpop.f32.mrb[0].mxu0
      %1420 = vmatprep.mubr.f32.mxu0 0.0
      %1421 = vmatmul.mubr.f32.gmra.mrb[0].mxu0 %v1171
      %v1422 = vpop.f32.mrb[0].mxu0
      %v1423 = vadd.f32 0.0, %v1422
      %v1424 = vpop.f32.mrb[0].mxu0
      %1425 = vmatprep.mubr.f32.mxu0 0.0
      %1426 = vmatmul.mubr.f32.gmra.mrb[0].mxu0 %v1172
      %v1427 = vpop.f32.mrb[0].mxu0
      %v1428 = vadd.f32 0.0, %v1427
      %v1429 = vpop.f32.mrb[0].mxu0
      %1430 = vmatprep.mubr.f32.mxu0 0.0
      %1431 = vmatmul.mubr.f32.gmra.mrb[0].mxu0 %v1173
      %v1432 = vpop.f32.mrb[0].mxu0
      %v1433 = vadd.f32 0.0, %v1432
      %v1434 = vpop.f32.mrb[0].mxu0
      %1435 = vdwg.mxu0
      %v1436 = vadd.f32 %v1102, %v1258
      %v1437 = vadd.f32 %v1103, %v1263
      %v1438 = vadd.f32 %v1104, %v1268
      %v1439 = vadd.f32 %v1105, %v1273
      %v1440 = vadd.f32 %v1106, %v1278
      %v1441 = vadd.f32 %v1107, %v1283
      %v1442 = vadd.f32 %v1108, %v1288
      %v1443 = vadd.f32 %v1109, %v1293
      %v1444 = vadd.f32 %v1110, %v1298
      %v1445 = vadd.f32 %v1111, %v1303
      %v1446 = vadd.f32 %v1112, %v1308
      %v1447 = vadd.f32 %v1113, %v1313
      %v1448 = vadd.f32 %v1114, %v1318
      %v1449 = vadd.f32 %v1115, %v1323
      %v1450 = vadd.f32 %v1116, %v1328
      %v1451 = vadd.f32 %v1117, %v1333
      %v1452 = vadd.f32 %v1118, %v1338
      %v1453 = vadd.f32 %v1119, %v1343
      %v1454 = vadd.f32 %v1120, %v1348
      %v1455 = vadd.f32 %v1121, %v1353
      %v1456 = vadd.f32 %v1122, %v1358
      %v1457 = vadd.f32 %v1123, %v1363
      %v1458 = vadd.f32 %v1124, %v1368
      %v1459 = vadd.f32 %v1125, %v1373
      %v1460 = vadd.f32 %v1126, %v1378
      %v1461 = vadd.f32 %v1127, %v1383
      %v1462 = vadd.f32 %v1128, %v1388
      %v1463 = vadd.f32 %v1129, %v1393
      %v1464 = vadd.f32 %v1130, %v1398
      %v1465 = vadd.f32 %v1131, %v1403
      %v1466 = vadd.f32 %v1132, %v1408
      %v1467 = vadd.f32 %v1133, %v1413
      %v1468 = vadd.f32 %v1134, %v1418
      %v1469 = vadd.f32 %v1135, %v1423
      %v1470 = vadd.f32 %v1136, %v1428
      %v1471 = vadd.f32 %v1137, %v1433
      %v1472 = vld [vmem:[%s199 + $0x13] sm:$0xff]
      %v1473 = vld [vmem:[%s199 + $0x1b] sm:$0xff]
      %v1474 = vld [vmem:[%s199 + $0x23] sm:$0xff]
      %v1475 = vld [vmem:[%s199 + $0x2b] sm:$0xff]
      %v1476 = vld [vmem:[%s199 + $0x33] sm:$0xff]
      %v1477 = vld [vmem:[%s199 + $0x3b] sm:$0xff]
      %v1478 = vld [vmem:[%s199 + $0x43] sm:$0xff]
      %v1479 = vld [vmem:[%s199 + $0x4b] sm:$0xff]
      %v1480 = vld [vmem:[%s199 + $0x53] sm:$0xff]
      %v1481 = vld [vmem:[%s199 + $0x5b] sm:$0xff]
      %v1482 = vld [vmem:[%s199 + $0x63] sm:$0xff]
      %v1483 = vld [vmem:[%s199 + $0x6b] sm:$0xff]
      %v1484 = vld [vmem:[%s199 + $0x73] sm:$0xff]
      %v1485 = vld [vmem:[%s199 + $0x7b] sm:$0xff]
      %v1486 = vld [vmem:[%s199 + $0x83] sm:$0xff]
      %v1487 = vld [vmem:[%s199 + $0x8b] sm:$0xff]
      %v1488 = vld [vmem:[%s199 + $0x93] sm:$0xff]
      %v1489 = vld [vmem:[%s199 + $0x9b] sm:$0xff]
      %v1490 = vld [vmem:[%s199 + $0xa3] sm:$0xff]
      %v1491 = vld [vmem:[%s199 + $0xab] sm:$0xff]
      %v1492 = vld [vmem:[%s199 + $0xb3] sm:$0xff]
      %v1493 = vld [vmem:[%s199 + $0xbb] sm:$0xff]
      %v1494 = vld [vmem:[%s199 + $0xc3] sm:$0xff]
      %v1495 = vld [vmem:[%s199 + $0xcb] sm:$0xff]
      %v1496 = vld [vmem:[%s199 + $0xd3] sm:$0xff]
      %v1497 = vld [vmem:[%s199 + $0xdb] sm:$0xff]
      %v1498 = vld [vmem:[%s199 + $0xe3] sm:$0xff]
      %v1499 = vld [vmem:[%s199 + $0xeb] sm:$0xff]
      %v1500 = vld [vmem:[%s199 + $0xf3] sm:$0xff]
      %v1501 = vld [vmem:[%s199 + $0xfb] sm:$0xff]
      %v1502 = vld [vmem:[%s199 + $0x103] sm:$0xff]
      %v1503 = vld [vmem:[%s199 + $0x10b] sm:$0xff]
      %v1504 = vld [vmem:[%s199 + $0x113] sm:$0xff]
      %v1505 = vld [vmem:[%s199 + $0x11b] sm:$0xff]
      %v1506 = vld [vmem:[%s199 + $0x123] sm:$0xff]
      %v1507 = vld [vmem:[%s199 + $0x12b] sm:$0xff]
      %s1508 = scalar_lea.vmem %s1, 512
      %v1509 = vld [vmem:[%s1508] sm:$0xff]
      %v1510 = vld [vmem:[%s1508 + $0x8] sm:$0xff]
      %v1511 = vld [vmem:[%s1508 + $0x10] sm:$0xff]
      %v1512 = vld [vmem:[%s1508 + $0x18] sm:$0xff]
      %v1513 = vld [vmem:[%s1508 + $0x20] sm:$0xff]
      %v1514 = vld [vmem:[%s1508 + $0x28] sm:$0xff]
      %v1515 = vld [vmem:[%s1508 + $0x30] sm:$0xff]
      %v1516 = vld [vmem:[%s1508 + $0x38] sm:$0xff]
      %v1517 = vld [vmem:[%s1508 + $0x40] sm:$0xff]
      %v1518 = vld [vmem:[%s1508 + $0x48] sm:$0xff]
      %v1519 = vld [vmem:[%s1508 + $0x50] sm:$0xff]
      %v1520 = vld [vmem:[%s1508 + $0x58] sm:$0xff]
      %v1521 = vld [vmem:[%s1508 + $0x60] sm:$0xff]
      %v1522 = vld [vmem:[%s1508 + $0x68] sm:$0xff]
      %v1523 = vld [vmem:[%s1508 + $0x70] sm:$0xff]
      %v1524 = vld [vmem:[%s1508 + $0x78] sm:$0xff]
      %1525 = vmatprep.subr.mxu0 0.0
      %1526 = vmatpush1.msra.mxu0 %v1509
      %1527 = vmatprep.subr.mxu0 0.0
      %1528 = vmatpush1.msra.mxu0 %v1510
      %1529 = vmatprep.subr.mxu0 0.0
      %1530 = vmatpush1.msra.mxu0 %v1511
      %1531 = vmatprep.subr.mxu0 0.0
      %1532 = vmatpush1.msra.mxu0 %v1512
      %1533 = vmatprep.subr.mxu0 0.0
      %1534 = vmatpush1.msra.mxu0 %v1513
      %1535 = vmatprep.subr.mxu0 0.0
      %1536 = vmatpush1.msra.mxu0 %v1514
      %1537 = vmatprep.subr.mxu0 0.0
      %1538 = vmatpush1.msra.mxu0 %v1515
      %1539 = vmatprep.subr.mxu0 0.0
      %1540 = vmatpush1.msra.mxu0 %v1516
      %1541 = vmatprep.subr.mxu0 0.0
      %1542 = vmatpush1.msra.mxu0 %v1517
      %1543 = vmatprep.subr.mxu0 0.0
      %1544 = vmatpush1.msra.mxu0 %v1518
      %1545 = vmatprep.subr.mxu0 0.0
      %1546 = vmatpush1.msra.mxu0 %v1519
      %1547 = vmatprep.subr.mxu0 0.0
      %1548 = vmatpush1.msra.mxu0 %v1520
      %1549 = vmatprep.subr.mxu0 0.0
      %1550 = vmatpush1.msra.mxu0 %v1521
      %1551 = vmatprep.subr.mxu0 0.0
      %1552 = vmatpush1.msra.mxu0 %v1522
      %1553 = vmatprep.subr.mxu0 0.0
      %1554 = vmatpush1.msra.mxu0 %v1523
      %1555 = vmatprep.subr.mxu0 0.0
      %1556 = vmatpush1.msra.mxu0 %v1524
      %1557 = vmatprep.subr.mxu0 0.0
      %1558 = vmatpush1.msra.mxu0 0.0
      %1559 = vmatprep.subr.mxu0 0.0
      %1560 = vmatpush1.msra.mxu0 0.0
      %1561 = vmatprep.subr.mxu0 0.0
      %1562 = vmatpush1.msra.mxu0 0.0
      %1563 = vmatprep.subr.mxu0 0.0
      %1564 = vmatpush1.msra.mxu0 0.0
      %1565 = vmatprep.subr.mxu0 0.0
      %1566 = vmatpush1.msra.mxu0 0.0
      %1567 = vmatprep.subr.mxu0 0.0
      %1568 = vmatpush1.msra.mxu0 0.0
      %1569 = vmatprep.subr.mxu0 0.0
      %1570 = vmatpush1.msra.mxu0 0.0
      %1571 = vmatprep.subr.mxu0 0.0
      %1572 = vmatpush1.msra.mxu0 0.0
      %1573 = vmatprep.subr.mxu0 0.0
      %1574 = vmatpush1.msra.mxu0 0.0
      %1575 = vmatprep.subr.mxu0 0.0
      %1576 = vmatpush1.msra.mxu0 0.0
      %1577 = vmatprep.subr.mxu0 0.0
      %1578 = vmatpush1.msra.mxu0 0.0
      %1579 = vmatprep.subr.mxu0 0.0
      %1580 = vmatpush1.msra.mxu0 0.0
      %1581 = vmatprep.subr.mxu0 0.0
      %1582 = vmatpush1.msra.mxu0 0.0
      %1583 = vmatprep.subr.mxu0 0.0
      %1584 = vmatpush1.msra.mxu0 0.0
      %1585 = vmatprep.subr.mxu0 0.0
      %1586 = vmatpush1.msra.mxu0 0.0
      %1587 = vmatprep.subr.mxu0 0.0
      %1588 = vmatpush1.msra.mxu0 0.0
      %1589 = vmatprep.mubr.f32.mxu0 0.0
      %1590 = vmatmul.mubr.f32.gmra.mrb[0].mxu0 %v1472
      %v1591 = vpop.f32.mrb[0].mxu0
      %v1592 = vadd.f32 0.0, %v1591
      %v1593 = vpop.f32.mrb[0].mxu0
      %1594 = vmatprep.mubr.f32.mxu0 0.0
      %1595 = vmatmul.mubr.f32.gmra.mrb[0].mxu0 %v1473
      %v1596 = vpop.f32.mrb[0].mxu0
      %v1597 = vadd.f32 0.0, %v1596
      %v1598 = vpop.f32.mrb[0].mxu0
      %1599 = vmatprep.mubr.f32.mxu0 0.0
      %1600 = vmatmul.mubr.f32.gmra.mrb[0].mxu0 %v1474
      %v1601 = vpop.f32.mrb[0].mxu0
      %v1602 = vadd.f32 0.0, %v1601
      %v1603 = vpop.f32.mrb[0].mxu0
      %1604 = vmatprep.mubr.f32.mxu0 0.0
      %1605 = vmatmul.mubr.f32.gmra.mrb[0].mxu0 %v1475
      %v1606 = vpop.f32.mrb[0].mxu0
      %v1607 = vadd.f32 0.0, %v1606
      %v1608 = vpop.f32.mrb[0].mxu0
      %1609 = vmatprep.mubr.f32.mxu0 0.0
      %1610 = vmatmul.mubr.f32.gmra.mrb[0].mxu0 %v1476
      %v1611 = vpop.f32.mrb[0].mxu0
      %v1612 = vadd.f32 0.0, %v1611
      %v1613 = vpop.f32.mrb[0].mxu0
      %1614 = vmatprep.mubr.f32.mxu0 0.0
      %1615 = vmatmul.mubr.f32.gmra.mrb[0].mxu0 %v1477
      %v1616 = vpop.f32.mrb[0].mxu0
      %v1617 = vadd.f32 0.0, %v1616
      %v1618 = vpop.f32.mrb[0].mxu0
      %1619 = vmatprep.mubr.f32.mxu0 0.0
      %1620 = vmatmul.mubr.f32.gmra.mrb[0].mxu0 %v1478
      %v1621 = vpop.f32.mrb[0].mxu0
      %v1622 = vadd.f32 0.0, %v1621
      %v1623 = vpop.f32.mrb[0].mxu0
      %1624 = vmatprep.mubr.f32.mxu0 0.0
      %1625 = vmatmul.mubr.f32.gmra.mrb[0].mxu0 %v1479
      %v1626 = vpop.f32.mrb[0].mxu0
      %v1627 = vadd.f32 0.0, %v1626
      %v1628 = vpop.f32.mrb[0].mxu0
      %1629 = vmatprep.mubr.f32.mxu0 0.0
      %1630 = vmatmul.mubr.f32.gmra.mrb[0].mxu0 %v1480
      %v1631 = vpop.f32.mrb[0].mxu0
      %v1632 = vadd.f32 0.0, %v1631
      %v1633 = vpop.f32.mrb[0].mxu0
      %1634 = vmatprep.mubr.f32.mxu0 0.0
      %1635 = vmatmul.mubr.f32.gmra.mrb[0].mxu0 %v1481
      %v1636 = vpop.f32.mrb[0].mxu0
      %v1637 = vadd.f32 0.0, %v1636
      %v1638 = vpop.f32.mrb[0].mxu0
      %1639 = vmatprep.mubr.f32.mxu0 0.0
      %1640 = vmatmul.mubr.f32.gmra.mrb[0].mxu0 %v1482
      %v1641 = vpop.f32.mrb[0].mxu0
      %v1642 = vadd.f32 0.0, %v1641
      %v1643 = vpop.f32.mrb[0].mxu0
      %1644 = vmatprep.mubr.f32.mxu0 0.0
      %1645 = vmatmul.mubr.f32.gmra.mrb[0].mxu0 %v1483
      %v1646 = vpop.f32.mrb[0].mxu0
      %v1647 = vadd.f32 0.0, %v1646
      %v1648 = vpop.f32.mrb[0].mxu0
      %1649 = vmatprep.mubr.f32.mxu0 0.0
      %1650 = vmatmul.mubr.f32.gmra.mrb[0].mxu0 %v1484
      %v1651 = vpop.f32.mrb[0].mxu0
      %v1652 = vadd.f32 0.0, %v1651
      %v1653 = vpop.f32.mrb[0].mxu0
      %1654 = vmatprep.mubr.f32.mxu0 0.0
      %1655 = vmatmul.mubr.f32.gmra.mrb[0].mxu0 %v1485
      %v1656 = vpop.f32.mrb[0].mxu0
      %v1657 = vadd.f32 0.0, %v1656
      %v1658 = vpop.f32.mrb[0].mxu0
      %1659 = vmatprep.mubr.f32.mxu0 0.0
      %1660 = vmatmul.mubr.f32.gmra.mrb[0].mxu0 %v1486
      %v1661 = vpop.f32.mrb[0].mxu0
      %v1662 = vadd.f32 0.0, %v1661
      %v1663 = vpop.f32.mrb[0].mxu0
      %1664 = vmatprep.mubr.f32.mxu0 0.0
      %1665 = vmatmul.mubr.f32.gmra.mrb[0].mxu0 %v1487
      %v1666 = vpop.f32.mrb[0].mxu0
      %v1667 = vadd.f32 0.0, %v1666
      %v1668 = vpop.f32.mrb[0].mxu0
      %1669 = vmatprep.mubr.f32.mxu0 0.0
      %1670 = vmatmul.mubr.f32.gmra.mrb[0].mxu0 %v1488
      %v1671 = vpop.f32.mrb[0].mxu0
      %v1672 = vadd.f32 0.0, %v1671
      %v1673 = vpop.f32.mrb[0].mxu0
      %1674 = vmatprep.mubr.f32.mxu0 0.0
      %1675 = vmatmul.mubr.f32.gmra.mrb[0].mxu0 %v1489
      %v1676 = vpop.f32.mrb[0].mxu0
      %v1677 = vadd.f32 0.0, %v1676
      %v1678 = vpop.f32.mrb[0].mxu0
      %1679 = vmatprep.mubr.f32.mxu0 0.0
      %1680 = vmatmul.mubr.f32.gmra.mrb[0].mxu0 %v1490
      %v1681 = vpop.f32.mrb[0].mxu0
      %v1682 = vadd.f32 0.0, %v1681
      %v1683 = vpop.f32.mrb[0].mxu0
      %1684 = vmatprep.mubr.f32.mxu0 0.0
      %1685 = vmatmul.mubr.f32.gmra.mrb[0].mxu0 %v1491
      %v1686 = vpop.f32.mrb[0].mxu0
      %v1687 = vadd.f32 0.0, %v1686
      %v1688 = vpop.f32.mrb[0].mxu0
      %1689 = vmatprep.mubr.f32.mxu0 0.0
      %1690 = vmatmul.mubr.f32.gmra.mrb[0].mxu0 %v1492
      %v1691 = vpop.f32.mrb[0].mxu0
      %v1692 = vadd.f32 0.0, %v1691
      %v1693 = vpop.f32.mrb[0].mxu0
      %1694 = vmatprep.mubr.f32.mxu0 0.0
      %1695 = vmatmul.mubr.f32.gmra.mrb[0].mxu0 %v1493
      %v1696 = vpop.f32.mrb[0].mxu0
      %v1697 = vadd.f32 0.0, %v1696
      %v1698 = vpop.f32.mrb[0].mxu0
      %1699 = vmatprep.mubr.f32.mxu0 0.0
      %1700 = vmatmul.mubr.f32.gmra.mrb[0].mxu0 %v1494
      %v1701 = vpop.f32.mrb[0].mxu0
      %v1702 = vadd.f32 0.0, %v1701
      %v1703 = vpop.f32.mrb[0].mxu0
      %1704 = vmatprep.mubr.f32.mxu0 0.0
      %1705 = vmatmul.mubr.f32.gmra.mrb[0].mxu0 %v1495
      %v1706 = vpop.f32.mrb[0].mxu0
      %v1707 = vadd.f32 0.0, %v1706
      %v1708 = vpop.f32.mrb[0].mxu0
      %1709 = vmatprep.mubr.f32.mxu0 0.0
      %1710 = vmatmul.mubr.f32.gmra.mrb[0].mxu0 %v1496
      %v1711 = vpop.f32.mrb[0].mxu0
      %v1712 = vadd.f32 0.0, %v1711
      %v1713 = vpop.f32.mrb[0].mxu0
      %1714 = vmatprep.mubr.f32.mxu0 0.0
      %1715 = vmatmul.mubr.f32.gmra.mrb[0].mxu0 %v1497
      %v1716 = vpop.f32.mrb[0].mxu0
      %v1717 = vadd.f32 0.0, %v1716
      %v1718 = vpop.f32.mrb[0].mxu0
      %1719 = vmatprep.mubr.f32.mxu0 0.0
      %1720 = vmatmul.mubr.f32.gmra.mrb[0].mxu0 %v1498
      %v1721 = vpop.f32.mrb[0].mxu0
      %v1722 = vadd.f32 0.0, %v1721
      %v1723 = vpop.f32.mrb[0].mxu0
      %1724 = vmatprep.mubr.f32.mxu0 0.0
      %1725 = vmatmul.mubr.f32.gmra.mrb[0].mxu0 %v1499
      %v1726 = vpop.f32.mrb[0].mxu0
      %v1727 = vadd.f32 0.0, %v1726
      %v1728 = vpop.f32.mrb[0].mxu0
      %1729 = vmatprep.mubr.f32.mxu0 0.0
      %1730 = vmatmul.mubr.f32.gmra.mrb[0].mxu0 %v1500
      %v1731 = vpop.f32.mrb[0].mxu0
      %v1732 = vadd.f32 0.0, %v1731
      %v1733 = vpop.f32.mrb[0].mxu0
      %1734 = vmatprep.mubr.f32.mxu0 0.0
      %1735 = vmatmul.mubr.f32.gmra.mrb[0].mxu0 %v1501
      %v1736 = vpop.f32.mrb[0].mxu0
      %v1737 = vadd.f32 0.0, %v1736
      %v1738 = vpop.f32.mrb[0].mxu0
      %1739 = vmatprep.mubr.f32.mxu0 0.0
      %1740 = vmatmul.mubr.f32.gmra.mrb[0].mxu0 %v1502
      %v1741 = vpop.f32.mrb[0].mxu0
      %v1742 = vadd.f32 0.0, %v1741
      %v1743 = vpop.f32.mrb[0].mxu0
      %1744 = vmatprep.mubr.f32.mxu0 0.0
      %1745 = vmatmul.mubr.f32.gmra.mrb[0].mxu0 %v1503
      %v1746 = vpop.f32.mrb[0].mxu0
      %v1747 = vadd.f32 0.0, %v1746
      %v1748 = vpop.f32.mrb[0].mxu0
      %1749 = vmatprep.mubr.f32.mxu0 0.0
      %1750 = vmatmul.mubr.f32.gmra.mrb[0].mxu0 %v1504
      %v1751 = vpop.f32.mrb[0].mxu0
      %v1752 = vadd.f32 0.0, %v1751
      %v1753 = vpop.f32.mrb[0].mxu0
      %1754 = vmatprep.mubr.f32.mxu0 0.0
      %1755 = vmatmul.mubr.f32.gmra.mrb[0].mxu0 %v1505
      %v1756 = vpop.f32.mrb[0].mxu0
      %v1757 = vadd.f32 0.0, %v1756
      %v1758 = vpop.f32.mrb[0].mxu0
      %1759 = vmatprep.mubr.f32.mxu0 0.0
      %1760 = vmatmul.mubr.f32.gmra.mrb[0].mxu0 %v1506
      %v1761 = vpop.f32.mrb[0].mxu0
      %v1762 = vadd.f32 0.0, %v1761
      %v1763 = vpop.f32.mrb[0].mxu0
      %1764 = vmatprep.mubr.f32.mxu0 0.0
      %1765 = vmatmul.mubr.f32.gmra.mrb[0].mxu0 %v1507
      %v1766 = vpop.f32.mrb[0].mxu0
      %v1767 = vadd.f32 0.0, %v1766
      %v1768 = vpop.f32.mrb[0].mxu0
      %1769 = vdwg.mxu0
      %v1770 = vadd.f32 %v1436, %v1592
      %v1771 = vadd.f32 %v1437, %v1597
      %v1772 = vadd.f32 %v1438, %v1602
      %v1773 = vadd.f32 %v1439, %v1607
      %v1774 = vadd.f32 %v1440, %v1612
      %v1775 = vadd.f32 %v1441, %v1617
      %v1776 = vadd.f32 %v1442, %v1622
      %v1777 = vadd.f32 %v1443, %v1627
      %v1778 = vadd.f32 %v1444, %v1632
      %v1779 = vadd.f32 %v1445, %v1637
      %v1780 = vadd.f32 %v1446, %v1642
      %v1781 = vadd.f32 %v1447, %v1647
      %v1782 = vadd.f32 %v1448, %v1652
      %v1783 = vadd.f32 %v1449, %v1657
      %v1784 = vadd.f32 %v1450, %v1662
      %v1785 = vadd.f32 %v1451, %v1667
      %v1786 = vadd.f32 %v1452, %v1672
      %v1787 = vadd.f32 %v1453, %v1677
      %v1788 = vadd.f32 %v1454, %v1682
      %v1789 = vadd.f32 %v1455, %v1687
      %v1790 = vadd.f32 %v1456, %v1692
      %v1791 = vadd.f32 %v1457, %v1697
      %v1792 = vadd.f32 %v1458, %v1702
      %v1793 = vadd.f32 %v1459, %v1707
      %v1794 = vadd.f32 %v1460, %v1712
      %v1795 = vadd.f32 %v1461, %v1717
      %v1796 = vadd.f32 %v1462, %v1722
      %v1797 = vadd.f32 %v1463, %v1727
      %v1798 = vadd.f32 %v1464, %v1732
      %v1799 = vadd.f32 %v1465, %v1737
      %v1800 = vadd.f32 %v1466, %v1742
      %v1801 = vadd.f32 %v1467, %v1747
      %v1802 = vadd.f32 %v1468, %v1752
      %v1803 = vadd.f32 %v1469, %v1757
      %v1804 = vadd.f32 %v1470, %v1762
      %v1805 = vadd.f32 %v1471, %v1767
      %v1806 = vld [vmem:[%s199 + $0x14] sm:$0xff]
      %v1807 = vld [vmem:[%s199 + $0x1c] sm:$0xff]
      %v1808 = vld [vmem:[%s199 + $0x24] sm:$0xff]
      %v1809 = vld [vmem:[%s199 + $0x2c] sm:$0xff]
      %v1810 = vld [vmem:[%s199 + $0x34] sm:$0xff]
      %v1811 = vld [vmem:[%s199 + $0x3c] sm:$0xff]
      %v1812 = vld [vmem:[%s199 + $0x44] sm:$0xff]
      %v1813 = vld [vmem:[%s199 + $0x4c] sm:$0xff]
      %v1814 = vld [vmem:[%s199 + $0x54] sm:$0xff]
      %v1815 = vld [vmem:[%s199 + $0x5c] sm:$0xff]
      %v1816 = vld [vmem:[%s199 + $0x64] sm:$0xff]
      %v1817 = vld [vmem:[%s199 + $0x6c] sm:$0xff]
      %v1818 = vld [vmem:[%s199 + $0x74] sm:$0xff]
      %v1819 = vld [vmem:[%s199 + $0x7c] sm:$0xff]
      %v1820 = vld [vmem:[%s199 + $0x84] sm:$0xff]
      %v1821 = vld [vmem:[%s199 + $0x8c] sm:$0xff]
      %v1822 = vld [vmem:[%s199 + $0x94] sm:$0xff]
      %v1823 = vld [vmem:[%s199 + $0x9c] sm:$0xff]
      %v1824 = vld [vmem:[%s199 + $0xa4] sm:$0xff]
      %v1825 = vld [vmem:[%s199 + $0xac] sm:$0xff]
      %v1826 = vld [vmem:[%s199 + $0xb4] sm:$0xff]
      %v1827 = vld [vmem:[%s199 + $0xbc] sm:$0xff]
      %v1828 = vld [vmem:[%s199 + $0xc4] sm:$0xff]
      %v1829 = vld [vmem:[%s199 + $0xcc] sm:$0xff]
      %v1830 = vld [vmem:[%s199 + $0xd4] sm:$0xff]
      %v1831 = vld [vmem:[%s199 + $0xdc] sm:$0xff]
      %v1832 = vld [vmem:[%s199 + $0xe4] sm:$0xff]
      %v1833 = vld [vmem:[%s199 + $0xec] sm:$0xff]
      %v1834 = vld [vmem:[%s199 + $0xf4] sm:$0xff]
      %v1835 = vld [vmem:[%s199 + $0xfc] sm:$0xff]
      %v1836 = vld [vmem:[%s199 + $0x104] sm:$0xff]
      %v1837 = vld [vmem:[%s199 + $0x10c] sm:$0xff]
      %v1838 = vld [vmem:[%s199 + $0x114] sm:$0xff]
      %v1839 = vld [vmem:[%s199 + $0x11c] sm:$0xff]
      %v1840 = vld [vmem:[%s199 + $0x124] sm:$0xff]
      %v1841 = vld [vmem:[%s199 + $0x12c] sm:$0xff]
      %s1842 = scalar_lea.vmem %s1, 640
      %v1843 = vld [vmem:[%s1842] sm:$0xff]
      %v1844 = vld [vmem:[%s1842 + $0x8] sm:$0xff]
      %v1845 = vld [vmem:[%s1842 + $0x10] sm:$0xff]
      %v1846 = vld [vmem:[%s1842 + $0x18] sm:$0xff]
      %v1847 = vld [vmem:[%s1842 + $0x20] sm:$0xff]
      %v1848 = vld [vmem:[%s1842 + $0x28] sm:$0xff]
      %v1849 = vld [vmem:[%s1842 + $0x30] sm:$0xff]
      %v1850 = vld [vmem:[%s1842 + $0x38] sm:$0xff]
      %v1851 = vld [vmem:[%s1842 + $0x40] sm:$0xff]
      %v1852 = vld [vmem:[%s1842 + $0x48] sm:$0xff]
      %v1853 = vld [vmem:[%s1842 + $0x50] sm:$0xff]
      %v1854 = vld [vmem:[%s1842 + $0x58] sm:$0xff]
      %v1855 = vld [vmem:[%s1842 + $0x60] sm:$0xff]
      %v1856 = vld [vmem:[%s1842 + $0x68] sm:$0xff]
      %v1857 = vld [vmem:[%s1842 + $0x70] sm:$0xff]
      %v1858 = vld [vmem:[%s1842 + $0x78] sm:$0xff]
      %1859 = vmatprep.subr.mxu0 0.0
      %1860 = vmatpush1.msra.mxu0 %v1843
      %1861 = vmatprep.subr.mxu0 0.0
      %1862 = vmatpush1.msra.mxu0 %v1844
      %1863 = vmatprep.subr.mxu0 0.0
      %1864 = vmatpush1.msra.mxu0 %v1845
      %1865 = vmatprep.subr.mxu0 0.0
      %1866 = vmatpush1.msra.mxu0 %v1846
      %1867 = vmatprep.subr.mxu0 0.0
      %1868 = vmatpush1.msra.mxu0 %v1847
      %1869 = vmatprep.subr.mxu0 0.0
      %1870 = vmatpush1.msra.mxu0 %v1848
      %1871 = vmatprep.subr.mxu0 0.0
      %1872 = vmatpush1.msra.mxu0 %v1849
      %1873 = vmatprep.subr.mxu0 0.0
      %1874 = vmatpush1.msra.mxu0 %v1850
      %1875 = vmatprep.subr.mxu0 0.0
      %1876 = vmatpush1.msra.mxu0 %v1851
      %1877 = vmatprep.subr.mxu0 0.0
      %1878 = vmatpush1.msra.mxu0 %v1852
      %1879 = vmatprep.subr.mxu0 0.0
      %1880 = vmatpush1.msra.mxu0 %v1853
      %1881 = vmatprep.subr.mxu0 0.0
      %1882 = vmatpush1.msra.mxu0 %v1854
      %1883 = vmatprep.subr.mxu0 0.0
      %1884 = vmatpush1.msra.mxu0 %v1855
      %1885 = vmatprep.subr.mxu0 0.0
      %1886 = vmatpush1.msra.mxu0 %v1856
      %1887 = vmatprep.subr.mxu0 0.0
      %1888 = vmatpush1.msra.mxu0 %v1857
      %1889 = vmatprep.subr.mxu0 0.0
      %1890 = vmatpush1.msra.mxu0 %v1858
      %1891 = vmatprep.subr.mxu0 0.0
      %1892 = vmatpush1.msra.mxu0 0.0
      %1893 = vmatprep.subr.mxu0 0.0
      %1894 = vmatpush1.msra.mxu0 0.0
      %1895 = vmatprep.subr.mxu0 0.0
      %1896 = vmatpush1.msra.mxu0 0.0
      %1897 = vmatprep.subr.mxu0 0.0
      %1898 = vmatpush1.msra.mxu0 0.0
      %1899 = vmatprep.subr.mxu0 0.0
      %1900 = vmatpush1.msra.mxu0 0.0
      %1901 = vmatprep.subr.mxu0 0.0
      %1902 = vmatpush1.msra.mxu0 0.0
      %1903 = vmatprep.subr.mxu0 0.0
      %1904 = vmatpush1.msra.mxu0 0.0
      %1905 = vmatprep.subr.mxu0 0.0
      %1906 = vmatpush1.msra.mxu0 0.0
      %1907 = vmatprep.subr.mxu0 0.0
      %1908 = vmatpush1.msra.mxu0 0.0
      %1909 = vmatprep.subr.mxu0 0.0
      %1910 = vmatpush1.msra.mxu0 0.0
      %1911 = vmatprep.subr.mxu0 0.0
      %1912 = vmatpush1.msra.mxu0 0.0
      %1913 = vmatprep.subr.mxu0 0.0
      %1914 = vmatpush1.msra.mxu0 0.0
      %1915 = vmatprep.subr.mxu0 0.0
      %1916 = vmatpush1.msra.mxu0 0.0
      %1917 = vmatprep.subr.mxu0 0.0
      %1918 = vmatpush1.msra.mxu0 0.0
      %1919 = vmatprep.subr.mxu0 0.0
      %1920 = vmatpush1.msra.mxu0 0.0
      %1921 = vmatprep.subr.mxu0 0.0
      %1922 = vmatpush1.msra.mxu0 0.0
      %1923 = vmatprep.mubr.f32.mxu0 0.0
      %1924 = vmatmul.mubr.f32.gmra.mrb[0].mxu0 %v1806
      %v1925 = vpop.f32.mrb[0].mxu0
      %v1926 = vadd.f32 0.0, %v1925
      %v1927 = vpop.f32.mrb[0].mxu0
      %1928 = vmatprep.mubr.f32.mxu0 0.0
      %1929 = vmatmul.mubr.f32.gmra.mrb[0].mxu0 %v1807
      %v1930 = vpop.f32.mrb[0].mxu0
      %v1931 = vadd.f32 0.0, %v1930
      %v1932 = vpop.f32.mrb[0].mxu0
      %1933 = vmatprep.mubr.f32.mxu0 0.0
      %1934 = vmatmul.mubr.f32.gmra.mrb[0].mxu0 %v1808
      %v1935 = vpop.f32.mrb[0].mxu0
      %v1936 = vadd.f32 0.0, %v1935
      %v1937 = vpop.f32.mrb[0].mxu0
      %1938 = vmatprep.mubr.f32.mxu0 0.0
      %1939 = vmatmul.mubr.f32.gmra.mrb[0].mxu0 %v1809
      %v1940 = vpop.f32.mrb[0].mxu0
      %v1941 = vadd.f32 0.0, %v1940
      %v1942 = vpop.f32.mrb[0].mxu0
      %1943 = vmatprep.mubr.f32.mxu0 0.0
      %1944 = vmatmul.mubr.f32.gmra.mrb[0].mxu0 %v1810
      %v1945 = vpop.f32.mrb[0].mxu0
      %v1946 = vadd.f32 0.0, %v1945
      %v1947 = vpop.f32.mrb[0].mxu0
      %1948 = vmatprep.mubr.f32.mxu0 0.0
      %1949 = vmatmul.mubr.f32.gmra.mrb[0].mxu0 %v1811
      %v1950 = vpop.f32.mrb[0].mxu0
      %v1951 = vadd.f32 0.0, %v1950
      %v1952 = vpop.f32.mrb[0].mxu0
      %1953 = vmatprep.mubr.f32.mxu0 0.0
      %1954 = vmatmul.mubr.f32.gmra.mrb[0].mxu0 %v1812
      %v1955 = vpop.f32.mrb[0].mxu0
      %v1956 = vadd.f32 0.0, %v1955
      %v1957 = vpop.f32.mrb[0].mxu0
      %1958 = vmatprep.mubr.f32.mxu0 0.0
      %1959 = vmatmul.mubr.f32.gmra.mrb[0].mxu0 %v1813
      %v1960 = vpop.f32.mrb[0].mxu0
      %v1961 = vadd.f32 0.0, %v1960
      %v1962 = vpop.f32.mrb[0].mxu0
      %1963 = vmatprep.mubr.f32.mxu0 0.0
      %1964 = vmatmul.mubr.f32.gmra.mrb[0].mxu0 %v1814
      %v1965 = vpop.f32.mrb[0].mxu0
      %v1966 = vadd.f32 0.0, %v1965
      %v1967 = vpop.f32.mrb[0].mxu0
      %1968 = vmatprep.mubr.f32.mxu0 0.0
      %1969 = vmatmul.mubr.f32.gmra.mrb[0].mxu0 %v1815
      %v1970 = vpop.f32.mrb[0].mxu0
      %v1971 = vadd.f32 0.0, %v1970
      %v1972 = vpop.f32.mrb[0].mxu0
      %1973 = vmatprep.mubr.f32.mxu0 0.0
      %1974 = vmatmul.mubr.f32.gmra.mrb[0].mxu0 %v1816
      %v1975 = vpop.f32.mrb[0].mxu0
      %v1976 = vadd.f32 0.0, %v1975
      %v1977 = vpop.f32.mrb[0].mxu0
      %1978 = vmatprep.mubr.f32.mxu0 0.0
      %1979 = vmatmul.mubr.f32.gmra.mrb[0].mxu0 %v1817
      %v1980 = vpop.f32.mrb[0].mxu0
      %v1981 = vadd.f32 0.0, %v1980
      %v1982 = vpop.f32.mrb[0].mxu0
      %1983 = vmatprep.mubr.f32.mxu0 0.0
      %1984 = vmatmul.mubr.f32.gmra.mrb[0].mxu0 %v1818
      %v1985 = vpop.f32.mrb[0].mxu0
      %v1986 = vadd.f32 0.0, %v1985
      %v1987 = vpop.f32.mrb[0].mxu0
      %1988 = vmatprep.mubr.f32.mxu0 0.0
      %1989 = vmatmul.mubr.f32.gmra.mrb[0].mxu0 %v1819
      %v1990 = vpop.f32.mrb[0].mxu0
      %v1991 = vadd.f32 0.0, %v1990
      %v1992 = vpop.f32.mrb[0].mxu0
      %1993 = vmatprep.mubr.f32.mxu0 0.0
      %1994 = vmatmul.mubr.f32.gmra.mrb[0].mxu0 %v1820
      %v1995 = vpop.f32.mrb[0].mxu0
      %v1996 = vadd.f32 0.0, %v1995
      %v1997 = vpop.f32.mrb[0].mxu0
      %1998 = vmatprep.mubr.f32.mxu0 0.0
      %1999 = vmatmul.mubr.f32.gmra.mrb[0].mxu0 %v1821
      %v2000 = vpop.f32.mrb[0].mxu0
      %v2001 = vadd.f32 0.0, %v2000
      %v2002 = vpop.f32.mrb[0].mxu0
      %2003 = vmatprep.mubr.f32.mxu0 0.0
      %2004 = vmatmul.mubr.f32.gmra.mrb[0].mxu0 %v1822
      %v2005 = vpop.f32.mrb[0].mxu0
      %v2006 = vadd.f32 0.0, %v2005
      %v2007 = vpop.f32.mrb[0].mxu0
      %2008 = vmatprep.mubr.f32.mxu0 0.0
      %2009 = vmatmul.mubr.f32.gmra.mrb[0].mxu0 %v1823
      %v2010 = vpop.f32.mrb[0].mxu0
      %v2011 = vadd.f32 0.0, %v2010
      %v2012 = vpop.f32.mrb[0].mxu0
      %2013 = vmatprep.mubr.f32.mxu0 0.0
      %2014 = vmatmul.mubr.f32.gmra.mrb[0].mxu0 %v1824
      %v2015 = vpop.f32.mrb[0].mxu0
      %v2016 = vadd.f32 0.0, %v2015
      %v2017 = vpop.f32.mrb[0].mxu0
      %2018 = vmatprep.mubr.f32.mxu0 0.0
      %2019 = vmatmul.mubr.f32.gmra.mrb[0].mxu0 %v1825
      %v2020 = vpop.f32.mrb[0].mxu0
      %v2021 = vadd.f32 0.0, %v2020
      %v2022 = vpop.f32.mrb[0].mxu0
      %2023 = vmatprep.mubr.f32.mxu0 0.0
      %2024 = vmatmul.mubr.f32.gmra.mrb[0].mxu0 %v1826
      %v2025 = vpop.f32.mrb[0].mxu0
      %v2026 = vadd.f32 0.0, %v2025
      %v2027 = vpop.f32.mrb[0].mxu0
      %2028 = vmatprep.mubr.f32.mxu0 0.0
      %2029 = vmatmul.mubr.f32.gmra.mrb[0].mxu0 %v1827
      %v2030 = vpop.f32.mrb[0].mxu0
      %v2031 = vadd.f32 0.0, %v2030
      %v2032 = vpop.f32.mrb[0].mxu0
      %2033 = vmatprep.mubr.f32.mxu0 0.0
      %2034 = vmatmul.mubr.f32.gmra.mrb[0].mxu0 %v1828
      %v2035 = vpop.f32.mrb[0].mxu0
      %v2036 = vadd.f32 0.0, %v2035
      %v2037 = vpop.f32.mrb[0].mxu0
      %2038 = vmatprep.mubr.f32.mxu0 0.0
      %2039 = vmatmul.mubr.f32.gmra.mrb[0].mxu0 %v1829
      %v2040 = vpop.f32.mrb[0].mxu0
      %v2041 = vadd.f32 0.0, %v2040
      %v2042 = vpop.f32.mrb[0].mxu0
      %2043 = vmatprep.mubr.f32.mxu0 0.0
      %2044 = vmatmul.mubr.f32.gmra.mrb[0].mxu0 %v1830
      %v2045 = vpop.f32.mrb[0].mxu0
      %v2046 = vadd.f32 0.0, %v2045
      %v2047 = vpop.f32.mrb[0].mxu0
      %2048 = vmatprep.mubr.f32.mxu0 0.0
      %2049 = vmatmul.mubr.f32.gmra.mrb[0].mxu0 %v1831
      %v2050 = vpop.f32.mrb[0].mxu0
      %v2051 = vadd.f32 0.0, %v2050
      %v2052 = vpop.f32.mrb[0].mxu0
      %2053 = vmatprep.mubr.f32.mxu0 0.0
      %2054 = vmatmul.mubr.f32.gmra.mrb[0].mxu0 %v1832
      %v2055 = vpop.f32.mrb[0].mxu0
      %v2056 = vadd.f32 0.0, %v2055
      %v2057 = vpop.f32.mrb[0].mxu0
      %2058 = vmatprep.mubr.f32.mxu0 0.0
      %2059 = vmatmul.mubr.f32.gmra.mrb[0].mxu0 %v1833
      %v2060 = vpop.f32.mrb[0].mxu0
      %v2061 = vadd.f32 0.0, %v2060
      %v2062 = vpop.f32.mrb[0].mxu0
      %2063 = vmatprep.mubr.f32.mxu0 0.0
      %2064 = vmatmul.mubr.f32.gmra.mrb[0].mxu0 %v1834
      %v2065 = vpop.f32.mrb[0].mxu0
      %v2066 = vadd.f32 0.0, %v2065
      %v2067 = vpop.f32.mrb[0].mxu0
      %2068 = vmatprep.mubr.f32.mxu0 0.0
      %2069 = vmatmul.mubr.f32.gmra.mrb[0].mxu0 %v1835
      %v2070 = vpop.f32.mrb[0].mxu0
      %v2071 = vadd.f32 0.0, %v2070
      %v2072 = vpop.f32.mrb[0].mxu0
      %2073 = vmatprep.mubr.f32.mxu0 0.0
      %2074 = vmatmul.mubr.f32.gmra.mrb[0].mxu0 %v1836
      %v2075 = vpop.f32.mrb[0].mxu0
      %v2076 = vadd.f32 0.0, %v2075
      %v2077 = vpop.f32.mrb[0].mxu0
      %2078 = vmatprep.mubr.f32.mxu0 0.0
      %2079 = vmatmul.mubr.f32.gmra.mrb[0].mxu0 %v1837
      %v2080 = vpop.f32.mrb[0].mxu0
      %v2081 = vadd.f32 0.0, %v2080
      %v2082 = vpop.f32.mrb[0].mxu0
      %2083 = vmatprep.mubr.f32.mxu0 0.0
      %2084 = vmatmul.mubr.f32.gmra.mrb[0].mxu0 %v1838
      %v2085 = vpop.f32.mrb[0].mxu0
      %v2086 = vadd.f32 0.0, %v2085
      %v2087 = vpop.f32.mrb[0].mxu0
      %2088 = vmatprep.mubr.f32.mxu0 0.0
      %2089 = vmatmul.mubr.f32.gmra.mrb[0].mxu0 %v1839
      %v2090 = vpop.f32.mrb[0].mxu0
      %v2091 = vadd.f32 0.0, %v2090
      %v2092 = vpop.f32.mrb[0].mxu0
      %2093 = vmatprep.mubr.f32.mxu0 0.0
      %2094 = vmatmul.mubr.f32.gmra.mrb[0].mxu0 %v1840
      %v2095 = vpop.f32.mrb[0].mxu0
      %v2096 = vadd.f32 0.0, %v2095
      %v2097 = vpop.f32.mrb[0].mxu0
      %2098 = vmatprep.mubr.f32.mxu0 0.0
      %2099 = vmatmul.mubr.f32.gmra.mrb[0].mxu0 %v1841
      %v2100 = vpop.f32.mrb[0].mxu0
      %v2101 = vadd.f32 0.0, %v2100
      %v2102 = vpop.f32.mrb[0].mxu0
      %2103 = vdwg.mxu0
      %v2104 = vadd.f32 %v1770, %v1926
      %v2105 = vadd.f32 %v1771, %v1931
      %v2106 = vadd.f32 %v1772, %v1936
      %v2107 = vadd.f32 %v1773, %v1941
      %v2108 = vadd.f32 %v1774, %v1946
      %v2109 = vadd.f32 %v1775, %v1951
      %v2110 = vadd.f32 %v1776, %v1956
      %v2111 = vadd.f32 %v1777, %v1961
      %v2112 = vadd.f32 %v1778, %v1966
      %v2113 = vadd.f32 %v1779, %v1971
      %v2114 = vadd.f32 %v1780, %v1976
      %v2115 = vadd.f32 %v1781, %v1981
      %v2116 = vadd.f32 %v1782, %v1986
      %v2117 = vadd.f32 %v1783, %v1991
      %v2118 = vadd.f32 %v1784, %v1996
      %v2119 = vadd.f32 %v1785, %v2001
      %v2120 = vadd.f32 %v1786, %v2006
      %v2121 = vadd.f32 %v1787, %v2011
      %v2122 = vadd.f32 %v1788, %v2016
      %v2123 = vadd.f32 %v1789, %v2021
      %v2124 = vadd.f32 %v1790, %v2026
      %v2125 = vadd.f32 %v1791, %v2031
      %v2126 = vadd.f32 %v1792, %v2036
      %v2127 = vadd.f32 %v1793, %v2041
      %v2128 = vadd.f32 %v1794, %v2046
      %v2129 = vadd.f32 %v1795, %v2051
      %v2130 = vadd.f32 %v1796, %v2056
      %v2131 = vadd.f32 %v1797, %v2061
      %v2132 = vadd.f32 %v1798, %v2066
      %v2133 = vadd.f32 %v1799, %v2071
      %v2134 = vadd.f32 %v1800, %v2076
      %v2135 = vadd.f32 %v1801, %v2081
      %v2136 = vadd.f32 %v1802, %v2086
      %v2137 = vadd.f32 %v1803, %v2091
      %v2138 = vadd.f32 %v1804, %v2096
      %v2139 = vadd.f32 %v1805, %v2101
      %v2140 = vld [vmem:[%s199 + $0x24] sm:$0xff]
      %v2141 = vld [vmem:[%s199 + $0x2c] sm:$0xff]
      %v2142 = vld [vmem:[%s199 + $0x34] sm:$0xff]
      %v2143 = vld [vmem:[%s199 + $0x3c] sm:$0xff]
      %v2144 = vld [vmem:[%s199 + $0x44] sm:$0xff]
      %v2145 = vld [vmem:[%s199 + $0x4c] sm:$0xff]
      %v2146 = vld [vmem:[%s199 + $0x54] sm:$0xff]
      %v2147 = vld [vmem:[%s199 + $0x5c] sm:$0xff]
      %v2148 = vld [vmem:[%s199 + $0x64] sm:$0xff]
      %v2149 = vld [vmem:[%s199 + $0x6c] sm:$0xff]
      %v2150 = vld [vmem:[%s199 + $0x74] sm:$0xff]
      %v2151 = vld [vmem:[%s199 + $0x7c] sm:$0xff]
      %v2152 = vld [vmem:[%s199 + $0x84] sm:$0xff]
      %v2153 = vld [vmem:[%s199 + $0x8c] sm:$0xff]
      %v2154 = vld [vmem:[%s199 + $0x94] sm:$0xff]
      %v2155 = vld [vmem:[%s199 + $0x9c] sm:$0xff]
      %v2156 = vld [vmem:[%s199 + $0xa4] sm:$0xff]
      %v2157 = vld [vmem:[%s199 + $0xac] sm:$0xff]
      %v2158 = vld [vmem:[%s199 + $0xb4] sm:$0xff]
      %v2159 = vld [vmem:[%s199 + $0xbc] sm:$0xff]
      %v2160 = vld [vmem:[%s199 + $0xc4] sm:$0xff]
      %v2161 = vld [vmem:[%s199 + $0xcc] sm:$0xff]
      %v2162 = vld [vmem:[%s199 + $0xd4] sm:$0xff]
      %v2163 = vld [vmem:[%s199 + $0xdc] sm:$0xff]
      %v2164 = vld [vmem:[%s199 + $0xe4] sm:$0xff]
      %v2165 = vld [vmem:[%s199 + $0xec] sm:$0xff]
      %v2166 = vld [vmem:[%s199 + $0xf4] sm:$0xff]
      %v2167 = vld [vmem:[%s199 + $0xfc] sm:$0xff]
      %v2168 = vld [vmem:[%s199 + $0x104] sm:$0xff]
      %v2169 = vld [vmem:[%s199 + $0x10c] sm:$0xff]
      %v2170 = vld [vmem:[%s199 + $0x114] sm:$0xff]
      %v2171 = vld [vmem:[%s199 + $0x11c] sm:$0xff]
      %v2172 = vld [vmem:[%s199 + $0x124] sm:$0xff]
      %v2173 = vld [vmem:[%s199 + $0x12c] sm:$0xff]
      %v2174 = vld [vmem:[%s199 + $0x134] sm:$0xff]
      %v2175 = vld [vmem:[%s199 + $0x13c] sm:$0xff]
      %s2176 = scalar_lea.vmem %s1, 768
      %v2177 = vld [vmem:[%s2176] sm:$0xff]
      %v2178 = vld [vmem:[%s2176 + $0x8] sm:$0xff]
      %v2179 = vld [vmem:[%s2176 + $0x10] sm:$0xff]
      %v2180 = vld [vmem:[%s2176 + $0x18] sm:$0xff]
      %v2181 = vld [vmem:[%s2176 + $0x20] sm:$0xff]
      %v2182 = vld [vmem:[%s2176 + $0x28] sm:$0xff]
      %v2183 = vld [vmem:[%s2176 + $0x30] sm:$0xff]
      %v2184 = vld [vmem:[%s2176 + $0x38] sm:$0xff]
      %v2185 = vld [vmem:[%s2176 + $0x40] sm:$0xff]
      %v2186 = vld [vmem:[%s2176 + $0x48] sm:$0xff]
      %v2187 = vld [vmem:[%s2176 + $0x50] sm:$0xff]
      %v2188 = vld [vmem:[%s2176 + $0x58] sm:$0xff]
      %v2189 = vld [vmem:[%s2176 + $0x60] sm:$0xff]
      %v2190 = vld [vmem:[%s2176 + $0x68] sm:$0xff]
      %v2191 = vld [vmem:[%s2176 + $0x70] sm:$0xff]
      %v2192 = vld [vmem:[%s2176 + $0x78] sm:$0xff]
      %2193 = vmatprep.subr.mxu0 0.0
      %2194 = vmatpush1.msra.mxu0 %v2177
      %2195 = vmatprep.subr.mxu0 0.0
      %2196 = vmatpush1.msra.mxu0 %v2178
      %2197 = vmatprep.subr.mxu0 0.0
      %2198 = vmatpush1.msra.mxu0 %v2179
      %2199 = vmatprep.subr.mxu0 0.0
      %2200 = vmatpush1.msra.mxu0 %v2180
      %2201 = vmatprep.subr.mxu0 0.0
      %2202 = vmatpush1.msra.mxu0 %v2181
      %2203 = vmatprep.subr.mxu0 0.0
      %2204 = vmatpush1.msra.mxu0 %v2182
      %2205 = vmatprep.subr.mxu0 0.0
      %2206 = vmatpush1.msra.mxu0 %v2183
      %2207 = vmatprep.subr.mxu0 0.0
      %2208 = vmatpush1.msra.mxu0 %v2184
      %2209 = vmatprep.subr.mxu0 0.0
      %2210 = vmatpush1.msra.mxu0 %v2185
      %2211 = vmatprep.subr.mxu0 0.0
      %2212 = vmatpush1.msra.mxu0 %v2186
      %2213 = vmatprep.subr.mxu0 0.0
      %2214 = vmatpush1.msra.mxu0 %v2187
      %2215 = vmatprep.subr.mxu0 0.0
      %2216 = vmatpush1.msra.mxu0 %v2188
      %2217 = vmatprep.subr.mxu0 0.0
      %2218 = vmatpush1.msra.mxu0 %v2189
      %2219 = vmatprep.subr.mxu0 0.0
      %2220 = vmatpush1.msra.mxu0 %v2190
      %2221 = vmatprep.subr.mxu0 0.0
      %2222 = vmatpush1.msra.mxu0 %v2191
      %2223 = vmatprep.subr.mxu0 0.0
      %2224 = vmatpush1.msra.mxu0 %v2192
      %2225 = vmatprep.subr.mxu0 0.0
      %2226 = vmatpush1.msra.mxu0 0.0
      %2227 = vmatprep.subr.mxu0 0.0
      %2228 = vmatpush1.msra.mxu0 0.0
      %2229 = vmatprep.subr.mxu0 0.0
      %2230 = vmatpush1.msra.mxu0 0.0
      %2231 = vmatprep.subr.mxu0 0.0
      %2232 = vmatpush1.msra.mxu0 0.0
      %2233 = vmatprep.subr.mxu0 0.0
      %2234 = vmatpush1.msra.mxu0 0.0
      %2235 = vmatprep.subr.mxu0 0.0
      %2236 = vmatpush1.msra.mxu0 0.0
      %2237 = vmatprep.subr.mxu0 0.0
      %2238 = vmatpush1.msra.mxu0 0.0
      %2239 = vmatprep.subr.mxu0 0.0
      %2240 = vmatpush1.msra.mxu0 0.0
      %2241 = vmatprep.subr.mxu0 0.0
      %2242 = vmatpush1.msra.mxu0 0.0
      %2243 = vmatprep.subr.mxu0 0.0
      %2244 = vmatpush1.msra.mxu0 0.0
      %2245 = vmatprep.subr.mxu0 0.0
      %2246 = vmatpush1.msra.mxu0 0.0
      %2247 = vmatprep.subr.mxu0 0.0
      %2248 = vmatpush1.msra.mxu0 0.0
      %2249 = vmatprep.subr.mxu0 0.0
      %2250 = vmatpush1.msra.mxu0 0.0
      %2251 = vmatprep.subr.mxu0 0.0
      %2252 = vmatpush1.msra.mxu0 0.0
      %2253 = vmatprep.subr.mxu0 0.0
      %2254 = vmatpush1.msra.mxu0 0.0
      %2255 = vmatprep.subr.mxu0 0.0
      %2256 = vmatpush1.msra.mxu0 0.0
      %2257 = vmatprep.mubr.f32.mxu0 0.0
      %2258 = vmatmul.mubr.f32.gmra.mrb[0].mxu0 %v2140
      %v2259 = vpop.f32.mrb[0].mxu0
      %v2260 = vadd.f32 0.0, %v2259
      %v2261 = vpop.f32.mrb[0].mxu0
      %2262 = vmatprep.mubr.f32.mxu0 0.0
      %2263 = vmatmul.mubr.f32.gmra.mrb[0].mxu0 %v2141
      %v2264 = vpop.f32.mrb[0].mxu0
      %v2265 = vadd.f32 0.0, %v2264
      %v2266 = vpop.f32.mrb[0].mxu0
      %2267 = vmatprep.mubr.f32.mxu0 0.0
      %2268 = vmatmul.mubr.f32.gmra.mrb[0].mxu0 %v2142
      %v2269 = vpop.f32.mrb[0].mxu0
      %v2270 = vadd.f32 0.0, %v2269
      %v2271 = vpop.f32.mrb[0].mxu0
      %2272 = vmatprep.mubr.f32.mxu0 0.0
      %2273 = vmatmul.mubr.f32.gmra.mrb[0].mxu0 %v2143
      %v2274 = vpop.f32.mrb[0].mxu0
      %v2275 = vadd.f32 0.0, %v2274
      %v2276 = vpop.f32.mrb[0].mxu0
      %2277 = vmatprep.mubr.f32.mxu0 0.0
      %2278 = vmatmul.mubr.f32.gmra.mrb[0].mxu0 %v2144
      %v2279 = vpop.f32.mrb[0].mxu0
      %v2280 = vadd.f32 0.0, %v2279
      %v2281 = vpop.f32.mrb[0].mxu0
      %2282 = vmatprep.mubr.f32.mxu0 0.0
      %2283 = vmatmul.mubr.f32.gmra.mrb[0].mxu0 %v2145
      %v2284 = vpop.f32.mrb[0].mxu0
      %v2285 = vadd.f32 0.0, %v2284
      %v2286 = vpop.f32.mrb[0].mxu0
      %2287 = vmatprep.mubr.f32.mxu0 0.0
      %2288 = vmatmul.mubr.f32.gmra.mrb[0].mxu0 %v2146
      %v2289 = vpop.f32.mrb[0].mxu0
      %v2290 = vadd.f32 0.0, %v2289
      %v2291 = vpop.f32.mrb[0].mxu0
      %2292 = vmatprep.mubr.f32.mxu0 0.0
      %2293 = vmatmul.mubr.f32.gmra.mrb[0].mxu0 %v2147
      %v2294 = vpop.f32.mrb[0].mxu0
      %v2295 = vadd.f32 0.0, %v2294
      %v2296 = vpop.f32.mrb[0].mxu0
      %2297 = vmatprep.mubr.f32.mxu0 0.0
      %2298 = vmatmul.mubr.f32.gmra.mrb[0].mxu0 %v2148
      %v2299 = vpop.f32.mrb[0].mxu0
      %v2300 = vadd.f32 0.0, %v2299
      %v2301 = vpop.f32.mrb[0].mxu0
      %2302 = vmatprep.mubr.f32.mxu0 0.0
      %2303 = vmatmul.mubr.f32.gmra.mrb[0].mxu0 %v2149
      %v2304 = vpop.f32.mrb[0].mxu0
      %v2305 = vadd.f32 0.0, %v2304
      %v2306 = vpop.f32.mrb[0].mxu0
      %2307 = vmatprep.mubr.f32.mxu0 0.0
      %2308 = vmatmul.mubr.f32.gmra.mrb[0].mxu0 %v2150
      %v2309 = vpop.f32.mrb[0].mxu0
      %v2310 = vadd.f32 0.0, %v2309
      %v2311 = vpop.f32.mrb[0].mxu0
      %2312 = vmatprep.mubr.f32.mxu0 0.0
      %2313 = vmatmul.mubr.f32.gmra.mrb[0].mxu0 %v2151
      %v2314 = vpop.f32.mrb[0].mxu0
      %v2315 = vadd.f32 0.0, %v2314
      %v2316 = vpop.f32.mrb[0].mxu0
      %2317 = vmatprep.mubr.f32.mxu0 0.0
      %2318 = vmatmul.mubr.f32.gmra.mrb[0].mxu0 %v2152
      %v2319 = vpop.f32.mrb[0].mxu0
      %v2320 = vadd.f32 0.0, %v2319
      %v2321 = vpop.f32.mrb[0].mxu0
      %2322 = vmatprep.mubr.f32.mxu0 0.0
      %2323 = vmatmul.mubr.f32.gmra.mrb[0].mxu0 %v2153
      %v2324 = vpop.f32.mrb[0].mxu0
      %v2325 = vadd.f32 0.0, %v2324
      %v2326 = vpop.f32.mrb[0].mxu0
      %2327 = vmatprep.mubr.f32.mxu0 0.0
      %2328 = vmatmul.mubr.f32.gmra.mrb[0].mxu0 %v2154
      %v2329 = vpop.f32.mrb[0].mxu0
      %v2330 = vadd.f32 0.0, %v2329
      %v2331 = vpop.f32.mrb[0].mxu0
      %2332 = vmatprep.mubr.f32.mxu0 0.0
      %2333 = vmatmul.mubr.f32.gmra.mrb[0].mxu0 %v2155
      %v2334 = vpop.f32.mrb[0].mxu0
      %v2335 = vadd.f32 0.0, %v2334
      %v2336 = vpop.f32.mrb[0].mxu0
      %2337 = vmatprep.mubr.f32.mxu0 0.0
      %2338 = vmatmul.mubr.f32.gmra.mrb[0].mxu0 %v2156
      %v2339 = vpop.f32.mrb[0].mxu0
      %v2340 = vadd.f32 0.0, %v2339
      %v2341 = vpop.f32.mrb[0].mxu0
      %2342 = vmatprep.mubr.f32.mxu0 0.0
      %2343 = vmatmul.mubr.f32.gmra.mrb[0].mxu0 %v2157
      %v2344 = vpop.f32.mrb[0].mxu0
      %v2345 = vadd.f32 0.0, %v2344
      %v2346 = vpop.f32.mrb[0].mxu0
      %2347 = vmatprep.mubr.f32.mxu0 0.0
      %2348 = vmatmul.mubr.f32.gmra.mrb[0].mxu0 %v2158
      %v2349 = vpop.f32.mrb[0].mxu0
      %v2350 = vadd.f32 0.0, %v2349
      %v2351 = vpop.f32.mrb[0].mxu0
      %2352 = vmatprep.mubr.f32.mxu0 0.0
      %2353 = vmatmul.mubr.f32.gmra.mrb[0].mxu0 %v2159
      %v2354 = vpop.f32.mrb[0].mxu0
      %v2355 = vadd.f32 0.0, %v2354
      %v2356 = vpop.f32.mrb[0].mxu0
      %2357 = vmatprep.mubr.f32.mxu0 0.0
      %2358 = vmatmul.mubr.f32.gmra.mrb[0].mxu0 %v2160
      %v2359 = vpop.f32.mrb[0].mxu0
      %v2360 = vadd.f32 0.0, %v2359
      %v2361 = vpop.f32.mrb[0].mxu0
      %2362 = vmatprep.mubr.f32.mxu0 0.0
      %2363 = vmatmul.mubr.f32.gmra.mrb[0].mxu0 %v2161
      %v2364 = vpop.f32.mrb[0].mxu0
      %v2365 = vadd.f32 0.0, %v2364
      %v2366 = vpop.f32.mrb[0].mxu0
      %2367 = vmatprep.mubr.f32.mxu0 0.0
      %2368 = vmatmul.mubr.f32.gmra.mrb[0].mxu0 %v2162
      %v2369 = vpop.f32.mrb[0].mxu0
      %v2370 = vadd.f32 0.0, %v2369
      %v2371 = vpop.f32.mrb[0].mxu0
      %2372 = vmatprep.mubr.f32.mxu0 0.0
      %2373 = vmatmul.mubr.f32.gmra.mrb[0].mxu0 %v2163
      %v2374 = vpop.f32.mrb[0].mxu0
      %v2375 = vadd.f32 0.0, %v2374
      %v2376 = vpop.f32.mrb[0].mxu0
      %2377 = vmatprep.mubr.f32.mxu0 0.0
      %2378 = vmatmul.mubr.f32.gmra.mrb[0].mxu0 %v2164
      %v2379 = vpop.f32.mrb[0].mxu0
      %v2380 = vadd.f32 0.0, %v2379
      %v2381 = vpop.f32.mrb[0].mxu0
      %2382 = vmatprep.mubr.f32.mxu0 0.0
      %2383 = vmatmul.mubr.f32.gmra.mrb[0].mxu0 %v2165
      %v2384 = vpop.f32.mrb[0].mxu0
      %v2385 = vadd.f32 0.0, %v2384
      %v2386 = vpop.f32.mrb[0].mxu0
      %2387 = vmatprep.mubr.f32.mxu0 0.0
      %2388 = vmatmul.mubr.f32.gmra.mrb[0].mxu0 %v2166
      %v2389 = vpop.f32.mrb[0].mxu0
      %v2390 = vadd.f32 0.0, %v2389
      %v2391 = vpop.f32.mrb[0].mxu0
      %2392 = vmatprep.mubr.f32.mxu0 0.0
      %2393 = vmatmul.mubr.f32.gmra.mrb[0].mxu0 %v2167
      %v2394 = vpop.f32.mrb[0].mxu0
      %v2395 = vadd.f32 0.0, %v2394
      %v2396 = vpop.f32.mrb[0].mxu0
      %2397 = vmatprep.mubr.f32.mxu0 0.0
      %2398 = vmatmul.mubr.f32.gmra.mrb[0].mxu0 %v2168
      %v2399 = vpop.f32.mrb[0].mxu0
      %v2400 = vadd.f32 0.0, %v2399
      %v2401 = vpop.f32.mrb[0].mxu0
      %2402 = vmatprep.mubr.f32.mxu0 0.0
      %2403 = vmatmul.mubr.f32.gmra.mrb[0].mxu0 %v2169
      %v2404 = vpop.f32.mrb[0].mxu0
      %v2405 = vadd.f32 0.0, %v2404
      %v2406 = vpop.f32.mrb[0].mxu0
      %2407 = vmatprep.mubr.f32.mxu0 0.0
      %2408 = vmatmul.mubr.f32.gmra.mrb[0].mxu0 %v2170
      %v2409 = vpop.f32.mrb[0].mxu0
      %v2410 = vadd.f32 0.0, %v2409
      %v2411 = vpop.f32.mrb[0].mxu0
      %2412 = vmatprep.mubr.f32.mxu0 0.0
      %2413 = vmatmul.mubr.f32.gmra.mrb[0].mxu0 %v2171
      %v2414 = vpop.f32.mrb[0].mxu0
      %v2415 = vadd.f32 0.0, %v2414
      %v2416 = vpop.f32.mrb[0].mxu0
      %2417 = vmatprep.mubr.f32.mxu0 0.0
      %2418 = vmatmul.mubr.f32.gmra.mrb[0].mxu0 %v2172
      %v2419 = vpop.f32.mrb[0].mxu0
      %v2420 = vadd.f32 0.0, %v2419
      %v2421 = vpop.f32.mrb[0].mxu0
      %2422 = vmatprep.mubr.f32.mxu0 0.0
      %2423 = vmatmul.mubr.f32.gmra.mrb[0].mxu0 %v2173
      %v2424 = vpop.f32.mrb[0].mxu0
      %v2425 = vadd.f32 0.0, %v2424
      %v2426 = vpop.f32.mrb[0].mxu0
      %2427 = vmatprep.mubr.f32.mxu0 0.0
      %2428 = vmatmul.mubr.f32.gmra.mrb[0].mxu0 %v2174
      %v2429 = vpop.f32.mrb[0].mxu0
      %v2430 = vadd.f32 0.0, %v2429
      %v2431 = vpop.f32.mrb[0].mxu0
      %2432 = vmatprep.mubr.f32.mxu0 0.0
      %2433 = vmatmul.mubr.f32.gmra.mrb[0].mxu0 %v2175
      %v2434 = vpop.f32.mrb[0].mxu0
      %v2435 = vadd.f32 0.0, %v2434
      %v2436 = vpop.f32.mrb[0].mxu0
      %2437 = vdwg.mxu0
      %v2438 = vadd.f32 %v2104, %v2260
      %v2439 = vadd.f32 %v2105, %v2265
      %v2440 = vadd.f32 %v2106, %v2270
      %v2441 = vadd.f32 %v2107, %v2275
      %v2442 = vadd.f32 %v2108, %v2280
      %v2443 = vadd.f32 %v2109, %v2285
      %v2444 = vadd.f32 %v2110, %v2290
      %v2445 = vadd.f32 %v2111, %v2295
      %v2446 = vadd.f32 %v2112, %v2300
      %v2447 = vadd.f32 %v2113, %v2305
      %v2448 = vadd.f32 %v2114, %v2310
      %v2449 = vadd.f32 %v2115, %v2315
      %v2450 = vadd.f32 %v2116, %v2320
      %v2451 = vadd.f32 %v2117, %v2325
      %v2452 = vadd.f32 %v2118, %v2330
      %v2453 = vadd.f32 %v2119, %v2335
      %v2454 = vadd.f32 %v2120, %v2340
      %v2455 = vadd.f32 %v2121, %v2345
      %v2456 = vadd.f32 %v2122, %v2350
      %v2457 = vadd.f32 %v2123, %v2355
      %v2458 = vadd.f32 %v2124, %v2360
      %v2459 = vadd.f32 %v2125, %v2365
      %v2460 = vadd.f32 %v2126, %v2370
      %v2461 = vadd.f32 %v2127, %v2375
      %v2462 = vadd.f32 %v2128, %v2380
      %v2463 = vadd.f32 %v2129, %v2385
      %v2464 = vadd.f32 %v2130, %v2390
      %v2465 = vadd.f32 %v2131, %v2395
      %v2466 = vadd.f32 %v2132, %v2400
      %v2467 = vadd.f32 %v2133, %v2405
      %v2468 = vadd.f32 %v2134, %v2410
      %v2469 = vadd.f32 %v2135, %v2415
      %v2470 = vadd.f32 %v2136, %v2420
      %v2471 = vadd.f32 %v2137, %v2425
      %v2472 = vadd.f32 %v2138, %v2430
      %v2473 = vadd.f32 %v2139, %v2435
      %v2474 = vld [vmem:[%s199 + $0x25] sm:$0xff]
      %v2475 = vld [vmem:[%s199 + $0x2d] sm:$0xff]
      %v2476 = vld [vmem:[%s199 + $0x35] sm:$0xff]
      %v2477 = vld [vmem:[%s199 + $0x3d] sm:$0xff]
      %v2478 = vld [vmem:[%s199 + $0x45] sm:$0xff]
      %v2479 = vld [vmem:[%s199 + $0x4d] sm:$0xff]
      %v2480 = vld [vmem:[%s199 + $0x55] sm:$0xff]
      %v2481 = vld [vmem:[%s199 + $0x5d] sm:$0xff]
      %v2482 = vld [vmem:[%s199 + $0x65] sm:$0xff]
      %v2483 = vld [vmem:[%s199 + $0x6d] sm:$0xff]
      %v2484 = vld [vmem:[%s199 + $0x75] sm:$0xff]
      %v2485 = vld [vmem:[%s199 + $0x7d] sm:$0xff]
      %v2486 = vld [vmem:[%s199 + $0x85] sm:$0xff]
      %v2487 = vld [vmem:[%s199 + $0x8d] sm:$0xff]
      %v2488 = vld [vmem:[%s199 + $0x95] sm:$0xff]
      %v2489 = vld [vmem:[%s199 + $0x9d] sm:$0xff]
      %v2490 = vld [vmem:[%s199 + $0xa5] sm:$0xff]
      %v2491 = vld [vmem:[%s199 + $0xad] sm:$0xff]
      %v2492 = vld [vmem:[%s199 + $0xb5] sm:$0xff]
      %v2493 = vld [vmem:[%s199 + $0xbd] sm:$0xff]
      %v2494 = vld [vmem:[%s199 + $0xc5] sm:$0xff]
      %v2495 = vld [vmem:[%s199 + $0xcd] sm:$0xff]
      %v2496 = vld [vmem:[%s199 + $0xd5] sm:$0xff]
      %v2497 = vld [vmem:[%s199 + $0xdd] sm:$0xff]
      %v2498 = vld [vmem:[%s199 + $0xe5] sm:$0xff]
      %v2499 = vld [vmem:[%s199 + $0xed] sm:$0xff]
      %v2500 = vld [vmem:[%s199 + $0xf5] sm:$0xff]
      %v2501 = vld [vmem:[%s199 + $0xfd] sm:$0xff]
      %v2502 = vld [vmem:[%s199 + $0x105] sm:$0xff]
      %v2503 = vld [vmem:[%s199 + $0x10d] sm:$0xff]
      %v2504 = vld [vmem:[%s199 + $0x115] sm:$0xff]
      %v2505 = vld [vmem:[%s199 + $0x11d] sm:$0xff]
      %v2506 = vld [vmem:[%s199 + $0x125] sm:$0xff]
      %v2507 = vld [vmem:[%s199 + $0x12d] sm:$0xff]
      %v2508 = vld [vmem:[%s199 + $0x135] sm:$0xff]
      %v2509 = vld [vmem:[%s199 + $0x13d] sm:$0xff]
      %s2510 = scalar_lea.vmem %s1, 896
      %v2511 = vld [vmem:[%s2510] sm:$0xff]
      %v2512 = vld [vmem:[%s2510 + $0x8] sm:$0xff]
      %v2513 = vld [vmem:[%s2510 + $0x10] sm:$0xff]
      %v2514 = vld [vmem:[%s2510 + $0x18] sm:$0xff]
      %v2515 = vld [vmem:[%s2510 + $0x20] sm:$0xff]
      %v2516 = vld [vmem:[%s2510 + $0x28] sm:$0xff]
      %v2517 = vld [vmem:[%s2510 + $0x30] sm:$0xff]
      %v2518 = vld [vmem:[%s2510 + $0x38] sm:$0xff]
      %v2519 = vld [vmem:[%s2510 + $0x40] sm:$0xff]
      %v2520 = vld [vmem:[%s2510 + $0x48] sm:$0xff]
      %v2521 = vld [vmem:[%s2510 + $0x50] sm:$0xff]
      %v2522 = vld [vmem:[%s2510 + $0x58] sm:$0xff]
      %v2523 = vld [vmem:[%s2510 + $0x60] sm:$0xff]
      %v2524 = vld [vmem:[%s2510 + $0x68] sm:$0xff]
      %v2525 = vld [vmem:[%s2510 + $0x70] sm:$0xff]
      %v2526 = vld [vmem:[%s2510 + $0x78] sm:$0xff]
      %2527 = vmatprep.subr.mxu0 0.0
      %2528 = vmatpush1.msra.mxu0 %v2511
      %2529 = vmatprep.subr.mxu0 0.0
      %2530 = vmatpush1.msra.mxu0 %v2512
      %2531 = vmatprep.subr.mxu0 0.0
      %2532 = vmatpush1.msra.mxu0 %v2513
      %2533 = vmatprep.subr.mxu0 0.0
      %2534 = vmatpush1.msra.mxu0 %v2514
      %2535 = vmatprep.subr.mxu0 0.0
      %2536 = vmatpush1.msra.mxu0 %v2515
      %2537 = vmatprep.subr.mxu0 0.0
      %2538 = vmatpush1.msra.mxu0 %v2516
      %2539 = vmatprep.subr.mxu0 0.0
      %2540 = vmatpush1.msra.mxu0 %v2517
      %2541 = vmatprep.subr.mxu0 0.0
      %2542 = vmatpush1.msra.mxu0 %v2518
      %2543 = vmatprep.subr.mxu0 0.0
      %2544 = vmatpush1.msra.mxu0 %v2519
      %2545 = vmatprep.subr.mxu0 0.0
      %2546 = vmatpush1.msra.mxu0 %v2520
      %2547 = vmatprep.subr.mxu0 0.0
      %2548 = vmatpush1.msra.mxu0 %v2521
      %2549 = vmatprep.subr.mxu0 0.0
      %2550 = vmatpush1.msra.mxu0 %v2522
      %2551 = vmatprep.subr.mxu0 0.0
      %2552 = vmatpush1.msra.mxu0 %v2523
      %2553 = vmatprep.subr.mxu0 0.0
      %2554 = vmatpush1.msra.mxu0 %v2524
      %2555 = vmatprep.subr.mxu0 0.0
      %2556 = vmatpush1.msra.mxu0 %v2525
      %2557 = vmatprep.subr.mxu0 0.0
      %2558 = vmatpush1.msra.mxu0 %v2526
      %2559 = vmatprep.subr.mxu0 0.0
      %2560 = vmatpush1.msra.mxu0 0.0
      %2561 = vmatprep.subr.mxu0 0.0
      %2562 = vmatpush1.msra.mxu0 0.0
      %2563 = vmatprep.subr.mxu0 0.0
      %2564 = vmatpush1.msra.mxu0 0.0
      %2565 = vmatprep.subr.mxu0 0.0
      %2566 = vmatpush1.msra.mxu0 0.0
      %2567 = vmatprep.subr.mxu0 0.0
      %2568 = vmatpush1.msra.mxu0 0.0
      %2569 = vmatprep.subr.mxu0 0.0
      %2570 = vmatpush1.msra.mxu0 0.0
      %2571 = vmatprep.subr.mxu0 0.0
      %2572 = vmatpush1.msra.mxu0 0.0
      %2573 = vmatprep.subr.mxu0 0.0
      %2574 = vmatpush1.msra.mxu0 0.0
      %2575 = vmatprep.subr.mxu0 0.0
      %2576 = vmatpush1.msra.mxu0 0.0
      %2577 = vmatprep.subr.mxu0 0.0
      %2578 = vmatpush1.msra.mxu0 0.0
      %2579 = vmatprep.subr.mxu0 0.0
      %2580 = vmatpush1.msra.mxu0 0.0
      %2581 = vmatprep.subr.mxu0 0.0
      %2582 = vmatpush1.msra.mxu0 0.0
      %2583 = vmatprep.subr.mxu0 0.0
      %2584 = vmatpush1.msra.mxu0 0.0
      %2585 = vmatprep.subr.mxu0 0.0
      %2586 = vmatpush1.msra.mxu0 0.0
      %2587 = vmatprep.subr.mxu0 0.0
      %2588 = vmatpush1.msra.mxu0 0.0
      %2589 = vmatprep.subr.mxu0 0.0
      %2590 = vmatpush1.msra.mxu0 0.0
      %2591 = vmatprep.mubr.f32.mxu0 0.0
      %2592 = vmatmul.mubr.f32.gmra.mrb[0].mxu0 %v2474
      %v2593 = vpop.f32.mrb[0].mxu0
      %v2594 = vadd.f32 0.0, %v2593
      %v2595 = vpop.f32.mrb[0].mxu0
      %2596 = vmatprep.mubr.f32.mxu0 0.0
      %2597 = vmatmul.mubr.f32.gmra.mrb[0].mxu0 %v2475
      %v2598 = vpop.f32.mrb[0].mxu0
      %v2599 = vadd.f32 0.0, %v2598
      %v2600 = vpop.f32.mrb[0].mxu0
      %2601 = vmatprep.mubr.f32.mxu0 0.0
      %2602 = vmatmul.mubr.f32.gmra.mrb[0].mxu0 %v2476
      %v2603 = vpop.f32.mrb[0].mxu0
      %v2604 = vadd.f32 0.0, %v2603
      %v2605 = vpop.f32.mrb[0].mxu0
      %2606 = vmatprep.mubr.f32.mxu0 0.0
      %2607 = vmatmul.mubr.f32.gmra.mrb[0].mxu0 %v2477
      %v2608 = vpop.f32.mrb[0].mxu0
      %v2609 = vadd.f32 0.0, %v2608
      %v2610 = vpop.f32.mrb[0].mxu0
      %2611 = vmatprep.mubr.f32.mxu0 0.0
      %2612 = vmatmul.mubr.f32.gmra.mrb[0].mxu0 %v2478
      %v2613 = vpop.f32.mrb[0].mxu0
      %v2614 = vadd.f32 0.0, %v2613
      %v2615 = vpop.f32.mrb[0].mxu0
      %2616 = vmatprep.mubr.f32.mxu0 0.0
      %2617 = vmatmul.mubr.f32.gmra.mrb[0].mxu0 %v2479
      %v2618 = vpop.f32.mrb[0].mxu0
      %v2619 = vadd.f32 0.0, %v2618
      %v2620 = vpop.f32.mrb[0].mxu0
      %2621 = vmatprep.mubr.f32.mxu0 0.0
      %2622 = vmatmul.mubr.f32.gmra.mrb[0].mxu0 %v2480
      %v2623 = vpop.f32.mrb[0].mxu0
      %v2624 = vadd.f32 0.0, %v2623
      %v2625 = vpop.f32.mrb[0].mxu0
      %2626 = vmatprep.mubr.f32.mxu0 0.0
      %2627 = vmatmul.mubr.f32.gmra.mrb[0].mxu0 %v2481
      %v2628 = vpop.f32.mrb[0].mxu0
      %v2629 = vadd.f32 0.0, %v2628
      %v2630 = vpop.f32.mrb[0].mxu0
      %2631 = vmatprep.mubr.f32.mxu0 0.0
      %2632 = vmatmul.mubr.f32.gmra.mrb[0].mxu0 %v2482
      %v2633 = vpop.f32.mrb[0].mxu0
      %v2634 = vadd.f32 0.0, %v2633
      %v2635 = vpop.f32.mrb[0].mxu0
      %2636 = vmatprep.mubr.f32.mxu0 0.0
      %2637 = vmatmul.mubr.f32.gmra.mrb[0].mxu0 %v2483
      %v2638 = vpop.f32.mrb[0].mxu0
      %v2639 = vadd.f32 0.0, %v2638
      %v2640 = vpop.f32.mrb[0].mxu0
      %2641 = vmatprep.mubr.f32.mxu0 0.0
      %2642 = vmatmul.mubr.f32.gmra.mrb[0].mxu0 %v2484
      %v2643 = vpop.f32.mrb[0].mxu0
      %v2644 = vadd.f32 0.0, %v2643
      %v2645 = vpop.f32.mrb[0].mxu0
      %2646 = vmatprep.mubr.f32.mxu0 0.0
      %2647 = vmatmul.mubr.f32.gmra.mrb[0].mxu0 %v2485
      %v2648 = vpop.f32.mrb[0].mxu0
      %v2649 = vadd.f32 0.0, %v2648
      %v2650 = vpop.f32.mrb[0].mxu0
      %2651 = vmatprep.mubr.f32.mxu0 0.0
      %2652 = vmatmul.mubr.f32.gmra.mrb[0].mxu0 %v2486
      %v2653 = vpop.f32.mrb[0].mxu0
      %v2654 = vadd.f32 0.0, %v2653
      %v2655 = vpop.f32.mrb[0].mxu0
      %2656 = vmatprep.mubr.f32.mxu0 0.0
      %2657 = vmatmul.mubr.f32.gmra.mrb[0].mxu0 %v2487
      %v2658 = vpop.f32.mrb[0].mxu0
      %v2659 = vadd.f32 0.0, %v2658
      %v2660 = vpop.f32.mrb[0].mxu0
      %2661 = vmatprep.mubr.f32.mxu0 0.0
      %2662 = vmatmul.mubr.f32.gmra.mrb[0].mxu0 %v2488
      %v2663 = vpop.f32.mrb[0].mxu0
      %v2664 = vadd.f32 0.0, %v2663
      %v2665 = vpop.f32.mrb[0].mxu0
      %2666 = vmatprep.mubr.f32.mxu0 0.0
      %2667 = vmatmul.mubr.f32.gmra.mrb[0].mxu0 %v2489
      %v2668 = vpop.f32.mrb[0].mxu0
      %v2669 = vadd.f32 0.0, %v2668
      %v2670 = vpop.f32.mrb[0].mxu0
      %2671 = vmatprep.mubr.f32.mxu0 0.0
      %2672 = vmatmul.mubr.f32.gmra.mrb[0].mxu0 %v2490
      %v2673 = vpop.f32.mrb[0].mxu0
      %v2674 = vadd.f32 0.0, %v2673
      %v2675 = vpop.f32.mrb[0].mxu0
      %2676 = vmatprep.mubr.f32.mxu0 0.0
      %2677 = vmatmul.mubr.f32.gmra.mrb[0].mxu0 %v2491
      %v2678 = vpop.f32.mrb[0].mxu0
      %v2679 = vadd.f32 0.0, %v2678
      %v2680 = vpop.f32.mrb[0].mxu0
      %2681 = vmatprep.mubr.f32.mxu0 0.0
      %2682 = vmatmul.mubr.f32.gmra.mrb[0].mxu0 %v2492
      %v2683 = vpop.f32.mrb[0].mxu0
      %v2684 = vadd.f32 0.0, %v2683
      %v2685 = vpop.f32.mrb[0].mxu0
      %2686 = vmatprep.mubr.f32.mxu0 0.0
      %2687 = vmatmul.mubr.f32.gmra.mrb[0].mxu0 %v2493
      %v2688 = vpop.f32.mrb[0].mxu0
      %v2689 = vadd.f32 0.0, %v2688
      %v2690 = vpop.f32.mrb[0].mxu0
      %2691 = vmatprep.mubr.f32.mxu0 0.0
      %2692 = vmatmul.mubr.f32.gmra.mrb[0].mxu0 %v2494
      %v2693 = vpop.f32.mrb[0].mxu0
      %v2694 = vadd.f32 0.0, %v2693
      %v2695 = vpop.f32.mrb[0].mxu0
      %2696 = vmatprep.mubr.f32.mxu0 0.0
      %2697 = vmatmul.mubr.f32.gmra.mrb[0].mxu0 %v2495
      %v2698 = vpop.f32.mrb[0].mxu0
      %v2699 = vadd.f32 0.0, %v2698
      %v2700 = vpop.f32.mrb[0].mxu0
      %2701 = vmatprep.mubr.f32.mxu0 0.0
      %2702 = vmatmul.mubr.f32.gmra.mrb[0].mxu0 %v2496
      %v2703 = vpop.f32.mrb[0].mxu0
      %v2704 = vadd.f32 0.0, %v2703
      %v2705 = vpop.f32.mrb[0].mxu0
      %2706 = vmatprep.mubr.f32.mxu0 0.0
      %2707 = vmatmul.mubr.f32.gmra.mrb[0].mxu0 %v2497
      %v2708 = vpop.f32.mrb[0].mxu0
      %v2709 = vadd.f32 0.0, %v2708
      %v2710 = vpop.f32.mrb[0].mxu0
      %2711 = vmatprep.mubr.f32.mxu0 0.0
      %2712 = vmatmul.mubr.f32.gmra.mrb[0].mxu0 %v2498
      %v2713 = vpop.f32.mrb[0].mxu0
      %v2714 = vadd.f32 0.0, %v2713
      %v2715 = vpop.f32.mrb[0].mxu0
      %2716 = vmatprep.mubr.f32.mxu0 0.0
      %2717 = vmatmul.mubr.f32.gmra.mrb[0].mxu0 %v2499
      %v2718 = vpop.f32.mrb[0].mxu0
      %v2719 = vadd.f32 0.0, %v2718
      %v2720 = vpop.f32.mrb[0].mxu0
      %2721 = vmatprep.mubr.f32.mxu0 0.0
      %2722 = vmatmul.mubr.f32.gmra.mrb[0].mxu0 %v2500
      %v2723 = vpop.f32.mrb[0].mxu0
      %v2724 = vadd.f32 0.0, %v2723
      %v2725 = vpop.f32.mrb[0].mxu0
      %2726 = vmatprep.mubr.f32.mxu0 0.0
      %2727 = vmatmul.mubr.f32.gmra.mrb[0].mxu0 %v2501
      %v2728 = vpop.f32.mrb[0].mxu0
      %v2729 = vadd.f32 0.0, %v2728
      %v2730 = vpop.f32.mrb[0].mxu0
      %2731 = vmatprep.mubr.f32.mxu0 0.0
      %2732 = vmatmul.mubr.f32.gmra.mrb[0].mxu0 %v2502
      %v2733 = vpop.f32.mrb[0].mxu0
      %v2734 = vadd.f32 0.0, %v2733
      %v2735 = vpop.f32.mrb[0].mxu0
      %2736 = vmatprep.mubr.f32.mxu0 0.0
      %2737 = vmatmul.mubr.f32.gmra.mrb[0].mxu0 %v2503
      %v2738 = vpop.f32.mrb[0].mxu0
      %v2739 = vadd.f32 0.0, %v2738
      %v2740 = vpop.f32.mrb[0].mxu0
      %2741 = vmatprep.mubr.f32.mxu0 0.0
      %2742 = vmatmul.mubr.f32.gmra.mrb[0].mxu0 %v2504
      %v2743 = vpop.f32.mrb[0].mxu0
      %v2744 = vadd.f32 0.0, %v2743
      %v2745 = vpop.f32.mrb[0].mxu0
      %2746 = vmatprep.mubr.f32.mxu0 0.0
      %2747 = vmatmul.mubr.f32.gmra.mrb[0].mxu0 %v2505
      %v2748 = vpop.f32.mrb[0].mxu0
      %v2749 = vadd.f32 0.0, %v2748
      %v2750 = vpop.f32.mrb[0].mxu0
      %2751 = vmatprep.mubr.f32.mxu0 0.0
      %2752 = vmatmul.mubr.f32.gmra.mrb[0].mxu0 %v2506
      %v2753 = vpop.f32.mrb[0].mxu0
      %v2754 = vadd.f32 0.0, %v2753
      %v2755 = vpop.f32.mrb[0].mxu0
      %2756 = vmatprep.mubr.f32.mxu0 0.0
      %2757 = vmatmul.mubr.f32.gmra.mrb[0].mxu0 %v2507
      %v2758 = vpop.f32.mrb[0].mxu0
      %v2759 = vadd.f32 0.0, %v2758
      %v2760 = vpop.f32.mrb[0].mxu0
      %2761 = vmatprep.mubr.f32.mxu0 0.0
      %2762 = vmatmul.mubr.f32.gmra.mrb[0].mxu0 %v2508
      %v2763 = vpop.f32.mrb[0].mxu0
      %v2764 = vadd.f32 0.0, %v2763
      %v2765 = vpop.f32.mrb[0].mxu0
      %2766 = vmatprep.mubr.f32.mxu0 0.0
      %2767 = vmatmul.mubr.f32.gmra.mrb[0].mxu0 %v2509
      %v2768 = vpop.f32.mrb[0].mxu0
      %v2769 = vadd.f32 0.0, %v2768
      %v2770 = vpop.f32.mrb[0].mxu0
      %2771 = vdwg.mxu0
      %v2772 = vadd.f32 %v2438, %v2594
      %v2773 = vadd.f32 %v2439, %v2599
      %v2774 = vadd.f32 %v2440, %v2604
      %v2775 = vadd.f32 %v2441, %v2609
      %v2776 = vadd.f32 %v2442, %v2614
      %v2777 = vadd.f32 %v2443, %v2619
      %v2778 = vadd.f32 %v2444, %v2624
      %v2779 = vadd.f32 %v2445, %v2629
      %v2780 = vadd.f32 %v2446, %v2634
      %v2781 = vadd.f32 %v2447, %v2639
      %v2782 = vadd.f32 %v2448, %v2644
      %v2783 = vadd.f32 %v2449, %v2649
      %v2784 = vadd.f32 %v2450, %v2654
      %v2785 = vadd.f32 %v2451, %v2659
      %v2786 = vadd.f32 %v2452, %v2664
      %v2787 = vadd.f32 %v2453, %v2669
      %v2788 = vadd.f32 %v2454, %v2674
      %v2789 = vadd.f32 %v2455, %v2679
      %v2790 = vadd.f32 %v2456, %v2684
      %v2791 = vadd.f32 %v2457, %v2689
      %v2792 = vadd.f32 %v2458, %v2694
      %v2793 = vadd.f32 %v2459, %v2699
      %v2794 = vadd.f32 %v2460, %v2704
      %v2795 = vadd.f32 %v2461, %v2709
      %v2796 = vadd.f32 %v2462, %v2714
      %v2797 = vadd.f32 %v2463, %v2719
      %v2798 = vadd.f32 %v2464, %v2724
      %v2799 = vadd.f32 %v2465, %v2729
      %v2800 = vadd.f32 %v2466, %v2734
      %v2801 = vadd.f32 %v2467, %v2739
      %v2802 = vadd.f32 %v2468, %v2744
      %v2803 = vadd.f32 %v2469, %v2749
      %v2804 = vadd.f32 %v2470, %v2754
      %v2805 = vadd.f32 %v2471, %v2759
      %v2806 = vadd.f32 %v2472, %v2764
      %v2807 = vadd.f32 %v2473, %v2769
      %v2808 = vld [vmem:[%s199 + $0x26] sm:$0xff]
      %v2809 = vld [vmem:[%s199 + $0x2e] sm:$0xff]
      %v2810 = vld [vmem:[%s199 + $0x36] sm:$0xff]
      %v2811 = vld [vmem:[%s199 + $0x3e] sm:$0xff]
      %v2812 = vld [vmem:[%s199 + $0x46] sm:$0xff]
      %v2813 = vld [vmem:[%s199 + $0x4e] sm:$0xff]
      %v2814 = vld [vmem:[%s199 + $0x56] sm:$0xff]
      %v2815 = vld [vmem:[%s199 + $0x5e] sm:$0xff]
      %v2816 = vld [vmem:[%s199 + $0x66] sm:$0xff]
      %v2817 = vld [vmem:[%s199 + $0x6e] sm:$0xff]
      %v2818 = vld [vmem:[%s199 + $0x76] sm:$0xff]
      %v2819 = vld [vmem:[%s199 + $0x7e] sm:$0xff]
      %v2820 = vld [vmem:[%s199 + $0x86] sm:$0xff]
      %v2821 = vld [vmem:[%s199 + $0x8e] sm:$0xff]
      %v2822 = vld [vmem:[%s199 + $0x96] sm:$0xff]
      %v2823 = vld [vmem:[%s199 + $0x9e] sm:$0xff]
      %v2824 = vld [vmem:[%s199 + $0xa6] sm:$0xff]
      %v2825 = vld [vmem:[%s199 + $0xae] sm:$0xff]
      %v2826 = vld [vmem:[%s199 + $0xb6] sm:$0xff]
      %v2827 = vld [vmem:[%s199 + $0xbe] sm:$0xff]
      %v2828 = vld [vmem:[%s199 + $0xc6] sm:$0xff]
      %v2829 = vld [vmem:[%s199 + $0xce] sm:$0xff]
      %v2830 = vld [vmem:[%s199 + $0xd6] sm:$0xff]
      %v2831 = vld [vmem:[%s199 + $0xde] sm:$0xff]
      %v2832 = vld [vmem:[%s199 + $0xe6] sm:$0xff]
      %v2833 = vld [vmem:[%s199 + $0xee] sm:$0xff]
      %v2834 = vld [vmem:[%s199 + $0xf6] sm:$0xff]
      %v2835 = vld [vmem:[%s199 + $0xfe] sm:$0xff]
      %v2836 = vld [vmem:[%s199 + $0x106] sm:$0xff]
      %v2837 = vld [vmem:[%s199 + $0x10e] sm:$0xff]
      %v2838 = vld [vmem:[%s199 + $0x116] sm:$0xff]
      %v2839 = vld [vmem:[%s199 + $0x11e] sm:$0xff]
      %v2840 = vld [vmem:[%s199 + $0x126] sm:$0xff]
      %v2841 = vld [vmem:[%s199 + $0x12e] sm:$0xff]
      %v2842 = vld [vmem:[%s199 + $0x136] sm:$0xff]
      %v2843 = vld [vmem:[%s199 + $0x13e] sm:$0xff]
      %s2844 = scalar_lea.vmem %s1, 1024
      %v2845 = vld [vmem:[%s2844] sm:$0xff]
      %v2846 = vld [vmem:[%s2844 + $0x8] sm:$0xff]
      %v2847 = vld [vmem:[%s2844 + $0x10] sm:$0xff]
      %v2848 = vld [vmem:[%s2844 + $0x18] sm:$0xff]
      %v2849 = vld [vmem:[%s2844 + $0x20] sm:$0xff]
      %v2850 = vld [vmem:[%s2844 + $0x28] sm:$0xff]
      %v2851 = vld [vmem:[%s2844 + $0x30] sm:$0xff]
      %v2852 = vld [vmem:[%s2844 + $0x38] sm:$0xff]
      %v2853 = vld [vmem:[%s2844 + $0x40] sm:$0xff]
      %v2854 = vld [vmem:[%s2844 + $0x48] sm:$0xff]
      %v2855 = vld [vmem:[%s2844 + $0x50] sm:$0xff]
      %v2856 = vld [vmem:[%s2844 + $0x58] sm:$0xff]
      %v2857 = vld [vmem:[%s2844 + $0x60] sm:$0xff]
      %v2858 = vld [vmem:[%s2844 + $0x68] sm:$0xff]
      %v2859 = vld [vmem:[%s2844 + $0x70] sm:$0xff]
      %v2860 = vld [vmem:[%s2844 + $0x78] sm:$0xff]
      %2861 = vmatprep.subr.mxu0 0.0
      %2862 = vmatpush1.msra.mxu0 %v2845
      %2863 = vmatprep.subr.mxu0 0.0
      %2864 = vmatpush1.msra.mxu0 %v2846
      %2865 = vmatprep.subr.mxu0 0.0
      %2866 = vmatpush1.msra.mxu0 %v2847
      %2867 = vmatprep.subr.mxu0 0.0
      %2868 = vmatpush1.msra.mxu0 %v2848
      %2869 = vmatprep.subr.mxu0 0.0
      %2870 = vmatpush1.msra.mxu0 %v2849
      %2871 = vmatprep.subr.mxu0 0.0
      %2872 = vmatpush1.msra.mxu0 %v2850
      %2873 = vmatprep.subr.mxu0 0.0
      %2874 = vmatpush1.msra.mxu0 %v2851
      %2875 = vmatprep.subr.mxu0 0.0
      %2876 = vmatpush1.msra.mxu0 %v2852
      %2877 = vmatprep.subr.mxu0 0.0
      %2878 = vmatpush1.msra.mxu0 %v2853
      %2879 = vmatprep.subr.mxu0 0.0
      %2880 = vmatpush1.msra.mxu0 %v2854
      %2881 = vmatprep.subr.mxu0 0.0
      %2882 = vmatpush1.msra.mxu0 %v2855
      %2883 = vmatprep.subr.mxu0 0.0
      %2884 = vmatpush1.msra.mxu0 %v2856
      %2885 = vmatprep.subr.mxu0 0.0
      %2886 = vmatpush1.msra.mxu0 %v2857
      %2887 = vmatprep.subr.mxu0 0.0
      %2888 = vmatpush1.msra.mxu0 %v2858
      %2889 = vmatprep.subr.mxu0 0.0
      %2890 = vmatpush1.msra.mxu0 %v2859
      %2891 = vmatprep.subr.mxu0 0.0
      %2892 = vmatpush1.msra.mxu0 %v2860
      %2893 = vmatprep.subr.mxu0 0.0
      %2894 = vmatpush1.msra.mxu0 0.0
      %2895 = vmatprep.subr.mxu0 0.0
      %2896 = vmatpush1.msra.mxu0 0.0
      %2897 = vmatprep.subr.mxu0 0.0
      %2898 = vmatpush1.msra.mxu0 0.0
      %2899 = vmatprep.subr.mxu0 0.0
      %2900 = vmatpush1.msra.mxu0 0.0
      %2901 = vmatprep.subr.mxu0 0.0
      %2902 = vmatpush1.msra.mxu0 0.0
      %2903 = vmatprep.subr.mxu0 0.0
      %2904 = vmatpush1.msra.mxu0 0.0
      %2905 = vmatprep.subr.mxu0 0.0
      %2906 = vmatpush1.msra.mxu0 0.0
      %2907 = vmatprep.subr.mxu0 0.0
      %2908 = vmatpush1.msra.mxu0 0.0
      %2909 = vmatprep.subr.mxu0 0.0
      %2910 = vmatpush1.msra.mxu0 0.0
      %2911 = vmatprep.subr.mxu0 0.0
      %2912 = vmatpush1.msra.mxu0 0.0
      %2913 = vmatprep.subr.mxu0 0.0
      %2914 = vmatpush1.msra.mxu0 0.0
      %2915 = vmatprep.subr.mxu0 0.0
      %2916 = vmatpush1.msra.mxu0 0.0
      %2917 = vmatprep.subr.mxu0 0.0
      %2918 = vmatpush1.msra.mxu0 0.0
      %2919 = vmatprep.subr.mxu0 0.0
      %2920 = vmatpush1.msra.mxu0 0.0
      %2921 = vmatprep.subr.mxu0 0.0
      %2922 = vmatpush1.msra.mxu0 0.0
      %2923 = vmatprep.subr.mxu0 0.0
      %2924 = vmatpush1.msra.mxu0 0.0
      %2925 = vmatprep.mubr.f32.mxu0 0.0
      %2926 = vmatmul.mubr.f32.gmra.mrb[0].mxu0 %v2808
      %v2927 = vpop.f32.mrb[0].mxu0
      %v2928 = vadd.f32 0.0, %v2927
      %v2929 = vpop.f32.mrb[0].mxu0
      %2930 = vmatprep.mubr.f32.mxu0 0.0
      %2931 = vmatmul.mubr.f32.gmra.mrb[0].mxu0 %v2809
      %v2932 = vpop.f32.mrb[0].mxu0
      %v2933 = vadd.f32 0.0, %v2932
      %v2934 = vpop.f32.mrb[0].mxu0
      %2935 = vmatprep.mubr.f32.mxu0 0.0
      %2936 = vmatmul.mubr.f32.gmra.mrb[0].mxu0 %v2810
      %v2937 = vpop.f32.mrb[0].mxu0
      %v2938 = vadd.f32 0.0, %v2937
      %v2939 = vpop.f32.mrb[0].mxu0
      %2940 = vmatprep.mubr.f32.mxu0 0.0
      %2941 = vmatmul.mubr.f32.gmra.mrb[0].mxu0 %v2811
      %v2942 = vpop.f32.mrb[0].mxu0
      %v2943 = vadd.f32 0.0, %v2942
      %v2944 = vpop.f32.mrb[0].mxu0
      %2945 = vmatprep.mubr.f32.mxu0 0.0
      %2946 = vmatmul.mubr.f32.gmra.mrb[0].mxu0 %v2812
      %v2947 = vpop.f32.mrb[0].mxu0
      %v2948 = vadd.f32 0.0, %v2947
      %v2949 = vpop.f32.mrb[0].mxu0
      %2950 = vmatprep.mubr.f32.mxu0 0.0
      %2951 = vmatmul.mubr.f32.gmra.mrb[0].mxu0 %v2813
      %v2952 = vpop.f32.mrb[0].mxu0
      %v2953 = vadd.f32 0.0, %v2952
      %v2954 = vpop.f32.mrb[0].mxu0
      %2955 = vmatprep.mubr.f32.mxu0 0.0
      %2956 = vmatmul.mubr.f32.gmra.mrb[0].mxu0 %v2814
      %v2957 = vpop.f32.mrb[0].mxu0
      %v2958 = vadd.f32 0.0, %v2957
      %v2959 = vpop.f32.mrb[0].mxu0
      %2960 = vmatprep.mubr.f32.mxu0 0.0
      %2961 = vmatmul.mubr.f32.gmra.mrb[0].mxu0 %v2815
      %v2962 = vpop.f32.mrb[0].mxu0
      %v2963 = vadd.f32 0.0, %v2962
      %v2964 = vpop.f32.mrb[0].mxu0
      %2965 = vmatprep.mubr.f32.mxu0 0.0
      %2966 = vmatmul.mubr.f32.gmra.mrb[0].mxu0 %v2816
      %v2967 = vpop.f32.mrb[0].mxu0
      %v2968 = vadd.f32 0.0, %v2967
      %v2969 = vpop.f32.mrb[0].mxu0
      %2970 = vmatprep.mubr.f32.mxu0 0.0
      %2971 = vmatmul.mubr.f32.gmra.mrb[0].mxu0 %v2817
      %v2972 = vpop.f32.mrb[0].mxu0
      %v2973 = vadd.f32 0.0, %v2972
      %v2974 = vpop.f32.mrb[0].mxu0
      %2975 = vmatprep.mubr.f32.mxu0 0.0
      %2976 = vmatmul.mubr.f32.gmra.mrb[0].mxu0 %v2818
      %v2977 = vpop.f32.mrb[0].mxu0
      %v2978 = vadd.f32 0.0, %v2977
      %v2979 = vpop.f32.mrb[0].mxu0
      %2980 = vmatprep.mubr.f32.mxu0 0.0
      %2981 = vmatmul.mubr.f32.gmra.mrb[0].mxu0 %v2819
      %v2982 = vpop.f32.mrb[0].mxu0
      %v2983 = vadd.f32 0.0, %v2982
      %v2984 = vpop.f32.mrb[0].mxu0
      %2985 = vmatprep.mubr.f32.mxu0 0.0
      %2986 = vmatmul.mubr.f32.gmra.mrb[0].mxu0 %v2820
      %v2987 = vpop.f32.mrb[0].mxu0
      %v2988 = vadd.f32 0.0, %v2987
      %v2989 = vpop.f32.mrb[0].mxu0
      %2990 = vmatprep.mubr.f32.mxu0 0.0
      %2991 = vmatmul.mubr.f32.gmra.mrb[0].mxu0 %v2821
      %v2992 = vpop.f32.mrb[0].mxu0
      %v2993 = vadd.f32 0.0, %v2992
      %v2994 = vpop.f32.mrb[0].mxu0
      %2995 = vmatprep.mubr.f32.mxu0 0.0
      %2996 = vmatmul.mubr.f32.gmra.mrb[0].mxu0 %v2822
      %v2997 = vpop.f32.mrb[0].mxu0
      %v2998 = vadd.f32 0.0, %v2997
      %v2999 = vpop.f32.mrb[0].mxu0
      %3000 = vmatprep.mubr.f32.mxu0 0.0
      %3001 = vmatmul.mubr.f32.gmra.mrb[0].mxu0 %v2823
      %v3002 = vpop.f32.mrb[0].mxu0
      %v3003 = vadd.f32 0.0, %v3002
      %v3004 = vpop.f32.mrb[0].mxu0
      %3005 = vmatprep.mubr.f32.mxu0 0.0
      %3006 = vmatmul.mubr.f32.gmra.mrb[0].mxu0 %v2824
      %v3007 = vpop.f32.mrb[0].mxu0
      %v3008 = vadd.f32 0.0, %v3007
      %v3009 = vpop.f32.mrb[0].mxu0
      %3010 = vmatprep.mubr.f32.mxu0 0.0
      %3011 = vmatmul.mubr.f32.gmra.mrb[0].mxu0 %v2825
      %v3012 = vpop.f32.mrb[0].mxu0
      %v3013 = vadd.f32 0.0, %v3012
      %v3014 = vpop.f32.mrb[0].mxu0
      %3015 = vmatprep.mubr.f32.mxu0 0.0
      %3016 = vmatmul.mubr.f32.gmra.mrb[0].mxu0 %v2826
      %v3017 = vpop.f32.mrb[0].mxu0
      %v3018 = vadd.f32 0.0, %v3017
      %v3019 = vpop.f32.mrb[0].mxu0
      %3020 = vmatprep.mubr.f32.mxu0 0.0
      %3021 = vmatmul.mubr.f32.gmra.mrb[0].mxu0 %v2827
      %v3022 = vpop.f32.mrb[0].mxu0
      %v3023 = vadd.f32 0.0, %v3022
      %v3024 = vpop.f32.mrb[0].mxu0
      %3025 = vmatprep.mubr.f32.mxu0 0.0
      %3026 = vmatmul.mubr.f32.gmra.mrb[0].mxu0 %v2828
      %v3027 = vpop.f32.mrb[0].mxu0
      %v3028 = vadd.f32 0.0, %v3027
      %v3029 = vpop.f32.mrb[0].mxu0
      %3030 = vmatprep.mubr.f32.mxu0 0.0
      %3031 = vmatmul.mubr.f32.gmra.mrb[0].mxu0 %v2829
      %v3032 = vpop.f32.mrb[0].mxu0
      %v3033 = vadd.f32 0.0, %v3032
      %v3034 = vpop.f32.mrb[0].mxu0
      %3035 = vmatprep.mubr.f32.mxu0 0.0
      %3036 = vmatmul.mubr.f32.gmra.mrb[0].mxu0 %v2830
      %v3037 = vpop.f32.mrb[0].mxu0
      %v3038 = vadd.f32 0.0, %v3037
      %v3039 = vpop.f32.mrb[0].mxu0
      %3040 = vmatprep.mubr.f32.mxu0 0.0
      %3041 = vmatmul.mubr.f32.gmra.mrb[0].mxu0 %v2831
      %v3042 = vpop.f32.mrb[0].mxu0
      %v3043 = vadd.f32 0.0, %v3042
      %v3044 = vpop.f32.mrb[0].mxu0
      %3045 = vmatprep.mubr.f32.mxu0 0.0
      %3046 = vmatmul.mubr.f32.gmra.mrb[0].mxu0 %v2832
      %v3047 = vpop.f32.mrb[0].mxu0
      %v3048 = vadd.f32 0.0, %v3047
      %v3049 = vpop.f32.mrb[0].mxu0
      %3050 = vmatprep.mubr.f32.mxu0 0.0
      %3051 = vmatmul.mubr.f32.gmra.mrb[0].mxu0 %v2833
      %v3052 = vpop.f32.mrb[0].mxu0
      %v3053 = vadd.f32 0.0, %v3052
      %v3054 = vpop.f32.mrb[0].mxu0
      %3055 = vmatprep.mubr.f32.mxu0 0.0
      %3056 = vmatmul.mubr.f32.gmra.mrb[0].mxu0 %v2834
      %v3057 = vpop.f32.mrb[0].mxu0
      %v3058 = vadd.f32 0.0, %v3057
      %v3059 = vpop.f32.mrb[0].mxu0
      %3060 = vmatprep.mubr.f32.mxu0 0.0
      %3061 = vmatmul.mubr.f32.gmra.mrb[0].mxu0 %v2835
      %v3062 = vpop.f32.mrb[0].mxu0
      %v3063 = vadd.f32 0.0, %v3062
      %v3064 = vpop.f32.mrb[0].mxu0
      %3065 = vmatprep.mubr.f32.mxu0 0.0
      %3066 = vmatmul.mubr.f32.gmra.mrb[0].mxu0 %v2836
      %v3067 = vpop.f32.mrb[0].mxu0
      %v3068 = vadd.f32 0.0, %v3067
      %v3069 = vpop.f32.mrb[0].mxu0
      %3070 = vmatprep.mubr.f32.mxu0 0.0
      %3071 = vmatmul.mubr.f32.gmra.mrb[0].mxu0 %v2837
      %v3072 = vpop.f32.mrb[0].mxu0
      %v3073 = vadd.f32 0.0, %v3072
      %v3074 = vpop.f32.mrb[0].mxu0
      %3075 = vmatprep.mubr.f32.mxu0 0.0
      %3076 = vmatmul.mubr.f32.gmra.mrb[0].mxu0 %v2838
      %v3077 = vpop.f32.mrb[0].mxu0
      %v3078 = vadd.f32 0.0, %v3077
      %v3079 = vpop.f32.mrb[0].mxu0
      %3080 = vmatprep.mubr.f32.mxu0 0.0
      %3081 = vmatmul.mubr.f32.gmra.mrb[0].mxu0 %v2839
      %v3082 = vpop.f32.mrb[0].mxu0
      %v3083 = vadd.f32 0.0, %v3082
      %v3084 = vpop.f32.mrb[0].mxu0
      %3085 = vmatprep.mubr.f32.mxu0 0.0
      %3086 = vmatmul.mubr.f32.gmra.mrb[0].mxu0 %v2840
      %v3087 = vpop.f32.mrb[0].mxu0
      %v3088 = vadd.f32 0.0, %v3087
      %v3089 = vpop.f32.mrb[0].mxu0
      %3090 = vmatprep.mubr.f32.mxu0 0.0
      %3091 = vmatmul.mubr.f32.gmra.mrb[0].mxu0 %v2841
      %v3092 = vpop.f32.mrb[0].mxu0
      %v3093 = vadd.f32 0.0, %v3092
      %v3094 = vpop.f32.mrb[0].mxu0
      %3095 = vmatprep.mubr.f32.mxu0 0.0
      %3096 = vmatmul.mubr.f32.gmra.mrb[0].mxu0 %v2842
      %v3097 = vpop.f32.mrb[0].mxu0
      %v3098 = vadd.f32 0.0, %v3097
      %v3099 = vpop.f32.mrb[0].mxu0
      %3100 = vmatprep.mubr.f32.mxu0 0.0
      %3101 = vmatmul.mubr.f32.gmra.mrb[0].mxu0 %v2843
      %v3102 = vpop.f32.mrb[0].mxu0
      %v3103 = vadd.f32 0.0, %v3102
      %v3104 = vpop.f32.mrb[0].mxu0
      %3105 = vdwg.mxu0
      %v3106 = vadd.f32 %v2772, %v2928
      %v3107 = vadd.f32 %v2773, %v2933
      %v3108 = vadd.f32 %v2774, %v2938
      %v3109 = vadd.f32 %v2775, %v2943
      %v3110 = vadd.f32 %v2776, %v2948
      %v3111 = vadd.f32 %v2777, %v2953
      %v3112 = vadd.f32 %v2778, %v2958
      %v3113 = vadd.f32 %v2779, %v2963
      %v3114 = vadd.f32 %v2780, %v2968
      %v3115 = vadd.f32 %v2781, %v2973
      %v3116 = vadd.f32 %v2782, %v2978
      %v3117 = vadd.f32 %v2783, %v2983
      %v3118 = vadd.f32 %v2784, %v2988
      %v3119 = vadd.f32 %v2785, %v2993
      %v3120 = vadd.f32 %v2786, %v2998
      %v3121 = vadd.f32 %v2787, %v3003
      %v3122 = vadd.f32 %v2788, %v3008
      %v3123 = vadd.f32 %v2789, %v3013
      %v3124 = vadd.f32 %v2790, %v3018
      %v3125 = vadd.f32 %v2791, %v3023
      %v3126 = vadd.f32 %v2792, %v3028
      %v3127 = vadd.f32 %v2793, %v3033
      %v3128 = vadd.f32 %v2794, %v3038
      %v3129 = vadd.f32 %v2795, %v3043
      %v3130 = vadd.f32 %v2796, %v3048
      %v3131 = vadd.f32 %v2797, %v3053
      %v3132 = vadd.f32 %v2798, %v3058
      %v3133 = vadd.f32 %v2799, %v3063
      %v3134 = vadd.f32 %v2800, %v3068
      %v3135 = vadd.f32 %v2801, %v3073
      %v3136 = vadd.f32 %v2802, %v3078
      %v3137 = vadd.f32 %v2803, %v3083
      %v3138 = vadd.f32 %v2804, %v3088
      %v3139 = vadd.f32 %v2805, %v3093
      %v3140 = vadd.f32 %v2806, %v3098
      %v3141 = vadd.f32 %v2807, %v3103
      %v3142 = vld [vmem:[%s2] sm:$0x1]
      %v3144 = vlaneseq
      %v3145 = vshrl.u32 %v3144, 7
      %v3146 = vsub.s32 0, %v3145
      %v3147 = vrot.slane %v3142, %v3146
      %v3149 = vadd.f32 %v3106, %v3147
      %v3150 = vadd.f32 %v3107, %v3147
      %v3151 = vadd.f32 %v3108, %v3147
      %v3152 = vadd.f32 %v3109, %v3147
      %v3153 = vadd.f32 %v3110, %v3147
      %v3154 = vadd.f32 %v3111, %v3147
      %v3155 = vadd.f32 %v3112, %v3147
      %v3156 = vadd.f32 %v3113, %v3147
      %v3157 = vadd.f32 %v3114, %v3147
      %v3158 = vadd.f32 %v3115, %v3147
      %v3159 = vadd.f32 %v3116, %v3147
      %v3160 = vadd.f32 %v3117, %v3147
      %v3161 = vadd.f32 %v3118, %v3147
      %v3162 = vadd.f32 %v3119, %v3147
      %v3163 = vadd.f32 %v3120, %v3147
      %v3164 = vadd.f32 %v3121, %v3147
      %v3165 = vadd.f32 %v3122, %v3147
      %v3166 = vadd.f32 %v3123, %v3147
      %v3167 = vadd.f32 %v3124, %v3147
      %v3168 = vadd.f32 %v3125, %v3147
      %v3169 = vadd.f32 %v3126, %v3147
      %v3170 = vadd.f32 %v3127, %v3147
      %v3171 = vadd.f32 %v3128, %v3147
      %v3172 = vadd.f32 %v3129, %v3147
      %v3173 = vadd.f32 %v3130, %v3147
      %v3174 = vadd.f32 %v3131, %v3147
      %v3175 = vadd.f32 %v3132, %v3147
      %v3176 = vadd.f32 %v3133, %v3147
      %v3177 = vadd.f32 %v3134, %v3147
      %v3178 = vadd.f32 %v3135, %v3147
      %v3179 = vadd.f32 %v3136, %v3147
      %v3180 = vadd.f32 %v3137, %v3147
      %v3181 = vadd.f32 %v3138, %v3147
      %v3182 = vadd.f32 %v3139, %v3147
      %v3183 = vadd.f32 %v3140, %v3147
      %v3184 = vadd.f32 %v3141, %v3147
      %v3185 = vmax.f32 %v3149, 0.0
      %v3186 = vmax.f32 %v3150, 0.0
      %v3187 = vmax.f32 %v3151, 0.0
      %v3188 = vmax.f32 %v3152, 0.0
      %v3189 = vmax.f32 %v3153, 0.0
      %v3190 = vmax.f32 %v3154, 0.0
      %v3191 = vmax.f32 %v3155, 0.0
      %v3192 = vmax.f32 %v3156, 0.0
      %v3193 = vmax.f32 %v3157, 0.0
      %v3194 = vmax.f32 %v3158, 0.0
      %v3195 = vmax.f32 %v3159, 0.0
      %v3196 = vmax.f32 %v3160, 0.0
      %v3197 = vmax.f32 %v3161, 0.0
      %v3198 = vmax.f32 %v3162, 0.0
      %v3199 = vmax.f32 %v3163, 0.0
      %v3200 = vmax.f32 %v3164, 0.0
      %v3201 = vmax.f32 %v3165, 0.0
      %v3202 = vmax.f32 %v3166, 0.0
      %v3203 = vmax.f32 %v3167, 0.0
      %v3204 = vmax.f32 %v3168, 0.0
      %v3205 = vmax.f32 %v3169, 0.0
      %v3206 = vmax.f32 %v3170, 0.0
      %v3207 = vmax.f32 %v3171, 0.0
      %v3208 = vmax.f32 %v3172, 0.0
      %v3209 = vmax.f32 %v3173, 0.0
      %v3210 = vmax.f32 %v3174, 0.0
      %v3211 = vmax.f32 %v3175, 0.0
      %v3212 = vmax.f32 %v3176, 0.0
      %v3213 = vmax.f32 %v3177, 0.0
      %v3214 = vmax.f32 %v3178, 0.0
      %v3215 = vmax.f32 %v3179, 0.0
      %v3216 = vmax.f32 %v3180, 0.0
      %v3217 = vmax.f32 %v3181, 0.0
      %v3218 = vmax.f32 %v3182, 0.0
      %v3219 = vmax.f32 %v3183, 0.0
      %v3220 = vmax.f32 %v3184, 0.0
      %3221 = vst [vmem:[%s204] sm:$0xff] %v3185
      %3222 = vst [vmem:[%s204 + $0x8] sm:$0xff] %v3186
      %3223 = vst [vmem:[%s204 + $0x10] sm:$0xff] %v3187
      %3224 = vst [vmem:[%s204 + $0x18] sm:$0xff] %v3188
      %3225 = vst [vmem:[%s204 + $0x20] sm:$0xff] %v3189
      %3226 = vst [vmem:[%s204 + $0x28] sm:$0xff] %v3190
      %3227 = vst [vmem:[%s204 + $0x30] sm:$0xff] %v3191
      %3228 = vst [vmem:[%s204 + $0x38] sm:$0xff] %v3192
      %3229 = vst [vmem:[%s204 + $0x40] sm:$0xff] %v3193
      %3230 = vst [vmem:[%s204 + $0x48] sm:$0xff] %v3194
      %3231 = vst [vmem:[%s204 + $0x50] sm:$0xff] %v3195
      %3232 = vst [vmem:[%s204 + $0x58] sm:$0xff] %v3196
      %3233 = vst [vmem:[%s204 + $0x60] sm:$0xff] %v3197
      %3234 = vst [vmem:[%s204 + $0x68] sm:$0xff] %v3198
      %3235 = vst [vmem:[%s204 + $0x70] sm:$0xff] %v3199
      %3236 = vst [vmem:[%s204 + $0x78] sm:$0xff] %v3200
      %3237 = vst [vmem:[%s204 + $0x80] sm:$0xff] %v3201
      %3238 = vst [vmem:[%s204 + $0x88] sm:$0xff] %v3202
      %3239 = vst [vmem:[%s204 + $0x90] sm:$0xff] %v3203
      %3240 = vst [vmem:[%s204 + $0x98] sm:$0xff] %v3204
      %3241 = vst [vmem:[%s204 + $0xa0] sm:$0xff] %v3205
      %3242 = vst [vmem:[%s204 + $0xa8] sm:$0xff] %v3206
      %3243 = vst [vmem:[%s204 + $0xb0] sm:$0xff] %v3207
      %3244 = vst [vmem:[%s204 + $0xb8] sm:$0xff] %v3208
      %3245 = vst [vmem:[%s204 + $0xc0] sm:$0xff] %v3209
      %3246 = vst [vmem:[%s204 + $0xc8] sm:$0xff] %v3210
      %3247 = vst [vmem:[%s204 + $0xd0] sm:$0xff] %v3211
      %3248 = vst [vmem:[%s204 + $0xd8] sm:$0xff] %v3212
      %3249 = vst [vmem:[%s204 + $0xe0] sm:$0xff] %v3213
      %3250 = vst [vmem:[%s204 + $0xe8] sm:$0xff] %v3214
      %3251 = vst [vmem:[%s204 + $0xf0] sm:$0xff] %v3215
      %3252 = vst [vmem:[%s204 + $0xf8] sm:$0xff] %v3216
      %3253 = vst [vmem:[%s204 + $0x100] sm:$0xff] %v3217
      %3254 = vst [vmem:[%s204 + $0x108] sm:$0xff] %v3218
      %3255 = vst [vmem:[%s204 + $0x110] sm:$0xff] %v3219
      %3256 = vst [vmem:[%s204 + $0x118] sm:$0xff] %v3220
      %v3257 = vlaneseq
      %v3258 = vshrl.u32 %v3257, 7
      %v3259 = vadd.s32 %v3258, 8
      %v3260 = vadd.s32 %v3258, 16
      %v3261 = vadd.s32 %v3258, 24
      %v3262 = vadd.s32 %v3258, 32
      %v3263 = vadd.s32 %v3258, 40
      %v3264 = vadd.s32 %v3258, 48
      %v3265 = vadd.s32 %v3258, 56
      %v3266 = vadd.s32 %v3258, 64
      %v3267 = vadd.s32 %v3258, 72
      %v3268 = vadd.s32 %v3258, 80
      %v3269 = vadd.s32 %v3258, 88
      %v3270 = vadd.s32 %v3258, 96
      %v3271 = vadd.s32 %v3258, 104
      %v3272 = vadd.s32 %v3258, 112
      %v3273 = vadd.s32 %v3258, 120
      %v3274 = vadd.s32 %v3258, 128
      %v3275 = vadd.s32 %v3258, 136
      %v3276 = vadd.s32 %v3258, 144
      %v3277 = vadd.s32 %v3258, 152
      %v3278 = vadd.s32 %v3258, 160
      %v3279 = vadd.s32 %v3258, 168
      %v3280 = vadd.s32 %v3258, 176
      %v3281 = vadd.s32 %v3258, 184
      %v3282 = vadd.s32 %v3258, 192
      %v3283 = vadd.s32 %v3258, 200
      %v3284 = vadd.s32 %v3258, 208
      %v3285 = vadd.s32 %v3258, 216
      %v3286 = vadd.s32 %v3258, 224
      %v3287 = vadd.s32 %v3258, 232
      %v3288 = vadd.s32 %v3258, 240
      %v3289 = vadd.s32 %v3258, 248
      %v3290 = vadd.s32 %v3258, 256
      %v3291 = vadd.s32 %v3258, 264
      %v3292 = vadd.s32 %v3258, 272
      %v3293 = vadd.s32 %v3258, 280
      %vm3294 = vcmp.lt.s32.totalorder %v3258, 0
      %v3295 = vsub.s32 0, %v3258
      %v3296 = vsel %vm3294, %v3295, %v3258
      %v3297 = vmul.u32.u64.compose %v3296, 3817748708
      %v3298 = vextract.low.u32 %v3297
      %v3299 = vextract.high.u32 %v3297
      %v3300 = vshrl.u32 %v3299, 4
      %v3301 = vmul.u32 %v3300, 18
      %v3302 = vsub.s32 %v3296, %v3301
      %v3303 = vsub.s32 0, %v3302
      %v3304 = vsel %vm3294, %v3303, %v3302
      %vm3305 = vcmp.lt.s32.totalorder %v3259, 0
      %v3306 = vsub.s32 0, %v3259
      %v3307 = vsel %vm3305, %v3306, %v3259
      %v3308 = vmul.u32.u64.compose %v3307, 3817748708
      %v3309 = vextract.low.u32 %v3308
      %v3310 = vextract.high.u32 %v3308
      %v3311 = vshrl.u32 %v3310, 4
      %v3312 = vmul.u32 %v3311, 18
      %v3313 = vsub.s32 %v3307, %v3312
      %v3314 = vsub.s32 0, %v3313
      %v3315 = vsel %vm3305, %v3314, %v3313
      %vm3316 = vcmp.lt.s32.totalorder %v3260, 0
      %v3317 = vsub.s32 0, %v3260
      %v3318 = vsel %vm3316, %v3317, %v3260
      %v3319 = vmul.u32.u64.compose %v3318, 3817748708
      %v3320 = vextract.low.u32 %v3319
      %v3321 = vextract.high.u32 %v3319
      %v3322 = vshrl.u32 %v3321, 4
      %v3323 = vmul.u32 %v3322, 18
      %v3324 = vsub.s32 %v3318, %v3323
      %v3325 = vsub.s32 0, %v3324
      %v3326 = vsel %vm3316, %v3325, %v3324
      %vm3327 = vcmp.lt.s32.totalorder %v3261, 0
      %v3328 = vsub.s32 0, %v3261
      %v3329 = vsel %vm3327, %v3328, %v3261
      %v3330 = vmul.u32.u64.compose %v3329, 3817748708
      %v3331 = vextract.low.u32 %v3330
      %v3332 = vextract.high.u32 %v3330
      %v3333 = vshrl.u32 %v3332, 4
      %v3334 = vmul.u32 %v3333, 18
      %v3335 = vsub.s32 %v3329, %v3334
      %v3336 = vsub.s32 0, %v3335
      %v3337 = vsel %vm3327, %v3336, %v3335
      %vm3338 = vcmp.lt.s32.totalorder %v3262, 0
      %v3339 = vsub.s32 0, %v3262
      %v3340 = vsel %vm3338, %v3339, %v3262
      %v3341 = vmul.u32.u64.compose %v3340, 3817748708
      %v3342 = vextract.low.u32 %v3341
      %v3343 = vextract.high.u32 %v3341
      %v3344 = vshrl.u32 %v3343, 4
      %v3345 = vmul.u32 %v3344, 18
      %v3346 = vsub.s32 %v3340, %v3345
      %v3347 = vsub.s32 0, %v3346
      %v3348 = vsel %vm3338, %v3347, %v3346
      %vm3349 = vcmp.lt.s32.totalorder %v3263, 0
      %v3350 = vsub.s32 0, %v3263
      %v3351 = vsel %vm3349, %v3350, %v3263
      %v3352 = vmul.u32.u64.compose %v3351, 3817748708
      %v3353 = vextract.low.u32 %v3352
      %v3354 = vextract.high.u32 %v3352
      %v3355 = vshrl.u32 %v3354, 4
      %v3356 = vmul.u32 %v3355, 18
      %v3357 = vsub.s32 %v3351, %v3356
      %v3358 = vsub.s32 0, %v3357
      %v3359 = vsel %vm3349, %v3358, %v3357
      %vm3360 = vcmp.lt.s32.totalorder %v3264, 0
      %v3361 = vsub.s32 0, %v3264
      %v3362 = vsel %vm3360, %v3361, %v3264
      %v3363 = vmul.u32.u64.compose %v3362, 3817748708
      %v3364 = vextract.low.u32 %v3363
      %v3365 = vextract.high.u32 %v3363
      %v3366 = vshrl.u32 %v3365, 4
      %v3367 = vmul.u32 %v3366, 18
      %v3368 = vsub.s32 %v3362, %v3367
      %v3369 = vsub.s32 0, %v3368
      %v3370 = vsel %vm3360, %v3369, %v3368
      %vm3371 = vcmp.lt.s32.totalorder %v3265, 0
      %v3372 = vsub.s32 0, %v3265
      %v3373 = vsel %vm3371, %v3372, %v3265
      %v3374 = vmul.u32.u64.compose %v3373, 3817748708
      %v3375 = vextract.low.u32 %v3374
      %v3376 = vextract.high.u32 %v3374
      %v3377 = vshrl.u32 %v3376, 4
      %v3378 = vmul.u32 %v3377, 18
      %v3379 = vsub.s32 %v3373, %v3378
      %v3380 = vsub.s32 0, %v3379
      %v3381 = vsel %vm3371, %v3380, %v3379
      %vm3382 = vcmp.lt.s32.totalorder %v3266, 0
      %v3383 = vsub.s32 0, %v3266
      %v3384 = vsel %vm3382, %v3383, %v3266
      %v3385 = vmul.u32.u64.compose %v3384, 3817748708
      %v3386 = vextract.low.u32 %v3385
      %v3387 = vextract.high.u32 %v3385
      %v3388 = vshrl.u32 %v3387, 4
      %v3389 = vmul.u32 %v3388, 18
      %v3390 = vsub.s32 %v3384, %v3389
      %v3391 = vsub.s32 0, %v3390
      %v3392 = vsel %vm3382, %v3391, %v3390
      %vm3393 = vcmp.lt.s32.totalorder %v3267, 0
      %v3394 = vsub.s32 0, %v3267
      %v3395 = vsel %vm3393, %v3394, %v3267
      %v3396 = vmul.u32.u64.compose %v3395, 3817748708
      %v3397 = vextract.low.u32 %v3396
      %v3398 = vextract.high.u32 %v3396
      %v3399 = vshrl.u32 %v3398, 4
      %v3400 = vmul.u32 %v3399, 18
      %v3401 = vsub.s32 %v3395, %v3400
      %v3402 = vsub.s32 0, %v3401
      %v3403 = vsel %vm3393, %v3402, %v3401
      %vm3404 = vcmp.lt.s32.totalorder %v3268, 0
      %v3405 = vsub.s32 0, %v3268
      %v3406 = vsel %vm3404, %v3405, %v3268
      %v3407 = vmul.u32.u64.compose %v3406, 3817748708
      %v3408 = vextract.low.u32 %v3407
      %v3409 = vextract.high.u32 %v3407
      %v3410 = vshrl.u32 %v3409, 4
      %v3411 = vmul.u32 %v3410, 18
      %v3412 = vsub.s32 %v3406, %v3411
      %v3413 = vsub.s32 0, %v3412
      %v3414 = vsel %vm3404, %v3413, %v3412
      %vm3415 = vcmp.lt.s32.totalorder %v3269, 0
      %v3416 = vsub.s32 0, %v3269
      %v3417 = vsel %vm3415, %v3416, %v3269
      %v3418 = vmul.u32.u64.compose %v3417, 3817748708
      %v3419 = vextract.low.u32 %v3418
      %v3420 = vextract.high.u32 %v3418
      %v3421 = vshrl.u32 %v3420, 4
      %v3422 = vmul.u32 %v3421, 18
      %v3423 = vsub.s32 %v3417, %v3422
      %v3424 = vsub.s32 0, %v3423
      %v3425 = vsel %vm3415, %v3424, %v3423
      %vm3426 = vcmp.lt.s32.totalorder %v3270, 0
      %v3427 = vsub.s32 0, %v3270
      %v3428 = vsel %vm3426, %v3427, %v3270
      %v3429 = vmul.u32.u64.compose %v3428, 3817748708
      %v3430 = vextract.low.u32 %v3429
      %v3431 = vextract.high.u32 %v3429
      %v3432 = vshrl.u32 %v3431, 4
      %v3433 = vmul.u32 %v3432, 18
      %v3434 = vsub.s32 %v3428, %v3433
      %v3435 = vsub.s32 0, %v3434
      %v3436 = vsel %vm3426, %v3435, %v3434
      %vm3437 = vcmp.lt.s32.totalorder %v3271, 0
      %v3438 = vsub.s32 0, %v3271
      %v3439 = vsel %vm3437, %v3438, %v3271
      %v3440 = vmul.u32.u64.compose %v3439, 3817748708
      %v3441 = vextract.low.u32 %v3440
      %v3442 = vextract.high.u32 %v3440
      %v3443 = vshrl.u32 %v3442, 4
      %v3444 = vmul.u32 %v3443, 18
      %v3445 = vsub.s32 %v3439, %v3444
      %v3446 = vsub.s32 0, %v3445
      %v3447 = vsel %vm3437, %v3446, %v3445
      %vm3448 = vcmp.lt.s32.totalorder %v3272, 0
      %v3449 = vsub.s32 0, %v3272
      %v3450 = vsel %vm3448, %v3449, %v3272
      %v3451 = vmul.u32.u64.compose %v3450, 3817748708
      %v3452 = vextract.low.u32 %v3451
      %v3453 = vextract.high.u32 %v3451
      %v3454 = vshrl.u32 %v3453, 4
      %v3455 = vmul.u32 %v3454, 18
      %v3456 = vsub.s32 %v3450, %v3455
      %v3457 = vsub.s32 0, %v3456
      %v3458 = vsel %vm3448, %v3457, %v3456
      %vm3459 = vcmp.lt.s32.totalorder %v3273, 0
      %v3460 = vsub.s32 0, %v3273
      %v3461 = vsel %vm3459, %v3460, %v3273
      %v3462 = vmul.u32.u64.compose %v3461, 3817748708
      %v3463 = vextract.low.u32 %v3462
      %v3464 = vextract.high.u32 %v3462
      %v3465 = vshrl.u32 %v3464, 4
      %v3466 = vmul.u32 %v3465, 18
      %v3467 = vsub.s32 %v3461, %v3466
      %v3468 = vsub.s32 0, %v3467
      %v3469 = vsel %vm3459, %v3468, %v3467
      %vm3470 = vcmp.lt.s32.totalorder %v3274, 0
      %v3471 = vsub.s32 0, %v3274
      %v3472 = vsel %vm3470, %v3471, %v3274
      %v3473 = vmul.u32.u64.compose %v3472, 3817748708
      %v3474 = vextract.low.u32 %v3473
      %v3475 = vextract.high.u32 %v3473
      %v3476 = vshrl.u32 %v3475, 4
      %v3477 = vmul.u32 %v3476, 18
      %v3478 = vsub.s32 %v3472, %v3477
      %v3479 = vsub.s32 0, %v3478
      %v3480 = vsel %vm3470, %v3479, %v3478
      %vm3481 = vcmp.lt.s32.totalorder %v3275, 0
      %v3482 = vsub.s32 0, %v3275
      %v3483 = vsel %vm3481, %v3482, %v3275
      %v3484 = vmul.u32.u64.compose %v3483, 3817748708
      %v3485 = vextract.low.u32 %v3484
      %v3486 = vextract.high.u32 %v3484
      %v3487 = vshrl.u32 %v3486, 4
      %v3488 = vmul.u32 %v3487, 18
      %v3489 = vsub.s32 %v3483, %v3488
      %v3490 = vsub.s32 0, %v3489
      %v3491 = vsel %vm3481, %v3490, %v3489
      %vm3492 = vcmp.lt.s32.totalorder %v3276, 0
      %v3493 = vsub.s32 0, %v3276
      %v3494 = vsel %vm3492, %v3493, %v3276
      %v3495 = vmul.u32.u64.compose %v3494, 3817748708
      %v3496 = vextract.low.u32 %v3495
      %v3497 = vextract.high.u32 %v3495
      %v3498 = vshrl.u32 %v3497, 4
      %v3499 = vmul.u32 %v3498, 18
      %v3500 = vsub.s32 %v3494, %v3499
      %v3501 = vsub.s32 0, %v3500
      %v3502 = vsel %vm3492, %v3501, %v3500
      %vm3503 = vcmp.lt.s32.totalorder %v3277, 0
      %v3504 = vsub.s32 0, %v3277
      %v3505 = vsel %vm3503, %v3504, %v3277
      %v3506 = vmul.u32.u64.compose %v3505, 3817748708
      %v3507 = vextract.low.u32 %v3506
      %v3508 = vextract.high.u32 %v3506
      %v3509 = vshrl.u32 %v3508, 4
      %v3510 = vmul.u32 %v3509, 18
      %v3511 = vsub.s32 %v3505, %v3510
      %v3512 = vsub.s32 0, %v3511
      %v3513 = vsel %vm3503, %v3512, %v3511
      %vm3514 = vcmp.lt.s32.totalorder %v3278, 0
      %v3515 = vsub.s32 0, %v3278
      %v3516 = vsel %vm3514, %v3515, %v3278
      %v3517 = vmul.u32.u64.compose %v3516, 3817748708
      %v3518 = vextract.low.u32 %v3517
      %v3519 = vextract.high.u32 %v3517
      %v3520 = vshrl.u32 %v3519, 4
      %v3521 = vmul.u32 %v3520, 18
      %v3522 = vsub.s32 %v3516, %v3521
      %v3523 = vsub.s32 0, %v3522
      %v3524 = vsel %vm3514, %v3523, %v3522
      %vm3525 = vcmp.lt.s32.totalorder %v3279, 0
      %v3526 = vsub.s32 0, %v3279
      %v3527 = vsel %vm3525, %v3526, %v3279
      %v3528 = vmul.u32.u64.compose %v3527, 3817748708
      %v3529 = vextract.low.u32 %v3528
      %v3530 = vextract.high.u32 %v3528
      %v3531 = vshrl.u32 %v3530, 4
      %v3532 = vmul.u32 %v3531, 18
      %v3533 = vsub.s32 %v3527, %v3532
      %v3534 = vsub.s32 0, %v3533
      %v3535 = vsel %vm3525, %v3534, %v3533
      %vm3536 = vcmp.lt.s32.totalorder %v3280, 0
      %v3537 = vsub.s32 0, %v3280
      %v3538 = vsel %vm3536, %v3537, %v3280
      %v3539 = vmul.u32.u64.compose %v3538, 3817748708
      %v3540 = vextract.low.u32 %v3539
      %v3541 = vextract.high.u32 %v3539
      %v3542 = vshrl.u32 %v3541, 4
      %v3543 = vmul.u32 %v3542, 18
      %v3544 = vsub.s32 %v3538, %v3543
      %v3545 = vsub.s32 0, %v3544
      %v3546 = vsel %vm3536, %v3545, %v3544
      %vm3547 = vcmp.lt.s32.totalorder %v3281, 0
      %v3548 = vsub.s32 0, %v3281
      %v3549 = vsel %vm3547, %v3548, %v3281
      %v3550 = vmul.u32.u64.compose %v3549, 3817748708
      %v3551 = vextract.low.u32 %v3550
      %v3552 = vextract.high.u32 %v3550
      %v3553 = vshrl.u32 %v3552, 4
      %v3554 = vmul.u32 %v3553, 18
      %v3555 = vsub.s32 %v3549, %v3554
      %v3556 = vsub.s32 0, %v3555
      %v3557 = vsel %vm3547, %v3556, %v3555
      %vm3558 = vcmp.lt.s32.totalorder %v3282, 0
      %v3559 = vsub.s32 0, %v3282
      %v3560 = vsel %vm3558, %v3559, %v3282
      %v3561 = vmul.u32.u64.compose %v3560, 3817748708
      %v3562 = vextract.low.u32 %v3561
      %v3563 = vextract.high.u32 %v3561
      %v3564 = vshrl.u32 %v3563, 4
      %v3565 = vmul.u32 %v3564, 18
      %v3566 = vsub.s32 %v3560, %v3565
      %v3567 = vsub.s32 0, %v3566
      %v3568 = vsel %vm3558, %v3567, %v3566
      %vm3569 = vcmp.lt.s32.totalorder %v3283, 0
      %v3570 = vsub.s32 0, %v3283
      %v3571 = vsel %vm3569, %v3570, %v3283
      %v3572 = vmul.u32.u64.compose %v3571, 3817748708
      %v3573 = vextract.low.u32 %v3572
      %v3574 = vextract.high.u32 %v3572
      %v3575 = vshrl.u32 %v3574, 4
      %v3576 = vmul.u32 %v3575, 18
      %v3577 = vsub.s32 %v3571, %v3576
      %v3578 = vsub.s32 0, %v3577
      %v3579 = vsel %vm3569, %v3578, %v3577
      %vm3580 = vcmp.lt.s32.totalorder %v3284, 0
      %v3581 = vsub.s32 0, %v3284
      %v3582 = vsel %vm3580, %v3581, %v3284
      %v3583 = vmul.u32.u64.compose %v3582, 3817748708
      %v3584 = vextract.low.u32 %v3583
      %v3585 = vextract.high.u32 %v3583
      %v3586 = vshrl.u32 %v3585, 4
      %v3587 = vmul.u32 %v3586, 18
      %v3588 = vsub.s32 %v3582, %v3587
      %v3589 = vsub.s32 0, %v3588
      %v3590 = vsel %vm3580, %v3589, %v3588
      %vm3591 = vcmp.lt.s32.totalorder %v3285, 0
      %v3592 = vsub.s32 0, %v3285
      %v3593 = vsel %vm3591, %v3592, %v3285
      %v3594 = vmul.u32.u64.compose %v3593, 3817748708
      %v3595 = vextract.low.u32 %v3594
      %v3596 = vextract.high.u32 %v3594
      %v3597 = vshrl.u32 %v3596, 4
      %v3598 = vmul.u32 %v3597, 18
      %v3599 = vsub.s32 %v3593, %v3598
      %v3600 = vsub.s32 0, %v3599
      %v3601 = vsel %vm3591, %v3600, %v3599
      %vm3602 = vcmp.lt.s32.totalorder %v3286, 0
      %v3603 = vsub.s32 0, %v3286
      %v3604 = vsel %vm3602, %v3603, %v3286
      %v3605 = vmul.u32.u64.compose %v3604, 3817748708
      %v3606 = vextract.low.u32 %v3605
      %v3607 = vextract.high.u32 %v3605
      %v3608 = vshrl.u32 %v3607, 4
      %v3609 = vmul.u32 %v3608, 18
      %v3610 = vsub.s32 %v3604, %v3609
      %v3611 = vsub.s32 0, %v3610
      %v3612 = vsel %vm3602, %v3611, %v3610
      %vm3613 = vcmp.lt.s32.totalorder %v3287, 0
      %v3614 = vsub.s32 0, %v3287
      %v3615 = vsel %vm3613, %v3614, %v3287
      %v3616 = vmul.u32.u64.compose %v3615, 3817748708
      %v3617 = vextract.low.u32 %v3616
      %v3618 = vextract.high.u32 %v3616
      %v3619 = vshrl.u32 %v3618, 4
      %v3620 = vmul.u32 %v3619, 18
      %v3621 = vsub.s32 %v3615, %v3620
      %v3622 = vsub.s32 0, %v3621
      %v3623 = vsel %vm3613, %v3622, %v3621
      %vm3624 = vcmp.lt.s32.totalorder %v3288, 0
      %v3625 = vsub.s32 0, %v3288
      %v3626 = vsel %vm3624, %v3625, %v3288
      %v3627 = vmul.u32.u64.compose %v3626, 3817748708
      %v3628 = vextract.low.u32 %v3627
      %v3629 = vextract.high.u32 %v3627
      %v3630 = vshrl.u32 %v3629, 4
      %v3631 = vmul.u32 %v3630, 18
      %v3632 = vsub.s32 %v3626, %v3631
      %v3633 = vsub.s32 0, %v3632
      %v3634 = vsel %vm3624, %v3633, %v3632
      %vm3635 = vcmp.lt.s32.totalorder %v3289, 0
      %v3636 = vsub.s32 0, %v3289
      %v3637 = vsel %vm3635, %v3636, %v3289
      %v3638 = vmul.u32.u64.compose %v3637, 3817748708
      %v3639 = vextract.low.u32 %v3638
      %v3640 = vextract.high.u32 %v3638
      %v3641 = vshrl.u32 %v3640, 4
      %v3642 = vmul.u32 %v3641, 18
      %v3643 = vsub.s32 %v3637, %v3642
      %v3644 = vsub.s32 0, %v3643
      %v3645 = vsel %vm3635, %v3644, %v3643
      %vm3646 = vcmp.lt.s32.totalorder %v3290, 0
      %v3647 = vsub.s32 0, %v3290
      %v3648 = vsel %vm3646, %v3647, %v3290
      %v3649 = vmul.u32.u64.compose %v3648, 3817748708
      %v3650 = vextract.low.u32 %v3649
      %v3651 = vextract.high.u32 %v3649
      %v3652 = vshrl.u32 %v3651, 4
      %v3653 = vmul.u32 %v3652, 18
      %v3654 = vsub.s32 %v3648, %v3653
      %v3655 = vsub.s32 0, %v3654
      %v3656 = vsel %vm3646, %v3655, %v3654
      %vm3657 = vcmp.lt.s32.totalorder %v3291, 0
      %v3658 = vsub.s32 0, %v3291
      %v3659 = vsel %vm3657, %v3658, %v3291
      %v3660 = vmul.u32.u64.compose %v3659, 3817748708
      %v3661 = vextract.low.u32 %v3660
      %v3662 = vextract.high.u32 %v3660
      %v3663 = vshrl.u32 %v3662, 4
      %v3664 = vmul.u32 %v3663, 18
      %v3665 = vsub.s32 %v3659, %v3664
      %v3666 = vsub.s32 0, %v3665
      %v3667 = vsel %vm3657, %v3666, %v3665
      %vm3668 = vcmp.lt.s32.totalorder %v3292, 0
      %v3669 = vsub.s32 0, %v3292
      %v3670 = vsel %vm3668, %v3669, %v3292
      %v3671 = vmul.u32.u64.compose %v3670, 3817748708
      %v3672 = vextract.low.u32 %v3671
      %v3673 = vextract.high.u32 %v3671
      %v3674 = vshrl.u32 %v3673, 4
      %v3675 = vmul.u32 %v3674, 18
      %v3676 = vsub.s32 %v3670, %v3675
      %v3677 = vsub.s32 0, %v3676
      %v3678 = vsel %vm3668, %v3677, %v3676
      %vm3679 = vcmp.lt.s32.totalorder %v3293, 0
      %v3680 = vsub.s32 0, %v3293
      %v3681 = vsel %vm3679, %v3680, %v3293
      %v3682 = vmul.u32.u64.compose %v3681, 3817748708
      %v3683 = vextract.low.u32 %v3682
      %v3684 = vextract.high.u32 %v3682
      %v3685 = vshrl.u32 %v3684, 4
      %v3686 = vmul.u32 %v3685, 18
      %v3687 = vsub.s32 %v3681, %v3686
      %v3688 = vsub.s32 0, %v3687
      %v3689 = vsel %vm3679, %v3688, %v3687
      %vm3690 = vcmp.ne.s32.totalorder %v3304, 0
      %vm3691 = vcmp.ne.s32.totalorder %v3315, 0
      %vm3692 = vcmp.ne.s32.totalorder %v3326, 0
      %vm3693 = vcmp.ne.s32.totalorder %v3337, 0
      %vm3694 = vcmp.ne.s32.totalorder %v3348, 0
      %vm3695 = vcmp.ne.s32.totalorder %v3359, 0
      %vm3696 = vcmp.ne.s32.totalorder %v3370, 0
      %vm3697 = vcmp.ne.s32.totalorder %v3381, 0
      %vm3698 = vcmp.ne.s32.totalorder %v3392, 0
      %vm3699 = vcmp.ne.s32.totalorder %v3403, 0
      %vm3700 = vcmp.ne.s32.totalorder %v3414, 0
      %vm3701 = vcmp.ne.s32.totalorder %v3425, 0
      %vm3702 = vcmp.ne.s32.totalorder %v3436, 0
      %vm3703 = vcmp.ne.s32.totalorder %v3447, 0
      %vm3704 = vcmp.ne.s32.totalorder %v3458, 0
      %vm3705 = vcmp.ne.s32.totalorder %v3469, 0
      %vm3706 = vcmp.ne.s32.totalorder %v3480, 0
      %vm3707 = vcmp.ne.s32.totalorder %v3491, 0
      %vm3708 = vcmp.ne.s32.totalorder %v3502, 0
      %vm3709 = vcmp.ne.s32.totalorder %v3513, 0
      %vm3710 = vcmp.ne.s32.totalorder %v3524, 0
      %vm3711 = vcmp.ne.s32.totalorder %v3535, 0
      %vm3712 = vcmp.ne.s32.totalorder %v3546, 0
      %vm3713 = vcmp.ne.s32.totalorder %v3557, 0
      %vm3714 = vcmp.ne.s32.totalorder %v3568, 0
      %vm3715 = vcmp.ne.s32.totalorder %v3579, 0
      %vm3716 = vcmp.ne.s32.totalorder %v3590, 0
      %vm3717 = vcmp.ne.s32.totalorder %v3601, 0
      %vm3718 = vcmp.ne.s32.totalorder %v3612, 0
      %vm3719 = vcmp.ne.s32.totalorder %v3623, 0
      %vm3720 = vcmp.ne.s32.totalorder %v3634, 0
      %vm3721 = vcmp.ne.s32.totalorder %v3645, 0
      %vm3722 = vcmp.ne.s32.totalorder %v3656, 0
      %vm3723 = vcmp.ne.s32.totalorder %v3667, 0
      %vm3724 = vcmp.ne.s32.totalorder %v3678, 0
      %vm3725 = vcmp.ne.s32.totalorder %v3689, 0
      %vm3726 = vcmp.lt.s32.totalorder %v3304, 0
      %vm3727 = vcmp.lt.s32.totalorder %v3315, 0
      %vm3728 = vcmp.lt.s32.totalorder %v3326, 0
      %vm3729 = vcmp.lt.s32.totalorder %v3337, 0
      %vm3730 = vcmp.lt.s32.totalorder %v3348, 0
      %vm3731 = vcmp.lt.s32.totalorder %v3359, 0
      %vm3732 = vcmp.lt.s32.totalorder %v3370, 0
      %vm3733 = vcmp.lt.s32.totalorder %v3381, 0
      %vm3734 = vcmp.lt.s32.totalorder %v3392, 0
      %vm3735 = vcmp.lt.s32.totalorder %v3403, 0
      %vm3736 = vcmp.lt.s32.totalorder %v3414, 0
      %vm3737 = vcmp.lt.s32.totalorder %v3425, 0
      %vm3738 = vcmp.lt.s32.totalorder %v3436, 0
      %vm3739 = vcmp.lt.s32.totalorder %v3447, 0
      %vm3740 = vcmp.lt.s32.totalorder %v3458, 0
      %vm3741 = vcmp.lt.s32.totalorder %v3469, 0
      %vm3742 = vcmp.lt.s32.totalorder %v3480, 0
      %vm3743 = vcmp.lt.s32.totalorder %v3491, 0
      %vm3744 = vcmp.lt.s32.totalorder %v3502, 0
      %vm3745 = vcmp.lt.s32.totalorder %v3513, 0
      %vm3746 = vcmp.lt.s32.totalorder %v3524, 0
      %vm3747 = vcmp.lt.s32.totalorder %v3535, 0
      %vm3748 = vcmp.lt.s32.totalorder %v3546, 0
      %vm3749 = vcmp.lt.s32.totalorder %v3557, 0
      %vm3750 = vcmp.lt.s32.totalorder %v3568, 0
      %vm3751 = vcmp.lt.s32.totalorder %v3579, 0
      %vm3752 = vcmp.lt.s32.totalorder %v3590, 0
      %vm3753 = vcmp.lt.s32.totalorder %v3601, 0
      %vm3754 = vcmp.lt.s32.totalorder %v3612, 0
      %vm3755 = vcmp.lt.s32.totalorder %v3623, 0
      %vm3756 = vcmp.lt.s32.totalorder %v3634, 0
      %vm3757 = vcmp.lt.s32.totalorder %v3645, 0
      %vm3758 = vcmp.lt.s32.totalorder %v3656, 0
      %vm3759 = vcmp.lt.s32.totalorder %v3667, 0
      %vm3760 = vcmp.lt.s32.totalorder %v3678, 0
      %vm3761 = vcmp.lt.s32.totalorder %v3689, 0
      %vm3762 = vmand %vm3726, %vm3690
      %vm3763 = vmand %vm3727, %vm3691
      %vm3764 = vmand %vm3728, %vm3692
      %vm3765 = vmand %vm3729, %vm3693
      %vm3766 = vmand %vm3730, %vm3694
      %vm3767 = vmand %vm3731, %vm3695
      %vm3768 = vmand %vm3732, %vm3696
      %vm3769 = vmand %vm3733, %vm3697
      %vm3770 = vmand %vm3734, %vm3698
      %vm3771 = vmand %vm3735, %vm3699
      %vm3772 = vmand %vm3736, %vm3700
      %vm3773 = vmand %vm3737, %vm3701
      %vm3774 = vmand %vm3738, %vm3702
      %vm3775 = vmand %vm3739, %vm3703
      %vm3776 = vmand %vm3740, %vm3704
      %vm3777 = vmand %vm3741, %vm3705
      %vm3778 = vmand %vm3742, %vm3706
      %vm3779 = vmand %vm3743, %vm3707
      %vm3780 = vmand %vm3744, %vm3708
      %vm3781 = vmand %vm3745, %vm3709
      %vm3782 = vmand %vm3746, %vm3710
      %vm3783 = vmand %vm3747, %vm3711
      %vm3784 = vmand %vm3748, %vm3712
      %vm3785 = vmand %vm3749, %vm3713
      %vm3786 = vmand %vm3750, %vm3714
      %vm3787 = vmand %vm3751, %vm3715
      %vm3788 = vmand %vm3752, %vm3716
      %vm3789 = vmand %vm3753, %vm3717
      %vm3790 = vmand %vm3754, %vm3718
      %vm3791 = vmand %vm3755, %vm3719
      %vm3792 = vmand %vm3756, %vm3720
      %vm3793 = vmand %vm3757, %vm3721
      %vm3794 = vmand %vm3758, %vm3722
      %vm3795 = vmand %vm3759, %vm3723
      %vm3796 = vmand %vm3760, %vm3724
      %vm3797 = vmand %vm3761, %vm3725
      %v3798 = vadd.s32 %v3304, 18
      %v3799 = vadd.s32 %v3315, 18
      %v3800 = vadd.s32 %v3326, 18
      %v3801 = vadd.s32 %v3337, 18
      %v3802 = vadd.s32 %v3348, 18
      %v3803 = vadd.s32 %v3359, 18
      %v3804 = vadd.s32 %v3370, 18
      %v3805 = vadd.s32 %v3381, 18
      %v3806 = vadd.s32 %v3392, 18
      %v3807 = vadd.s32 %v3403, 18
      %v3808 = vadd.s32 %v3414, 18
      %v3809 = vadd.s32 %v3425, 18
      %v3810 = vadd.s32 %v3436, 18
      %v3811 = vadd.s32 %v3447, 18
      %v3812 = vadd.s32 %v3458, 18
      %v3813 = vadd.s32 %v3469, 18
      %v3814 = vadd.s32 %v3480, 18
      %v3815 = vadd.s32 %v3491, 18
      %v3816 = vadd.s32 %v3502, 18
      %v3817 = vadd.s32 %v3513, 18
      %v3818 = vadd.s32 %v3524, 18
      %v3819 = vadd.s32 %v3535, 18
      %v3820 = vadd.s32 %v3546, 18
      %v3821 = vadd.s32 %v3557, 18
      %v3822 = vadd.s32 %v3568, 18
      %v3823 = vadd.s32 %v3579, 18
      %v3824 = vadd.s32 %v3590, 18
      %v3825 = vadd.s32 %v3601, 18
      %v3826 = vadd.s32 %v3612, 18
      %v3827 = vadd.s32 %v3623, 18
      %v3828 = vadd.s32 %v3634, 18
      %v3829 = vadd.s32 %v3645, 18
      %v3830 = vadd.s32 %v3656, 18
      %v3831 = vadd.s32 %v3667, 18
      %v3832 = vadd.s32 %v3678, 18
      %v3833 = vadd.s32 %v3689, 18
      %v3834 = vsel %vm3762, %v3798, %v3304
      %v3835 = vsel %vm3763, %v3799, %v3315
      %v3836 = vsel %vm3764, %v3800, %v3326
      %v3837 = vsel %vm3765, %v3801, %v3337
      %v3838 = vsel %vm3766, %v3802, %v3348
      %v3839 = vsel %vm3767, %v3803, %v3359
      %v3840 = vsel %vm3768, %v3804, %v3370
      %v3841 = vsel %vm3769, %v3805, %v3381
      %v3842 = vsel %vm3770, %v3806, %v3392
      %v3843 = vsel %vm3771, %v3807, %v3403
      %v3844 = vsel %vm3772, %v3808, %v3414
      %v3845 = vsel %vm3773, %v3809, %v3425
      %v3846 = vsel %vm3774, %v3810, %v3436
      %v3847 = vsel %vm3775, %v3811, %v3447
      %v3848 = vsel %vm3776, %v3812, %v3458
      %v3849 = vsel %vm3777, %v3813, %v3469
      %v3850 = vsel %vm3778, %v3814, %v3480
      %v3851 = vsel %vm3779, %v3815, %v3491
      %v3852 = vsel %vm3780, %v3816, %v3502
      %v3853 = vsel %vm3781, %v3817, %v3513
      %v3854 = vsel %vm3782, %v3818, %v3524
      %v3855 = vsel %vm3783, %v3819, %v3535
      %v3856 = vsel %vm3784, %v3820, %v3546
      %v3857 = vsel %vm3785, %v3821, %v3557
      %v3858 = vsel %vm3786, %v3822, %v3568
      %v3859 = vsel %vm3787, %v3823, %v3579
      %v3860 = vsel %vm3788, %v3824, %v3590
      %v3861 = vsel %vm3789, %v3825, %v3601
      %v3862 = vsel %vm3790, %v3826, %v3612
      %v3863 = vsel %vm3791, %v3827, %v3623
      %v3864 = vsel %vm3792, %v3828, %v3634
      %v3865 = vsel %vm3793, %v3829, %v3645
      %v3866 = vsel %vm3794, %v3830, %v3656
      %v3867 = vsel %vm3795, %v3831, %v3667
      %v3868 = vsel %vm3796, %v3832, %v3678
      %v3869 = vsel %vm3797, %v3833, %v3689
      %vm3870 = vcmp.lt.s32.totalorder %v3834, 16
      %vm3871 = vcmp.lt.s32.totalorder %v3835, 16
      %vm3872 = vcmp.lt.s32.totalorder %v3836, 16
      %vm3873 = vcmp.lt.s32.totalorder %v3837, 16
      %vm3874 = vcmp.lt.s32.totalorder %v3838, 16
      %vm3875 = vcmp.lt.s32.totalorder %v3839, 16
      %vm3876 = vcmp.lt.s32.totalorder %v3840, 16
      %vm3877 = vcmp.lt.s32.totalorder %v3841, 16
      %vm3878 = vcmp.lt.s32.totalorder %v3842, 16
      %vm3879 = vcmp.lt.s32.totalorder %v3843, 16
      %vm3880 = vcmp.lt.s32.totalorder %v3844, 16
      %vm3881 = vcmp.lt.s32.totalorder %v3845, 16
      %vm3882 = vcmp.lt.s32.totalorder %v3846, 16
      %vm3883 = vcmp.lt.s32.totalorder %v3847, 16
      %vm3884 = vcmp.lt.s32.totalorder %v3848, 16
      %vm3885 = vcmp.lt.s32.totalorder %v3849, 16
      %vm3886 = vcmp.lt.s32.totalorder %v3850, 16
      %vm3887 = vcmp.lt.s32.totalorder %v3851, 16
      %vm3888 = vcmp.lt.s32.totalorder %v3852, 16
      %vm3889 = vcmp.lt.s32.totalorder %v3853, 16
      %vm3890 = vcmp.lt.s32.totalorder %v3854, 16
      %vm3891 = vcmp.lt.s32.totalorder %v3855, 16
      %vm3892 = vcmp.lt.s32.totalorder %v3856, 16
      %vm3893 = vcmp.lt.s32.totalorder %v3857, 16
      %vm3894 = vcmp.lt.s32.totalorder %v3858, 16
      %vm3895 = vcmp.lt.s32.totalorder %v3859, 16
      %vm3896 = vcmp.lt.s32.totalorder %v3860, 16
      %vm3897 = vcmp.lt.s32.totalorder %v3861, 16
      %vm3898 = vcmp.lt.s32.totalorder %v3862, 16
      %vm3899 = vcmp.lt.s32.totalorder %v3863, 16
      %vm3900 = vcmp.lt.s32.totalorder %v3864, 16
      %vm3901 = vcmp.lt.s32.totalorder %v3865, 16
      %vm3902 = vcmp.lt.s32.totalorder %v3866, 16
      %vm3903 = vcmp.lt.s32.totalorder %v3867, 16
      %vm3904 = vcmp.lt.s32.totalorder %v3868, 16
      %vm3905 = vcmp.lt.s32.totalorder %v3869, 16
      %v3906 = vsel %vm3870, 1, 0
      %v3907 = vsel %vm3871, 1, 0
      %v3908 = vsel %vm3872, 1, 0
      %v3909 = vsel %vm3873, 1, 0
      %v3910 = vsel %vm3874, 1, 0
      %v3911 = vsel %vm3875, 1, 0
      %v3912 = vsel %vm3876, 1, 0
      %v3913 = vsel %vm3877, 1, 0
      %v3914 = vsel %vm3878, 1, 0
      %v3915 = vsel %vm3879, 1, 0
      %v3916 = vsel %vm3880, 1, 0
      %v3917 = vsel %vm3881, 1, 0
      %v3918 = vsel %vm3882, 1, 0
      %v3919 = vsel %vm3883, 1, 0
      %v3920 = vsel %vm3884, 1, 0
      %v3921 = vsel %vm3885, 1, 0
      %v3922 = vsel %vm3886, 1, 0
      %v3923 = vsel %vm3887, 1, 0
      %v3924 = vsel %vm3888, 1, 0
      %v3925 = vsel %vm3889, 1, 0
      %v3926 = vsel %vm3890, 1, 0
      %v3927 = vsel %vm3891, 1, 0
      %v3928 = vsel %vm3892, 1, 0
      %v3929 = vsel %vm3893, 1, 0
      %v3930 = vsel %vm3894, 1, 0
      %v3931 = vsel %vm3895, 1, 0
      %v3932 = vsel %vm3896, 1, 0
      %v3933 = vsel %vm3897, 1, 0
      %v3934 = vsel %vm3898, 1, 0
      %v3935 = vsel %vm3899, 1, 0
      %v3936 = vsel %vm3900, 1, 0
      %v3937 = vsel %vm3901, 1, 0
      %v3938 = vsel %vm3902, 1, 0
      %v3939 = vsel %vm3903, 1, 0
      %v3940 = vsel %vm3904, 1, 0
      %v3941 = vsel %vm3905, 1, 0
      %v3942 = vcvt.s32.f32 %v3906
      %v3943 = vcvt.s32.f32 %v3907
      %v3944 = vcvt.s32.f32 %v3908
      %v3945 = vcvt.s32.f32 %v3909
      %v3946 = vcvt.s32.f32 %v3910
      %v3947 = vcvt.s32.f32 %v3911
      %v3948 = vcvt.s32.f32 %v3912
      %v3949 = vcvt.s32.f32 %v3913
      %v3950 = vcvt.s32.f32 %v3914
      %v3951 = vcvt.s32.f32 %v3915
      %v3952 = vcvt.s32.f32 %v3916
      %v3953 = vcvt.s32.f32 %v3917
      %v3954 = vcvt.s32.f32 %v3918
      %v3955 = vcvt.s32.f32 %v3919
      %v3956 = vcvt.s32.f32 %v3920
      %v3957 = vcvt.s32.f32 %v3921
      %v3958 = vcvt.s32.f32 %v3922
      %v3959 = vcvt.s32.f32 %v3923
      %v3960 = vcvt.s32.f32 %v3924
      %v3961 = vcvt.s32.f32 %v3925
      %v3962 = vcvt.s32.f32 %v3926
      %v3963 = vcvt.s32.f32 %v3927
      %v3964 = vcvt.s32.f32 %v3928
      %v3965 = vcvt.s32.f32 %v3929
      %v3966 = vcvt.s32.f32 %v3930
      %v3967 = vcvt.s32.f32 %v3931
      %v3968 = vcvt.s32.f32 %v3932
      %v3969 = vcvt.s32.f32 %v3933
      %v3970 = vcvt.s32.f32 %v3934
      %v3971 = vcvt.s32.f32 %v3935
      %v3972 = vcvt.s32.f32 %v3936
      %v3973 = vcvt.s32.f32 %v3937
      %v3974 = vcvt.s32.f32 %v3938
      %v3975 = vcvt.s32.f32 %v3939
      %v3976 = vcvt.s32.f32 %v3940
      %v3977 = vcvt.s32.f32 %v3941
      %v3978 = vmul.f32 %v3185, %v3942
      %v3979 = vmul.f32 %v3186, %v3943
      %v3980 = vmul.f32 %v3187, %v3944
      %v3981 = vmul.f32 %v3188, %v3945
      %v3982 = vmul.f32 %v3189, %v3946
      %v3983 = vmul.f32 %v3190, %v3947
      %v3984 = vmul.f32 %v3191, %v3948
      %v3985 = vmul.f32 %v3192, %v3949
      %v3986 = vmul.f32 %v3193, %v3950
      %v3987 = vmul.f32 %v3194, %v3951
      %v3988 = vmul.f32 %v3195, %v3952
      %v3989 = vmul.f32 %v3196, %v3953
      %v3990 = vmul.f32 %v3197, %v3954
      %v3991 = vmul.f32 %v3198, %v3955
      %v3992 = vmul.f32 %v3199, %v3956
      %v3993 = vmul.f32 %v3200, %v3957
      %v3994 = vmul.f32 %v3201, %v3958
      %v3995 = vmul.f32 %v3202, %v3959
      %v3996 = vmul.f32 %v3203, %v3960
      %v3997 = vmul.f32 %v3204, %v3961
      %v3998 = vmul.f32 %v3205, %v3962
      %v3999 = vmul.f32 %v3206, %v3963
      %v4000 = vmul.f32 %v3207, %v3964
      %v4001 = vmul.f32 %v3208, %v3965
      %v4002 = vmul.f32 %v3209, %v3966
      %v4003 = vmul.f32 %v3210, %v3967
      %v4004 = vmul.f32 %v3211, %v3968
      %v4005 = vmul.f32 %v3212, %v3969
      %v4006 = vmul.f32 %v3213, %v3970
      %v4007 = vmul.f32 %v3214, %v3971
      %v4008 = vmul.f32 %v3215, %v3972
      %v4009 = vmul.f32 %v3216, %v3973
      %v4010 = vmul.f32 %v3217, %v3974
      %v4011 = vmul.f32 %v3218, %v3975
      %v4012 = vmul.f32 %v3219, %v3976
      %v4013 = vmul.f32 %v3220, %v3977
      %v4014 = vadd.f32 %v3978, %v3979
      %v4015 = vadd.f32 %v4014, %v3980
      %v4016 = vadd.f32 %v4015, %v3981
      %v4017 = vadd.f32 %v4016, %v3982
      %v4018 = vadd.f32 %v4017, %v3983
      %v4019 = vadd.f32 %v4018, %v3984
      %v4020 = vadd.f32 %v4019, %v3985
      %v4021 = vadd.f32 %v4020, %v3986
      %v4022 = vadd.f32 %v4021, %v3987
      %v4023 = vadd.f32 %v4022, %v3988
      %v4024 = vadd.f32 %v4023, %v3989
      %v4025 = vadd.f32 %v4024, %v3990
      %v4026 = vadd.f32 %v4025, %v3991
      %v4027 = vadd.f32 %v4026, %v3992
      %v4028 = vadd.f32 %v4027, %v3993
      %v4029 = vadd.f32 %v4028, %v3994
      %v4030 = vadd.f32 %v4029, %v3995
      %v4031 = vadd.f32 %v4030, %v3996
      %v4032 = vadd.f32 %v4031, %v3997
      %v4033 = vadd.f32 %v4032, %v3998
      %v4034 = vadd.f32 %v4033, %v3999
      %v4035 = vadd.f32 %v4034, %v4000
      %v4036 = vadd.f32 %v4035, %v4001
      %v4037 = vadd.f32 %v4036, %v4002
      %v4038 = vadd.f32 %v4037, %v4003
      %v4039 = vadd.f32 %v4038, %v4004
      %v4040 = vadd.f32 %v4039, %v4005
      %v4041 = vadd.f32 %v4040, %v4006
      %v4042 = vadd.f32 %v4041, %v4007
      %v4043 = vadd.f32 %v4042, %v4008
      %v4044 = vadd.f32 %v4043, %v4009
      %v4045 = vadd.f32 %v4044, %v4010
      %v4046 = vadd.f32 %v4045, %v4011
      %v4047 = vadd.f32 %v4046, %v4012
      %v4048 = vadd.f32 %v4047, %v4013
      %v4049 = vrot.slane %v4048, 4
      %v4050 = vadd.f32 %v4048, %v4049
      %v4051 = vrot.slane %v4050, 2
      %v4052 = vadd.f32 %v4050, %v4051
      %v4053 = vrot.slane %v4052, 1
      %v4054 = vadd.f32 %v4052, %v4053
      %v4055 = vmul.f32 %v3978, %v3978
      %v4056 = vmul.f32 %v3979, %v3979
      %v4057 = vmul.f32 %v3980, %v3980
      %v4058 = vmul.f32 %v3981, %v3981
      %v4059 = vmul.f32 %v3982, %v3982
      %v4060 = vmul.f32 %v3983, %v3983
      %v4061 = vmul.f32 %v3984, %v3984
      %v4062 = vmul.f32 %v3985, %v3985
      %v4063 = vmul.f32 %v3986, %v3986
      %v4064 = vmul.f32 %v3987, %v3987
      %v4065 = vmul.f32 %v3988, %v3988
      %v4066 = vmul.f32 %v3989, %v3989
      %v4067 = vmul.f32 %v3990, %v3990
      %v4068 = vmul.f32 %v3991, %v3991
      %v4069 = vmul.f32 %v3992, %v3992
      %v4070 = vmul.f32 %v3993, %v3993
      %v4071 = vmul.f32 %v3994, %v3994
      %v4072 = vmul.f32 %v3995, %v3995
      %v4073 = vmul.f32 %v3996, %v3996
      %v4074 = vmul.f32 %v3997, %v3997
      %v4075 = vmul.f32 %v3998, %v3998
      %v4076 = vmul.f32 %v3999, %v3999
      %v4077 = vmul.f32 %v4000, %v4000
      %v4078 = vmul.f32 %v4001, %v4001
      %v4079 = vmul.f32 %v4002, %v4002
      %v4080 = vmul.f32 %v4003, %v4003
      %v4081 = vmul.f32 %v4004, %v4004
      %v4082 = vmul.f32 %v4005, %v4005
      %v4083 = vmul.f32 %v4006, %v4006
      %v4084 = vmul.f32 %v4007, %v4007
      %v4085 = vmul.f32 %v4008, %v4008
      %v4086 = vmul.f32 %v4009, %v4009
      %v4087 = vmul.f32 %v4010, %v4010
      %v4088 = vmul.f32 %v4011, %v4011
      %v4089 = vmul.f32 %v4012, %v4012
      %v4090 = vmul.f32 %v4013, %v4013
      %v4091 = vadd.f32 %v4055, %v4056
      %v4092 = vadd.f32 %v4091, %v4057
      %v4093 = vadd.f32 %v4092, %v4058
      %v4094 = vadd.f32 %v4093, %v4059
      %v4095 = vadd.f32 %v4094, %v4060
      %v4096 = vadd.f32 %v4095, %v4061
      %v4097 = vadd.f32 %v4096, %v4062
      %v4098 = vadd.f32 %v4097, %v4063
      %v4099 = vadd.f32 %v4098, %v4064
      %v4100 = vadd.f32 %v4099, %v4065
      %v4101 = vadd.f32 %v4100, %v4066
      %v4102 = vadd.f32 %v4101, %v4067
      %v4103 = vadd.f32 %v4102, %v4068
      %v4104 = vadd.f32 %v4103, %v4069
      %v4105 = vadd.f32 %v4104, %v4070
      %v4106 = vadd.f32 %v4105, %v4071
      %v4107 = vadd.f32 %v4106, %v4072
      %v4108 = vadd.f32 %v4107, %v4073
      %v4109 = vadd.f32 %v4108, %v4074
      %v4110 = vadd.f32 %v4109, %v4075
      %v4111 = vadd.f32 %v4110, %v4076
      %v4112 = vadd.f32 %v4111, %v4077
      %v4113 = vadd.f32 %v4112, %v4078
      %v4114 = vadd.f32 %v4113, %v4079
      %v4115 = vadd.f32 %v4114, %v4080
      %v4116 = vadd.f32 %v4115, %v4081
      %v4117 = vadd.f32 %v4116, %v4082
      %v4118 = vadd.f32 %v4117, %v4083
      %v4119 = vadd.f32 %v4118, %v4084
      %v4120 = vadd.f32 %v4119, %v4085
      %v4121 = vadd.f32 %v4120, %v4086
      %v4122 = vadd.f32 %v4121, %v4087
      %v4123 = vadd.f32 %v4122, %v4088
      %v4124 = vadd.f32 %v4123, %v4089
      %v4125 = vadd.f32 %v4124, %v4090
      %v4126 = vrot.slane %v4125, 4
      %v4127 = vadd.f32 %v4125, %v4126
      %v4128 = vrot.slane %v4127, 2
      %v4129 = vadd.f32 %v4127, %v4128
      %v4130 = vrot.slane %v4129, 1
      %v4131 = vadd.f32 %v4129, %v4130
      %vm4132 = vcmask 1040384
      %v4133 = vsel %vm4132, %v4054, %v4131
      %4134 = vst [vmem:[%s208] sm:$0x3] %v4133
      %p4135 = scmp.lt.s32.totalorder %s16, 1
      %s4136 = scalar_select %p4135, %s16, 1
      %s4137 = smul.addr %s4136, 36
      %s4138 = smul.addr %s4137, 8
      %s4139 = scalar_lea.vmem %s3, %s4138
      %p4140 = scmp.lt.s32.totalorder %s16, 1
      %s4141 = scalar_select %p4140, %s16, 1
      %s4142 = smul.addr %s4141, 2
      %s4143 = scalar_lea.vmem %s4, %s4142
      // Predicated region
      $region33: #{encode_block_forward.4} parent=31 // pred_check
        %p4144 = pneg %p102
      $region34: #{encode_block_forward.4} parent=31 // pred_check_branch
        %4146 = sbr.rel (%p4144) target = $region36
      $region35: #{encode_block_forward.4} parent=31 // pred_region
        _
      $region36: #{encode_block_forward.4} parent=31 // pred_fallthru
        _
      // Predicated region
      $region37: #{encode_block_forward.4} parent=31 // pred_check
        %p4147 = pneg %p128
      $region38: #{encode_block_forward.4} parent=31 // pred_check_branch
        %4149 = sbr.rel (%p4147) target = $region40
      $region39: #{encode_block_forward.4} parent=31 // pred_region
        _
      $region40: #{encode_block_forward.4} parent=31 // pred_fallthru
        _
    $region32: #{encode_block_forward.4} parent=5 // pred_fallthru
      _
    %p4150 = scmp.le.s32.totalorder 2, %s11
    // Predicated region
    $region41: #{encode_block_forward.4} parent=5 // pred_check
      %p4151 = pneg %p4150
    $region42: #{encode_block_forward.4} parent=5 // pred_check_branch
      %4153 = sbr.rel (%p4151) target = $region44
    $region43: #{encode_block_forward.4} parent=5 // pred_region
      %s4154 = ssub.s32 %s11, 2
      // Predicated region
      $region45: #{encode_block_forward.4} parent=43 // pred_check
        %p4155 = pneg %p108
      $region46: #{encode_block_forward.4} parent=43 // pred_check_branch
        %4157 = sbr.rel (%p4155) target = $region48
      $region47: #{encode_block_forward.4} parent=43 // pred_region
        %p4158 = scmp.lt.s32.totalorder %s17, 1
        %s4159 = scalar_select %p4158, %s17, 1
        %s4160 = smul.addr %s4159, 36
        %s4161 = smul.addr %s4160, 8
        %s4162 = scalar_lea.vmem %s3, %s4161
      $region48: #{encode_block_forward.4} parent=43 // pred_fallthru
        _
      // Predicated region
      $region49: #{encode_block_forward.4} parent=43 // pred_check
        %p4163 = pneg %p134
      $region50: #{encode_block_forward.4} parent=43 // pred_check_branch
        %4165 = sbr.rel (%p4163) target = $region52
      $region51: #{encode_block_forward.4} parent=43 // pred_region
        %p4166 = scmp.lt.s32.totalorder %s17, 1
        %s4167 = scalar_select %p4166, %s17, 1
        %s4168 = smul.addr %s4167, 2
        %s4169 = scalar_lea.vmem %s4, %s4168
      $region52: #{encode_block_forward.4} parent=43 // pred_fallthru
        _
    $region44: #{encode_block_forward.4} parent=5 // pred_fallthru
      _
  $region6: #{encode_block_forward.4} parent=0 // loop_footer
    %s15 = sadd.s32 1, %s11
  $region7: #{encode_block_forward.4} parent=0 // loop_footer_branch
    %10 = sbr.rel target = $region3
  $region8: #{encode_block_forward.4} parent=0 // loop_exit
    _

</llo_original>
